<compile_context>
chip_gen: v6e
topology: v6e:2x2x1
jax: 0.10.0
libtpu: 0.0.40
codegen_flags: <defaults>
</compile_context>

<pallas_src>
import functools

import jax
import jax.numpy as jnp
from jax import lax
from jax.experimental import pallas as pl
from jax.experimental.pallas import tpu as pltpu


# ----------------------------- Pallas kernel -------------------------------


def _flowhead3d_fused_kernel(x0_ref, x1_ref, x2_ref, w1_ref, b1_ref,
                             w2_ref, b2_ref, o_ref, ring_ref, *, H, W, D):
    """One (n, d) grid step of the fused conv1+ReLU+conv2.

    x{k}_ref : (1, 1, H+2, W+2, Cin)   padded input depth slice at padded d+k
    w1_ref   : (3, 3, 3, Cin, Chid)    conv1 weights (VMEM resident)
    b1_ref   : (1, Chid)
    w2_ref   : (3, 3, 3, Chid, Cout)   conv2 weights (VMEM resident)
    b2_ref   : (1, Cout)
    o_ref    : (1, 1, H, W, Cout)      output depth slice d-1 (written if d>=1)
    ring_ref : (3, H+2, W+2, Chid)     rolling hidden ring, slot h%3 <- hidden[h]
    """
    d = pl.program_id(1)
    Cin = x0_ref.shape[-1]
    Chid = w1_ref.shape[-1]
    Cout = w2_ref.shape[-1]

    # New batch element: clear the whole ring.  This zeroes both the slot that
    # stands in for hidden[-1] (depth padding) and the spatial borders that
    # conv2's padding=1 relies on (borders are never written afterwards).
    @pl.when(d == 0)
    def _():
        ring_ref[...] = jnp.zeros_like(ring_ref)

    # conv1 + ReLU for hidden depth d (uses padded input depths d, d+1, d+2).
    @pl.when(d < D)
    def _():
        slabs = (x0_ref, x1_ref, x2_ref)
        acc = jnp.zeros((H * W, Chid), jnp.float32)
        for kd in range(3):
            for kh in range(3):
                for kw in range(3):
                    patch = slabs[kd][0, 0, pl.ds(kh, H), pl.ds(kw, W), :]
                    acc = acc + jnp.dot(patch.reshape(H * W, Cin),
                                        w1_ref[kd, kh, kw],
                                        preferred_element_type=jnp.float32)
        hid = jnp.maximum(acc + b1_ref[0], 0.0)
        ring_ref[lax.rem(d, 3), pl.ds(1, H), pl.ds(1, W), :] = (
            hid.reshape(H, W, Chid))

    # Last step of this batch element: hidden[D] is depth padding -> zeros.
    @pl.when(d == D)
    def _():
        ring_ref[lax.rem(d, 3), pl.ds(1, H), pl.ds(1, W), :] = (
            jnp.zeros((H, W, Chid), jnp.float32))

    # conv2 for output depth d-1, consuming hidden depths d-2, d-1, d, which
    # live in ring slots (d+1)%3, (d+2)%3, d%3 (mod-3 rotation, non-negative).
    @pl.when(d >= 1)
    def _():
        slots = (lax.rem(d + 1, 3), lax.rem(d + 2, 3), lax.rem(d, 3))
        acc2 = jnp.zeros((H * W, Cout), jnp.float32)
        for kd2 in range(3):
            slot = slots[kd2]
            for kh in range(3):
                for kw in range(3):
                    patch = ring_ref[slot, pl.ds(kh, H), pl.ds(kw, W), :]
                    acc2 = acc2 + jnp.dot(patch.reshape(H * W, Chid),
                                          w2_ref[kd2, kh, kw],
                                          preferred_element_type=jnp.float32)
        out = acc2 + b2_ref[0]
        o_ref[0, 0] = out.reshape(H, W, Cout).astype(o_ref.dtype)


def flowhead3d_pallas(x_ndhwc, w1, b1, w2, b2):
    """Fused FlowHead3D forward on NDHWC input.

    x_ndhwc: (N, D, H, W, Cin) float32
    w1: (3, 3, 3, Cin, Chid),  b1: (Chid,)
    w2: (3, 3, 3, Chid, Cout), b2: (Cout,)
    returns (N, D, H, W, Cout)
    """
    N, D, H, W, Cin = x_ndhwc.shape
    assert w1.shape[:4] == (3, 3, 3, Cin), w1.shape
    Chid = w1.shape[-1]
    assert w2.shape[:4] == (3, 3, 3, Chid), w2.shape
    Cout = w2.shape[-1]

    # Single spatial + depth zero-pad (padding=1); the only extra HBM copy.
    xp = jnp.pad(x_ndhwc, ((0, 0), (1, 1), (1, 1), (1, 1), (0, 0)))
    b1r = b1.reshape(1, Chid)
    b2r = b2.reshape(1, Cout)

    kernel = functools.partial(_flowhead3d_fused_kernel, H=H, W=W, D=D)

    def x_spec(kd):
        # Depth block size 1 => block index == element index, so d + kd is the
        # padded depth; clamp so the unused fetch at the extra step d == D stays
        # in range.
        return pl.BlockSpec(
            (1, 1, H + 2, W + 2, Cin),
            lambda n, d, _kd=kd: (n, jnp.minimum(d + _kd, D + 1), 0, 0, 0))

    flops = 2 * N * D * H * W * 27 * (Cin * Chid + Chid * Cout)
    bytes_accessed = 4 * (3 * xp.size + w1.size + b1.size + w2.size + b2.size
                          + N * D * H * W * Cout)

    out = pl.pallas_call(
        kernel,
        out_shape=jax.ShapeDtypeStruct((N, D, H, W, Cout), x_ndhwc.dtype),
        grid_spec=pltpu.PrefetchScalarGridSpec(
            num_scalar_prefetch=0,
            grid=(N, D + 1),
            in_specs=[
                x_spec(0), x_spec(1), x_spec(2),
                pl.BlockSpec((3, 3, 3, Cin, Chid),
                             lambda n, d: (0, 0, 0, 0, 0)),
                pl.BlockSpec((1, Chid), lambda n, d: (0, 0)),
                pl.BlockSpec((3, 3, 3, Chid, Cout),
                             lambda n, d: (0, 0, 0, 0, 0)),
                pl.BlockSpec((1, Cout), lambda n, d: (0, 0)),
            ],
            out_specs=pl.BlockSpec(
                (1, 1, H, W, Cout),
                # Output depth d-1; the d == 0 step maps (harmlessly) to 0 and
                # does not write -- the block is revisited and written at d == 1
                # before writeback.
                lambda n, d: (n, jnp.maximum(d - 1, 0), 0, 0, 0)),
            scratch_shapes=[
                pltpu.VMEM((3, H + 2, W + 2, Chid), jnp.float32),
            ],
        ),
        compiler_params=pltpu.CompilerParams(
            # Depth axis is sequential (ring-buffer carry); batch is parallel.
            dimension_semantics=("parallel", "arbitrary"),
            vmem_limit_bytes=48 * 1024 * 1024,
        ),
        cost_estimate=pl.CostEstimate(
            flops=flops, transcendentals=0, bytes_accessed=bytes_accessed),
    )(xp, xp, xp, w1, b1r, w2, b2r)
    return out


# ----------------------------- FlowHead3D ----------------------------------


def init_flowhead3d_params(key, input_dim, hidden_dim):
    """Init matching the PyTorch module's parameter shapes.

    PyTorch Conv3d weight is (Cout, Cin, 3, 3, 3); we store the equivalent
    (3, 3, 3, Cin, Cout) ("DHWIO") layout directly.
    """
    k1, k2, k3, k4 = jax.random.split(key, 4)
    fan1 = input_dim * 27
    fan2 = hidden_dim * 27
    bound1 = 1.0 / jnp.sqrt(fan1)
    bound2 = 1.0 / jnp.sqrt(fan2)
    return {
        "w1": jax.random.uniform(k1, (3, 3, 3, input_dim, hidden_dim),
                                 jnp.float32, -bound1, bound1),
        "b1": jax.random.uniform(k2, (hidden_dim,), jnp.float32, -bound1, bound1),
        "w2": jax.random.uniform(k3, (3, 3, 3, hidden_dim, 2),
                                 jnp.float32, -bound2, bound2),
        "b2": jax.random.uniform(k4, (2,), jnp.float32, -bound2, bound2),
    }


def flowhead3d_forward(x_ncdhw, params):
    """Forward pass.  Input/output in PyTorch NCDHW layout."""
    x = jnp.transpose(x_ncdhw, (0, 2, 3, 4, 1))          # NCDHW -> NDHWC
    y = flowhead3d_pallas(x, params["w1"], params["b1"],
                          params["w2"], params["b2"])
    return jnp.transpose(y, (0, 4, 1, 2, 3))              # NDHWC -> NCDHW


# ------------------------------ reference ----------------------------------


def _conv3d_ref(x_ndhwc, w, b):
    out = lax.conv_general_dilated(
        x_ndhwc, w,
        window_strides=(1, 1, 1),
        padding="SAME",
        dimension_numbers=("NDHWC", "DHWIO", "NDHWC"),
    )
    return out + b


def flowhead3d_ref(x_ncdhw, params):
    x = jnp.transpose(x_ncdhw, (0, 2, 3, 4, 1))
    h = jnp.maximum(_conv3d_ref(x, params["w1"], params["b1"]), 0.0)
    y = _conv3d_ref(h, params["w2"], params["b2"])
    return jnp.transpose(y, (0, 4, 1, 2, 3))


# -------------------------------- main --------------------------------------


if __name__ == "__main__":
    key = jax.random.PRNGKey(0)
    kx, kp = jax.random.split(key)

    # Small shapes consistent with the module: batch=2, input_dim=8,
    # hidden_dim=16, spatial D=H=W=8.  (Module defaults are 128/256.)
    N, Cin, Chid, D, H, W = 2, 8, 16, 8, 8, 8

    x = jax.random.normal(kx, (N, Cin, D, H, W), dtype=jnp.float32)  # NCDHW
    params = init_flowhead3d_params(kp, input_dim=Cin, hidden_dim=Chid)

    fwd = jax.jit(flowhead3d_forward)
    y = jax.block_until_ready(fwd(x, params))
    y_ref = jax.block_until_ready(flowhead3d_ref(x, params))

    assert y.shape == (N, 2, D, H, W), y.shape
    assert jnp.allclose(y, y_ref, atol=1e-4, rtol=1e-4), (
        float(jnp.max(jnp.abs(y - y_ref)))
    )

    print("KERNEL_OK")
</pallas_src>

<mosaic_0001>
module attributes {stable_mosaic.version = 11 : i64} {
  func.func @_flowhead3d_fused_kernel(%arg0: i32, %arg1: i32, %arg2: memref<1x1x10x10x8xf32, #tpu.memory_space<vmem>>, %arg3: memref<1x1x10x10x8xf32, #tpu.memory_space<vmem>>, %arg4: memref<1x1x10x10x8xf32, #tpu.memory_space<vmem>>, %arg5: memref<3x3x3x8x16xf32, #tpu.memory_space<vmem>>, %arg6: memref<1x16xf32, #tpu.memory_space<vmem>>, %arg7: memref<3x3x3x16x2xf32, #tpu.memory_space<vmem>>, %arg8: memref<1x2xf32, #tpu.memory_space<vmem>>, %arg9: memref<1x1x8x8x2xf32, #tpu.memory_space<vmem>>, %arg10: memref<3x10x10x16xf32, #tpu.memory_space<vmem>>) attributes {dimension_semantics = [#tpu.dimension_semantics<parallel>, #tpu.dimension_semantics<arbitrary>], iteration_bounds = array<i64: 2, 9>, scalar_prefetch = 0 : i64, scratch_operands = 1 : i64, tpu.core_type = #tpu.core_type<tc>, window_params = [{transform_indices = @transform_0, window_bounds = array<i64: 1, 1, 10, 10, 8>}, {transform_indices = @transform_1, window_bounds = array<i64: 1, 1, 10, 10, 8>}, {transform_indices = @transform_2, window_bounds = array<i64: 1, 1, 10, 10, 8>}, {pipeline_mode = #tpu.pipeline_mode<synchronous>, transform_indices = @transform_3, window_bounds = array<i64: 3, 3, 3, 8, 16>}, {pipeline_mode = #tpu.pipeline_mode<synchronous>, transform_indices = @transform_4, window_bounds = array<i64: 1, 16>}, {pipeline_mode = #tpu.pipeline_mode<synchronous>, transform_indices = @transform_5, window_bounds = array<i64: 3, 3, 3, 16, 2>}, {pipeline_mode = #tpu.pipeline_mode<synchronous>, transform_indices = @transform_6, window_bounds = array<i64: 1, 2>}, {transform_indices = @transform_7, window_bounds = array<i64: 1, 1, 8, 8, 2>}]} {
    %c0_i32 = arith.constant 0 : i32
    %0 = arith.cmpi eq, %arg1, %c0_i32 : i32
    %1 = arith.extui %0 : i1 to i32
    %c0_i32_0 = arith.constant 0 : i32
    %2 = arith.cmpi ne, %1, %c0_i32_0 : i32
    scf.if %2 {
      %cst = arith.constant 0.000000e+00 : f32
      %12 = vector.broadcast %cst : f32 to vector<3x10x10x16xf32>
      %c0 = arith.constant 0 : index
      %c0_5 = arith.constant 0 : index
      %c0_6 = arith.constant 0 : index
      %c0_7 = arith.constant 0 : index
      %13 = vector.load %arg10[%c0, %c0_5, %c0_6, %c0_7] : memref<3x10x10x16xf32, #tpu.memory_space<vmem>>, vector<3x10x10x16xf32>
      tpu.vector_store %arg10[%c0, %c0_5, %c0_6, %c0_7], %12 {strides = array<i32>} : memref<3x10x10x16xf32, #tpu.memory_space<vmem>>, vector<3x10x10x16xf32>,
    } else {
    }
    %c8_i32 = arith.constant 8 : i32
    %3 = arith.cmpi slt, %arg1, %c8_i32 : i32
    %4 = arith.extui %3 : i1 to i32
    %c0_i32_1 = arith.constant 0 : i32
    %5 = arith.cmpi ne, %4, %c0_i32_1 : i32
    scf.if %5 {
      %cst = arith.constant 0.000000e+00 : f32
      %12 = vector.broadcast %cst : f32 to vector<64x16xf32>
      %c0 = arith.constant 0 : index
      %c0_5 = arith.constant 0 : index
      %c0_6 = arith.constant 0 : index
      %c0_7 = arith.constant 0 : index
      %c0_8 = arith.constant 0 : index
      %13 = vector.load %arg2[%c0, %c0_5, %c0_6, %c0_7, %c0_8] : memref<1x1x10x10x8xf32, #tpu.memory_space<vmem>>, vector<1x1x8x8x8xf32>
      %14 = vector.shape_cast %13 : vector<1x1x8x8x8xf32> to vector<8x8x8xf32>
      %15 = vector.shape_cast %14 : vector<8x8x8xf32> to vector<64x8xf32>
      %c0_9 = arith.constant 0 : index
      %c0_10 = arith.constant 0 : index
      %c0_11 = arith.constant 0 : index
      %c0_12 = arith.constant 0 : index
      %c0_13 = arith.constant 0 : index
      %16 = vector.load %arg5[%c0_9, %c0_10, %c0_11, %c0_12, %c0_13] : memref<3x3x3x8x16xf32, #tpu.memory_space<vmem>>, vector<1x1x1x8x16xf32>
      %17 = vector.shape_cast %16 : vector<1x1x1x8x16xf32> to vector<8x16xf32>
      %cst_14 = arith.constant dense<0.000000e+00> : vector<64x16xf32>
      %18 = tpu.matmul %15, %17, %cst_14 {dimension_numbers = #tpu.dot_dimension_numbers<[1], [0], [0], [1], [0, 0, 1, 1], [], []>} : vector<64x8xf32>, vector<8x16xf32>, vector<64x16xf32> -> vector<64x16xf32>
      %19 = arith.addf %12, %18 : vector<64x16xf32>
      %c0_15 = arith.constant 0 : index
      %c0_16 = arith.constant 0 : index
      %c0_17 = arith.constant 0 : index
      %c1 = arith.constant 1 : index
      %c0_18 = arith.constant 0 : index
      %20 = vector.load %arg2[%c0_15, %c0_16, %c0_17, %c1, %c0_18] : memref<1x1x10x10x8xf32, #tpu.memory_space<vmem>>, vector<1x1x8x8x8xf32>
      %21 = vector.shape_cast %20 : vector<1x1x8x8x8xf32> to vector<8x8x8xf32>
      %22 = vector.shape_cast %21 : vector<8x8x8xf32> to vector<64x8xf32>
      %c0_19 = arith.constant 0 : index
      %c0_20 = arith.constant 0 : index
      %c1_21 = arith.constant 1 : index
      %c0_22 = arith.constant 0 : index
      %c0_23 = arith.constant 0 : index
      %23 = vector.load %arg5[%c0_19, %c0_20, %c1_21, %c0_22, %c0_23] : memref<3x3x3x8x16xf32, #tpu.memory_space<vmem>>, vector<1x1x1x8x16xf32>
      %24 = vector.shape_cast %23 : vector<1x1x1x8x16xf32> to vector<8x16xf32>
      %cst_24 = arith.constant dense<0.000000e+00> : vector<64x16xf32>
      %25 = tpu.matmul %22, %24, %cst_24 {dimension_numbers = #tpu.dot_dimension_numbers<[1], [0], [0], [1], [0, 0, 1, 1], [], []>} : vector<64x8xf32>, vector<8x16xf32>, vector<64x16xf32> -> vector<64x16xf32>
      %26 = arith.addf %19, %25 : vector<64x16xf32>
      %c0_25 = arith.constant 0 : index
      %c0_26 = arith.constant 0 : index
      %c0_27 = arith.constant 0 : index
      %c2 = arith.constant 2 : index
      %c0_28 = arith.constant 0 : index
      %27 = vector.load %arg2[%c0_25, %c0_26, %c0_27, %c2, %c0_28] : memref<1x1x10x10x8xf32, #tpu.memory_space<vmem>>, vector<1x1x8x8x8xf32>
      %28 = vector.shape_cast %27 : vector<1x1x8x8x8xf32> to vector<8x8x8xf32>
      %29 = vector.shape_cast %28 : vector<8x8x8xf32> to vector<64x8xf32>
      %c0_29 = arith.constant 0 : index
      %c0_30 = arith.constant 0 : index
      %c2_31 = arith.constant 2 : index
      %c0_32 = arith.constant 0 : index
      %c0_33 = arith.constant 0 : index
      %30 = vector.load %arg5[%c0_29, %c0_30, %c2_31, %c0_32, %c0_33] : memref<3x3x3x8x16xf32, #tpu.memory_space<vmem>>, vector<1x1x1x8x16xf32>
      %31 = vector.shape_cast %30 : vector<1x1x1x8x16xf32> to vector<8x16xf32>
      %cst_34 = arith.constant dense<0.000000e+00> : vector<64x16xf32>
      %32 = tpu.matmul %29, %31, %cst_34 {dimension_numbers = #tpu.dot_dimension_numbers<[1], [0], [0], [1], [0, 0, 1, 1], [], []>} : vector<64x8xf32>, vector<8x16xf32>, vector<64x16xf32> -> vector<64x16xf32>
      %33 = arith.addf %26, %32 : vector<64x16xf32>
      %c0_35 = arith.constant 0 : index
      %c0_36 = arith.constant 0 : index
      %c1_37 = arith.constant 1 : index
      %c0_38 = arith.constant 0 : index
      %c0_39 = arith.constant 0 : index
      %34 = vector.load %arg2[%c0_35, %c0_36, %c1_37, %c0_38, %c0_39] : memref<1x1x10x10x8xf32, #tpu.memory_space<vmem>>, vector<1x1x8x8x8xf32>
      %35 = vector.shape_cast %34 : vector<1x1x8x8x8xf32> to vector<8x8x8xf32>
      %36 = vector.shape_cast %35 : vector<8x8x8xf32> to vector<64x8xf32>
      %c0_40 = arith.constant 0 : index
      %c1_41 = arith.constant 1 : index
      %c0_42 = arith.constant 0 : index
      %c0_43 = arith.constant 0 : index
      %c0_44 = arith.constant 0 : index
      %37 = vector.load %arg5[%c0_40, %c1_41, %c0_42, %c0_43, %c0_44] : memref<3x3x3x8x16xf32, #tpu.memory_space<vmem>>, vector<1x1x1x8x16xf32>
      %38 = vector.shape_cast %37 : vector<1x1x1x8x16xf32> to vector<8x16xf32>
      %cst_45 = arith.constant dense<0.000000e+00> : vector<64x16xf32>
      %39 = tpu.matmul %36, %38, %cst_45 {dimension_numbers = #tpu.dot_dimension_numbers<[1], [0], [0], [1], [0, 0, 1, 1], [], []>} : vector<64x8xf32>, vector<8x16xf32>, vector<64x16xf32> -> vector<64x16xf32>
      %40 = arith.addf %33, %39 : vector<64x16xf32>
      %c0_46 = arith.constant 0 : index
      %c0_47 = arith.constant 0 : index
      %c1_48 = arith.constant 1 : index
      %c1_49 = arith.constant 1 : index
      %c0_50 = arith.constant 0 : index
      %41 = vector.load %arg2[%c0_46, %c0_47, %c1_48, %c1_49, %c0_50] : memref<1x1x10x10x8xf32, #tpu.memory_space<vmem>>, vector<1x1x8x8x8xf32>
      %42 = vector.shape_cast %41 : vector<1x1x8x8x8xf32> to vector<8x8x8xf32>
      %43 = vector.shape_cast %42 : vector<8x8x8xf32> to vector<64x8xf32>
      %c0_51 = arith.constant 0 : index
      %c1_52 = arith.constant 1 : index
      %c1_53 = arith.constant 1 : index
      %c0_54 = arith.constant 0 : index
      %c0_55 = arith.constant 0 : index
      %44 = vector.load %arg5[%c0_51, %c1_52, %c1_53, %c0_54, %c0_55] : memref<3x3x3x8x16xf32, #tpu.memory_space<vmem>>, vector<1x1x1x8x16xf32>
      %45 = vector.shape_cast %44 : vector<1x1x1x8x16xf32> to vector<8x16xf32>
      %cst_56 = arith.constant dense<0.000000e+00> : vector<64x16xf32>
      %46 = tpu.matmul %43, %45, %cst_56 {dimension_numbers = #tpu.dot_dimension_numbers<[1], [0], [0], [1], [0, 0, 1, 1], [], []>} : vector<64x8xf32>, vector<8x16xf32>, vector<64x16xf32> -> vector<64x16xf32>
      %47 = arith.addf %40, %46 : vector<64x16xf32>
      %c0_57 = arith.constant 0 : index
      %c0_58 = arith.constant 0 : index
      %c1_59 = arith.constant 1 : index
      %c2_60 = arith.constant 2 : index
      %c0_61 = arith.constant 0 : index
      %48 = vector.load %arg2[%c0_57, %c0_58, %c1_59, %c2_60, %c0_61] : memref<1x1x10x10x8xf32, #tpu.memory_space<vmem>>, vector<1x1x8x8x8xf32>
      %49 = vector.shape_cast %48 : vector<1x1x8x8x8xf32> to vector<8x8x8xf32>
      %50 = vector.shape_cast %49 : vector<8x8x8xf32> to vector<64x8xf32>
      %c0_62 = arith.constant 0 : index
      %c1_63 = arith.constant 1 : index
      %c2_64 = arith.constant 2 : index
      %c0_65 = arith.constant 0 : index
      %c0_66 = arith.constant 0 : index
      %51 = vector.load %arg5[%c0_62, %c1_63, %c2_64, %c0_65, %c0_66] : memref<3x3x3x8x16xf32, #tpu.memory_space<vmem>>, vector<1x1x1x8x16xf32>
      %52 = vector.shape_cast %51 : vector<1x1x1x8x16xf32> to vector<8x16xf32>
      %cst_67 = arith.constant dense<0.000000e+00> : vector<64x16xf32>
      %53 = tpu.matmul %50, %52, %cst_67 {dimension_numbers = #tpu.dot_dimension_numbers<[1], [0], [0], [1], [0, 0, 1, 1], [], []>} : vector<64x8xf32>, vector<8x16xf32>, vector<64x16xf32> -> vector<64x16xf32>
      %54 = arith.addf %47, %53 : vector<64x16xf32>
      %c0_68 = arith.constant 0 : index
      %c0_69 = arith.constant 0 : index
      %c2_70 = arith.constant 2 : index
      %c0_71 = arith.constant 0 : index
      %c0_72 = arith.constant 0 : index
      %55 = vector.load %arg2[%c0_68, %c0_69, %c2_70, %c0_71, %c0_72] : memref<1x1x10x10x8xf32, #tpu.memory_space<vmem>>, vector<1x1x8x8x8xf32>
      %56 = vector.shape_cast %55 : vector<1x1x8x8x8xf32> to vector<8x8x8xf32>
      %57 = vector.shape_cast %56 : vector<8x8x8xf32> to vector<64x8xf32>
      %c0_73 = arith.constant 0 : index
      %c2_74 = arith.constant 2 : index
      %c0_75 = arith.constant 0 : index
      %c0_76 = arith.constant 0 : index
      %c0_77 = arith.constant 0 : index
      %58 = vector.load %arg5[%c0_73, %c2_74, %c0_75, %c0_76, %c0_77] : memref<3x3x3x8x16xf32, #tpu.memory_space<vmem>>, vector<1x1x1x8x16xf32>
      %59 = vector.shape_cast %58 : vector<1x1x1x8x16xf32> to vector<8x16xf32>
      %cst_78 = arith.constant dense<0.000000e+00> : vector<64x16xf32>
      %60 = tpu.matmul %57, %59, %cst_78 {dimension_numbers = #tpu.dot_dimension_numbers<[1], [0], [0], [1], [0, 0, 1, 1], [], []>} : vector<64x8xf32>, vector<8x16xf32>, vector<64x16xf32> -> vector<64x16xf32>
      %61 = arith.addf %54, %60 : vector<64x16xf32>
      %c0_79 = arith.constant 0 : index
      %c0_80 = arith.constant 0 : index
      %c2_81 = arith.constant 2 : index
      %c1_82 = arith.constant 1 : index
      %c0_83 = arith.constant 0 : index
      %62 = vector.load %arg2[%c0_79, %c0_80, %c2_81, %c1_82, %c0_83] : memref<1x1x10x10x8xf32, #tpu.memory_space<vmem>>, vector<1x1x8x8x8xf32>
      %63 = vector.shape_cast %62 : vector<1x1x8x8x8xf32> to vector<8x8x8xf32>
      %64 = vector.shape_cast %63 : vector<8x8x8xf32> to vector<64x8xf32>
      %c0_84 = arith.constant 0 : index
      %c2_85 = arith.constant 2 : index
      %c1_86 = arith.constant 1 : index
      %c0_87 = arith.constant 0 : index
      %c0_88 = arith.constant 0 : index
      %65 = vector.load %arg5[%c0_84, %c2_85, %c1_86, %c0_87, %c0_88] : memref<3x3x3x8x16xf32, #tpu.memory_space<vmem>>, vector<1x1x1x8x16xf32>
      %66 = vector.shape_cast %65 : vector<1x1x1x8x16xf32> to vector<8x16xf32>
      %cst_89 = arith.constant dense<0.000000e+00> : vector<64x16xf32>
      %67 = tpu.matmul %64, %66, %cst_89 {dimension_numbers = #tpu.dot_dimension_numbers<[1], [0], [0], [1], [0, 0, 1, 1], [], []>} : vector<64x8xf32>, vector<8x16xf32>, vector<64x16xf32> -> vector<64x16xf32>
      %68 = arith.addf %61, %67 : vector<64x16xf32>
      %c0_90 = arith.constant 0 : index
      %c0_91 = arith.constant 0 : index
      %c2_92 = arith.constant 2 : index
      %c2_93 = arith.constant 2 : index
      %c0_94 = arith.constant 0 : index
      %69 = vector.load %arg2[%c0_90, %c0_91, %c2_92, %c2_93, %c0_94] : memref<1x1x10x10x8xf32, #tpu.memory_space<vmem>>, vector<1x1x8x8x8xf32>
      %70 = vector.shape_cast %69 : vector<1x1x8x8x8xf32> to vector<8x8x8xf32>
      %71 = vector.shape_cast %70 : vector<8x8x8xf32> to vector<64x8xf32>
      %c0_95 = arith.constant 0 : index
      %c2_96 = arith.constant 2 : index
      %c2_97 = arith.constant 2 : index
      %c0_98 = arith.constant 0 : index
      %c0_99 = arith.constant 0 : index
      %72 = vector.load %arg5[%c0_95, %c2_96, %c2_97, %c0_98, %c0_99] : memref<3x3x3x8x16xf32, #tpu.memory_space<vmem>>, vector<1x1x1x8x16xf32>
      %73 = vector.shape_cast %72 : vector<1x1x1x8x16xf32> to vector<8x16xf32>
      %cst_100 = arith.constant dense<0.000000e+00> : vector<64x16xf32>
      %74 = tpu.matmul %71, %73, %cst_100 {dimension_numbers = #tpu.dot_dimension_numbers<[1], [0], [0], [1], [0, 0, 1, 1], [], []>} : vector<64x8xf32>, vector<8x16xf32>, vector<64x16xf32> -> vector<64x16xf32>
      %75 = arith.addf %68, %74 : vector<64x16xf32>
      %c0_101 = arith.constant 0 : index
      %c0_102 = arith.constant 0 : index
      %c0_103 = arith.constant 0 : index
      %c0_104 = arith.constant 0 : index
      %c0_105 = arith.constant 0 : index
      %76 = vector.load %arg3[%c0_101, %c0_102, %c0_103, %c0_104, %c0_105] : memref<1x1x10x10x8xf32, #tpu.memory_space<vmem>>, vector<1x1x8x8x8xf32>
      %77 = vector.shape_cast %76 : vector<1x1x8x8x8xf32> to vector<8x8x8xf32>
      %78 = vector.shape_cast %77 : vector<8x8x8xf32> to vector<64x8xf32>
      %c1_106 = arith.constant 1 : index
      %c0_107 = arith.constant 0 : index
      %c0_108 = arith.constant 0 : index
      %c0_109 = arith.constant 0 : index
      %c0_110 = arith.constant 0 : index
      %79 = vector.load %arg5[%c1_106, %c0_107, %c0_108, %c0_109, %c0_110] : memref<3x3x3x8x16xf32, #tpu.memory_space<vmem>>, vector<1x1x1x8x16xf32>
      %80 = vector.shape_cast %79 : vector<1x1x1x8x16xf32> to vector<8x16xf32>
      %cst_111 = arith.constant dense<0.000000e+00> : vector<64x16xf32>
      %81 = tpu.matmul %78, %80, %cst_111 {dimension_numbers = #tpu.dot_dimension_numbers<[1], [0], [0], [1], [0, 0, 1, 1], [], []>} : vector<64x8xf32>, vector<8x16xf32>, vector<64x16xf32> -> vector<64x16xf32>
      %82 = arith.addf %75, %81 : vector<64x16xf32>
      %c0_112 = arith.constant 0 : index
      %c0_113 = arith.constant 0 : index
      %c0_114 = arith.constant 0 : index
      %c1_115 = arith.constant 1 : index
      %c0_116 = arith.constant 0 : index
      %83 = vector.load %arg3[%c0_112, %c0_113, %c0_114, %c1_115, %c0_116] : memref<1x1x10x10x8xf32, #tpu.memory_space<vmem>>, vector<1x1x8x8x8xf32>
      %84 = vector.shape_cast %83 : vector<1x1x8x8x8xf32> to vector<8x8x8xf32>
      %85 = vector.shape_cast %84 : vector<8x8x8xf32> to vector<64x8xf32>
      %c1_117 = arith.constant 1 : index
      %c0_118 = arith.constant 0 : index
      %c1_119 = arith.constant 1 : index
      %c0_120 = arith.constant 0 : index
      %c0_121 = arith.constant 0 : index
      %86 = vector.load %arg5[%c1_117, %c0_118, %c1_119, %c0_120, %c0_121] : memref<3x3x3x8x16xf32, #tpu.memory_space<vmem>>, vector<1x1x1x8x16xf32>
      %87 = vector.shape_cast %86 : vector<1x1x1x8x16xf32> to vector<8x16xf32>
      %cst_122 = arith.constant dense<0.000000e+00> : vector<64x16xf32>
      %88 = tpu.matmul %85, %87, %cst_122 {dimension_numbers = #tpu.dot_dimension_numbers<[1], [0], [0], [1], [0, 0, 1, 1], [], []>} : vector<64x8xf32>, vector<8x16xf32>, vector<64x16xf32> -> vector<64x16xf32>
      %89 = arith.addf %82, %88 : vector<64x16xf32>
      %c0_123 = arith.constant 0 : index
      %c0_124 = arith.constant 0 : index
      %c0_125 = arith.constant 0 : index
      %c2_126 = arith.constant 2 : index
      %c0_127 = arith.constant 0 : index
      %90 = vector.load %arg3[%c0_123, %c0_124, %c0_125, %c2_126, %c0_127] : memref<1x1x10x10x8xf32, #tpu.memory_space<vmem>>, vector<1x1x8x8x8xf32>
      %91 = vector.shape_cast %90 : vector<1x1x8x8x8xf32> to vector<8x8x8xf32>
      %92 = vector.shape_cast %91 : vector<8x8x8xf32> to vector<64x8xf32>
      %c1_128 = arith.constant 1 : index
      %c0_129 = arith.constant 0 : index
      %c2_130 = arith.constant 2 : index
      %c0_131 = arith.constant 0 : index
      %c0_132 = arith.constant 0 : index
      %93 = vector.load %arg5[%c1_128, %c0_129, %c2_130, %c0_131, %c0_132] : memref<3x3x3x8x16xf32, #tpu.memory_space<vmem>>, vector<1x1x1x8x16xf32>
      %94 = vector.shape_cast %93 : vector<1x1x1x8x16xf32> to vector<8x16xf32>
      %cst_133 = arith.constant dense<0.000000e+00> : vector<64x16xf32>
      %95 = tpu.matmul %92, %94, %cst_133 {dimension_numbers = #tpu.dot_dimension_numbers<[1], [0], [0], [1], [0, 0, 1, 1], [], []>} : vector<64x8xf32>, vector<8x16xf32>, vector<64x16xf32> -> vector<64x16xf32>
      %96 = arith.addf %89, %95 : vector<64x16xf32>
      %c0_134 = arith.constant 0 : index
      %c0_135 = arith.constant 0 : index
      %c1_136 = arith.constant 1 : index
      %c0_137 = arith.constant 0 : index
      %c0_138 = arith.constant 0 : index
      %97 = vector.load %arg3[%c0_134, %c0_135, %c1_136, %c0_137, %c0_138] : memref<1x1x10x10x8xf32, #tpu.memory_space<vmem>>, vector<1x1x8x8x8xf32>
      %98 = vector.shape_cast %97 : vector<1x1x8x8x8xf32> to vector<8x8x8xf32>
      %99 = vector.shape_cast %98 : vector<8x8x8xf32> to vector<64x8xf32>
      %c1_139 = arith.constant 1 : index
      %c1_140 = arith.constant 1 : index
      %c0_141 = arith.constant 0 : index
      %c0_142 = arith.constant 0 : index
      %c0_143 = arith.constant 0 : index
      %100 = vector.load %arg5[%c1_139, %c1_140, %c0_141, %c0_142, %c0_143] : memref<3x3x3x8x16xf32, #tpu.memory_space<vmem>>, vector<1x1x1x8x16xf32>
      %101 = vector.shape_cast %100 : vector<1x1x1x8x16xf32> to vector<8x16xf32>
      %cst_144 = arith.constant dense<0.000000e+00> : vector<64x16xf32>
      %102 = tpu.matmul %99, %101, %cst_144 {dimension_numbers = #tpu.dot_dimension_numbers<[1], [0], [0], [1], [0, 0, 1, 1], [], []>} : vector<64x8xf32>, vector<8x16xf32>, vector<64x16xf32> -> vector<64x16xf32>
      %103 = arith.addf %96, %102 : vector<64x16xf32>
      %c0_145 = arith.constant 0 : index
      %c0_146 = arith.constant 0 : index
      %c1_147 = arith.constant 1 : index
      %c1_148 = arith.constant 1 : index
      %c0_149 = arith.constant 0 : index
      %104 = vector.load %arg3[%c0_145, %c0_146, %c1_147, %c1_148, %c0_149] : memref<1x1x10x10x8xf32, #tpu.memory_space<vmem>>, vector<1x1x8x8x8xf32>
      %105 = vector.shape_cast %104 : vector<1x1x8x8x8xf32> to vector<8x8x8xf32>
      %106 = vector.shape_cast %105 : vector<8x8x8xf32> to vector<64x8xf32>
      %c1_150 = arith.constant 1 : index
      %c1_151 = arith.constant 1 : index
      %c1_152 = arith.constant 1 : index
      %c0_153 = arith.constant 0 : index
      %c0_154 = arith.constant 0 : index
      %107 = vector.load %arg5[%c1_150, %c1_151, %c1_152, %c0_153, %c0_154] : memref<3x3x3x8x16xf32, #tpu.memory_space<vmem>>, vector<1x1x1x8x16xf32>
      %108 = vector.shape_cast %107 : vector<1x1x1x8x16xf32> to vector<8x16xf32>
      %cst_155 = arith.constant dense<0.000000e+00> : vector<64x16xf32>
      %109 = tpu.matmul %106, %108, %cst_155 {dimension_numbers = #tpu.dot_dimension_numbers<[1], [0], [0], [1], [0, 0, 1, 1], [], []>} : vector<64x8xf32>, vector<8x16xf32>, vector<64x16xf32> -> vector<64x16xf32>
      %110 = arith.addf %103, %109 : vector<64x16xf32>
      %c0_156 = arith.constant 0 : index
      %c0_157 = arith.constant 0 : index
      %c1_158 = arith.constant 1 : index
      %c2_159 = arith.constant 2 : index
      %c0_160 = arith.constant 0 : index
      %111 = vector.load %arg3[%c0_156, %c0_157, %c1_158, %c2_159, %c0_160] : memref<1x1x10x10x8xf32, #tpu.memory_space<vmem>>, vector<1x1x8x8x8xf32>
      %112 = vector.shape_cast %111 : vector<1x1x8x8x8xf32> to vector<8x8x8xf32>
      %113 = vector.shape_cast %112 : vector<8x8x8xf32> to vector<64x8xf32>
      %c1_161 = arith.constant 1 : index
      %c1_162 = arith.constant 1 : index
      %c2_163 = arith.constant 2 : index
      %c0_164 = arith.constant 0 : index
      %c0_165 = arith.constant 0 : index
      %114 = vector.load %arg5[%c1_161, %c1_162, %c2_163, %c0_164, %c0_165] : memref<3x3x3x8x16xf32, #tpu.memory_space<vmem>>, vector<1x1x1x8x16xf32>
      %115 = vector.shape_cast %114 : vector<1x1x1x8x16xf32> to vector<8x16xf32>
      %cst_166 = arith.constant dense<0.000000e+00> : vector<64x16xf32>
      %116 = tpu.matmul %113, %115, %cst_166 {dimension_numbers = #tpu.dot_dimension_numbers<[1], [0], [0], [1], [0, 0, 1, 1], [], []>} : vector<64x8xf32>, vector<8x16xf32>, vector<64x16xf32> -> vector<64x16xf32>
      %117 = arith.addf %110, %116 : vector<64x16xf32>
      %c0_167 = arith.constant 0 : index
      %c0_168 = arith.constant 0 : index
      %c2_169 = arith.constant 2 : index
      %c0_170 = arith.constant 0 : index
      %c0_171 = arith.constant 0 : index
      %118 = vector.load %arg3[%c0_167, %c0_168, %c2_169, %c0_170, %c0_171] : memref<1x1x10x10x8xf32, #tpu.memory_space<vmem>>, vector<1x1x8x8x8xf32>
      %119 = vector.shape_cast %118 : vector<1x1x8x8x8xf32> to vector<8x8x8xf32>
      %120 = vector.shape_cast %119 : vector<8x8x8xf32> to vector<64x8xf32>
      %c1_172 = arith.constant 1 : index
      %c2_173 = arith.constant 2 : index
      %c0_174 = arith.constant 0 : index
      %c0_175 = arith.constant 0 : index
      %c0_176 = arith.constant 0 : index
      %121 = vector.load %arg5[%c1_172, %c2_173, %c0_174, %c0_175, %c0_176] : memref<3x3x3x8x16xf32, #tpu.memory_space<vmem>>, vector<1x1x1x8x16xf32>
      %122 = vector.shape_cast %121 : vector<1x1x1x8x16xf32> to vector<8x16xf32>
      %cst_177 = arith.constant dense<0.000000e+00> : vector<64x16xf32>
      %123 = tpu.matmul %120, %122, %cst_177 {dimension_numbers = #tpu.dot_dimension_numbers<[1], [0], [0], [1], [0, 0, 1, 1], [], []>} : vector<64x8xf32>, vector<8x16xf32>, vector<64x16xf32> -> vector<64x16xf32>
      %124 = arith.addf %117, %123 : vector<64x16xf32>
      %c0_178 = arith.constant 0 : index
      %c0_179 = arith.constant 0 : index
      %c2_180 = arith.constant 2 : index
      %c1_181 = arith.constant 1 : index
      %c0_182 = arith.constant 0 : index
      %125 = vector.load %arg3[%c0_178, %c0_179, %c2_180, %c1_181, %c0_182] : memref<1x1x10x10x8xf32, #tpu.memory_space<vmem>>, vector<1x1x8x8x8xf32>
      %126 = vector.shape_cast %125 : vector<1x1x8x8x8xf32> to vector<8x8x8xf32>
      %127 = vector.shape_cast %126 : vector<8x8x8xf32> to vector<64x8xf32>
      %c1_183 = arith.constant 1 : index
      %c2_184 = arith.constant 2 : index
      %c1_185 = arith.constant 1 : index
      %c0_186 = arith.constant 0 : index
      %c0_187 = arith.constant 0 : index
      %128 = vector.load %arg5[%c1_183, %c2_184, %c1_185, %c0_186, %c0_187] : memref<3x3x3x8x16xf32, #tpu.memory_space<vmem>>, vector<1x1x1x8x16xf32>
      %129 = vector.shape_cast %128 : vector<1x1x1x8x16xf32> to vector<8x16xf32>
      %cst_188 = arith.constant dense<0.000000e+00> : vector<64x16xf32>
      %130 = tpu.matmul %127, %129, %cst_188 {dimension_numbers = #tpu.dot_dimension_numbers<[1], [0], [0], [1], [0, 0, 1, 1], [], []>} : vector<64x8xf32>, vector<8x16xf32>, vector<64x16xf32> -> vector<64x16xf32>
      %131 = arith.addf %124, %130 : vector<64x16xf32>
      %c0_189 = arith.constant 0 : index
      %c0_190 = arith.constant 0 : index
      %c2_191 = arith.constant 2 : index
      %c2_192 = arith.constant 2 : index
      %c0_193 = arith.constant 0 : index
      %132 = vector.load %arg3[%c0_189, %c0_190, %c2_191, %c2_192, %c0_193] : memref<1x1x10x10x8xf32, #tpu.memory_space<vmem>>, vector<1x1x8x8x8xf32>
      %133 = vector.shape_cast %132 : vector<1x1x8x8x8xf32> to vector<8x8x8xf32>
      %134 = vector.shape_cast %133 : vector<8x8x8xf32> to vector<64x8xf32>
      %c1_194 = arith.constant 1 : index
      %c2_195 = arith.constant 2 : index
      %c2_196 = arith.constant 2 : index
      %c0_197 = arith.constant 0 : index
      %c0_198 = arith.constant 0 : index
      %135 = vector.load %arg5[%c1_194, %c2_195, %c2_196, %c0_197, %c0_198] : memref<3x3x3x8x16xf32, #tpu.memory_space<vmem>>, vector<1x1x1x8x16xf32>
      %136 = vector.shape_cast %135 : vector<1x1x1x8x16xf32> to vector<8x16xf32>
      %cst_199 = arith.constant dense<0.000000e+00> : vector<64x16xf32>
      %137 = tpu.matmul %134, %136, %cst_199 {dimension_numbers = #tpu.dot_dimension_numbers<[1], [0], [0], [1], [0, 0, 1, 1], [], []>} : vector<64x8xf32>, vector<8x16xf32>, vector<64x16xf32> -> vector<64x16xf32>
      %138 = arith.addf %131, %137 : vector<64x16xf32>
      %c0_200 = arith.constant 0 : index
      %c0_201 = arith.constant 0 : index
      %c0_202 = arith.constant 0 : index
      %c0_203 = arith.constant 0 : index
      %c0_204 = arith.constant 0 : index
      %139 = vector.load %arg4[%c0_200, %c0_201, %c0_202, %c0_203, %c0_204] : memref<1x1x10x10x8xf32, #tpu.memory_space<vmem>>, vector<1x1x8x8x8xf32>
      %140 = vector.shape_cast %139 : vector<1x1x8x8x8xf32> to vector<8x8x8xf32>
      %141 = vector.shape_cast %140 : vector<8x8x8xf32> to vector<64x8xf32>
      %c2_205 = arith.constant 2 : index
      %c0_206 = arith.constant 0 : index
      %c0_207 = arith.constant 0 : index
      %c0_208 = arith.constant 0 : index
      %c0_209 = arith.constant 0 : index
      %142 = vector.load %arg5[%c2_205, %c0_206, %c0_207, %c0_208, %c0_209] : memref<3x3x3x8x16xf32, #tpu.memory_space<vmem>>, vector<1x1x1x8x16xf32>
      %143 = vector.shape_cast %142 : vector<1x1x1x8x16xf32> to vector<8x16xf32>
      %cst_210 = arith.constant dense<0.000000e+00> : vector<64x16xf32>
      %144 = tpu.matmul %141, %143, %cst_210 {dimension_numbers = #tpu.dot_dimension_numbers<[1], [0], [0], [1], [0, 0, 1, 1], [], []>} : vector<64x8xf32>, vector<8x16xf32>, vector<64x16xf32> -> vector<64x16xf32>
      %145 = arith.addf %138, %144 : vector<64x16xf32>
      %c0_211 = arith.constant 0 : index
      %c0_212 = arith.constant 0 : index
      %c0_213 = arith.constant 0 : index
      %c1_214 = arith.constant 1 : index
      %c0_215 = arith.constant 0 : index
      %146 = vector.load %arg4[%c0_211, %c0_212, %c0_213, %c1_214, %c0_215] : memref<1x1x10x10x8xf32, #tpu.memory_space<vmem>>, vector<1x1x8x8x8xf32>
      %147 = vector.shape_cast %146 : vector<1x1x8x8x8xf32> to vector<8x8x8xf32>
      %148 = vector.shape_cast %147 : vector<8x8x8xf32> to vector<64x8xf32>
      %c2_216 = arith.constant 2 : index
      %c0_217 = arith.constant 0 : index
      %c1_218 = arith.constant 1 : index
      %c0_219 = arith.constant 0 : index
      %c0_220 = arith.constant 0 : index
      %149 = vector.load %arg5[%c2_216, %c0_217, %c1_218, %c0_219, %c0_220] : memref<3x3x3x8x16xf32, #tpu.memory_space<vmem>>, vector<1x1x1x8x16xf32>
      %150 = vector.shape_cast %149 : vector<1x1x1x8x16xf32> to vector<8x16xf32>
      %cst_221 = arith.constant dense<0.000000e+00> : vector<64x16xf32>
      %151 = tpu.matmul %148, %150, %cst_221 {dimension_numbers = #tpu.dot_dimension_numbers<[1], [0], [0], [1], [0, 0, 1, 1], [], []>} : vector<64x8xf32>, vector<8x16xf32>, vector<64x16xf32> -> vector<64x16xf32>
      %152 = arith.addf %145, %151 : vector<64x16xf32>
      %c0_222 = arith.constant 0 : index
      %c0_223 = arith.constant 0 : index
      %c0_224 = arith.constant 0 : index
      %c2_225 = arith.constant 2 : index
      %c0_226 = arith.constant 0 : index
      %153 = vector.load %arg4[%c0_222, %c0_223, %c0_224, %c2_225, %c0_226] : memref<1x1x10x10x8xf32, #tpu.memory_space<vmem>>, vector<1x1x8x8x8xf32>
      %154 = vector.shape_cast %153 : vector<1x1x8x8x8xf32> to vector<8x8x8xf32>
      %155 = vector.shape_cast %154 : vector<8x8x8xf32> to vector<64x8xf32>
      %c2_227 = arith.constant 2 : index
      %c0_228 = arith.constant 0 : index
      %c2_229 = arith.constant 2 : index
      %c0_230 = arith.constant 0 : index
      %c0_231 = arith.constant 0 : index
      %156 = vector.load %arg5[%c2_227, %c0_228, %c2_229, %c0_230, %c0_231] : memref<3x3x3x8x16xf32, #tpu.memory_space<vmem>>, vector<1x1x1x8x16xf32>
      %157 = vector.shape_cast %156 : vector<1x1x1x8x16xf32> to vector<8x16xf32>
      %cst_232 = arith.constant dense<0.000000e+00> : vector<64x16xf32>
      %158 = tpu.matmul %155, %157, %cst_232 {dimension_numbers = #tpu.dot_dimension_numbers<[1], [0], [0], [1], [0, 0, 1, 1], [], []>} : vector<64x8xf32>, vector<8x16xf32>, vector<64x16xf32> -> vector<64x16xf32>
      %159 = arith.addf %152, %158 : vector<64x16xf32>
      %c0_233 = arith.constant 0 : index
      %c0_234 = arith.constant 0 : index
      %c1_235 = arith.constant 1 : index
      %c0_236 = arith.constant 0 : index
      %c0_237 = arith.constant 0 : index
      %160 = vector.load %arg4[%c0_233, %c0_234, %c1_235, %c0_236, %c0_237] : memref<1x1x10x10x8xf32, #tpu.memory_space<vmem>>, vector<1x1x8x8x8xf32>
      %161 = vector.shape_cast %160 : vector<1x1x8x8x8xf32> to vector<8x8x8xf32>
      %162 = vector.shape_cast %161 : vector<8x8x8xf32> to vector<64x8xf32>
      %c2_238 = arith.constant 2 : index
      %c1_239 = arith.constant 1 : index
      %c0_240 = arith.constant 0 : index
      %c0_241 = arith.constant 0 : index
      %c0_242 = arith.constant 0 : index
      %163 = vector.load %arg5[%c2_238, %c1_239, %c0_240, %c0_241, %c0_242] : memref<3x3x3x8x16xf32, #tpu.memory_space<vmem>>, vector<1x1x1x8x16xf32>
      %164 = vector.shape_cast %163 : vector<1x1x1x8x16xf32> to vector<8x16xf32>
      %cst_243 = arith.constant dense<0.000000e+00> : vector<64x16xf32>
      %165 = tpu.matmul %162, %164, %cst_243 {dimension_numbers = #tpu.dot_dimension_numbers<[1], [0], [0], [1], [0, 0, 1, 1], [], []>} : vector<64x8xf32>, vector<8x16xf32>, vector<64x16xf32> -> vector<64x16xf32>
      %166 = arith.addf %159, %165 : vector<64x16xf32>
      %c0_244 = arith.constant 0 : index
      %c0_245 = arith.constant 0 : index
      %c1_246 = arith.constant 1 : index
      %c1_247 = arith.constant 1 : index
      %c0_248 = arith.constant 0 : index
      %167 = vector.load %arg4[%c0_244, %c0_245, %c1_246, %c1_247, %c0_248] : memref<1x1x10x10x8xf32, #tpu.memory_space<vmem>>, vector<1x1x8x8x8xf32>
      %168 = vector.shape_cast %167 : vector<1x1x8x8x8xf32> to vector<8x8x8xf32>
      %169 = vector.shape_cast %168 : vector<8x8x8xf32> to vector<64x8xf32>
      %c2_249 = arith.constant 2 : index
      %c1_250 = arith.constant 1 : index
      %c1_251 = arith.constant 1 : index
      %c0_252 = arith.constant 0 : index
      %c0_253 = arith.constant 0 : index
      %170 = vector.load %arg5[%c2_249, %c1_250, %c1_251, %c0_252, %c0_253] : memref<3x3x3x8x16xf32, #tpu.memory_space<vmem>>, vector<1x1x1x8x16xf32>
      %171 = vector.shape_cast %170 : vector<1x1x1x8x16xf32> to vector<8x16xf32>
      %cst_254 = arith.constant dense<0.000000e+00> : vector<64x16xf32>
      %172 = tpu.matmul %169, %171, %cst_254 {dimension_numbers = #tpu.dot_dimension_numbers<[1], [0], [0], [1], [0, 0, 1, 1], [], []>} : vector<64x8xf32>, vector<8x16xf32>, vector<64x16xf32> -> vector<64x16xf32>
      %173 = arith.addf %166, %172 : vector<64x16xf32>
      %c0_255 = arith.constant 0 : index
      %c0_256 = arith.constant 0 : index
      %c1_257 = arith.constant 1 : index
      %c2_258 = arith.constant 2 : index
      %c0_259 = arith.constant 0 : index
      %174 = vector.load %arg4[%c0_255, %c0_256, %c1_257, %c2_258, %c0_259] : memref<1x1x10x10x8xf32, #tpu.memory_space<vmem>>, vector<1x1x8x8x8xf32>
      %175 = vector.shape_cast %174 : vector<1x1x8x8x8xf32> to vector<8x8x8xf32>
      %176 = vector.shape_cast %175 : vector<8x8x8xf32> to vector<64x8xf32>
      %c2_260 = arith.constant 2 : index
      %c1_261 = arith.constant 1 : index
      %c2_262 = arith.constant 2 : index
      %c0_263 = arith.constant 0 : index
      %c0_264 = arith.constant 0 : index
      %177 = vector.load %arg5[%c2_260, %c1_261, %c2_262, %c0_263, %c0_264] : memref<3x3x3x8x16xf32, #tpu.memory_space<vmem>>, vector<1x1x1x8x16xf32>
      %178 = vector.shape_cast %177 : vector<1x1x1x8x16xf32> to vector<8x16xf32>
      %cst_265 = arith.constant dense<0.000000e+00> : vector<64x16xf32>
      %179 = tpu.matmul %176, %178, %cst_265 {dimension_numbers = #tpu.dot_dimension_numbers<[1], [0], [0], [1], [0, 0, 1, 1], [], []>} : vector<64x8xf32>, vector<8x16xf32>, vector<64x16xf32> -> vector<64x16xf32>
      %180 = arith.addf %173, %179 : vector<64x16xf32>
      %c0_266 = arith.constant 0 : index
      %c0_267 = arith.constant 0 : index
      %c2_268 = arith.constant 2 : index
      %c0_269 = arith.constant 0 : index
      %c0_270 = arith.constant 0 : index
      %181 = vector.load %arg4[%c0_266, %c0_267, %c2_268, %c0_269, %c0_270] : memref<1x1x10x10x8xf32, #tpu.memory_space<vmem>>, vector<1x1x8x8x8xf32>
      %182 = vector.shape_cast %181 : vector<1x1x8x8x8xf32> to vector<8x8x8xf32>
      %183 = vector.shape_cast %182 : vector<8x8x8xf32> to vector<64x8xf32>
      %c2_271 = arith.constant 2 : index
      %c2_272 = arith.constant 2 : index
      %c0_273 = arith.constant 0 : index
      %c0_274 = arith.constant 0 : index
      %c0_275 = arith.constant 0 : index
      %184 = vector.load %arg5[%c2_271, %c2_272, %c0_273, %c0_274, %c0_275] : memref<3x3x3x8x16xf32, #tpu.memory_space<vmem>>, vector<1x1x1x8x16xf32>
      %185 = vector.shape_cast %184 : vector<1x1x1x8x16xf32> to vector<8x16xf32>
      %cst_276 = arith.constant dense<0.000000e+00> : vector<64x16xf32>
      %186 = tpu.matmul %183, %185, %cst_276 {dimension_numbers = #tpu.dot_dimension_numbers<[1], [0], [0], [1], [0, 0, 1, 1], [], []>} : vector<64x8xf32>, vector<8x16xf32>, vector<64x16xf32> -> vector<64x16xf32>
      %187 = arith.addf %180, %186 : vector<64x16xf32>
      %c0_277 = arith.constant 0 : index
      %c0_278 = arith.constant 0 : index
      %c2_279 = arith.constant 2 : index
      %c1_280 = arith.constant 1 : index
      %c0_281 = arith.constant 0 : index
      %188 = vector.load %arg4[%c0_277, %c0_278, %c2_279, %c1_280, %c0_281] : memref<1x1x10x10x8xf32, #tpu.memory_space<vmem>>, vector<1x1x8x8x8xf32>
      %189 = vector.shape_cast %188 : vector<1x1x8x8x8xf32> to vector<8x8x8xf32>
      %190 = vector.shape_cast %189 : vector<8x8x8xf32> to vector<64x8xf32>
      %c2_282 = arith.constant 2 : index
      %c2_283 = arith.constant 2 : index
      %c1_284 = arith.constant 1 : index
      %c0_285 = arith.constant 0 : index
      %c0_286 = arith.constant 0 : index
      %191 = vector.load %arg5[%c2_282, %c2_283, %c1_284, %c0_285, %c0_286] : memref<3x3x3x8x16xf32, #tpu.memory_space<vmem>>, vector<1x1x1x8x16xf32>
      %192 = vector.shape_cast %191 : vector<1x1x1x8x16xf32> to vector<8x16xf32>
      %cst_287 = arith.constant dense<0.000000e+00> : vector<64x16xf32>
      %193 = tpu.matmul %190, %192, %cst_287 {dimension_numbers = #tpu.dot_dimension_numbers<[1], [0], [0], [1], [0, 0, 1, 1], [], []>} : vector<64x8xf32>, vector<8x16xf32>, vector<64x16xf32> -> vector<64x16xf32>
      %194 = arith.addf %187, %193 : vector<64x16xf32>
      %c0_288 = arith.constant 0 : index
      %c0_289 = arith.constant 0 : index
      %c2_290 = arith.constant 2 : index
      %c2_291 = arith.constant 2 : index
      %c0_292 = arith.constant 0 : index
      %195 = vector.load %arg4[%c0_288, %c0_289, %c2_290, %c2_291, %c0_292] : memref<1x1x10x10x8xf32, #tpu.memory_space<vmem>>, vector<1x1x8x8x8xf32>
      %196 = vector.shape_cast %195 : vector<1x1x8x8x8xf32> to vector<8x8x8xf32>
      %197 = vector.shape_cast %196 : vector<8x8x8xf32> to vector<64x8xf32>
      %c2_293 = arith.constant 2 : index
      %c2_294 = arith.constant 2 : index
      %c2_295 = arith.constant 2 : index
      %c0_296 = arith.constant 0 : index
      %c0_297 = arith.constant 0 : index
      %198 = vector.load %arg5[%c2_293, %c2_294, %c2_295, %c0_296, %c0_297] : memref<3x3x3x8x16xf32, #tpu.memory_space<vmem>>, vector<1x1x1x8x16xf32>
      %199 = vector.shape_cast %198 : vector<1x1x1x8x16xf32> to vector<8x16xf32>
      %cst_298 = arith.constant dense<0.000000e+00> : vector<64x16xf32>
      %200 = tpu.matmul %197, %199, %cst_298 {dimension_numbers = #tpu.dot_dimension_numbers<[1], [0], [0], [1], [0, 0, 1, 1], [], []>} : vector<64x8xf32>, vector<8x16xf32>, vector<64x16xf32> -> vector<64x16xf32>
      %201 = arith.addf %194, %200 : vector<64x16xf32>
      %c0_299 = arith.constant 0 : index
      %c0_300 = arith.constant 0 : index
      %202 = vector.load %arg6[%c0_299, %c0_300] : memref<1x16xf32, #tpu.memory_space<vmem>>, vector<1x16xf32>
      %203 = vector.shape_cast %202 : vector<1x16xf32> to vector<16xf32>
      %204 = vector.shape_cast %203 : vector<16xf32> to vector<1x16xf32>
      %205 = vector.broadcast %204 : vector<1x16xf32> to vector<64x16xf32>
      %206 = arith.addf %201, %205 : vector<64x16xf32>
      %cst_301 = arith.constant 0.000000e+00 : f32
      %207 = vector.broadcast %cst_301 : f32 to vector<64x16xf32>
      %208 = arith.maximumf %206, %207 : vector<64x16xf32>
      %209 = vector.shape_cast %208 : vector<64x16xf32> to vector<8x8x16xf32>
      %c3_i32 = arith.constant 3 : i32
      %210 = arith.remsi %arg1, %c3_i32 : i32
      %211 = arith.index_cast %210 : i32 to index
      %c1_302 = arith.constant 1 : index
      %c1_303 = arith.constant 1 : index
      %c0_304 = arith.constant 0 : index
      %212 = vector.load %arg10[%211, %c1_302, %c1_303, %c0_304] : memref<3x10x10x16xf32, #tpu.memory_space<vmem>>, vector<1x8x8x16xf32>
      %213 = vector.shape_cast %212 : vector<1x8x8x16xf32> to vector<8x8x16xf32>
      %214 = vector.shape_cast %209 : vector<8x8x16xf32> to vector<1x8x8x16xf32>
      tpu.vector_store %arg10[%211, %c1_302, %c1_303, %c0_304], %214 {strides = array<i32>} : memref<3x10x10x16xf32, #tpu.memory_space<vmem>>, vector<1x8x8x16xf32>,
    } else {
    }
    %c8_i32_2 = arith.constant 8 : i32
    %6 = arith.cmpi eq, %arg1, %c8_i32_2 : i32
    %7 = arith.extui %6 : i1 to i32
    %c0_i32_3 = arith.constant 0 : i32
    %8 = arith.cmpi ne, %7, %c0_i32_3 : i32
    scf.if %8 {
      %cst = arith.constant 0.000000e+00 : f32
      %12 = vector.broadcast %cst : f32 to vector<8x8x16xf32>
      %c3_i32 = arith.constant 3 : i32
      %13 = arith.remsi %arg1, %c3_i32 : i32
      %14 = arith.index_cast %13 : i32 to index
      %c1 = arith.constant 1 : index
      %c1_5 = arith.constant 1 : index
      %c0 = arith.constant 0 : index
      %15 = vector.load %arg10[%14, %c1, %c1_5, %c0] : memref<3x10x10x16xf32, #tpu.memory_space<vmem>>, vector<1x8x8x16xf32>
      %16 = vector.shape_cast %15 : vector<1x8x8x16xf32> to vector<8x8x16xf32>
      %17 = vector.shape_cast %12 : vector<8x8x16xf32> to vector<1x8x8x16xf32>
      tpu.vector_store %arg10[%14, %c1, %c1_5, %c0], %17 {strides = array<i32>} : memref<3x10x10x16xf32, #tpu.memory_space<vmem>>, vector<1x8x8x16xf32>,
    } else {
    }
    %c1_i32 = arith.constant 1 : i32
    %9 = arith.cmpi sge, %arg1, %c1_i32 : i32
    %10 = arith.extui %9 : i1 to i32
    %c0_i32_4 = arith.constant 0 : i32
    %11 = arith.cmpi ne, %10, %c0_i32_4 : i32
    scf.if %11 {
      %c1_i32_5 = arith.constant 1 : i32
      %12 = arith.addi %arg1, %c1_i32_5 : i32
      %c3_i32 = arith.constant 3 : i32
      %13 = arith.remsi %12, %c3_i32 : i32
      %c2_i32 = arith.constant 2 : i32
      %14 = arith.addi %arg1, %c2_i32 : i32
      %c3_i32_6 = arith.constant 3 : i32
      %15 = arith.remsi %14, %c3_i32_6 : i32
      %c3_i32_7 = arith.constant 3 : i32
      %16 = arith.remsi %arg1, %c3_i32_7 : i32
      %cst = arith.constant 0.000000e+00 : f32
      %17 = vector.broadcast %cst : f32 to vector<64x2xf32>
      %18 = arith.index_cast %13 : i32 to index
      %c0 = arith.constant 0 : index
      %c0_8 = arith.constant 0 : index
      %c0_9 = arith.constant 0 : index
      %19 = vector.load %arg10[%18, %c0, %c0_8, %c0_9] : memref<3x10x10x16xf32, #tpu.memory_space<vmem>>, vector<1x8x8x16xf32>
      %20 = vector.shape_cast %19 : vector<1x8x8x16xf32> to vector<8x8x16xf32>
      %21 = vector.shape_cast %20 : vector<8x8x16xf32> to vector<64x16xf32>
      %c0_10 = arith.constant 0 : index
      %c0_11 = arith.constant 0 : index
      %c0_12 = arith.constant 0 : index
      %c0_13 = arith.constant 0 : index
      %c0_14 = arith.constant 0 : index
      %22 = vector.load %arg7[%c0_10, %c0_11, %c0_12, %c0_13, %c0_14] : memref<3x3x3x16x2xf32, #tpu.memory_space<vmem>>, vector<1x1x1x16x2xf32>
      %23 = vector.shape_cast %22 : vector<1x1x1x16x2xf32> to vector<16x2xf32>
      %cst_15 = arith.constant dense<0.000000e+00> : vector<64x2xf32>
      %24 = tpu.matmul %21, %23, %cst_15 {dimension_numbers = #tpu.dot_dimension_numbers<[1], [0], [0], [1], [0, 0, 1, 1], [], []>} : vector<64x16xf32>, vector<16x2xf32>, vector<64x2xf32> -> vector<64x2xf32>
      %25 = arith.addf %17, %24 : vector<64x2xf32>
      %26 = arith.index_cast %13 : i32 to index
      %c0_16 = arith.constant 0 : index
      %c1 = arith.constant 1 : index
      %c0_17 = arith.constant 0 : index
      %27 = vector.load %arg10[%26, %c0_16, %c1, %c0_17] : memref<3x10x10x16xf32, #tpu.memory_space<vmem>>, vector<1x8x8x16xf32>
      %28 = vector.shape_cast %27 : vector<1x8x8x16xf32> to vector<8x8x16xf32>
      %29 = vector.shape_cast %28 : vector<8x8x16xf32> to vector<64x16xf32>
      %c0_18 = arith.constant 0 : index
      %c0_19 = arith.constant 0 : index
      %c1_20 = arith.constant 1 : index
      %c0_21 = arith.constant 0 : index
      %c0_22 = arith.constant 0 : index
      %30 = vector.load %arg7[%c0_18, %c0_19, %c1_20, %c0_21, %c0_22] : memref<3x3x3x16x2xf32, #tpu.memory_space<vmem>>, vector<1x1x1x16x2xf32>
      %31 = vector.shape_cast %30 : vector<1x1x1x16x2xf32> to vector<16x2xf32>
      %cst_23 = arith.constant dense<0.000000e+00> : vector<64x2xf32>
      %32 = tpu.matmul %29, %31, %cst_23 {dimension_numbers = #tpu.dot_dimension_numbers<[1], [0], [0], [1], [0, 0, 1, 1], [], []>} : vector<64x16xf32>, vector<16x2xf32>, vector<64x2xf32> -> vector<64x2xf32>
      %33 = arith.addf %25, %32 : vector<64x2xf32>
      %34 = arith.index_cast %13 : i32 to index
      %c0_24 = arith.constant 0 : index
      %c2 = arith.constant 2 : index
      %c0_25 = arith.constant 0 : index
      %35 = vector.load %arg10[%34, %c0_24, %c2, %c0_25] : memref<3x10x10x16xf32, #tpu.memory_space<vmem>>, vector<1x8x8x16xf32>
      %36 = vector.shape_cast %35 : vector<1x8x8x16xf32> to vector<8x8x16xf32>
      %37 = vector.shape_cast %36 : vector<8x8x16xf32> to vector<64x16xf32>
      %c0_26 = arith.constant 0 : index
      %c0_27 = arith.constant 0 : index
      %c2_28 = arith.constant 2 : index
      %c0_29 = arith.constant 0 : index
      %c0_30 = arith.constant 0 : index
      %38 = vector.load %arg7[%c0_26, %c0_27, %c2_28, %c0_29, %c0_30] : memref<3x3x3x16x2xf32, #tpu.memory_space<vmem>>, vector<1x1x1x16x2xf32>
      %39 = vector.shape_cast %38 : vector<1x1x1x16x2xf32> to vector<16x2xf32>
      %cst_31 = arith.constant dense<0.000000e+00> : vector<64x2xf32>
      %40 = tpu.matmul %37, %39, %cst_31 {dimension_numbers = #tpu.dot_dimension_numbers<[1], [0], [0], [1], [0, 0, 1, 1], [], []>} : vector<64x16xf32>, vector<16x2xf32>, vector<64x2xf32> -> vector<64x2xf32>
      %41 = arith.addf %33, %40 : vector<64x2xf32>
      %42 = arith.index_cast %13 : i32 to index
      %c1_32 = arith.constant 1 : index
      %c0_33 = arith.constant 0 : index
      %c0_34 = arith.constant 0 : index
      %43 = vector.load %arg10[%42, %c1_32, %c0_33, %c0_34] : memref<3x10x10x16xf32, #tpu.memory_space<vmem>>, vector<1x8x8x16xf32>
      %44 = vector.shape_cast %43 : vector<1x8x8x16xf32> to vector<8x8x16xf32>
      %45 = vector.shape_cast %44 : vector<8x8x16xf32> to vector<64x16xf32>
      %c0_35 = arith.constant 0 : index
      %c1_36 = arith.constant 1 : index
      %c0_37 = arith.constant 0 : index
      %c0_38 = arith.constant 0 : index
      %c0_39 = arith.constant 0 : index
      %46 = vector.load %arg7[%c0_35, %c1_36, %c0_37, %c0_38, %c0_39] : memref<3x3x3x16x2xf32, #tpu.memory_space<vmem>>, vector<1x1x1x16x2xf32>
      %47 = vector.shape_cast %46 : vector<1x1x1x16x2xf32> to vector<16x2xf32>
      %cst_40 = arith.constant dense<0.000000e+00> : vector<64x2xf32>
      %48 = tpu.matmul %45, %47, %cst_40 {dimension_numbers = #tpu.dot_dimension_numbers<[1], [0], [0], [1], [0, 0, 1, 1], [], []>} : vector<64x16xf32>, vector<16x2xf32>, vector<64x2xf32> -> vector<64x2xf32>
      %49 = arith.addf %41, %48 : vector<64x2xf32>
      %50 = arith.index_cast %13 : i32 to index
      %c1_41 = arith.constant 1 : index
      %c1_42 = arith.constant 1 : index
      %c0_43 = arith.constant 0 : index
      %51 = vector.load %arg10[%50, %c1_41, %c1_42, %c0_43] : memref<3x10x10x16xf32, #tpu.memory_space<vmem>>, vector<1x8x8x16xf32>
      %52 = vector.shape_cast %51 : vector<1x8x8x16xf32> to vector<8x8x16xf32>
      %53 = vector.shape_cast %52 : vector<8x8x16xf32> to vector<64x16xf32>
      %c0_44 = arith.constant 0 : index
      %c1_45 = arith.constant 1 : index
      %c1_46 = arith.constant 1 : index
      %c0_47 = arith.constant 0 : index
      %c0_48 = arith.constant 0 : index
      %54 = vector.load %arg7[%c0_44, %c1_45, %c1_46, %c0_47, %c0_48] : memref<3x3x3x16x2xf32, #tpu.memory_space<vmem>>, vector<1x1x1x16x2xf32>
      %55 = vector.shape_cast %54 : vector<1x1x1x16x2xf32> to vector<16x2xf32>
      %cst_49 = arith.constant dense<0.000000e+00> : vector<64x2xf32>
      %56 = tpu.matmul %53, %55, %cst_49 {dimension_numbers = #tpu.dot_dimension_numbers<[1], [0], [0], [1], [0, 0, 1, 1], [], []>} : vector<64x16xf32>, vector<16x2xf32>, vector<64x2xf32> -> vector<64x2xf32>
      %57 = arith.addf %49, %56 : vector<64x2xf32>
      %58 = arith.index_cast %13 : i32 to index
      %c1_50 = arith.constant 1 : index
      %c2_51 = arith.constant 2 : index
      %c0_52 = arith.constant 0 : index
      %59 = vector.load %arg10[%58, %c1_50, %c2_51, %c0_52] : memref<3x10x10x16xf32, #tpu.memory_space<vmem>>, vector<1x8x8x16xf32>
      %60 = vector.shape_cast %59 : vector<1x8x8x16xf32> to vector<8x8x16xf32>
      %61 = vector.shape_cast %60 : vector<8x8x16xf32> to vector<64x16xf32>
      %c0_53 = arith.constant 0 : index
      %c1_54 = arith.constant 1 : index
      %c2_55 = arith.constant 2 : index
      %c0_56 = arith.constant 0 : index
      %c0_57 = arith.constant 0 : index
      %62 = vector.load %arg7[%c0_53, %c1_54, %c2_55, %c0_56, %c0_57] : memref<3x3x3x16x2xf32, #tpu.memory_space<vmem>>, vector<1x1x1x16x2xf32>
      %63 = vector.shape_cast %62 : vector<1x1x1x16x2xf32> to vector<16x2xf32>
      %cst_58 = arith.constant dense<0.000000e+00> : vector<64x2xf32>
      %64 = tpu.matmul %61, %63, %cst_58 {dimension_numbers = #tpu.dot_dimension_numbers<[1], [0], [0], [1], [0, 0, 1, 1], [], []>} : vector<64x16xf32>, vector<16x2xf32>, vector<64x2xf32> -> vector<64x2xf32>
      %65 = arith.addf %57, %64 : vector<64x2xf32>
      %66 = arith.index_cast %13 : i32 to index
      %c2_59 = arith.constant 2 : index
      %c0_60 = arith.constant 0 : index
      %c0_61 = arith.constant 0 : index
      %67 = vector.load %arg10[%66, %c2_59, %c0_60, %c0_61] : memref<3x10x10x16xf32, #tpu.memory_space<vmem>>, vector<1x8x8x16xf32>
      %68 = vector.shape_cast %67 : vector<1x8x8x16xf32> to vector<8x8x16xf32>
      %69 = vector.shape_cast %68 : vector<8x8x16xf32> to vector<64x16xf32>
      %c0_62 = arith.constant 0 : index
      %c2_63 = arith.constant 2 : index
      %c0_64 = arith.constant 0 : index
      %c0_65 = arith.constant 0 : index
      %c0_66 = arith.constant 0 : index
      %70 = vector.load %arg7[%c0_62, %c2_63, %c0_64, %c0_65, %c0_66] : memref<3x3x3x16x2xf32, #tpu.memory_space<vmem>>, vector<1x1x1x16x2xf32>
      %71 = vector.shape_cast %70 : vector<1x1x1x16x2xf32> to vector<16x2xf32>
      %cst_67 = arith.constant dense<0.000000e+00> : vector<64x2xf32>
      %72 = tpu.matmul %69, %71, %cst_67 {dimension_numbers = #tpu.dot_dimension_numbers<[1], [0], [0], [1], [0, 0, 1, 1], [], []>} : vector<64x16xf32>, vector<16x2xf32>, vector<64x2xf32> -> vector<64x2xf32>
      %73 = arith.addf %65, %72 : vector<64x2xf32>
      %74 = arith.index_cast %13 : i32 to index
      %c2_68 = arith.constant 2 : index
      %c1_69 = arith.constant 1 : index
      %c0_70 = arith.constant 0 : index
      %75 = vector.load %arg10[%74, %c2_68, %c1_69, %c0_70] : memref<3x10x10x16xf32, #tpu.memory_space<vmem>>, vector<1x8x8x16xf32>
      %76 = vector.shape_cast %75 : vector<1x8x8x16xf32> to vector<8x8x16xf32>
      %77 = vector.shape_cast %76 : vector<8x8x16xf32> to vector<64x16xf32>
      %c0_71 = arith.constant 0 : index
      %c2_72 = arith.constant 2 : index
      %c1_73 = arith.constant 1 : index
      %c0_74 = arith.constant 0 : index
      %c0_75 = arith.constant 0 : index
      %78 = vector.load %arg7[%c0_71, %c2_72, %c1_73, %c0_74, %c0_75] : memref<3x3x3x16x2xf32, #tpu.memory_space<vmem>>, vector<1x1x1x16x2xf32>
      %79 = vector.shape_cast %78 : vector<1x1x1x16x2xf32> to vector<16x2xf32>
      %cst_76 = arith.constant dense<0.000000e+00> : vector<64x2xf32>
      %80 = tpu.matmul %77, %79, %cst_76 {dimension_numbers = #tpu.dot_dimension_numbers<[1], [0], [0], [1], [0, 0, 1, 1], [], []>} : vector<64x16xf32>, vector<16x2xf32>, vector<64x2xf32> -> vector<64x2xf32>
      %81 = arith.addf %73, %80 : vector<64x2xf32>
      %82 = arith.index_cast %13 : i32 to index
      %c2_77 = arith.constant 2 : index
      %c2_78 = arith.constant 2 : index
      %c0_79 = arith.constant 0 : index
      %83 = vector.load %arg10[%82, %c2_77, %c2_78, %c0_79] : memref<3x10x10x16xf32, #tpu.memory_space<vmem>>, vector<1x8x8x16xf32>
      %84 = vector.shape_cast %83 : vector<1x8x8x16xf32> to vector<8x8x16xf32>
      %85 = vector.shape_cast %84 : vector<8x8x16xf32> to vector<64x16xf32>
      %c0_80 = arith.constant 0 : index
      %c2_81 = arith.constant 2 : index
      %c2_82 = arith.constant 2 : index
      %c0_83 = arith.constant 0 : index
      %c0_84 = arith.constant 0 : index
      %86 = vector.load %arg7[%c0_80, %c2_81, %c2_82, %c0_83, %c0_84] : memref<3x3x3x16x2xf32, #tpu.memory_space<vmem>>, vector<1x1x1x16x2xf32>
      %87 = vector.shape_cast %86 : vector<1x1x1x16x2xf32> to vector<16x2xf32>
      %cst_85 = arith.constant dense<0.000000e+00> : vector<64x2xf32>
      %88 = tpu.matmul %85, %87, %cst_85 {dimension_numbers = #tpu.dot_dimension_numbers<[1], [0], [0], [1], [0, 0, 1, 1], [], []>} : vector<64x16xf32>, vector<16x2xf32>, vector<64x2xf32> -> vector<64x2xf32>
      %89 = arith.addf %81, %88 : vector<64x2xf32>
      %90 = arith.index_cast %15 : i32 to index
      %c0_86 = arith.constant 0 : index
      %c0_87 = arith.constant 0 : index
      %c0_88 = arith.constant 0 : index
      %91 = vector.load %arg10[%90, %c0_86, %c0_87, %c0_88] : memref<3x10x10x16xf32, #tpu.memory_space<vmem>>, vector<1x8x8x16xf32>
      %92 = vector.shape_cast %91 : vector<1x8x8x16xf32> to vector<8x8x16xf32>
      %93 = vector.shape_cast %92 : vector<8x8x16xf32> to vector<64x16xf32>
      %c1_89 = arith.constant 1 : index
      %c0_90 = arith.constant 0 : index
      %c0_91 = arith.constant 0 : index
      %c0_92 = arith.constant 0 : index
      %c0_93 = arith.constant 0 : index
      %94 = vector.load %arg7[%c1_89, %c0_90, %c0_91, %c0_92, %c0_93] : memref<3x3x3x16x2xf32, #tpu.memory_space<vmem>>, vector<1x1x1x16x2xf32>
      %95 = vector.shape_cast %94 : vector<1x1x1x16x2xf32> to vector<16x2xf32>
      %cst_94 = arith.constant dense<0.000000e+00> : vector<64x2xf32>
      %96 = tpu.matmul %93, %95, %cst_94 {dimension_numbers = #tpu.dot_dimension_numbers<[1], [0], [0], [1], [0, 0, 1, 1], [], []>} : vector<64x16xf32>, vector<16x2xf32>, vector<64x2xf32> -> vector<64x2xf32>
      %97 = arith.addf %89, %96 : vector<64x2xf32>
      %98 = arith.index_cast %15 : i32 to index
      %c0_95 = arith.constant 0 : index
      %c1_96 = arith.constant 1 : index
      %c0_97 = arith.constant 0 : index
      %99 = vector.load %arg10[%98, %c0_95, %c1_96, %c0_97] : memref<3x10x10x16xf32, #tpu.memory_space<vmem>>, vector<1x8x8x16xf32>
      %100 = vector.shape_cast %99 : vector<1x8x8x16xf32> to vector<8x8x16xf32>
      %101 = vector.shape_cast %100 : vector<8x8x16xf32> to vector<64x16xf32>
      %c1_98 = arith.constant 1 : index
      %c0_99 = arith.constant 0 : index
      %c1_100 = arith.constant 1 : index
      %c0_101 = arith.constant 0 : index
      %c0_102 = arith.constant 0 : index
      %102 = vector.load %arg7[%c1_98, %c0_99, %c1_100, %c0_101, %c0_102] : memref<3x3x3x16x2xf32, #tpu.memory_space<vmem>>, vector<1x1x1x16x2xf32>
      %103 = vector.shape_cast %102 : vector<1x1x1x16x2xf32> to vector<16x2xf32>
      %cst_103 = arith.constant dense<0.000000e+00> : vector<64x2xf32>
      %104 = tpu.matmul %101, %103, %cst_103 {dimension_numbers = #tpu.dot_dimension_numbers<[1], [0], [0], [1], [0, 0, 1, 1], [], []>} : vector<64x16xf32>, vector<16x2xf32>, vector<64x2xf32> -> vector<64x2xf32>
      %105 = arith.addf %97, %104 : vector<64x2xf32>
      %106 = arith.index_cast %15 : i32 to index
      %c0_104 = arith.constant 0 : index
      %c2_105 = arith.constant 2 : index
      %c0_106 = arith.constant 0 : index
      %107 = vector.load %arg10[%106, %c0_104, %c2_105, %c0_106] : memref<3x10x10x16xf32, #tpu.memory_space<vmem>>, vector<1x8x8x16xf32>
      %108 = vector.shape_cast %107 : vector<1x8x8x16xf32> to vector<8x8x16xf32>
      %109 = vector.shape_cast %108 : vector<8x8x16xf32> to vector<64x16xf32>
      %c1_107 = arith.constant 1 : index
      %c0_108 = arith.constant 0 : index
      %c2_109 = arith.constant 2 : index
      %c0_110 = arith.constant 0 : index
      %c0_111 = arith.constant 0 : index
      %110 = vector.load %arg7[%c1_107, %c0_108, %c2_109, %c0_110, %c0_111] : memref<3x3x3x16x2xf32, #tpu.memory_space<vmem>>, vector<1x1x1x16x2xf32>
      %111 = vector.shape_cast %110 : vector<1x1x1x16x2xf32> to vector<16x2xf32>
      %cst_112 = arith.constant dense<0.000000e+00> : vector<64x2xf32>
      %112 = tpu.matmul %109, %111, %cst_112 {dimension_numbers = #tpu.dot_dimension_numbers<[1], [0], [0], [1], [0, 0, 1, 1], [], []>} : vector<64x16xf32>, vector<16x2xf32>, vector<64x2xf32> -> vector<64x2xf32>
      %113 = arith.addf %105, %112 : vector<64x2xf32>
      %114 = arith.index_cast %15 : i32 to index
      %c1_113 = arith.constant 1 : index
      %c0_114 = arith.constant 0 : index
      %c0_115 = arith.constant 0 : index
      %115 = vector.load %arg10[%114, %c1_113, %c0_114, %c0_115] : memref<3x10x10x16xf32, #tpu.memory_space<vmem>>, vector<1x8x8x16xf32>
      %116 = vector.shape_cast %115 : vector<1x8x8x16xf32> to vector<8x8x16xf32>
      %117 = vector.shape_cast %116 : vector<8x8x16xf32> to vector<64x16xf32>
      %c1_116 = arith.constant 1 : index
      %c1_117 = arith.constant 1 : index
      %c0_118 = arith.constant 0 : index
      %c0_119 = arith.constant 0 : index
      %c0_120 = arith.constant 0 : index
      %118 = vector.load %arg7[%c1_116, %c1_117, %c0_118, %c0_119, %c0_120] : memref<3x3x3x16x2xf32, #tpu.memory_space<vmem>>, vector<1x1x1x16x2xf32>
      %119 = vector.shape_cast %118 : vector<1x1x1x16x2xf32> to vector<16x2xf32>
      %cst_121 = arith.constant dense<0.000000e+00> : vector<64x2xf32>
      %120 = tpu.matmul %117, %119, %cst_121 {dimension_numbers = #tpu.dot_dimension_numbers<[1], [0], [0], [1], [0, 0, 1, 1], [], []>} : vector<64x16xf32>, vector<16x2xf32>, vector<64x2xf32> -> vector<64x2xf32>
      %121 = arith.addf %113, %120 : vector<64x2xf32>
      %122 = arith.index_cast %15 : i32 to index
      %c1_122 = arith.constant 1 : index
      %c1_123 = arith.constant 1 : index
      %c0_124 = arith.constant 0 : index
      %123 = vector.load %arg10[%122, %c1_122, %c1_123, %c0_124] : memref<3x10x10x16xf32, #tpu.memory_space<vmem>>, vector<1x8x8x16xf32>
      %124 = vector.shape_cast %123 : vector<1x8x8x16xf32> to vector<8x8x16xf32>
      %125 = vector.shape_cast %124 : vector<8x8x16xf32> to vector<64x16xf32>
      %c1_125 = arith.constant 1 : index
      %c1_126 = arith.constant 1 : index
      %c1_127 = arith.constant 1 : index
      %c0_128 = arith.constant 0 : index
      %c0_129 = arith.constant 0 : index
      %126 = vector.load %arg7[%c1_125, %c1_126, %c1_127, %c0_128, %c0_129] : memref<3x3x3x16x2xf32, #tpu.memory_space<vmem>>, vector<1x1x1x16x2xf32>
      %127 = vector.shape_cast %126 : vector<1x1x1x16x2xf32> to vector<16x2xf32>
      %cst_130 = arith.constant dense<0.000000e+00> : vector<64x2xf32>
      %128 = tpu.matmul %125, %127, %cst_130 {dimension_numbers = #tpu.dot_dimension_numbers<[1], [0], [0], [1], [0, 0, 1, 1], [], []>} : vector<64x16xf32>, vector<16x2xf32>, vector<64x2xf32> -> vector<64x2xf32>
      %129 = arith.addf %121, %128 : vector<64x2xf32>
      %130 = arith.index_cast %15 : i32 to index
      %c1_131 = arith.constant 1 : index
      %c2_132 = arith.constant 2 : index
      %c0_133 = arith.constant 0 : index
      %131 = vector.load %arg10[%130, %c1_131, %c2_132, %c0_133] : memref<3x10x10x16xf32, #tpu.memory_space<vmem>>, vector<1x8x8x16xf32>
      %132 = vector.shape_cast %131 : vector<1x8x8x16xf32> to vector<8x8x16xf32>
      %133 = vector.shape_cast %132 : vector<8x8x16xf32> to vector<64x16xf32>
      %c1_134 = arith.constant 1 : index
      %c1_135 = arith.constant 1 : index
      %c2_136 = arith.constant 2 : index
      %c0_137 = arith.constant 0 : index
      %c0_138 = arith.constant 0 : index
      %134 = vector.load %arg7[%c1_134, %c1_135, %c2_136, %c0_137, %c0_138] : memref<3x3x3x16x2xf32, #tpu.memory_space<vmem>>, vector<1x1x1x16x2xf32>
      %135 = vector.shape_cast %134 : vector<1x1x1x16x2xf32> to vector<16x2xf32>
      %cst_139 = arith.constant dense<0.000000e+00> : vector<64x2xf32>
      %136 = tpu.matmul %133, %135, %cst_139 {dimension_numbers = #tpu.dot_dimension_numbers<[1], [0], [0], [1], [0, 0, 1, 1], [], []>} : vector<64x16xf32>, vector<16x2xf32>, vector<64x2xf32> -> vector<64x2xf32>
      %137 = arith.addf %129, %136 : vector<64x2xf32>
      %138 = arith.index_cast %15 : i32 to index
      %c2_140 = arith.constant 2 : index
      %c0_141 = arith.constant 0 : index
      %c0_142 = arith.constant 0 : index
      %139 = vector.load %arg10[%138, %c2_140, %c0_141, %c0_142] : memref<3x10x10x16xf32, #tpu.memory_space<vmem>>, vector<1x8x8x16xf32>
      %140 = vector.shape_cast %139 : vector<1x8x8x16xf32> to vector<8x8x16xf32>
      %141 = vector.shape_cast %140 : vector<8x8x16xf32> to vector<64x16xf32>
      %c1_143 = arith.constant 1 : index
      %c2_144 = arith.constant 2 : index
      %c0_145 = arith.constant 0 : index
      %c0_146 = arith.constant 0 : index
      %c0_147 = arith.constant 0 : index
      %142 = vector.load %arg7[%c1_143, %c2_144, %c0_145, %c0_146, %c0_147] : memref<3x3x3x16x2xf32, #tpu.memory_space<vmem>>, vector<1x1x1x16x2xf32>
      %143 = vector.shape_cast %142 : vector<1x1x1x16x2xf32> to vector<16x2xf32>
      %cst_148 = arith.constant dense<0.000000e+00> : vector<64x2xf32>
      %144 = tpu.matmul %141, %143, %cst_148 {dimension_numbers = #tpu.dot_dimension_numbers<[1], [0], [0], [1], [0, 0, 1, 1], [], []>} : vector<64x16xf32>, vector<16x2xf32>, vector<64x2xf32> -> vector<64x2xf32>
      %145 = arith.addf %137, %144 : vector<64x2xf32>
      %146 = arith.index_cast %15 : i32 to index
      %c2_149 = arith.constant 2 : index
      %c1_150 = arith.constant 1 : index
      %c0_151 = arith.constant 0 : index
      %147 = vector.load %arg10[%146, %c2_149, %c1_150, %c0_151] : memref<3x10x10x16xf32, #tpu.memory_space<vmem>>, vector<1x8x8x16xf32>
      %148 = vector.shape_cast %147 : vector<1x8x8x16xf32> to vector<8x8x16xf32>
      %149 = vector.shape_cast %148 : vector<8x8x16xf32> to vector<64x16xf32>
      %c1_152 = arith.constant 1 : index
      %c2_153 = arith.constant 2 : index
      %c1_154 = arith.constant 1 : index
      %c0_155 = arith.constant 0 : index
      %c0_156 = arith.constant 0 : index
      %150 = vector.load %arg7[%c1_152, %c2_153, %c1_154, %c0_155, %c0_156] : memref<3x3x3x16x2xf32, #tpu.memory_space<vmem>>, vector<1x1x1x16x2xf32>
      %151 = vector.shape_cast %150 : vector<1x1x1x16x2xf32> to vector<16x2xf32>
      %cst_157 = arith.constant dense<0.000000e+00> : vector<64x2xf32>
      %152 = tpu.matmul %149, %151, %cst_157 {dimension_numbers = #tpu.dot_dimension_numbers<[1], [0], [0], [1], [0, 0, 1, 1], [], []>} : vector<64x16xf32>, vector<16x2xf32>, vector<64x2xf32> -> vector<64x2xf32>
      %153 = arith.addf %145, %152 : vector<64x2xf32>
      %154 = arith.index_cast %15 : i32 to index
      %c2_158 = arith.constant 2 : index
      %c2_159 = arith.constant 2 : index
      %c0_160 = arith.constant 0 : index
      %155 = vector.load %arg10[%154, %c2_158, %c2_159, %c0_160] : memref<3x10x10x16xf32, #tpu.memory_space<vmem>>, vector<1x8x8x16xf32>
      %156 = vector.shape_cast %155 : vector<1x8x8x16xf32> to vector<8x8x16xf32>
      %157 = vector.shape_cast %156 : vector<8x8x16xf32> to vector<64x16xf32>
      %c1_161 = arith.constant 1 : index
      %c2_162 = arith.constant 2 : index
      %c2_163 = arith.constant 2 : index
      %c0_164 = arith.constant 0 : index
      %c0_165 = arith.constant 0 : index
      %158 = vector.load %arg7[%c1_161, %c2_162, %c2_163, %c0_164, %c0_165] : memref<3x3x3x16x2xf32, #tpu.memory_space<vmem>>, vector<1x1x1x16x2xf32>
      %159 = vector.shape_cast %158 : vector<1x1x1x16x2xf32> to vector<16x2xf32>
      %cst_166 = arith.constant dense<0.000000e+00> : vector<64x2xf32>
      %160 = tpu.matmul %157, %159, %cst_166 {dimension_numbers = #tpu.dot_dimension_numbers<[1], [0], [0], [1], [0, 0, 1, 1], [], []>} : vector<64x16xf32>, vector<16x2xf32>, vector<64x2xf32> -> vector<64x2xf32>
      %161 = arith.addf %153, %160 : vector<64x2xf32>
      %162 = arith.index_cast %16 : i32 to index
      %c0_167 = arith.constant 0 : index
      %c0_168 = arith.constant 0 : index
      %c0_169 = arith.constant 0 : index
      %163 = vector.load %arg10[%162, %c0_167, %c0_168, %c0_169] : memref<3x10x10x16xf32, #tpu.memory_space<vmem>>, vector<1x8x8x16xf32>
      %164 = vector.shape_cast %163 : vector<1x8x8x16xf32> to vector<8x8x16xf32>
      %165 = vector.shape_cast %164 : vector<8x8x16xf32> to vector<64x16xf32>
      %c2_170 = arith.constant 2 : index
      %c0_171 = arith.constant 0 : index
      %c0_172 = arith.constant 0 : index
      %c0_173 = arith.constant 0 : index
      %c0_174 = arith.constant 0 : index
      %166 = vector.load %arg7[%c2_170, %c0_171, %c0_172, %c0_173, %c0_174] : memref<3x3x3x16x2xf32, #tpu.memory_space<vmem>>, vector<1x1x1x16x2xf32>
      %167 = vector.shape_cast %166 : vector<1x1x1x16x2xf32> to vector<16x2xf32>
      %cst_175 = arith.constant dense<0.000000e+00> : vector<64x2xf32>
      %168 = tpu.matmul %165, %167, %cst_175 {dimension_numbers = #tpu.dot_dimension_numbers<[1], [0], [0], [1], [0, 0, 1, 1], [], []>} : vector<64x16xf32>, vector<16x2xf32>, vector<64x2xf32> -> vector<64x2xf32>
      %169 = arith.addf %161, %168 : vector<64x2xf32>
      %170 = arith.index_cast %16 : i32 to index
      %c0_176 = arith.constant 0 : index
      %c1_177 = arith.constant 1 : index
      %c0_178 = arith.constant 0 : index
      %171 = vector.load %arg10[%170, %c0_176, %c1_177, %c0_178] : memref<3x10x10x16xf32, #tpu.memory_space<vmem>>, vector<1x8x8x16xf32>
      %172 = vector.shape_cast %171 : vector<1x8x8x16xf32> to vector<8x8x16xf32>
      %173 = vector.shape_cast %172 : vector<8x8x16xf32> to vector<64x16xf32>
      %c2_179 = arith.constant 2 : index
      %c0_180 = arith.constant 0 : index
      %c1_181 = arith.constant 1 : index
      %c0_182 = arith.constant 0 : index
      %c0_183 = arith.constant 0 : index
      %174 = vector.load %arg7[%c2_179, %c0_180, %c1_181, %c0_182, %c0_183] : memref<3x3x3x16x2xf32, #tpu.memory_space<vmem>>, vector<1x1x1x16x2xf32>
      %175 = vector.shape_cast %174 : vector<1x1x1x16x2xf32> to vector<16x2xf32>
      %cst_184 = arith.constant dense<0.000000e+00> : vector<64x2xf32>
      %176 = tpu.matmul %173, %175, %cst_184 {dimension_numbers = #tpu.dot_dimension_numbers<[1], [0], [0], [1], [0, 0, 1, 1], [], []>} : vector<64x16xf32>, vector<16x2xf32>, vector<64x2xf32> -> vector<64x2xf32>
      %177 = arith.addf %169, %176 : vector<64x2xf32>
      %178 = arith.index_cast %16 : i32 to index
      %c0_185 = arith.constant 0 : index
      %c2_186 = arith.constant 2 : index
      %c0_187 = arith.constant 0 : index
      %179 = vector.load %arg10[%178, %c0_185, %c2_186, %c0_187] : memref<3x10x10x16xf32, #tpu.memory_space<vmem>>, vector<1x8x8x16xf32>
      %180 = vector.shape_cast %179 : vector<1x8x8x16xf32> to vector<8x8x16xf32>
      %181 = vector.shape_cast %180 : vector<8x8x16xf32> to vector<64x16xf32>
      %c2_188 = arith.constant 2 : index
      %c0_189 = arith.constant 0 : index
      %c2_190 = arith.constant 2 : index
      %c0_191 = arith.constant 0 : index
      %c0_192 = arith.constant 0 : index
      %182 = vector.load %arg7[%c2_188, %c0_189, %c2_190, %c0_191, %c0_192] : memref<3x3x3x16x2xf32, #tpu.memory_space<vmem>>, vector<1x1x1x16x2xf32>
      %183 = vector.shape_cast %182 : vector<1x1x1x16x2xf32> to vector<16x2xf32>
      %cst_193 = arith.constant dense<0.000000e+00> : vector<64x2xf32>
      %184 = tpu.matmul %181, %183, %cst_193 {dimension_numbers = #tpu.dot_dimension_numbers<[1], [0], [0], [1], [0, 0, 1, 1], [], []>} : vector<64x16xf32>, vector<16x2xf32>, vector<64x2xf32> -> vector<64x2xf32>
      %185 = arith.addf %177, %184 : vector<64x2xf32>
      %186 = arith.index_cast %16 : i32 to index
      %c1_194 = arith.constant 1 : index
      %c0_195 = arith.constant 0 : index
      %c0_196 = arith.constant 0 : index
      %187 = vector.load %arg10[%186, %c1_194, %c0_195, %c0_196] : memref<3x10x10x16xf32, #tpu.memory_space<vmem>>, vector<1x8x8x16xf32>
      %188 = vector.shape_cast %187 : vector<1x8x8x16xf32> to vector<8x8x16xf32>
      %189 = vector.shape_cast %188 : vector<8x8x16xf32> to vector<64x16xf32>
      %c2_197 = arith.constant 2 : index
      %c1_198 = arith.constant 1 : index
      %c0_199 = arith.constant 0 : index
      %c0_200 = arith.constant 0 : index
      %c0_201 = arith.constant 0 : index
      %190 = vector.load %arg7[%c2_197, %c1_198, %c0_199, %c0_200, %c0_201] : memref<3x3x3x16x2xf32, #tpu.memory_space<vmem>>, vector<1x1x1x16x2xf32>
      %191 = vector.shape_cast %190 : vector<1x1x1x16x2xf32> to vector<16x2xf32>
      %cst_202 = arith.constant dense<0.000000e+00> : vector<64x2xf32>
      %192 = tpu.matmul %189, %191, %cst_202 {dimension_numbers = #tpu.dot_dimension_numbers<[1], [0], [0], [1], [0, 0, 1, 1], [], []>} : vector<64x16xf32>, vector<16x2xf32>, vector<64x2xf32> -> vector<64x2xf32>
      %193 = arith.addf %185, %192 : vector<64x2xf32>
      %194 = arith.index_cast %16 : i32 to index
      %c1_203 = arith.constant 1 : index
      %c1_204 = arith.constant 1 : index
      %c0_205 = arith.constant 0 : index
      %195 = vector.load %arg10[%194, %c1_203, %c1_204, %c0_205] : memref<3x10x10x16xf32, #tpu.memory_space<vmem>>, vector<1x8x8x16xf32>
      %196 = vector.shape_cast %195 : vector<1x8x8x16xf32> to vector<8x8x16xf32>
      %197 = vector.shape_cast %196 : vector<8x8x16xf32> to vector<64x16xf32>
      %c2_206 = arith.constant 2 : index
      %c1_207 = arith.constant 1 : index
      %c1_208 = arith.constant 1 : index
      %c0_209 = arith.constant 0 : index
      %c0_210 = arith.constant 0 : index
      %198 = vector.load %arg7[%c2_206, %c1_207, %c1_208, %c0_209, %c0_210] : memref<3x3x3x16x2xf32, #tpu.memory_space<vmem>>, vector<1x1x1x16x2xf32>
      %199 = vector.shape_cast %198 : vector<1x1x1x16x2xf32> to vector<16x2xf32>
      %cst_211 = arith.constant dense<0.000000e+00> : vector<64x2xf32>
      %200 = tpu.matmul %197, %199, %cst_211 {dimension_numbers = #tpu.dot_dimension_numbers<[1], [0], [0], [1], [0, 0, 1, 1], [], []>} : vector<64x16xf32>, vector<16x2xf32>, vector<64x2xf32> -> vector<64x2xf32>
      %201 = arith.addf %193, %200 : vector<64x2xf32>
      %202 = arith.index_cast %16 : i32 to index
      %c1_212 = arith.constant 1 : index
      %c2_213 = arith.constant 2 : index
      %c0_214 = arith.constant 0 : index
      %203 = vector.load %arg10[%202, %c1_212, %c2_213, %c0_214] : memref<3x10x10x16xf32, #tpu.memory_space<vmem>>, vector<1x8x8x16xf32>
      %204 = vector.shape_cast %203 : vector<1x8x8x16xf32> to vector<8x8x16xf32>
      %205 = vector.shape_cast %204 : vector<8x8x16xf32> to vector<64x16xf32>
      %c2_215 = arith.constant 2 : index
      %c1_216 = arith.constant 1 : index
      %c2_217 = arith.constant 2 : index
      %c0_218 = arith.constant 0 : index
      %c0_219 = arith.constant 0 : index
      %206 = vector.load %arg7[%c2_215, %c1_216, %c2_217, %c0_218, %c0_219] : memref<3x3x3x16x2xf32, #tpu.memory_space<vmem>>, vector<1x1x1x16x2xf32>
      %207 = vector.shape_cast %206 : vector<1x1x1x16x2xf32> to vector<16x2xf32>
      %cst_220 = arith.constant dense<0.000000e+00> : vector<64x2xf32>
      %208 = tpu.matmul %205, %207, %cst_220 {dimension_numbers = #tpu.dot_dimension_numbers<[1], [0], [0], [1], [0, 0, 1, 1], [], []>} : vector<64x16xf32>, vector<16x2xf32>, vector<64x2xf32> -> vector<64x2xf32>
      %209 = arith.addf %201, %208 : vector<64x2xf32>
      %210 = arith.index_cast %16 : i32 to index
      %c2_221 = arith.constant 2 : index
      %c0_222 = arith.constant 0 : index
      %c0_223 = arith.constant 0 : index
      %211 = vector.load %arg10[%210, %c2_221, %c0_222, %c0_223] : memref<3x10x10x16xf32, #tpu.memory_space<vmem>>, vector<1x8x8x16xf32>
      %212 = vector.shape_cast %211 : vector<1x8x8x16xf32> to vector<8x8x16xf32>
      %213 = vector.shape_cast %212 : vector<8x8x16xf32> to vector<64x16xf32>
      %c2_224 = arith.constant 2 : index
      %c2_225 = arith.constant 2 : index
      %c0_226 = arith.constant 0 : index
      %c0_227 = arith.constant 0 : index
      %c0_228 = arith.constant 0 : index
      %214 = vector.load %arg7[%c2_224, %c2_225, %c0_226, %c0_227, %c0_228] : memref<3x3x3x16x2xf32, #tpu.memory_space<vmem>>, vector<1x1x1x16x2xf32>
      %215 = vector.shape_cast %214 : vector<1x1x1x16x2xf32> to vector<16x2xf32>
      %cst_229 = arith.constant dense<0.000000e+00> : vector<64x2xf32>
      %216 = tpu.matmul %213, %215, %cst_229 {dimension_numbers = #tpu.dot_dimension_numbers<[1], [0], [0], [1], [0, 0, 1, 1], [], []>} : vector<64x16xf32>, vector<16x2xf32>, vector<64x2xf32> -> vector<64x2xf32>
      %217 = arith.addf %209, %216 : vector<64x2xf32>
      %218 = arith.index_cast %16 : i32 to index
      %c2_230 = arith.constant 2 : index
      %c1_231 = arith.constant 1 : index
      %c0_232 = arith.constant 0 : index
      %219 = vector.load %arg10[%218, %c2_230, %c1_231, %c0_232] : memref<3x10x10x16xf32, #tpu.memory_space<vmem>>, vector<1x8x8x16xf32>
      %220 = vector.shape_cast %219 : vector<1x8x8x16xf32> to vector<8x8x16xf32>
      %221 = vector.shape_cast %220 : vector<8x8x16xf32> to vector<64x16xf32>
      %c2_233 = arith.constant 2 : index
      %c2_234 = arith.constant 2 : index
      %c1_235 = arith.constant 1 : index
      %c0_236 = arith.constant 0 : index
      %c0_237 = arith.constant 0 : index
      %222 = vector.load %arg7[%c2_233, %c2_234, %c1_235, %c0_236, %c0_237] : memref<3x3x3x16x2xf32, #tpu.memory_space<vmem>>, vector<1x1x1x16x2xf32>
      %223 = vector.shape_cast %222 : vector<1x1x1x16x2xf32> to vector<16x2xf32>
      %cst_238 = arith.constant dense<0.000000e+00> : vector<64x2xf32>
      %224 = tpu.matmul %221, %223, %cst_238 {dimension_numbers = #tpu.dot_dimension_numbers<[1], [0], [0], [1], [0, 0, 1, 1], [], []>} : vector<64x16xf32>, vector<16x2xf32>, vector<64x2xf32> -> vector<64x2xf32>
      %225 = arith.addf %217, %224 : vector<64x2xf32>
      %226 = arith.index_cast %16 : i32 to index
      %c2_239 = arith.constant 2 : index
      %c2_240 = arith.constant 2 : index
      %c0_241 = arith.constant 0 : index
      %227 = vector.load %arg10[%226, %c2_239, %c2_240, %c0_241] : memref<3x10x10x16xf32, #tpu.memory_space<vmem>>, vector<1x8x8x16xf32>
      %228 = vector.shape_cast %227 : vector<1x8x8x16xf32> to vector<8x8x16xf32>
      %229 = vector.shape_cast %228 : vector<8x8x16xf32> to vector<64x16xf32>
      %c2_242 = arith.constant 2 : index
      %c2_243 = arith.constant 2 : index
      %c2_244 = arith.constant 2 : index
      %c0_245 = arith.constant 0 : index
      %c0_246 = arith.constant 0 : index
      %230 = vector.load %arg7[%c2_242, %c2_243, %c2_244, %c0_245, %c0_246] : memref<3x3x3x16x2xf32, #tpu.memory_space<vmem>>, vector<1x1x1x16x2xf32>
      %231 = vector.shape_cast %230 : vector<1x1x1x16x2xf32> to vector<16x2xf32>
      %cst_247 = arith.constant dense<0.000000e+00> : vector<64x2xf32>
      %232 = tpu.matmul %229, %231, %cst_247 {dimension_numbers = #tpu.dot_dimension_numbers<[1], [0], [0], [1], [0, 0, 1, 1], [], []>} : vector<64x16xf32>, vector<16x2xf32>, vector<64x2xf32> -> vector<64x2xf32>
      %233 = arith.addf %225, %232 : vector<64x2xf32>
      %c0_248 = arith.constant 0 : index
      %c0_249 = arith.constant 0 : index
      %234 = vector.load %arg8[%c0_248, %c0_249] : memref<1x2xf32, #tpu.memory_space<vmem>>, vector<1x2xf32>
      %235 = vector.shape_cast %234 : vector<1x2xf32> to vector<2xf32>
      %236 = vector.shape_cast %235 : vector<2xf32> to vector<1x2xf32>
      %237 = vector.broadcast %236 : vector<1x2xf32> to vector<64x2xf32>
      %238 = arith.addf %233, %237 : vector<64x2xf32>
      %239 = vector.shape_cast %238 : vector<64x2xf32> to vector<8x8x2xf32>
      %c0_250 = arith.constant 0 : index
      %c0_251 = arith.constant 0 : index
      %c0_252 = arith.constant 0 : index
      %c0_253 = arith.constant 0 : index
      %c0_254 = arith.constant 0 : index
      %240 = vector.load %arg9[%c0_250, %c0_251, %c0_252, %c0_253, %c0_254] : memref<1x1x8x8x2xf32, #tpu.memory_space<vmem>>, vector<1x1x8x8x2xf32>
      %241 = vector.shape_cast %240 : vector<1x1x8x8x2xf32> to vector<8x8x2xf32>
      %242 = vector.shape_cast %239 : vector<8x8x2xf32> to vector<1x1x8x8x2xf32>
      tpu.vector_store %arg9[%c0_250, %c0_251, %c0_252, %c0_253, %c0_254], %242 {strides = array<i32>} : memref<1x1x8x8x2xf32, #tpu.memory_space<vmem>>, vector<1x1x8x8x2xf32>,
    } else {
    }
    return
  }
  func.func @transform_0(%arg0: i32, %arg1: i32) -> (i32, i32, i32, i32, i32) {
    %c0_i32 = arith.constant 0 : i32
    %0 = arith.addi %arg1, %c0_i32 : i32
    %c9_i32 = arith.constant 9 : i32
    %1 = arith.minsi %0, %c9_i32 : i32
    %c0_i32_0 = arith.constant 0 : i32
    %c0_i32_1 = arith.constant 0 : i32
    %c0_i32_2 = arith.constant 0 : i32
    %c0_i32_3 = arith.constant 0 : i32
    return %arg0, %1, %c0_i32_0, %c0_i32_1, %c0_i32_2 : i32, i32, i32, i32, i32
  }
  func.func @transform_1(%arg0: i32, %arg1: i32) -> (i32, i32, i32, i32, i32) {
    %c1_i32 = arith.constant 1 : i32
    %0 = arith.addi %arg1, %c1_i32 : i32
    %c9_i32 = arith.constant 9 : i32
    %1 = arith.minsi %0, %c9_i32 : i32
    %c0_i32 = arith.constant 0 : i32
    %c0_i32_0 = arith.constant 0 : i32
    %c0_i32_1 = arith.constant 0 : i32
    %c0_i32_2 = arith.constant 0 : i32
    return %arg0, %1, %c0_i32, %c0_i32_0, %c0_i32_1 : i32, i32, i32, i32, i32
  }
  func.func @transform_2(%arg0: i32, %arg1: i32) -> (i32, i32, i32, i32, i32) {
    %c2_i32 = arith.constant 2 : i32
    %0 = arith.addi %arg1, %c2_i32 : i32
    %c9_i32 = arith.constant 9 : i32
    %1 = arith.minsi %0, %c9_i32 : i32
    %c0_i32 = arith.constant 0 : i32
    %c0_i32_0 = arith.constant 0 : i32
    %c0_i32_1 = arith.constant 0 : i32
    %c0_i32_2 = arith.constant 0 : i32
    return %arg0, %1, %c0_i32, %c0_i32_0, %c0_i32_1 : i32, i32, i32, i32, i32
  }
  func.func @transform_3(%arg0: i32, %arg1: i32) -> (i32, i32, i32, i32, i32) {
    %c0_i32 = arith.constant 0 : i32
    %c0_i32_0 = arith.constant 0 : i32
    %c0_i32_1 = arith.constant 0 : i32
    %c0_i32_2 = arith.constant 0 : i32
    %c0_i32_3 = arith.constant 0 : i32
    %c0_i32_4 = arith.constant 0 : i32
    return %c0_i32, %c0_i32_0, %c0_i32_1, %c0_i32_2, %c0_i32_3 : i32, i32, i32, i32, i32
  }
  func.func @transform_4(%arg0: i32, %arg1: i32) -> (i32, i32) {
    %c0_i32 = arith.constant 0 : i32
    %c0_i32_0 = arith.constant 0 : i32
    %c0_i32_1 = arith.constant 0 : i32
    return %c0_i32, %c0_i32_0 : i32, i32
  }
  func.func @transform_5(%arg0: i32, %arg1: i32) -> (i32, i32, i32, i32, i32) {
    %c0_i32 = arith.constant 0 : i32
    %c0_i32_0 = arith.constant 0 : i32
    %c0_i32_1 = arith.constant 0 : i32
    %c0_i32_2 = arith.constant 0 : i32
    %c0_i32_3 = arith.constant 0 : i32
    %c0_i32_4 = arith.constant 0 : i32
    return %c0_i32, %c0_i32_0, %c0_i32_1, %c0_i32_2, %c0_i32_3 : i32, i32, i32, i32, i32
  }
  func.func @transform_6(%arg0: i32, %arg1: i32) -> (i32, i32) {
    %c0_i32 = arith.constant 0 : i32
    %c0_i32_0 = arith.constant 0 : i32
    %c0_i32_1 = arith.constant 0 : i32
    return %c0_i32, %c0_i32_0 : i32, i32
  }
  func.func @transform_7(%arg0: i32, %arg1: i32) -> (i32, i32, i32, i32, i32) {
    %c1_i32 = arith.constant 1 : i32
    %0 = arith.subi %arg1, %c1_i32 : i32
    %c0_i32 = arith.constant 0 : i32
    %1 = arith.maxsi %0, %c0_i32 : i32
    %c0_i32_0 = arith.constant 0 : i32
    %c0_i32_1 = arith.constant 0 : i32
    %c0_i32_2 = arith.constant 0 : i32
    %c0_i32_3 = arith.constant 0 : i32
    return %arg0, %1, %c0_i32_0, %c0_i32_1, %c0_i32_2 : i32, i32, i32, i32, i32
  }
}

</mosaic_0001>

<llo_original>
// kernel: flowhead3d_forward.1
$region0: #{flowhead3d_forward.1}
  #allocation0 [shape = 'u32[]', space=smem, size = 0x4, offset = 0x4, fixed_abs, tag = 'smem constant byte address 0x4 - core index']
  #allocation1 [shape = 'u32[144,128]{1,0:T(1,128)}', space=vmem, size = 0x12000, scoped, tag = 'internal scratch']
  #allocation2 [shape = 'f32[3,10,10,16]{3,2,1,0:T(8,128)}', space=vmem, size = 0x3c000, scoped, tag = 'scratch operand']
  %s0 = inlined_call_operand.vmem [shape: f32[2,10,10,10,8], index: 0, kind: input, shape index: {}, may-alias: {0,1,2}]
  %s1 = inlined_call_operand.vmem [shape: f32[2,10,10,10,8], index: 1, kind: input, shape index: {}, may-alias: {0,1,2}]
  %s2 = inlined_call_operand.vmem [shape: f32[2,10,10,10,8], index: 2, kind: input, shape index: {}, may-alias: {0,1,2}]
  %s3 = inlined_call_operand.vmem [shape: f32[3,3,3,8,16], index: 3, kind: input, shape index: {}]
  %s4 = inlined_call_operand.vmem [shape: f32[1,16], index: 4, kind: input, shape index: {}]
  %s5 = inlined_call_operand.vmem [shape: f32[3,3,3,16,2], index: 5, kind: input, shape index: {}]
  %s6 = inlined_call_operand.vmem [shape: f32[1,2], index: 6, kind: input, shape index: {}]
  %s7 = inlined_call_operand.vmem [shape: f32[2,8,8,8,2], index: 7, kind: output, shape index: {}]
  %s8 = sld [smem:[#allocation0]]
  $region77: #{flowhead3d_forward.1} parent=0
    _
  %s10 = ssub.s32 1, %s8
  %s11 = scalar_select 0, %s10, %s8
  loop: start=0, step=1, limit=20
  $region2: #{flowhead3d_forward.1} parent=0 // loop_pre_header
    _
  $region3: #{flowhead3d_forward.1} parent=0 // loop_header
    %s13 = sphi 0, %s17
    %p14 = scmp.ge.s32.totalorder %s13, 20
    %s20 = sphi 0, %s32
    %s21 = sphi 0, %s28
    %s22 = sphi 0, %s20
    %s23 = sphi 0, %s21
    %s24 = sphi 0, %s22
    %s25 = sphi 0, %s23
    %s41 = sphi 0, %s43
    %s44 = sphi 0, %s41
    %s45 = sphi 0, %s44
    %s61 = sphi 0, %s45
    %s75 = sphi 0, %s77
    %s78 = sphi 0, %s75
    %s79 = sphi 0, %s78
    %s95 = sphi 0, %s79
    %s109 = sphi 0, %s111
    %s112 = sphi 0, %s109
    %s113 = sphi 0, %s112
    %s129 = sphi 0, %s113
    %s133 = sphi 0, %s133
    %s135 = sphi 0, %s133
    %s136 = sphi 0, %s135
    %s150 = sphi 0, %s136
    %s154 = sphi 0, %s154
    %s156 = sphi 0, %s154
    %s157 = sphi 0, %s156
    %s171 = sphi 0, %s157
    %s175 = sphi 0, %s175
    %s177 = sphi 0, %s175
    %s178 = sphi 0, %s177
    %s192 = sphi 0, %s178
    %s196 = sphi 0, %s196
    %s198 = sphi 0, %s196
    %s199 = sphi 0, %s198
    %s213 = sphi 0, %s199
    %s227 = sphi 0, %s229
    %s230 = sphi 0, %s227
    %s231 = sphi 0, %s230
    %s247 = sphi 0, %s231
  $region4: #{flowhead3d_forward.1} parent=0 // loop_header_branch
    %16 = sbr.rel (%p14) target = $region8
  $region5: #{flowhead3d_forward.1} parent=0 // loop_body
    %s18 = ssub.s32 %s13, 1
    %s19 = ssub.s32 %s13, 2
    %s26 = sadd.s32 1, %s21
    %p27 = scmp.ge.s32.totalorder %s26, 9
    %s28 = scalar_select %p27, 0, %s26
    %s29 = sadd.s32 1, %s20
    %s30 = scalar_select %p27, %s29, %s20
    %p31 = scmp.ge.s32.totalorder %s30, 2
    %s32 = scalar_select %p31, 0, %s30
    %p33 = scmp.lt.s32.totalorder %s21, 9
    %s34 = scalar_select %p33, %s21, 9
    %p35 = scmp.lt.s32.totalorder %s28, 9
    %s36 = scalar_select %p35, %s28, 9
    %s37 = ssub.s32 %s20, %s32
    %s38 = ssub.s32 %s34, %s36
    %s39 = sor.u32 %s37, %s38
    %p40 = scmp.eq.s32.totalorder %s39, 0
    %s42 = sadd.s32 %s41, 1
    %s43 = scalar_select %p40, %s41, %s42
    %p46 = pneg %p40
    %p47 = scmp.eq.s32.totalorder %s13, 17
    %p48 = por %p46, %p47
    %p49 = scmp.ne.s32.totalorder %s41, %s44
    %p50 = scmp.eq.s32.totalorder %s13, 0
    %p51 = por %p49, %p50
    %p52 = scmp.ne.s32.totalorder %s41, %s44
    %p53 = scmp.eq.s32.totalorder %s18, 17
    %p54 = por %p52, %p53
    %p55 = scmp.ne.s32.totalorder %s44, %s45
    %p56 = scmp.eq.s32.totalorder %s18, 0
    %p57 = por %p55, %p56
    %p58 = scmp.ne.s32.totalorder %s44, %s45
    %p59 = scmp.eq.s32.totalorder %s19, 17
    %p60 = por %p58, %p59
    %p62 = scmp.ne.s32.totalorder %s45, %s61
    %p63 = scmp.eq.s32.totalorder %s19, 0
    %p64 = por %p62, %p63
    %s65 = sadd.s32 %s21, 1
    %p66 = scmp.lt.s32.totalorder %s65, 9
    %s67 = scalar_select %p66, %s65, 9
    %s68 = sadd.s32 %s28, 1
    %p69 = scmp.lt.s32.totalorder %s68, 9
    %s70 = scalar_select %p69, %s68, 9
    %s71 = ssub.s32 %s20, %s32
    %s72 = ssub.s32 %s67, %s70
    %s73 = sor.u32 %s71, %s72
    %p74 = scmp.eq.s32.totalorder %s73, 0
    %s76 = sadd.s32 %s75, 1
    %s77 = scalar_select %p74, %s75, %s76
    %p80 = pneg %p74
    %p81 = scmp.eq.s32.totalorder %s13, 17
    %p82 = por %p80, %p81
    %p83 = scmp.ne.s32.totalorder %s75, %s78
    %p84 = scmp.eq.s32.totalorder %s13, 0
    %p85 = por %p83, %p84
    %p86 = scmp.ne.s32.totalorder %s75, %s78
    %p87 = scmp.eq.s32.totalorder %s18, 17
    %p88 = por %p86, %p87
    %p89 = scmp.ne.s32.totalorder %s78, %s79
    %p90 = scmp.eq.s32.totalorder %s18, 0
    %p91 = por %p89, %p90
    %p92 = scmp.ne.s32.totalorder %s78, %s79
    %p93 = scmp.eq.s32.totalorder %s19, 17
    %p94 = por %p92, %p93
    %p96 = scmp.ne.s32.totalorder %s79, %s95
    %p97 = scmp.eq.s32.totalorder %s19, 0
    %p98 = por %p96, %p97
    %s99 = sadd.s32 %s21, 2
    %p100 = scmp.lt.s32.totalorder %s99, 9
    %s101 = scalar_select %p100, %s99, 9
    %s102 = sadd.s32 %s28, 2
    %p103 = scmp.lt.s32.totalorder %s102, 9
    %s104 = scalar_select %p103, %s102, 9
    %s105 = ssub.s32 %s20, %s32
    %s106 = ssub.s32 %s101, %s104
    %s107 = sor.u32 %s105, %s106
    %p108 = scmp.eq.s32.totalorder %s107, 0
    %s110 = sadd.s32 %s109, 1
    %s111 = scalar_select %p108, %s109, %s110
    %p114 = pneg %p108
    %p115 = scmp.eq.s32.totalorder %s13, 17
    %p116 = por %p114, %p115
    %p117 = scmp.ne.s32.totalorder %s109, %s112
    %p118 = scmp.eq.s32.totalorder %s13, 0
    %p119 = por %p117, %p118
    %p120 = scmp.ne.s32.totalorder %s109, %s112
    %p121 = scmp.eq.s32.totalorder %s18, 17
    %p122 = por %p120, %p121
    %p123 = scmp.ne.s32.totalorder %s112, %s113
    %p124 = scmp.eq.s32.totalorder %s18, 0
    %p125 = por %p123, %p124
    %p126 = scmp.ne.s32.totalorder %s112, %s113
    %p127 = scmp.eq.s32.totalorder %s19, 17
    %p128 = por %p126, %p127
    %p130 = scmp.ne.s32.totalorder %s113, %s129
    %p131 = scmp.eq.s32.totalorder %s19, 0
    %p132 = por %p130, %p131
    %s134 = sadd.s32 %s133, 1
    %p137 = scmp.eq.s32.totalorder %s13, 17
    %p138 = scmp.ne.s32.totalorder %s133, %s135
    %p139 = scmp.eq.s32.totalorder %s13, 0
    %p140 = por %p138, %p139
    %p141 = scmp.ne.s32.totalorder %s133, %s135
    %p142 = scmp.eq.s32.totalorder %s18, 17
    %p143 = por %p141, %p142
    %p144 = scmp.ne.s32.totalorder %s135, %s136
    %p145 = scmp.eq.s32.totalorder %s18, 0
    %p146 = por %p144, %p145
    %p147 = scmp.ne.s32.totalorder %s135, %s136
    %p148 = scmp.eq.s32.totalorder %s19, 17
    %p149 = por %p147, %p148
    %p151 = scmp.ne.s32.totalorder %s136, %s150
    %p152 = scmp.eq.s32.totalorder %s19, 0
    %p153 = por %p151, %p152
    %s155 = sadd.s32 %s154, 1
    %p158 = scmp.eq.s32.totalorder %s13, 17
    %p159 = scmp.ne.s32.totalorder %s154, %s156
    %p160 = scmp.eq.s32.totalorder %s13, 0
    %p161 = por %p159, %p160
    %p162 = scmp.ne.s32.totalorder %s154, %s156
    %p163 = scmp.eq.s32.totalorder %s18, 17
    %p164 = por %p162, %p163
    %p165 = scmp.ne.s32.totalorder %s156, %s157
    %p166 = scmp.eq.s32.totalorder %s18, 0
    %p167 = por %p165, %p166
    %p168 = scmp.ne.s32.totalorder %s156, %s157
    %p169 = scmp.eq.s32.totalorder %s19, 17
    %p170 = por %p168, %p169
    %p172 = scmp.ne.s32.totalorder %s157, %s171
    %p173 = scmp.eq.s32.totalorder %s19, 0
    %p174 = por %p172, %p173
    %s176 = sadd.s32 %s175, 1
    %p179 = scmp.eq.s32.totalorder %s13, 17
    %p180 = scmp.ne.s32.totalorder %s175, %s177
    %p181 = scmp.eq.s32.totalorder %s13, 0
    %p182 = por %p180, %p181
    %p183 = scmp.ne.s32.totalorder %s175, %s177
    %p184 = scmp.eq.s32.totalorder %s18, 17
    %p185 = por %p183, %p184
    %p186 = scmp.ne.s32.totalorder %s177, %s178
    %p187 = scmp.eq.s32.totalorder %s18, 0
    %p188 = por %p186, %p187
    %p189 = scmp.ne.s32.totalorder %s177, %s178
    %p190 = scmp.eq.s32.totalorder %s19, 17
    %p191 = por %p189, %p190
    %p193 = scmp.ne.s32.totalorder %s178, %s192
    %p194 = scmp.eq.s32.totalorder %s19, 0
    %p195 = por %p193, %p194
    %s197 = sadd.s32 %s196, 1
    %p200 = scmp.eq.s32.totalorder %s13, 17
    %p201 = scmp.ne.s32.totalorder %s196, %s198
    %p202 = scmp.eq.s32.totalorder %s13, 0
    %p203 = por %p201, %p202
    %p204 = scmp.ne.s32.totalorder %s196, %s198
    %p205 = scmp.eq.s32.totalorder %s18, 17
    %p206 = por %p204, %p205
    %p207 = scmp.ne.s32.totalorder %s198, %s199
    %p208 = scmp.eq.s32.totalorder %s18, 0
    %p209 = por %p207, %p208
    %p210 = scmp.ne.s32.totalorder %s198, %s199
    %p211 = scmp.eq.s32.totalorder %s19, 17
    %p212 = por %p210, %p211
    %p214 = scmp.ne.s32.totalorder %s199, %s213
    %p215 = scmp.eq.s32.totalorder %s19, 0
    %p216 = por %p214, %p215
    %s217 = ssub.s32 %s21, 1
    %p218 = scmp.gt.s32.totalorder %s217, 0
    %s219 = scalar_select %p218, %s217, 0
    %s220 = ssub.s32 %s28, 1
    %p221 = scmp.gt.s32.totalorder %s220, 0
    %s222 = scalar_select %p221, %s220, 0
    %s223 = ssub.s32 %s20, %s32
    %s224 = ssub.s32 %s219, %s222
    %s225 = sor.u32 %s223, %s224
    %p226 = scmp.eq.s32.totalorder %s225, 0
    %s228 = sadd.s32 %s227, 1
    %s229 = scalar_select %p226, %s227, %s228
    %p232 = pneg %p226
    %p233 = scmp.eq.s32.totalorder %s13, 17
    %p234 = por %p232, %p233
    %p235 = scmp.ne.s32.totalorder %s227, %s230
    %p236 = scmp.eq.s32.totalorder %s13, 0
    %p237 = por %p235, %p236
    %p238 = scmp.ne.s32.totalorder %s227, %s230
    %p239 = scmp.eq.s32.totalorder %s18, 17
    %p240 = por %p238, %p239
    %p241 = scmp.ne.s32.totalorder %s230, %s231
    %p242 = scmp.eq.s32.totalorder %s18, 0
    %p243 = por %p241, %p242
    %p244 = scmp.ne.s32.totalorder %s230, %s231
    %p245 = scmp.eq.s32.totalorder %s19, 17
    %p246 = por %p244, %p245
    %p248 = scmp.ne.s32.totalorder %s231, %s247
    %p249 = scmp.eq.s32.totalorder %s19, 0
    %p250 = por %p248, %p249
    %p251 = scmp.le.s32.totalorder 1, %s13
    %p252 = scmp.lt.s32.totalorder %s13, 19
    %p253 = pnand %p251, %p252
    %p254 = pneg %p253
    // Predicated region
    $region9: #{flowhead3d_forward.1} parent=5 // pred_check
      _
    $region10: #{flowhead3d_forward.1} parent=5 // pred_check_branch
      %256 = sbr.rel (%p253) target = $region12
    $region11: #{flowhead3d_forward.1} parent=5 // pred_region
      %s257 = ssub.s32 %s13, 1
      // Predicated region
      $region13: #{flowhead3d_forward.1} parent=11 // pred_check
        %p258 = pneg %p146
      $region14: #{flowhead3d_forward.1} parent=11 // pred_check_branch
        %260 = sbr.rel (%p258) target = $region16
      $region15: #{flowhead3d_forward.1} parent=11 // pred_region
        _
      $region16: #{flowhead3d_forward.1} parent=11 // pred_fallthru
        _
      // Predicated region
      $region17: #{flowhead3d_forward.1} parent=11 // pred_check
        %p261 = pneg %p167
      $region18: #{flowhead3d_forward.1} parent=11 // pred_check_branch
        %263 = sbr.rel (%p261) target = $region20
      $region19: #{flowhead3d_forward.1} parent=11 // pred_region
        _
      $region20: #{flowhead3d_forward.1} parent=11 // pred_fallthru
        _
      // Predicated region
      $region21: #{flowhead3d_forward.1} parent=11 // pred_check
        %p264 = pneg %p188
      $region22: #{flowhead3d_forward.1} parent=11 // pred_check_branch
        %266 = sbr.rel (%p264) target = $region24
      $region23: #{flowhead3d_forward.1} parent=11 // pred_region
        _
      $region24: #{flowhead3d_forward.1} parent=11 // pred_fallthru
        _
      // Predicated region
      $region25: #{flowhead3d_forward.1} parent=11 // pred_check
        %p267 = pneg %p209
      $region26: #{flowhead3d_forward.1} parent=11 // pred_check_branch
        %269 = sbr.rel (%p267) target = $region28
      $region27: #{flowhead3d_forward.1} parent=11 // pred_region
        _
      $region28: #{flowhead3d_forward.1} parent=11 // pred_fallthru
        _
    $region12: #{flowhead3d_forward.1} parent=5 // pred_fallthru
      _
    %p270 = scmp.lt.s32.totalorder %s13, 18
    // Predicated region
    $region29: #{flowhead3d_forward.1} parent=5 // pred_check
      %p271 = pneg %p270
    $region30: #{flowhead3d_forward.1} parent=5 // pred_check_branch
      %273 = sbr.rel (%p271) target = $region32
    $region31: #{flowhead3d_forward.1} parent=5 // pred_region
      // Predicated region
      $region33: #{flowhead3d_forward.1} parent=31 // pred_check
        %p274 = pneg %p51
      $region34: #{flowhead3d_forward.1} parent=31 // pred_check_branch
        %276 = sbr.rel (%p274) target = $region36
      $region35: #{flowhead3d_forward.1} parent=31 // pred_region
        %p277 = scmp.lt.s32.totalorder %s21, 9
        %s278 = scalar_select %p277, %s21, 9
        %p279 = scmp.lt.s32.totalorder %s20, 1
        %s280 = scalar_select %p279, %s20, 1
        %p281 = scmp.lt.s32.totalorder %s278, 9
        %s282 = scalar_select %p281, %s278, 9
        %s283 = smul.addr %s282, 20
        %s284 = smul.addr %s280, 200
        %s285 = sadd.s32 %s283, %s284
        %s286 = smul.addr %s285, 8
        %s287 = scalar_lea.vmem %s0, %s286
        %p288 = scmp.lt.s32.totalorder %s21, 9
        %s289 = scalar_select %p288, %s21, 9
      $region36: #{flowhead3d_forward.1} parent=31 // pred_fallthru
        _
      // Predicated region
      $region37: #{flowhead3d_forward.1} parent=31 // pred_check
        %p290 = pneg %p85
      $region38: #{flowhead3d_forward.1} parent=31 // pred_check_branch
        %292 = sbr.rel (%p290) target = $region40
      $region39: #{flowhead3d_forward.1} parent=31 // pred_region
        %s293 = sadd.s32 %s21, 1
        %p294 = scmp.lt.s32.totalorder %s293, 9
        %s295 = scalar_select %p294, %s293, 9
        %p296 = scmp.lt.s32.totalorder %s20, 1
        %s297 = scalar_select %p296, %s20, 1
        %p298 = scmp.lt.s32.totalorder %s295, 9
        %s299 = scalar_select %p298, %s295, 9
        %s300 = smul.addr %s299, 20
        %s301 = smul.addr %s297, 200
        %s302 = sadd.s32 %s300, %s301
        %s303 = smul.addr %s302, 8
        %s304 = scalar_lea.vmem %s1, %s303
        %s305 = sadd.s32 %s21, 1
        %p306 = scmp.lt.s32.totalorder %s305, 9
        %s307 = scalar_select %p306, %s305, 9
      $region40: #{flowhead3d_forward.1} parent=31 // pred_fallthru
        _
      // Predicated region
      $region41: #{flowhead3d_forward.1} parent=31 // pred_check
        %p308 = pneg %p119
      $region42: #{flowhead3d_forward.1} parent=31 // pred_check_branch
        %310 = sbr.rel (%p308) target = $region44
      $region43: #{flowhead3d_forward.1} parent=31 // pred_region
        %s311 = sadd.s32 %s21, 2
        %p312 = scmp.lt.s32.totalorder %s311, 9
        %s313 = scalar_select %p312, %s311, 9
        %p314 = scmp.lt.s32.totalorder %s20, 1
        %s315 = scalar_select %p314, %s20, 1
        %p316 = scmp.lt.s32.totalorder %s313, 9
        %s317 = scalar_select %p316, %s313, 9
        %s318 = smul.addr %s317, 20
        %s319 = smul.addr %s315, 200
        %s320 = sadd.s32 %s318, %s319
        %s321 = smul.addr %s320, 8
        %s322 = scalar_lea.vmem %s2, %s321
        %s323 = sadd.s32 %s21, 2
        %p324 = scmp.lt.s32.totalorder %s323, 9
        %s325 = scalar_select %p324, %s323, 9
      $region44: #{flowhead3d_forward.1} parent=31 // pred_fallthru
        _
    $region32: #{flowhead3d_forward.1} parent=5 // pred_fallthru
      _
    %p326 = scmp.le.s32.totalorder 1, %s13
    %p327 = scmp.lt.s32.totalorder %s13, 19
    %p328 = pnand %p326, %p327
    %p329 = pneg %p328
    // Predicated region
    $region45: #{flowhead3d_forward.1} parent=5 // pred_check
      _
    $region46: #{flowhead3d_forward.1} parent=5 // pred_check_branch
      %331 = sbr.rel (%p328) target = $region48
    $region47: #{flowhead3d_forward.1} parent=5 // pred_region
      %s332 = ssub.s32 %s13, 1
      %p333 = scmp.lt.s32.totalorder %s23, 9
      %s334 = scalar_select %p333, %s23, 9
      %p335 = scmp.lt.s32.totalorder %s22, 1
      %s336 = scalar_select %p335, %s22, 1
      %p337 = scmp.lt.s32.totalorder %s334, 9
      %s338 = scalar_select %p337, %s334, 9
      %s339 = smul.addr %s338, 20
      %s340 = smul.addr %s336, 200
      %s341 = sadd.s32 %s339, %s340
      %s342 = smul.addr %s341, 8
      %s343 = scalar_lea.vmem %s0, %s342
      %p344 = pneg %p57
      %p345 = pneg %p54
      %s346 = sadd.s32 %s23, 1
      %p347 = scmp.lt.s32.totalorder %s346, 9
      %s348 = scalar_select %p347, %s346, 9
      %p349 = scmp.lt.s32.totalorder %s22, 1
      %s350 = scalar_select %p349, %s22, 1
      %p351 = scmp.lt.s32.totalorder %s348, 9
      %s352 = scalar_select %p351, %s348, 9
      %s353 = smul.addr %s352, 20
      %s354 = smul.addr %s350, 200
      %s355 = sadd.s32 %s353, %s354
      %s356 = smul.addr %s355, 8
      %s357 = scalar_lea.vmem %s1, %s356
      %p358 = pneg %p91
      %p359 = pneg %p88
      %s360 = sadd.s32 %s23, 2
      %p361 = scmp.lt.s32.totalorder %s360, 9
      %s362 = scalar_select %p361, %s360, 9
      %p363 = scmp.lt.s32.totalorder %s22, 1
      %s364 = scalar_select %p363, %s22, 1
      %p365 = scmp.lt.s32.totalorder %s362, 9
      %s366 = scalar_select %p365, %s362, 9
      %s367 = smul.addr %s366, 20
      %s368 = smul.addr %s364, 200
      %s369 = sadd.s32 %s367, %s368
      %s370 = smul.addr %s369, 8
      %s371 = scalar_lea.vmem %s2, %s370
      %p372 = pneg %p125
      %p373 = pneg %p122
      %p374 = pneg %p146
      %p375 = pneg %p143
      %p376 = pneg %p167
      %p377 = pneg %p164
      %p378 = pneg %p188
      %p379 = pneg %p185
      %p380 = pneg %p209
      %p381 = pneg %p206
      %p382 = pneg %p243
      %p383 = pneg %p240
      %s384 = ssub.s32 %s23, 1
      %p385 = scmp.gt.s32.totalorder %s384, 0
      %s386 = scalar_select %p385, %s384, 0
      %p387 = scmp.lt.s32.totalorder %s22, 1
      %s388 = scalar_select %p387, %s22, 1
      %p389 = scmp.lt.s32.totalorder %s386, 7
      %s390 = scalar_select %p389, %s386, 7
      %s391 = smul.addr %s390, 8
      %s392 = smul.addr %s388, 64
      %s393 = sadd.s32 %s391, %s392
      %s394 = smul.addr %s393, 8
      %s395 = scalar_lea.vmem %s7, %s394
      %p396 = scmp.lt.s32.totalorder %s23, 9
      %s397 = scalar_select %p396, %s23, 9
      %p398 = scmp.lt.s32.totalorder %s22, 1
      %s399 = scalar_select %p398, %s22, 1
      %p400 = scmp.lt.s32.totalorder %s397, 9
      %s401 = scalar_select %p400, %s397, 9
      %s402 = smul.addr %s401, 20
      %s403 = smul.addr %s399, 200
      %s404 = sadd.s32 %s402, %s403
      %s405 = smul.addr %s404, 8
      %s406 = scalar_lea.vmem %s0, %s405
      %p407 = scmp.lt.s32.totalorder %s23, 9
      %s408 = scalar_select %p407, %s23, 9
      %s409 = sadd.s32 %s23, 1
      %p410 = scmp.lt.s32.totalorder %s409, 9
      %s411 = scalar_select %p410, %s409, 9
      %p412 = scmp.lt.s32.totalorder %s22, 1
      %s413 = scalar_select %p412, %s22, 1
      %p414 = scmp.lt.s32.totalorder %s411, 9
      %s415 = scalar_select %p414, %s411, 9
      %s416 = smul.addr %s415, 20
      %s417 = smul.addr %s413, 200
      %s418 = sadd.s32 %s416, %s417
      %s419 = smul.addr %s418, 8
      %s420 = scalar_lea.vmem %s1, %s419
      %s421 = sadd.s32 %s23, 1
      %p422 = scmp.lt.s32.totalorder %s421, 9
      %s423 = scalar_select %p422, %s421, 9
      %s424 = sadd.s32 %s23, 2
      %p425 = scmp.lt.s32.totalorder %s424, 9
      %s426 = scalar_select %p425, %s424, 9
      %p427 = scmp.lt.s32.totalorder %s22, 1
      %s428 = scalar_select %p427, %s22, 1
      %p429 = scmp.lt.s32.totalorder %s426, 9
      %s430 = scalar_select %p429, %s426, 9
      %s431 = smul.addr %s430, 20
      %s432 = smul.addr %s428, 200
      %s433 = sadd.s32 %s431, %s432
      %s434 = smul.addr %s433, 8
      %s435 = scalar_lea.vmem %s2, %s434
      %s436 = sadd.s32 %s23, 2
      %p437 = scmp.lt.s32.totalorder %s436, 9
      %s438 = scalar_select %p437, %s436, 9
      %s439 = ssub.s32 %s23, 1
      %p440 = scmp.gt.s32.totalorder %s439, 0
      %s441 = scalar_select %p440, %s439, 0
      %p442 = scmp.lt.s32.totalorder %s22, 1
      %s443 = scalar_select %p442, %s22, 1
      %p444 = scmp.lt.s32.totalorder %s441, 7
      %s445 = scalar_select %p444, %s441, 7
      %s446 = smul.addr %s445, 8
      %s447 = smul.addr %s443, 64
      %s448 = sadd.s32 %s446, %s447
      %s449 = smul.addr %s448, 8
      %s450 = scalar_lea.vmem %s7, %s449
      %s451 = ssub.s32 %s23, 1
      %p452 = scmp.gt.s32.totalorder %s451, 0
      %s453 = scalar_select %p452, %s451, 0
      %p454 = scmp.eq.s32.totalorder %s23, 0
      // Predicated region
      $region49: #{flowhead3d_forward.1} parent=47 // pred_check
        %p455 = pneg %p454
      $region50: #{flowhead3d_forward.1} parent=47 // pred_check_branch
        %457 = sbr.rel (%p455) target = $region52
      $region51: #{flowhead3d_forward.1} parent=47 // pred_region
        %vm458 = vcmask 130048
        %459 = vst.msk [vmem:[#allocation2] sm:$0xff] %vm458, 0.0
        %vm460 = vcmask 123904
        %461 = vst.msk [vmem:[#allocation2 + $0x8] sm:$0x3] %vm460, 0.0
        %462 = vst.msk [vmem:[#allocation2 + $0x10] sm:$0xff] %vm458, 0.0
        %463 = vst.msk [vmem:[#allocation2 + $0x18] sm:$0x3] %vm460, 0.0
        %464 = vst.msk [vmem:[#allocation2 + $0x20] sm:$0xff] %vm458, 0.0
        %465 = vst.msk [vmem:[#allocation2 + $0x28] sm:$0x3] %vm460, 0.0
        %466 = vst.msk [vmem:[#allocation2 + $0x30] sm:$0xff] %vm458, 0.0
        %467 = vst.msk [vmem:[#allocation2 + $0x38] sm:$0x3] %vm460, 0.0
        %468 = vst.msk [vmem:[#allocation2 + $0x40] sm:$0xff] %vm458, 0.0
        %469 = vst.msk [vmem:[#allocation2 + $0x48] sm:$0x3] %vm460, 0.0
        %470 = vst.msk [vmem:[#allocation2 + $0x50] sm:$0xff] %vm458, 0.0
        %471 = vst.msk [vmem:[#allocation2 + $0x58] sm:$0x3] %vm460, 0.0
        %472 = vst.msk [vmem:[#allocation2 + $0x60] sm:$0xff] %vm458, 0.0
        %473 = vst.msk [vmem:[#allocation2 + $0x68] sm:$0x3] %vm460, 0.0
        %474 = vst.msk [vmem:[#allocation2 + $0x70] sm:$0xff] %vm458, 0.0
        %475 = vst.msk [vmem:[#allocation2 + $0x78] sm:$0x3] %vm460, 0.0
        %476 = vst.msk [vmem:[#allocation2 + $0x80] sm:$0xff] %vm458, 0.0
        %477 = vst.msk [vmem:[#allocation2 + $0x88] sm:$0x3] %vm460, 0.0
        %478 = vst.msk [vmem:[#allocation2 + $0x90] sm:$0xff] %vm458, 0.0
        %479 = vst.msk [vmem:[#allocation2 + $0x98] sm:$0x3] %vm460, 0.0
        %480 = vst.msk [vmem:[#allocation2 + $0xa0] sm:$0xff] %vm458, 0.0
        %481 = vst.msk [vmem:[#allocation2 + $0xa8] sm:$0x3] %vm460, 0.0
        %482 = vst.msk [vmem:[#allocation2 + $0xb0] sm:$0xff] %vm458, 0.0
        %483 = vst.msk [vmem:[#allocation2 + $0xb8] sm:$0x3] %vm460, 0.0
        %484 = vst.msk [vmem:[#allocation2 + $0xc0] sm:$0xff] %vm458, 0.0
        %485 = vst.msk [vmem:[#allocation2 + $0xc8] sm:$0x3] %vm460, 0.0
        %486 = vst.msk [vmem:[#allocation2 + $0xd0] sm:$0xff] %vm458, 0.0
        %487 = vst.msk [vmem:[#allocation2 + $0xd8] sm:$0x3] %vm460, 0.0
        %488 = vst.msk [vmem:[#allocation2 + $0xe0] sm:$0xff] %vm458, 0.0
        %489 = vst.msk [vmem:[#allocation2 + $0xe8] sm:$0x3] %vm460, 0.0
        %490 = vst.msk [vmem:[#allocation2 + $0xf0] sm:$0xff] %vm458, 0.0
        %491 = vst.msk [vmem:[#allocation2 + $0xf8] sm:$0x3] %vm460, 0.0
        %492 = vst.msk [vmem:[#allocation2 + $0x100] sm:$0xff] %vm458, 0.0
        %493 = vst.msk [vmem:[#allocation2 + $0x108] sm:$0x3] %vm460, 0.0
        %494 = vst.msk [vmem:[#allocation2 + $0x110] sm:$0xff] %vm458, 0.0
        %495 = vst.msk [vmem:[#allocation2 + $0x118] sm:$0x3] %vm460, 0.0
        %496 = vst.msk [vmem:[#allocation2 + $0x120] sm:$0xff] %vm458, 0.0
        %497 = vst.msk [vmem:[#allocation2 + $0x128] sm:$0x3] %vm460, 0.0
        %498 = vst.msk [vmem:[#allocation2 + $0x130] sm:$0xff] %vm458, 0.0
        %499 = vst.msk [vmem:[#allocation2 + $0x138] sm:$0x3] %vm460, 0.0
        %500 = vst.msk [vmem:[#allocation2 + $0x140] sm:$0xff] %vm458, 0.0
        %501 = vst.msk [vmem:[#allocation2 + $0x148] sm:$0x3] %vm460, 0.0
        %502 = vst.msk [vmem:[#allocation2 + $0x150] sm:$0xff] %vm458, 0.0
        %503 = vst.msk [vmem:[#allocation2 + $0x158] sm:$0x3] %vm460, 0.0
        %504 = vst.msk [vmem:[#allocation2 + $0x160] sm:$0xff] %vm458, 0.0
        %505 = vst.msk [vmem:[#allocation2 + $0x168] sm:$0x3] %vm460, 0.0
        %506 = vst.msk [vmem:[#allocation2 + $0x170] sm:$0xff] %vm458, 0.0
        %507 = vst.msk [vmem:[#allocation2 + $0x178] sm:$0x3] %vm460, 0.0
        %508 = vst.msk [vmem:[#allocation2 + $0x180] sm:$0xff] %vm458, 0.0
        %509 = vst.msk [vmem:[#allocation2 + $0x188] sm:$0x3] %vm460, 0.0
        %510 = vst.msk [vmem:[#allocation2 + $0x190] sm:$0xff] %vm458, 0.0
        %511 = vst.msk [vmem:[#allocation2 + $0x198] sm:$0x3] %vm460, 0.0
        %512 = vst.msk [vmem:[#allocation2 + $0x1a0] sm:$0xff] %vm458, 0.0
        %513 = vst.msk [vmem:[#allocation2 + $0x1a8] sm:$0x3] %vm460, 0.0
        %514 = vst.msk [vmem:[#allocation2 + $0x1b0] sm:$0xff] %vm458, 0.0
        %515 = vst.msk [vmem:[#allocation2 + $0x1b8] sm:$0x3] %vm460, 0.0
        %516 = vst.msk [vmem:[#allocation2 + $0x1c0] sm:$0xff] %vm458, 0.0
        %517 = vst.msk [vmem:[#allocation2 + $0x1c8] sm:$0x3] %vm460, 0.0
        %518 = vst.msk [vmem:[#allocation2 + $0x1d0] sm:$0xff] %vm458, 0.0
        %519 = vst.msk [vmem:[#allocation2 + $0x1d8] sm:$0x3] %vm460, 0.0
      $region52: #{flowhead3d_forward.1} parent=47 // pred_fallthru
        _
      %p520 = scmp.lt.s32.totalorder %s23, 8
      // Predicated region
      $region53: #{flowhead3d_forward.1} parent=47 // pred_check
        %p521 = pneg %p520
      $region54: #{flowhead3d_forward.1} parent=47 // pred_check_branch
        %523 = sbr.rel (%p521) target = $region56
      $region55: #{flowhead3d_forward.1} parent=47 // pred_region
        %v524 = vld [vmem:[%s406] sm:$0xff]
        %v525 = vld [vmem:[%s406 + $0x10] sm:$0xff]
        %v526 = vld [vmem:[%s406 + $0x20] sm:$0xff]
        %v527 = vld [vmem:[%s406 + $0x30] sm:$0xff]
        %v528 = vld [vmem:[%s406 + $0x40] sm:$0xff]
        %v529 = vld [vmem:[%s406 + $0x50] sm:$0xff]
        %v530 = vld [vmem:[%s406 + $0x60] sm:$0xff]
        %v531 = vld [vmem:[%s406 + $0x70] sm:$0xff]
        %v532 = vld [vmem:[%s3] sm:$0xff]
        %v533 = vld [vmem:[%s406 + $0x1] sm:$0xff]
        %v534 = vld [vmem:[%s406 + $0x11] sm:$0xff]
        %v535 = vld [vmem:[%s406 + $0x21] sm:$0xff]
        %v536 = vld [vmem:[%s406 + $0x31] sm:$0xff]
        %v537 = vld [vmem:[%s406 + $0x41] sm:$0xff]
        %v538 = vld [vmem:[%s406 + $0x51] sm:$0xff]
        %v539 = vld [vmem:[%s406 + $0x61] sm:$0xff]
        %v540 = vld [vmem:[%s406 + $0x71] sm:$0xff]
        %s541 = scalar_lea.vmem %s3, 8
        %v542 = vld [vmem:[%s541] sm:$0xff]
        %vm543 = vcmask 64512
        %v545 = vsel %vm543, %v533, 0
        %v548 = vsel %vm543, %v534, 0
        %v551 = vsel %vm543, %v535, 0
        %v554 = vsel %vm543, %v536, 0
        %v557 = vsel %vm543, %v537, 0
        %v560 = vsel %vm543, %v538, 0
        %v563 = vsel %vm543, %v539, 0
        %v566 = vsel %vm543, %v540, 0
        %568 = vmatprep.subr.mxu0 0.0
        %569 = vmatpush1.msra.mxu0 0.0
        %570 = vmatprep.subr.mxu0 0.0
        %571 = vmatpush1.msra.mxu0 0.0
        %572 = vmatprep.subr.mxu0 0.0
        %573 = vmatpush1.msra.mxu0 0.0
        %574 = vmatprep.subr.mxu0 0.0
        %575 = vmatpush1.msra.mxu0 0.0
        %576 = vmatprep.subr.mxu0 0.0
        %577 = vmatpush1.msra.mxu0 0.0
        %578 = vmatprep.subr.mxu0 0.0
        %579 = vmatpush1.msra.mxu0 0.0
        %580 = vmatprep.subr.mxu0 0.0
        %581 = vmatpush1.msra.mxu0 0.0
        %582 = vmatprep.subr.mxu0 0.0
        %583 = vmatpush1.msra.mxu0 0.0
        %584 = vmatprep.subr.mxu0 0.0
        %585 = vmatpush1.msra.mxu0 0.0
        %586 = vmatprep.subr.mxu0 0.0
        %587 = vmatpush1.msra.mxu0 0.0
        %588 = vmatprep.subr.mxu0 0.0
        %589 = vmatpush1.msra.mxu0 0.0
        %590 = vmatprep.subr.mxu0 0.0
        %591 = vmatpush1.msra.mxu0 0.0
        %592 = vmatprep.subr.mxu0 0.0
        %593 = vmatpush1.msra.mxu0 0.0
        %594 = vmatprep.subr.mxu0 0.0
        %595 = vmatpush1.msra.mxu0 0.0
        %596 = vmatprep.subr.mxu0 0.0
        %597 = vmatpush1.msra.mxu0 0.0
        %598 = vmatprep.subr.mxu0 0.0
        %599 = vmatpush1.msra.mxu0 %v542
        %600 = vmatprep.subr.mxu0 0.0
        %601 = vmatpush2.msra.mxu0 0.0
        %602 = vmatprep.subr.mxu0 0.0
        %603 = vmatpush2.msra.mxu0 0.0
        %604 = vmatprep.subr.mxu0 0.0
        %605 = vmatpush2.msra.mxu0 0.0
        %606 = vmatprep.subr.mxu0 0.0
        %607 = vmatpush2.msra.mxu0 0.0
        %608 = vmatprep.subr.mxu0 0.0
        %609 = vmatpush2.msra.mxu0 0.0
        %610 = vmatprep.subr.mxu0 0.0
        %611 = vmatpush2.msra.mxu0 0.0
        %612 = vmatprep.subr.mxu0 0.0
        %613 = vmatpush2.msra.mxu0 0.0
        %614 = vmatprep.subr.mxu0 0.0
        %615 = vmatpush2.msra.mxu0 0.0
        %616 = vmatprep.subr.mxu0 0.0
        %617 = vmatpush2.msra.mxu0 0.0
        %618 = vmatprep.subr.mxu0 0.0
        %619 = vmatpush2.msra.mxu0 0.0
        %620 = vmatprep.subr.mxu0 0.0
        %621 = vmatpush2.msra.mxu0 0.0
        %622 = vmatprep.subr.mxu0 0.0
        %623 = vmatpush2.msra.mxu0 0.0
        %624 = vmatprep.subr.mxu0 0.0
        %625 = vmatpush2.msra.mxu0 0.0
        %626 = vmatprep.subr.mxu0 0.0
        %627 = vmatpush2.msra.mxu0 0.0
        %628 = vmatprep.subr.mxu0 0.0
        %629 = vmatpush2.msra.mxu0 0.0
        %630 = vmatprep.subr.mxu0 0.0
        %631 = vmatpush2.msra.mxu0 0.0
        %632 = vmatprep.mubr.f32.mxu0 0.0
        %633 = vmatmul.mubr.f32.gmra.mxu0 %v545
        %v634 = vpop.f32.mrf.mxu0
        %v635 = vadd.f32 0.0, %v634
        %v636 = vpop.f32.mrf.mxu0
        %637 = vmatprep.mubr.f32.mxu0 0.0
        %638 = vmatmul.mubr.f32.gmra.mxu0 %v548
        %v639 = vpop.f32.mrf.mxu0
        %v640 = vadd.f32 0.0, %v639
        %v641 = vpop.f32.mrf.mxu0
        %642 = vmatprep.mubr.f32.mxu0 0.0
        %643 = vmatmul.mubr.f32.gmra.mxu0 %v551
        %v644 = vpop.f32.mrf.mxu0
        %v645 = vadd.f32 0.0, %v644
        %v646 = vpop.f32.mrf.mxu0
        %647 = vmatprep.mubr.f32.mxu0 0.0
        %648 = vmatmul.mubr.f32.gmra.mxu0 %v554
        %v649 = vpop.f32.mrf.mxu0
        %v650 = vadd.f32 0.0, %v649
        %v651 = vpop.f32.mrf.mxu0
        %652 = vmatprep.mubr.f32.mxu0 0.0
        %653 = vmatmul.mubr.f32.gmra.mxu0 %v557
        %v654 = vpop.f32.mrf.mxu0
        %v655 = vadd.f32 0.0, %v654
        %v656 = vpop.f32.mrf.mxu0
        %657 = vmatprep.mubr.f32.mxu0 0.0
        %658 = vmatmul.mubr.f32.gmra.mxu0 %v560
        %v659 = vpop.f32.mrf.mxu0
        %v660 = vadd.f32 0.0, %v659
        %v661 = vpop.f32.mrf.mxu0
        %662 = vmatprep.mubr.f32.mxu0 0.0
        %663 = vmatmul.mubr.f32.gmra.mxu0 %v563
        %v664 = vpop.f32.mrf.mxu0
        %v665 = vadd.f32 0.0, %v664
        %v666 = vpop.f32.mrf.mxu0
        %667 = vmatprep.mubr.f32.mxu0 0.0
        %668 = vmatmul.mubr.f32.gmra.mxu0 %v566
        %v669 = vpop.f32.mrf.mxu0
        %v670 = vadd.f32 0.0, %v669
        %v671 = vpop.f32.mrf.mxu0
        %672 = vdwg.mxu0
        %v674 = vsel %vm543, %v524, 0
        %v677 = vsel %vm543, %v525, 0
        %v680 = vsel %vm543, %v526, 0
        %v683 = vsel %vm543, %v527, 0
        %v686 = vsel %vm543, %v528, 0
        %v689 = vsel %vm543, %v529, 0
        %v692 = vsel %vm543, %v530, 0
        %v695 = vsel %vm543, %v531, 0
        %697 = vmatprep.subr.mxu0 0.0
        %698 = vmatpush1.msra.mxu0 0.0
        %699 = vmatprep.subr.mxu0 0.0
        %700 = vmatpush1.msra.mxu0 0.0
        %701 = vmatprep.subr.mxu0 0.0
        %702 = vmatpush1.msra.mxu0 0.0
        %703 = vmatprep.subr.mxu0 0.0
        %704 = vmatpush1.msra.mxu0 0.0
        %705 = vmatprep.subr.mxu0 0.0
        %706 = vmatpush1.msra.mxu0 0.0
        %707 = vmatprep.subr.mxu0 0.0
        %708 = vmatpush1.msra.mxu0 0.0
        %709 = vmatprep.subr.mxu0 0.0
        %710 = vmatpush1.msra.mxu0 0.0
        %711 = vmatprep.subr.mxu0 0.0
        %712 = vmatpush1.msra.mxu0 0.0
        %713 = vmatprep.subr.mxu0 0.0
        %714 = vmatpush1.msra.mxu0 0.0
        %715 = vmatprep.subr.mxu0 0.0
        %716 = vmatpush1.msra.mxu0 0.0
        %717 = vmatprep.subr.mxu0 0.0
        %718 = vmatpush1.msra.mxu0 0.0
        %719 = vmatprep.subr.mxu0 0.0
        %720 = vmatpush1.msra.mxu0 0.0
        %721 = vmatprep.subr.mxu0 0.0
        %722 = vmatpush1.msra.mxu0 0.0
        %723 = vmatprep.subr.mxu0 0.0
        %724 = vmatpush1.msra.mxu0 0.0
        %725 = vmatprep.subr.mxu0 0.0
        %726 = vmatpush1.msra.mxu0 0.0
        %727 = vmatprep.subr.mxu0 0.0
        %728 = vmatpush1.msra.mxu0 %v532
        %729 = vmatprep.subr.mxu0 0.0
        %730 = vmatpush2.msra.mxu0 0.0
        %731 = vmatprep.subr.mxu0 0.0
        %732 = vmatpush2.msra.mxu0 0.0
        %733 = vmatprep.subr.mxu0 0.0
        %734 = vmatpush2.msra.mxu0 0.0
        %735 = vmatprep.subr.mxu0 0.0
        %736 = vmatpush2.msra.mxu0 0.0
        %737 = vmatprep.subr.mxu0 0.0
        %738 = vmatpush2.msra.mxu0 0.0
        %739 = vmatprep.subr.mxu0 0.0
        %740 = vmatpush2.msra.mxu0 0.0
        %741 = vmatprep.subr.mxu0 0.0
        %742 = vmatpush2.msra.mxu0 0.0
        %743 = vmatprep.subr.mxu0 0.0
        %744 = vmatpush2.msra.mxu0 0.0
        %745 = vmatprep.subr.mxu0 0.0
        %746 = vmatpush2.msra.mxu0 0.0
        %747 = vmatprep.subr.mxu0 0.0
        %748 = vmatpush2.msra.mxu0 0.0
        %749 = vmatprep.subr.mxu0 0.0
        %750 = vmatpush2.msra.mxu0 0.0
        %751 = vmatprep.subr.mxu0 0.0
        %752 = vmatpush2.msra.mxu0 0.0
        %753 = vmatprep.subr.mxu0 0.0
        %754 = vmatpush2.msra.mxu0 0.0
        %755 = vmatprep.subr.mxu0 0.0
        %756 = vmatpush2.msra.mxu0 0.0
        %757 = vmatprep.subr.mxu0 0.0
        %758 = vmatpush2.msra.mxu0 0.0
        %759 = vmatprep.subr.mxu0 0.0
        %760 = vmatpush2.msra.mxu0 0.0
        %761 = vmatprep.mubr.f32.mxu0 0.0
        %762 = vmatmul.mubr.f32.gmra.mxu0 %v674
        %v763 = vpop.f32.mrf.mxu0
        %v764 = vadd.f32 %v635, %v763
        %v765 = vpop.f32.mrf.mxu0
        %766 = vmatprep.mubr.f32.mxu0 0.0
        %767 = vmatmul.mubr.f32.gmra.mxu0 %v677
        %v768 = vpop.f32.mrf.mxu0
        %v769 = vadd.f32 %v640, %v768
        %v770 = vpop.f32.mrf.mxu0
        %771 = vmatprep.mubr.f32.mxu0 0.0
        %772 = vmatmul.mubr.f32.gmra.mxu0 %v680
        %v773 = vpop.f32.mrf.mxu0
        %v774 = vadd.f32 %v645, %v773
        %v775 = vpop.f32.mrf.mxu0
        %776 = vmatprep.mubr.f32.mxu0 0.0
        %777 = vmatmul.mubr.f32.gmra.mxu0 %v683
        %v778 = vpop.f32.mrf.mxu0
        %v779 = vadd.f32 %v650, %v778
        %v780 = vpop.f32.mrf.mxu0
        %781 = vmatprep.mubr.f32.mxu0 0.0
        %782 = vmatmul.mubr.f32.gmra.mxu0 %v686
        %v783 = vpop.f32.mrf.mxu0
        %v784 = vadd.f32 %v655, %v783
        %v785 = vpop.f32.mrf.mxu0
        %786 = vmatprep.mubr.f32.mxu0 0.0
        %787 = vmatmul.mubr.f32.gmra.mxu0 %v689
        %v788 = vpop.f32.mrf.mxu0
        %v789 = vadd.f32 %v660, %v788
        %v790 = vpop.f32.mrf.mxu0
        %791 = vmatprep.mubr.f32.mxu0 0.0
        %792 = vmatmul.mubr.f32.gmra.mxu0 %v692
        %v793 = vpop.f32.mrf.mxu0
        %v794 = vadd.f32 %v665, %v793
        %v795 = vpop.f32.mrf.mxu0
        %796 = vmatprep.mubr.f32.mxu0 0.0
        %797 = vmatmul.mubr.f32.gmra.mxu0 %v695
        %v798 = vpop.f32.mrf.mxu0
        %v799 = vadd.f32 %v670, %v798
        %v800 = vpop.f32.mrf.mxu0
        %801 = vdwg.mxu0
        %v802 = vld [vmem:[%s406 + $0x2] sm:$0xff]
        %v803 = vld [vmem:[%s406 + $0x12] sm:$0xff]
        %v804 = vld [vmem:[%s406 + $0x22] sm:$0xff]
        %v805 = vld [vmem:[%s406 + $0x32] sm:$0xff]
        %v806 = vld [vmem:[%s406 + $0x42] sm:$0xff]
        %v807 = vld [vmem:[%s406 + $0x52] sm:$0xff]
        %v808 = vld [vmem:[%s406 + $0x62] sm:$0xff]
        %v809 = vld [vmem:[%s406 + $0x72] sm:$0xff]
        %s810 = scalar_lea.vmem %s3, 16
        %v811 = vld [vmem:[%s810] sm:$0xff]
        %v813 = vsel %vm543, %v802, 0
        %v816 = vsel %vm543, %v803, 0
        %v819 = vsel %vm543, %v804, 0
        %v822 = vsel %vm543, %v805, 0
        %v825 = vsel %vm543, %v806, 0
        %v828 = vsel %vm543, %v807, 0
        %v831 = vsel %vm543, %v808, 0
        %v834 = vsel %vm543, %v809, 0
        %836 = vmatprep.subr.mxu0 0.0
        %837 = vmatpush1.msra.mxu0 0.0
        %838 = vmatprep.subr.mxu0 0.0
        %839 = vmatpush1.msra.mxu0 0.0
        %840 = vmatprep.subr.mxu0 0.0
        %841 = vmatpush1.msra.mxu0 0.0
        %842 = vmatprep.subr.mxu0 0.0
        %843 = vmatpush1.msra.mxu0 0.0
        %844 = vmatprep.subr.mxu0 0.0
        %845 = vmatpush1.msra.mxu0 0.0
        %846 = vmatprep.subr.mxu0 0.0
        %847 = vmatpush1.msra.mxu0 0.0
        %848 = vmatprep.subr.mxu0 0.0
        %849 = vmatpush1.msra.mxu0 0.0
        %850 = vmatprep.subr.mxu0 0.0
        %851 = vmatpush1.msra.mxu0 0.0
        %852 = vmatprep.subr.mxu0 0.0
        %853 = vmatpush1.msra.mxu0 0.0
        %854 = vmatprep.subr.mxu0 0.0
        %855 = vmatpush1.msra.mxu0 0.0
        %856 = vmatprep.subr.mxu0 0.0
        %857 = vmatpush1.msra.mxu0 0.0
        %858 = vmatprep.subr.mxu0 0.0
        %859 = vmatpush1.msra.mxu0 0.0
        %860 = vmatprep.subr.mxu0 0.0
        %861 = vmatpush1.msra.mxu0 0.0
        %862 = vmatprep.subr.mxu0 0.0
        %863 = vmatpush1.msra.mxu0 0.0
        %864 = vmatprep.subr.mxu0 0.0
        %865 = vmatpush1.msra.mxu0 0.0
        %866 = vmatprep.subr.mxu0 0.0
        %867 = vmatpush1.msra.mxu0 %v811
        %868 = vmatprep.subr.mxu0 0.0
        %869 = vmatpush2.msra.mxu0 0.0
        %870 = vmatprep.subr.mxu0 0.0
        %871 = vmatpush2.msra.mxu0 0.0
        %872 = vmatprep.subr.mxu0 0.0
        %873 = vmatpush2.msra.mxu0 0.0
        %874 = vmatprep.subr.mxu0 0.0
        %875 = vmatpush2.msra.mxu0 0.0
        %876 = vmatprep.subr.mxu0 0.0
        %877 = vmatpush2.msra.mxu0 0.0
        %878 = vmatprep.subr.mxu0 0.0
        %879 = vmatpush2.msra.mxu0 0.0
        %880 = vmatprep.subr.mxu0 0.0
        %881 = vmatpush2.msra.mxu0 0.0
        %882 = vmatprep.subr.mxu0 0.0
        %883 = vmatpush2.msra.mxu0 0.0
        %884 = vmatprep.subr.mxu0 0.0
        %885 = vmatpush2.msra.mxu0 0.0
        %886 = vmatprep.subr.mxu0 0.0
        %887 = vmatpush2.msra.mxu0 0.0
        %888 = vmatprep.subr.mxu0 0.0
        %889 = vmatpush2.msra.mxu0 0.0
        %890 = vmatprep.subr.mxu0 0.0
        %891 = vmatpush2.msra.mxu0 0.0
        %892 = vmatprep.subr.mxu0 0.0
        %893 = vmatpush2.msra.mxu0 0.0
        %894 = vmatprep.subr.mxu0 0.0
        %895 = vmatpush2.msra.mxu0 0.0
        %896 = vmatprep.subr.mxu0 0.0
        %897 = vmatpush2.msra.mxu0 0.0
        %898 = vmatprep.subr.mxu0 0.0
        %899 = vmatpush2.msra.mxu0 0.0
        %900 = vmatprep.mubr.f32.mxu0 0.0
        %901 = vmatmul.mubr.f32.gmra.mxu0 %v813
        %v902 = vpop.f32.mrf.mxu0
        %v903 = vadd.f32 0.0, %v902
        %v904 = vpop.f32.mrf.mxu0
        %905 = vmatprep.mubr.f32.mxu0 0.0
        %906 = vmatmul.mubr.f32.gmra.mxu0 %v816
        %v907 = vpop.f32.mrf.mxu0
        %v908 = vadd.f32 0.0, %v907
        %v909 = vpop.f32.mrf.mxu0
        %910 = vmatprep.mubr.f32.mxu0 0.0
        %911 = vmatmul.mubr.f32.gmra.mxu0 %v819
        %v912 = vpop.f32.mrf.mxu0
        %v913 = vadd.f32 0.0, %v912
        %v914 = vpop.f32.mrf.mxu0
        %915 = vmatprep.mubr.f32.mxu0 0.0
        %916 = vmatmul.mubr.f32.gmra.mxu0 %v822
        %v917 = vpop.f32.mrf.mxu0
        %v918 = vadd.f32 0.0, %v917
        %v919 = vpop.f32.mrf.mxu0
        %920 = vmatprep.mubr.f32.mxu0 0.0
        %921 = vmatmul.mubr.f32.gmra.mxu0 %v825
        %v922 = vpop.f32.mrf.mxu0
        %v923 = vadd.f32 0.0, %v922
        %v924 = vpop.f32.mrf.mxu0
        %925 = vmatprep.mubr.f32.mxu0 0.0
        %926 = vmatmul.mubr.f32.gmra.mxu0 %v828
        %v927 = vpop.f32.mrf.mxu0
        %v928 = vadd.f32 0.0, %v927
        %v929 = vpop.f32.mrf.mxu0
        %930 = vmatprep.mubr.f32.mxu0 0.0
        %931 = vmatmul.mubr.f32.gmra.mxu0 %v831
        %v932 = vpop.f32.mrf.mxu0
        %v933 = vadd.f32 0.0, %v932
        %v934 = vpop.f32.mrf.mxu0
        %935 = vmatprep.mubr.f32.mxu0 0.0
        %936 = vmatmul.mubr.f32.gmra.mxu0 %v834
        %v937 = vpop.f32.mrf.mxu0
        %v938 = vadd.f32 0.0, %v937
        %v939 = vpop.f32.mrf.mxu0
        %940 = vdwg.mxu0
        %v941 = vadd.f32 %v764, %v903
        %v942 = vadd.f32 %v769, %v908
        %v943 = vadd.f32 %v774, %v913
        %v944 = vadd.f32 %v779, %v918
        %v945 = vadd.f32 %v784, %v923
        %v946 = vadd.f32 %v789, %v928
        %v947 = vadd.f32 %v794, %v933
        %v948 = vadd.f32 %v799, %v938
        %s949 = scalar_lea.vmem %s406, 16
        %v950 = vld [vmem:[%s949] sm:$0xff]
        %v951 = vld [vmem:[%s949 + $0x10] sm:$0xff]
        %v952 = vld [vmem:[%s949 + $0x20] sm:$0xff]
        %v953 = vld [vmem:[%s949 + $0x30] sm:$0xff]
        %v954 = vld [vmem:[%s949 + $0x40] sm:$0xff]
        %v955 = vld [vmem:[%s949 + $0x50] sm:$0xff]
        %v956 = vld [vmem:[%s949 + $0x60] sm:$0xff]
        %v957 = vld [vmem:[%s949 + $0x70] sm:$0xff]
        %s958 = scalar_lea.vmem %s3, 24
        %v959 = vld [vmem:[%s958] sm:$0xff]
        %v961 = vsel %vm543, %v950, 0
        %v964 = vsel %vm543, %v951, 0
        %v967 = vsel %vm543, %v952, 0
        %v970 = vsel %vm543, %v953, 0
        %v973 = vsel %vm543, %v954, 0
        %v976 = vsel %vm543, %v955, 0
        %v979 = vsel %vm543, %v956, 0
        %v982 = vsel %vm543, %v957, 0
        %984 = vmatprep.subr.mxu0 0.0
        %985 = vmatpush1.msra.mxu0 0.0
        %986 = vmatprep.subr.mxu0 0.0
        %987 = vmatpush1.msra.mxu0 0.0
        %988 = vmatprep.subr.mxu0 0.0
        %989 = vmatpush1.msra.mxu0 0.0
        %990 = vmatprep.subr.mxu0 0.0
        %991 = vmatpush1.msra.mxu0 0.0
        %992 = vmatprep.subr.mxu0 0.0
        %993 = vmatpush1.msra.mxu0 0.0
        %994 = vmatprep.subr.mxu0 0.0
        %995 = vmatpush1.msra.mxu0 0.0
        %996 = vmatprep.subr.mxu0 0.0
        %997 = vmatpush1.msra.mxu0 0.0
        %998 = vmatprep.subr.mxu0 0.0
        %999 = vmatpush1.msra.mxu0 0.0
        %1000 = vmatprep.subr.mxu0 0.0
        %1001 = vmatpush1.msra.mxu0 0.0
        %1002 = vmatprep.subr.mxu0 0.0
        %1003 = vmatpush1.msra.mxu0 0.0
        %1004 = vmatprep.subr.mxu0 0.0
        %1005 = vmatpush1.msra.mxu0 0.0
        %1006 = vmatprep.subr.mxu0 0.0
        %1007 = vmatpush1.msra.mxu0 0.0
        %1008 = vmatprep.subr.mxu0 0.0
        %1009 = vmatpush1.msra.mxu0 0.0
        %1010 = vmatprep.subr.mxu0 0.0
        %1011 = vmatpush1.msra.mxu0 0.0
        %1012 = vmatprep.subr.mxu0 0.0
        %1013 = vmatpush1.msra.mxu0 0.0
        %1014 = vmatprep.subr.mxu0 0.0
        %1015 = vmatpush1.msra.mxu0 %v959
        %1016 = vmatprep.subr.mxu0 0.0
        %1017 = vmatpush2.msra.mxu0 0.0
        %1018 = vmatprep.subr.mxu0 0.0
        %1019 = vmatpush2.msra.mxu0 0.0
        %1020 = vmatprep.subr.mxu0 0.0
        %1021 = vmatpush2.msra.mxu0 0.0
        %1022 = vmatprep.subr.mxu0 0.0
        %1023 = vmatpush2.msra.mxu0 0.0
        %1024 = vmatprep.subr.mxu0 0.0
        %1025 = vmatpush2.msra.mxu0 0.0
        %1026 = vmatprep.subr.mxu0 0.0
        %1027 = vmatpush2.msra.mxu0 0.0
        %1028 = vmatprep.subr.mxu0 0.0
        %1029 = vmatpush2.msra.mxu0 0.0
        %1030 = vmatprep.subr.mxu0 0.0
        %1031 = vmatpush2.msra.mxu0 0.0
        %1032 = vmatprep.subr.mxu0 0.0
        %1033 = vmatpush2.msra.mxu0 0.0
        %1034 = vmatprep.subr.mxu0 0.0
        %1035 = vmatpush2.msra.mxu0 0.0
        %1036 = vmatprep.subr.mxu0 0.0
        %1037 = vmatpush2.msra.mxu0 0.0
        %1038 = vmatprep.subr.mxu0 0.0
        %1039 = vmatpush2.msra.mxu0 0.0
        %1040 = vmatprep.subr.mxu0 0.0
        %1041 = vmatpush2.msra.mxu0 0.0
        %1042 = vmatprep.subr.mxu0 0.0
        %1043 = vmatpush2.msra.mxu0 0.0
        %1044 = vmatprep.subr.mxu0 0.0
        %1045 = vmatpush2.msra.mxu0 0.0
        %1046 = vmatprep.subr.mxu0 0.0
        %1047 = vmatpush2.msra.mxu0 0.0
        %1048 = vmatprep.mubr.f32.mxu0 0.0
        %1049 = vmatmul.mubr.f32.gmra.mxu0 %v961
        %v1050 = vpop.f32.mrf.mxu0
        %v1051 = vadd.f32 0.0, %v1050
        %v1052 = vpop.f32.mrf.mxu0
        %1053 = vmatprep.mubr.f32.mxu0 0.0
        %1054 = vmatmul.mubr.f32.gmra.mxu0 %v964
        %v1055 = vpop.f32.mrf.mxu0
        %v1056 = vadd.f32 0.0, %v1055
        %v1057 = vpop.f32.mrf.mxu0
        %1058 = vmatprep.mubr.f32.mxu0 0.0
        %1059 = vmatmul.mubr.f32.gmra.mxu0 %v967
        %v1060 = vpop.f32.mrf.mxu0
        %v1061 = vadd.f32 0.0, %v1060
        %v1062 = vpop.f32.mrf.mxu0
        %1063 = vmatprep.mubr.f32.mxu0 0.0
        %1064 = vmatmul.mubr.f32.gmra.mxu0 %v970
        %v1065 = vpop.f32.mrf.mxu0
        %v1066 = vadd.f32 0.0, %v1065
        %v1067 = vpop.f32.mrf.mxu0
        %1068 = vmatprep.mubr.f32.mxu0 0.0
        %1069 = vmatmul.mubr.f32.gmra.mxu0 %v973
        %v1070 = vpop.f32.mrf.mxu0
        %v1071 = vadd.f32 0.0, %v1070
        %v1072 = vpop.f32.mrf.mxu0
        %1073 = vmatprep.mubr.f32.mxu0 0.0
        %1074 = vmatmul.mubr.f32.gmra.mxu0 %v976
        %v1075 = vpop.f32.mrf.mxu0
        %v1076 = vadd.f32 0.0, %v1075
        %v1077 = vpop.f32.mrf.mxu0
        %1078 = vmatprep.mubr.f32.mxu0 0.0
        %1079 = vmatmul.mubr.f32.gmra.mxu0 %v979
        %v1080 = vpop.f32.mrf.mxu0
        %v1081 = vadd.f32 0.0, %v1080
        %v1082 = vpop.f32.mrf.mxu0
        %1083 = vmatprep.mubr.f32.mxu0 0.0
        %1084 = vmatmul.mubr.f32.gmra.mxu0 %v982
        %v1085 = vpop.f32.mrf.mxu0
        %v1086 = vadd.f32 0.0, %v1085
        %v1087 = vpop.f32.mrf.mxu0
        %1088 = vdwg.mxu0
        %v1089 = vadd.f32 %v941, %v1051
        %v1090 = vadd.f32 %v942, %v1056
        %v1091 = vadd.f32 %v943, %v1061
        %v1092 = vadd.f32 %v944, %v1066
        %v1093 = vadd.f32 %v945, %v1071
        %v1094 = vadd.f32 %v946, %v1076
        %v1095 = vadd.f32 %v947, %v1081
        %v1096 = vadd.f32 %v948, %v1086
        %v1097 = vld [vmem:[%s949 + $0x1] sm:$0xff]
        %v1098 = vld [vmem:[%s949 + $0x11] sm:$0xff]
        %v1099 = vld [vmem:[%s949 + $0x21] sm:$0xff]
        %v1100 = vld [vmem:[%s949 + $0x31] sm:$0xff]
        %v1101 = vld [vmem:[%s949 + $0x41] sm:$0xff]
        %v1102 = vld [vmem:[%s949 + $0x51] sm:$0xff]
        %v1103 = vld [vmem:[%s949 + $0x61] sm:$0xff]
        %v1104 = vld [vmem:[%s949 + $0x71] sm:$0xff]
        %s1105 = scalar_lea.vmem %s3, 32
        %v1106 = vld [vmem:[%s1105] sm:$0xff]
        %v1108 = vsel %vm543, %v1097, 0
        %v1111 = vsel %vm543, %v1098, 0
        %v1114 = vsel %vm543, %v1099, 0
        %v1117 = vsel %vm543, %v1100, 0
        %v1120 = vsel %vm543, %v1101, 0
        %v1123 = vsel %vm543, %v1102, 0
        %v1126 = vsel %vm543, %v1103, 0
        %v1129 = vsel %vm543, %v1104, 0
        %1131 = vmatprep.subr.mxu0 0.0
        %1132 = vmatpush1.msra.mxu0 0.0
        %1133 = vmatprep.subr.mxu0 0.0
        %1134 = vmatpush1.msra.mxu0 0.0
        %1135 = vmatprep.subr.mxu0 0.0
        %1136 = vmatpush1.msra.mxu0 0.0
        %1137 = vmatprep.subr.mxu0 0.0
        %1138 = vmatpush1.msra.mxu0 0.0
        %1139 = vmatprep.subr.mxu0 0.0
        %1140 = vmatpush1.msra.mxu0 0.0
        %1141 = vmatprep.subr.mxu0 0.0
        %1142 = vmatpush1.msra.mxu0 0.0
        %1143 = vmatprep.subr.mxu0 0.0
        %1144 = vmatpush1.msra.mxu0 0.0
        %1145 = vmatprep.subr.mxu0 0.0
        %1146 = vmatpush1.msra.mxu0 0.0
        %1147 = vmatprep.subr.mxu0 0.0
        %1148 = vmatpush1.msra.mxu0 0.0
        %1149 = vmatprep.subr.mxu0 0.0
        %1150 = vmatpush1.msra.mxu0 0.0
        %1151 = vmatprep.subr.mxu0 0.0
        %1152 = vmatpush1.msra.mxu0 0.0
        %1153 = vmatprep.subr.mxu0 0.0
        %1154 = vmatpush1.msra.mxu0 0.0
        %1155 = vmatprep.subr.mxu0 0.0
        %1156 = vmatpush1.msra.mxu0 0.0
        %1157 = vmatprep.subr.mxu0 0.0
        %1158 = vmatpush1.msra.mxu0 0.0
        %1159 = vmatprep.subr.mxu0 0.0
        %1160 = vmatpush1.msra.mxu0 0.0
        %1161 = vmatprep.subr.mxu0 0.0
        %1162 = vmatpush1.msra.mxu0 %v1106
        %1163 = vmatprep.subr.mxu0 0.0
        %1164 = vmatpush2.msra.mxu0 0.0
        %1165 = vmatprep.subr.mxu0 0.0
        %1166 = vmatpush2.msra.mxu0 0.0
        %1167 = vmatprep.subr.mxu0 0.0
        %1168 = vmatpush2.msra.mxu0 0.0
        %1169 = vmatprep.subr.mxu0 0.0
        %1170 = vmatpush2.msra.mxu0 0.0
        %1171 = vmatprep.subr.mxu0 0.0
        %1172 = vmatpush2.msra.mxu0 0.0
        %1173 = vmatprep.subr.mxu0 0.0
        %1174 = vmatpush2.msra.mxu0 0.0
        %1175 = vmatprep.subr.mxu0 0.0
        %1176 = vmatpush2.msra.mxu0 0.0
        %1177 = vmatprep.subr.mxu0 0.0
        %1178 = vmatpush2.msra.mxu0 0.0
        %1179 = vmatprep.subr.mxu0 0.0
        %1180 = vmatpush2.msra.mxu0 0.0
        %1181 = vmatprep.subr.mxu0 0.0
        %1182 = vmatpush2.msra.mxu0 0.0
        %1183 = vmatprep.subr.mxu0 0.0
        %1184 = vmatpush2.msra.mxu0 0.0
        %1185 = vmatprep.subr.mxu0 0.0
        %1186 = vmatpush2.msra.mxu0 0.0
        %1187 = vmatprep.subr.mxu0 0.0
        %1188 = vmatpush2.msra.mxu0 0.0
        %1189 = vmatprep.subr.mxu0 0.0
        %1190 = vmatpush2.msra.mxu0 0.0
        %1191 = vmatprep.subr.mxu0 0.0
        %1192 = vmatpush2.msra.mxu0 0.0
        %1193 = vmatprep.subr.mxu0 0.0
        %1194 = vmatpush2.msra.mxu0 0.0
        %1195 = vmatprep.mubr.f32.mxu0 0.0
        %1196 = vmatmul.mubr.f32.gmra.mxu0 %v1108
        %v1197 = vpop.f32.mrf.mxu0
        %v1198 = vadd.f32 0.0, %v1197
        %v1199 = vpop.f32.mrf.mxu0
        %1200 = vmatprep.mubr.f32.mxu0 0.0
        %1201 = vmatmul.mubr.f32.gmra.mxu0 %v1111
        %v1202 = vpop.f32.mrf.mxu0
        %v1203 = vadd.f32 0.0, %v1202
        %v1204 = vpop.f32.mrf.mxu0
        %1205 = vmatprep.mubr.f32.mxu0 0.0
        %1206 = vmatmul.mubr.f32.gmra.mxu0 %v1114
        %v1207 = vpop.f32.mrf.mxu0
        %v1208 = vadd.f32 0.0, %v1207
        %v1209 = vpop.f32.mrf.mxu0
        %1210 = vmatprep.mubr.f32.mxu0 0.0
        %1211 = vmatmul.mubr.f32.gmra.mxu0 %v1117
        %v1212 = vpop.f32.mrf.mxu0
        %v1213 = vadd.f32 0.0, %v1212
        %v1214 = vpop.f32.mrf.mxu0
        %1215 = vmatprep.mubr.f32.mxu0 0.0
        %1216 = vmatmul.mubr.f32.gmra.mxu0 %v1120
        %v1217 = vpop.f32.mrf.mxu0
        %v1218 = vadd.f32 0.0, %v1217
        %v1219 = vpop.f32.mrf.mxu0
        %1220 = vmatprep.mubr.f32.mxu0 0.0
        %1221 = vmatmul.mubr.f32.gmra.mxu0 %v1123
        %v1222 = vpop.f32.mrf.mxu0
        %v1223 = vadd.f32 0.0, %v1222
        %v1224 = vpop.f32.mrf.mxu0
        %1225 = vmatprep.mubr.f32.mxu0 0.0
        %1226 = vmatmul.mubr.f32.gmra.mxu0 %v1126
        %v1227 = vpop.f32.mrf.mxu0
        %v1228 = vadd.f32 0.0, %v1227
        %v1229 = vpop.f32.mrf.mxu0
        %1230 = vmatprep.mubr.f32.mxu0 0.0
        %1231 = vmatmul.mubr.f32.gmra.mxu0 %v1129
        %v1232 = vpop.f32.mrf.mxu0
        %v1233 = vadd.f32 0.0, %v1232
        %v1234 = vpop.f32.mrf.mxu0
        %1235 = vdwg.mxu0
        %v1236 = vadd.f32 %v1089, %v1198
        %v1237 = vadd.f32 %v1090, %v1203
        %v1238 = vadd.f32 %v1091, %v1208
        %v1239 = vadd.f32 %v1092, %v1213
        %v1240 = vadd.f32 %v1093, %v1218
        %v1241 = vadd.f32 %v1094, %v1223
        %v1242 = vadd.f32 %v1095, %v1228
        %v1243 = vadd.f32 %v1096, %v1233
        %v1244 = vld [vmem:[%s949 + $0x2] sm:$0xff]
        %v1245 = vld [vmem:[%s949 + $0x12] sm:$0xff]
        %v1246 = vld [vmem:[%s949 + $0x22] sm:$0xff]
        %v1247 = vld [vmem:[%s949 + $0x32] sm:$0xff]
        %v1248 = vld [vmem:[%s949 + $0x42] sm:$0xff]
        %v1249 = vld [vmem:[%s949 + $0x52] sm:$0xff]
        %v1250 = vld [vmem:[%s949 + $0x62] sm:$0xff]
        %v1251 = vld [vmem:[%s949 + $0x72] sm:$0xff]
        %s1252 = scalar_lea.vmem %s3, 40
        %v1253 = vld [vmem:[%s1252] sm:$0xff]
        %v1255 = vsel %vm543, %v1244, 0
        %v1258 = vsel %vm543, %v1245, 0
        %v1261 = vsel %vm543, %v1246, 0
        %v1264 = vsel %vm543, %v1247, 0
        %v1267 = vsel %vm543, %v1248, 0
        %v1270 = vsel %vm543, %v1249, 0
        %v1273 = vsel %vm543, %v1250, 0
        %v1276 = vsel %vm543, %v1251, 0
        %1278 = vmatprep.subr.mxu0 0.0
        %1279 = vmatpush1.msra.mxu0 0.0
        %1280 = vmatprep.subr.mxu0 0.0
        %1281 = vmatpush1.msra.mxu0 0.0
        %1282 = vmatprep.subr.mxu0 0.0
        %1283 = vmatpush1.msra.mxu0 0.0
        %1284 = vmatprep.subr.mxu0 0.0
        %1285 = vmatpush1.msra.mxu0 0.0
        %1286 = vmatprep.subr.mxu0 0.0
        %1287 = vmatpush1.msra.mxu0 0.0
        %1288 = vmatprep.subr.mxu0 0.0
        %1289 = vmatpush1.msra.mxu0 0.0
        %1290 = vmatprep.subr.mxu0 0.0
        %1291 = vmatpush1.msra.mxu0 0.0
        %1292 = vmatprep.subr.mxu0 0.0
        %1293 = vmatpush1.msra.mxu0 0.0
        %1294 = vmatprep.subr.mxu0 0.0
        %1295 = vmatpush1.msra.mxu0 0.0
        %1296 = vmatprep.subr.mxu0 0.0
        %1297 = vmatpush1.msra.mxu0 0.0
        %1298 = vmatprep.subr.mxu0 0.0
        %1299 = vmatpush1.msra.mxu0 0.0
        %1300 = vmatprep.subr.mxu0 0.0
        %1301 = vmatpush1.msra.mxu0 0.0
        %1302 = vmatprep.subr.mxu0 0.0
        %1303 = vmatpush1.msra.mxu0 0.0
        %1304 = vmatprep.subr.mxu0 0.0
        %1305 = vmatpush1.msra.mxu0 0.0
        %1306 = vmatprep.subr.mxu0 0.0
        %1307 = vmatpush1.msra.mxu0 0.0
        %1308 = vmatprep.subr.mxu0 0.0
        %1309 = vmatpush1.msra.mxu0 %v1253
        %1310 = vmatprep.subr.mxu0 0.0
        %1311 = vmatpush2.msra.mxu0 0.0
        %1312 = vmatprep.subr.mxu0 0.0
        %1313 = vmatpush2.msra.mxu0 0.0
        %1314 = vmatprep.subr.mxu0 0.0
        %1315 = vmatpush2.msra.mxu0 0.0
        %1316 = vmatprep.subr.mxu0 0.0
        %1317 = vmatpush2.msra.mxu0 0.0
        %1318 = vmatprep.subr.mxu0 0.0
        %1319 = vmatpush2.msra.mxu0 0.0
        %1320 = vmatprep.subr.mxu0 0.0
        %1321 = vmatpush2.msra.mxu0 0.0
        %1322 = vmatprep.subr.mxu0 0.0
        %1323 = vmatpush2.msra.mxu0 0.0
        %1324 = vmatprep.subr.mxu0 0.0
        %1325 = vmatpush2.msra.mxu0 0.0
        %1326 = vmatprep.subr.mxu0 0.0
        %1327 = vmatpush2.msra.mxu0 0.0
        %1328 = vmatprep.subr.mxu0 0.0
        %1329 = vmatpush2.msra.mxu0 0.0
        %1330 = vmatprep.subr.mxu0 0.0
        %1331 = vmatpush2.msra.mxu0 0.0
        %1332 = vmatprep.subr.mxu0 0.0
        %1333 = vmatpush2.msra.mxu0 0.0
        %1334 = vmatprep.subr.mxu0 0.0
        %1335 = vmatpush2.msra.mxu0 0.0
        %1336 = vmatprep.subr.mxu0 0.0
        %1337 = vmatpush2.msra.mxu0 0.0
        %1338 = vmatprep.subr.mxu0 0.0
        %1339 = vmatpush2.msra.mxu0 0.0
        %1340 = vmatprep.subr.mxu0 0.0
        %1341 = vmatpush2.msra.mxu0 0.0
        %1342 = vmatprep.mubr.f32.mxu0 0.0
        %1343 = vmatmul.mubr.f32.gmra.mxu0 %v1255
        %v1344 = vpop.f32.mrf.mxu0
        %v1345 = vadd.f32 0.0, %v1344
        %v1346 = vpop.f32.mrf.mxu0
        %1347 = vmatprep.mubr.f32.mxu0 0.0
        %1348 = vmatmul.mubr.f32.gmra.mxu0 %v1258
        %v1349 = vpop.f32.mrf.mxu0
        %v1350 = vadd.f32 0.0, %v1349
        %v1351 = vpop.f32.mrf.mxu0
        %1352 = vmatprep.mubr.f32.mxu0 0.0
        %1353 = vmatmul.mubr.f32.gmra.mxu0 %v1261
        %v1354 = vpop.f32.mrf.mxu0
        %v1355 = vadd.f32 0.0, %v1354
        %v1356 = vpop.f32.mrf.mxu0
        %1357 = vmatprep.mubr.f32.mxu0 0.0
        %1358 = vmatmul.mubr.f32.gmra.mxu0 %v1264
        %v1359 = vpop.f32.mrf.mxu0
        %v1360 = vadd.f32 0.0, %v1359
        %v1361 = vpop.f32.mrf.mxu0
        %1362 = vmatprep.mubr.f32.mxu0 0.0
        %1363 = vmatmul.mubr.f32.gmra.mxu0 %v1267
        %v1364 = vpop.f32.mrf.mxu0
        %v1365 = vadd.f32 0.0, %v1364
        %v1366 = vpop.f32.mrf.mxu0
        %1367 = vmatprep.mubr.f32.mxu0 0.0
        %1368 = vmatmul.mubr.f32.gmra.mxu0 %v1270
        %v1369 = vpop.f32.mrf.mxu0
        %v1370 = vadd.f32 0.0, %v1369
        %v1371 = vpop.f32.mrf.mxu0
        %1372 = vmatprep.mubr.f32.mxu0 0.0
        %1373 = vmatmul.mubr.f32.gmra.mxu0 %v1273
        %v1374 = vpop.f32.mrf.mxu0
        %v1375 = vadd.f32 0.0, %v1374
        %v1376 = vpop.f32.mrf.mxu0
        %1377 = vmatprep.mubr.f32.mxu0 0.0
        %1378 = vmatmul.mubr.f32.gmra.mxu0 %v1276
        %v1379 = vpop.f32.mrf.mxu0
        %v1380 = vadd.f32 0.0, %v1379
        %v1381 = vpop.f32.mrf.mxu0
        %1382 = vdwg.mxu0
        %v1383 = vadd.f32 %v1236, %v1345
        %v1384 = vadd.f32 %v1237, %v1350
        %v1385 = vadd.f32 %v1238, %v1355
        %v1386 = vadd.f32 %v1239, %v1360
        %v1387 = vadd.f32 %v1240, %v1365
        %v1388 = vadd.f32 %v1241, %v1370
        %v1389 = vadd.f32 %v1242, %v1375
        %v1390 = vadd.f32 %v1243, %v1380
        %s1391 = scalar_lea.vmem %s406, 32
        %v1392 = vld [vmem:[%s1391] sm:$0xff]
        %v1393 = vld [vmem:[%s1391 + $0x10] sm:$0xff]
        %v1394 = vld [vmem:[%s1391 + $0x20] sm:$0xff]
        %v1395 = vld [vmem:[%s1391 + $0x30] sm:$0xff]
        %v1396 = vld [vmem:[%s1391 + $0x40] sm:$0xff]
        %v1397 = vld [vmem:[%s1391 + $0x50] sm:$0xff]
        %v1398 = vld [vmem:[%s1391 + $0x60] sm:$0xff]
        %v1399 = vld [vmem:[%s1391 + $0x70] sm:$0xff]
        %s1400 = scalar_lea.vmem %s3, 48
        %v1401 = vld [vmem:[%s1400] sm:$0xff]
        %v1403 = vsel %vm543, %v1392, 0
        %v1406 = vsel %vm543, %v1393, 0
        %v1409 = vsel %vm543, %v1394, 0
        %v1412 = vsel %vm543, %v1395, 0
        %v1415 = vsel %vm543, %v1396, 0
        %v1418 = vsel %vm543, %v1397, 0
        %v1421 = vsel %vm543, %v1398, 0
        %v1424 = vsel %vm543, %v1399, 0
        %1426 = vmatprep.subr.mxu0 0.0
        %1427 = vmatpush1.msra.mxu0 0.0
        %1428 = vmatprep.subr.mxu0 0.0
        %1429 = vmatpush1.msra.mxu0 0.0
        %1430 = vmatprep.subr.mxu0 0.0
        %1431 = vmatpush1.msra.mxu0 0.0
        %1432 = vmatprep.subr.mxu0 0.0
        %1433 = vmatpush1.msra.mxu0 0.0
        %1434 = vmatprep.subr.mxu0 0.0
        %1435 = vmatpush1.msra.mxu0 0.0
        %1436 = vmatprep.subr.mxu0 0.0
        %1437 = vmatpush1.msra.mxu0 0.0
        %1438 = vmatprep.subr.mxu0 0.0
        %1439 = vmatpush1.msra.mxu0 0.0
        %1440 = vmatprep.subr.mxu0 0.0
        %1441 = vmatpush1.msra.mxu0 0.0
        %1442 = vmatprep.subr.mxu0 0.0
        %1443 = vmatpush1.msra.mxu0 0.0
        %1444 = vmatprep.subr.mxu0 0.0
        %1445 = vmatpush1.msra.mxu0 0.0
        %1446 = vmatprep.subr.mxu0 0.0
        %1447 = vmatpush1.msra.mxu0 0.0
        %1448 = vmatprep.subr.mxu0 0.0
        %1449 = vmatpush1.msra.mxu0 0.0
        %1450 = vmatprep.subr.mxu0 0.0
        %1451 = vmatpush1.msra.mxu0 0.0
        %1452 = vmatprep.subr.mxu0 0.0
        %1453 = vmatpush1.msra.mxu0 0.0
        %1454 = vmatprep.subr.mxu0 0.0
        %1455 = vmatpush1.msra.mxu0 0.0
        %1456 = vmatprep.subr.mxu0 0.0
        %1457 = vmatpush1.msra.mxu0 %v1401
        %1458 = vmatprep.subr.mxu0 0.0
        %1459 = vmatpush2.msra.mxu0 0.0
        %1460 = vmatprep.subr.mxu0 0.0
        %1461 = vmatpush2.msra.mxu0 0.0
        %1462 = vmatprep.subr.mxu0 0.0
        %1463 = vmatpush2.msra.mxu0 0.0
        %1464 = vmatprep.subr.mxu0 0.0
        %1465 = vmatpush2.msra.mxu0 0.0
        %1466 = vmatprep.subr.mxu0 0.0
        %1467 = vmatpush2.msra.mxu0 0.0
        %1468 = vmatprep.subr.mxu0 0.0
        %1469 = vmatpush2.msra.mxu0 0.0
        %1470 = vmatprep.subr.mxu0 0.0
        %1471 = vmatpush2.msra.mxu0 0.0
        %1472 = vmatprep.subr.mxu0 0.0
        %1473 = vmatpush2.msra.mxu0 0.0
        %1474 = vmatprep.subr.mxu0 0.0
        %1475 = vmatpush2.msra.mxu0 0.0
        %1476 = vmatprep.subr.mxu0 0.0
        %1477 = vmatpush2.msra.mxu0 0.0
        %1478 = vmatprep.subr.mxu0 0.0
        %1479 = vmatpush2.msra.mxu0 0.0
        %1480 = vmatprep.subr.mxu0 0.0
        %1481 = vmatpush2.msra.mxu0 0.0
        %1482 = vmatprep.subr.mxu0 0.0
        %1483 = vmatpush2.msra.mxu0 0.0
        %1484 = vmatprep.subr.mxu0 0.0
        %1485 = vmatpush2.msra.mxu0 0.0
        %1486 = vmatprep.subr.mxu0 0.0
        %1487 = vmatpush2.msra.mxu0 0.0
        %1488 = vmatprep.subr.mxu0 0.0
        %1489 = vmatpush2.msra.mxu0 0.0
        %1490 = vmatprep.mubr.f32.mxu0 0.0
        %1491 = vmatmul.mubr.f32.gmra.mxu0 %v1403
        %v1492 = vpop.f32.mrf.mxu0
        %v1493 = vadd.f32 0.0, %v1492
        %v1494 = vpop.f32.mrf.mxu0
        %1495 = vmatprep.mubr.f32.mxu0 0.0
        %1496 = vmatmul.mubr.f32.gmra.mxu0 %v1406
        %v1497 = vpop.f32.mrf.mxu0
        %v1498 = vadd.f32 0.0, %v1497
        %v1499 = vpop.f32.mrf.mxu0
        %1500 = vmatprep.mubr.f32.mxu0 0.0
        %1501 = vmatmul.mubr.f32.gmra.mxu0 %v1409
        %v1502 = vpop.f32.mrf.mxu0
        %v1503 = vadd.f32 0.0, %v1502
        %v1504 = vpop.f32.mrf.mxu0
        %1505 = vmatprep.mubr.f32.mxu0 0.0
        %1506 = vmatmul.mubr.f32.gmra.mxu0 %v1412
        %v1507 = vpop.f32.mrf.mxu0
        %v1508 = vadd.f32 0.0, %v1507
        %v1509 = vpop.f32.mrf.mxu0
        %1510 = vmatprep.mubr.f32.mxu0 0.0
        %1511 = vmatmul.mubr.f32.gmra.mxu0 %v1415
        %v1512 = vpop.f32.mrf.mxu0
        %v1513 = vadd.f32 0.0, %v1512
        %v1514 = vpop.f32.mrf.mxu0
        %1515 = vmatprep.mubr.f32.mxu0 0.0
        %1516 = vmatmul.mubr.f32.gmra.mxu0 %v1418
        %v1517 = vpop.f32.mrf.mxu0
        %v1518 = vadd.f32 0.0, %v1517
        %v1519 = vpop.f32.mrf.mxu0
        %1520 = vmatprep.mubr.f32.mxu0 0.0
        %1521 = vmatmul.mubr.f32.gmra.mxu0 %v1421
        %v1522 = vpop.f32.mrf.mxu0
        %v1523 = vadd.f32 0.0, %v1522
        %v1524 = vpop.f32.mrf.mxu0
        %1525 = vmatprep.mubr.f32.mxu0 0.0
        %1526 = vmatmul.mubr.f32.gmra.mxu0 %v1424
        %v1527 = vpop.f32.mrf.mxu0
        %v1528 = vadd.f32 0.0, %v1527
        %v1529 = vpop.f32.mrf.mxu0
        %1530 = vdwg.mxu0
        %v1531 = vadd.f32 %v1383, %v1493
        %v1532 = vadd.f32 %v1384, %v1498
        %v1533 = vadd.f32 %v1385, %v1503
        %v1534 = vadd.f32 %v1386, %v1508
        %v1535 = vadd.f32 %v1387, %v1513
        %v1536 = vadd.f32 %v1388, %v1518
        %v1537 = vadd.f32 %v1389, %v1523
        %v1538 = vadd.f32 %v1390, %v1528
        %v1539 = vld [vmem:[%s1391 + $0x1] sm:$0xff]
        %v1540 = vld [vmem:[%s1391 + $0x11] sm:$0xff]
        %v1541 = vld [vmem:[%s1391 + $0x21] sm:$0xff]
        %v1542 = vld [vmem:[%s1391 + $0x31] sm:$0xff]
        %v1543 = vld [vmem:[%s1391 + $0x41] sm:$0xff]
        %v1544 = vld [vmem:[%s1391 + $0x51] sm:$0xff]
        %v1545 = vld [vmem:[%s1391 + $0x61] sm:$0xff]
        %v1546 = vld [vmem:[%s1391 + $0x71] sm:$0xff]
        %s1547 = scalar_lea.vmem %s3, 56
        %v1548 = vld [vmem:[%s1547] sm:$0xff]
        %v1550 = vsel %vm543, %v1539, 0
        %v1553 = vsel %vm543, %v1540, 0
        %v1556 = vsel %vm543, %v1541, 0
        %v1559 = vsel %vm543, %v1542, 0
        %v1562 = vsel %vm543, %v1543, 0
        %v1565 = vsel %vm543, %v1544, 0
        %v1568 = vsel %vm543, %v1545, 0
        %v1571 = vsel %vm543, %v1546, 0
        %1573 = vmatprep.subr.mxu0 0.0
        %1574 = vmatpush1.msra.mxu0 0.0
        %1575 = vmatprep.subr.mxu0 0.0
        %1576 = vmatpush1.msra.mxu0 0.0
        %1577 = vmatprep.subr.mxu0 0.0
        %1578 = vmatpush1.msra.mxu0 0.0
        %1579 = vmatprep.subr.mxu0 0.0
        %1580 = vmatpush1.msra.mxu0 0.0
        %1581 = vmatprep.subr.mxu0 0.0
        %1582 = vmatpush1.msra.mxu0 0.0
        %1583 = vmatprep.subr.mxu0 0.0
        %1584 = vmatpush1.msra.mxu0 0.0
        %1585 = vmatprep.subr.mxu0 0.0
        %1586 = vmatpush1.msra.mxu0 0.0
        %1587 = vmatprep.subr.mxu0 0.0
        %1588 = vmatpush1.msra.mxu0 0.0
        %1589 = vmatprep.subr.mxu0 0.0
        %1590 = vmatpush1.msra.mxu0 0.0
        %1591 = vmatprep.subr.mxu0 0.0
        %1592 = vmatpush1.msra.mxu0 0.0
        %1593 = vmatprep.subr.mxu0 0.0
        %1594 = vmatpush1.msra.mxu0 0.0
        %1595 = vmatprep.subr.mxu0 0.0
        %1596 = vmatpush1.msra.mxu0 0.0
        %1597 = vmatprep.subr.mxu0 0.0
        %1598 = vmatpush1.msra.mxu0 0.0
        %1599 = vmatprep.subr.mxu0 0.0
        %1600 = vmatpush1.msra.mxu0 0.0
        %1601 = vmatprep.subr.mxu0 0.0
        %1602 = vmatpush1.msra.mxu0 0.0
        %1603 = vmatprep.subr.mxu0 0.0
        %1604 = vmatpush1.msra.mxu0 %v1548
        %1605 = vmatprep.subr.mxu0 0.0
        %1606 = vmatpush2.msra.mxu0 0.0
        %1607 = vmatprep.subr.mxu0 0.0
        %1608 = vmatpush2.msra.mxu0 0.0
        %1609 = vmatprep.subr.mxu0 0.0
        %1610 = vmatpush2.msra.mxu0 0.0
        %1611 = vmatprep.subr.mxu0 0.0
        %1612 = vmatpush2.msra.mxu0 0.0
        %1613 = vmatprep.subr.mxu0 0.0
        %1614 = vmatpush2.msra.mxu0 0.0
        %1615 = vmatprep.subr.mxu0 0.0
        %1616 = vmatpush2.msra.mxu0 0.0
        %1617 = vmatprep.subr.mxu0 0.0
        %1618 = vmatpush2.msra.mxu0 0.0
        %1619 = vmatprep.subr.mxu0 0.0
        %1620 = vmatpush2.msra.mxu0 0.0
        %1621 = vmatprep.subr.mxu0 0.0
        %1622 = vmatpush2.msra.mxu0 0.0
        %1623 = vmatprep.subr.mxu0 0.0
        %1624 = vmatpush2.msra.mxu0 0.0
        %1625 = vmatprep.subr.mxu0 0.0
        %1626 = vmatpush2.msra.mxu0 0.0
        %1627 = vmatprep.subr.mxu0 0.0
        %1628 = vmatpush2.msra.mxu0 0.0
        %1629 = vmatprep.subr.mxu0 0.0
        %1630 = vmatpush2.msra.mxu0 0.0
        %1631 = vmatprep.subr.mxu0 0.0
        %1632 = vmatpush2.msra.mxu0 0.0
        %1633 = vmatprep.subr.mxu0 0.0
        %1634 = vmatpush2.msra.mxu0 0.0
        %1635 = vmatprep.subr.mxu0 0.0
        %1636 = vmatpush2.msra.mxu0 0.0
        %1637 = vmatprep.mubr.f32.mxu0 0.0
        %1638 = vmatmul.mubr.f32.gmra.mxu0 %v1550
        %v1639 = vpop.f32.mrf.mxu0
        %v1640 = vadd.f32 0.0, %v1639
        %v1641 = vpop.f32.mrf.mxu0
        %1642 = vmatprep.mubr.f32.mxu0 0.0
        %1643 = vmatmul.mubr.f32.gmra.mxu0 %v1553
        %v1644 = vpop.f32.mrf.mxu0
        %v1645 = vadd.f32 0.0, %v1644
        %v1646 = vpop.f32.mrf.mxu0
        %1647 = vmatprep.mubr.f32.mxu0 0.0
        %1648 = vmatmul.mubr.f32.gmra.mxu0 %v1556
        %v1649 = vpop.f32.mrf.mxu0
        %v1650 = vadd.f32 0.0, %v1649
        %v1651 = vpop.f32.mrf.mxu0
        %1652 = vmatprep.mubr.f32.mxu0 0.0
        %1653 = vmatmul.mubr.f32.gmra.mxu0 %v1559
        %v1654 = vpop.f32.mrf.mxu0
        %v1655 = vadd.f32 0.0, %v1654
        %v1656 = vpop.f32.mrf.mxu0
        %1657 = vmatprep.mubr.f32.mxu0 0.0
        %1658 = vmatmul.mubr.f32.gmra.mxu0 %v1562
        %v1659 = vpop.f32.mrf.mxu0
        %v1660 = vadd.f32 0.0, %v1659
        %v1661 = vpop.f32.mrf.mxu0
        %1662 = vmatprep.mubr.f32.mxu0 0.0
        %1663 = vmatmul.mubr.f32.gmra.mxu0 %v1565
        %v1664 = vpop.f32.mrf.mxu0
        %v1665 = vadd.f32 0.0, %v1664
        %v1666 = vpop.f32.mrf.mxu0
        %1667 = vmatprep.mubr.f32.mxu0 0.0
        %1668 = vmatmul.mubr.f32.gmra.mxu0 %v1568
        %v1669 = vpop.f32.mrf.mxu0
        %v1670 = vadd.f32 0.0, %v1669
        %v1671 = vpop.f32.mrf.mxu0
        %1672 = vmatprep.mubr.f32.mxu0 0.0
        %1673 = vmatmul.mubr.f32.gmra.mxu0 %v1571
        %v1674 = vpop.f32.mrf.mxu0
        %v1675 = vadd.f32 0.0, %v1674
        %v1676 = vpop.f32.mrf.mxu0
        %1677 = vdwg.mxu0
        %v1678 = vadd.f32 %v1531, %v1640
        %v1679 = vadd.f32 %v1532, %v1645
        %v1680 = vadd.f32 %v1533, %v1650
        %v1681 = vadd.f32 %v1534, %v1655
        %v1682 = vadd.f32 %v1535, %v1660
        %v1683 = vadd.f32 %v1536, %v1665
        %v1684 = vadd.f32 %v1537, %v1670
        %v1685 = vadd.f32 %v1538, %v1675
        %v1686 = vld [vmem:[%s1391 + $0x2] sm:$0xff]
        %v1687 = vld [vmem:[%s1391 + $0x12] sm:$0xff]
        %v1688 = vld [vmem:[%s1391 + $0x22] sm:$0xff]
        %v1689 = vld [vmem:[%s1391 + $0x32] sm:$0xff]
        %v1690 = vld [vmem:[%s1391 + $0x42] sm:$0xff]
        %v1691 = vld [vmem:[%s1391 + $0x52] sm:$0xff]
        %v1692 = vld [vmem:[%s1391 + $0x62] sm:$0xff]
        %v1693 = vld [vmem:[%s1391 + $0x72] sm:$0xff]
        %s1694 = scalar_lea.vmem %s3, 64
        %v1695 = vld [vmem:[%s1694] sm:$0xff]
        %v1697 = vsel %vm543, %v1686, 0
        %v1700 = vsel %vm543, %v1687, 0
        %v1703 = vsel %vm543, %v1688, 0
        %v1706 = vsel %vm543, %v1689, 0
        %v1709 = vsel %vm543, %v1690, 0
        %v1712 = vsel %vm543, %v1691, 0
        %v1715 = vsel %vm543, %v1692, 0
        %v1718 = vsel %vm543, %v1693, 0
        %1720 = vmatprep.subr.mxu0 0.0
        %1721 = vmatpush1.msra.mxu0 0.0
        %1722 = vmatprep.subr.mxu0 0.0
        %1723 = vmatpush1.msra.mxu0 0.0
        %1724 = vmatprep.subr.mxu0 0.0
        %1725 = vmatpush1.msra.mxu0 0.0
        %1726 = vmatprep.subr.mxu0 0.0
        %1727 = vmatpush1.msra.mxu0 0.0
        %1728 = vmatprep.subr.mxu0 0.0
        %1729 = vmatpush1.msra.mxu0 0.0
        %1730 = vmatprep.subr.mxu0 0.0
        %1731 = vmatpush1.msra.mxu0 0.0
        %1732 = vmatprep.subr.mxu0 0.0
        %1733 = vmatpush1.msra.mxu0 0.0
        %1734 = vmatprep.subr.mxu0 0.0
        %1735 = vmatpush1.msra.mxu0 0.0
        %1736 = vmatprep.subr.mxu0 0.0
        %1737 = vmatpush1.msra.mxu0 0.0
        %1738 = vmatprep.subr.mxu0 0.0
        %1739 = vmatpush1.msra.mxu0 0.0
        %1740 = vmatprep.subr.mxu0 0.0
        %1741 = vmatpush1.msra.mxu0 0.0
        %1742 = vmatprep.subr.mxu0 0.0
        %1743 = vmatpush1.msra.mxu0 0.0
        %1744 = vmatprep.subr.mxu0 0.0
        %1745 = vmatpush1.msra.mxu0 0.0
        %1746 = vmatprep.subr.mxu0 0.0
        %1747 = vmatpush1.msra.mxu0 0.0
        %1748 = vmatprep.subr.mxu0 0.0
        %1749 = vmatpush1.msra.mxu0 0.0
        %1750 = vmatprep.subr.mxu0 0.0
        %1751 = vmatpush1.msra.mxu0 %v1695
        %1752 = vmatprep.subr.mxu0 0.0
        %1753 = vmatpush2.msra.mxu0 0.0
        %1754 = vmatprep.subr.mxu0 0.0
        %1755 = vmatpush2.msra.mxu0 0.0
        %1756 = vmatprep.subr.mxu0 0.0
        %1757 = vmatpush2.msra.mxu0 0.0
        %1758 = vmatprep.subr.mxu0 0.0
        %1759 = vmatpush2.msra.mxu0 0.0
        %1760 = vmatprep.subr.mxu0 0.0
        %1761 = vmatpush2.msra.mxu0 0.0
        %1762 = vmatprep.subr.mxu0 0.0
        %1763 = vmatpush2.msra.mxu0 0.0
        %1764 = vmatprep.subr.mxu0 0.0
        %1765 = vmatpush2.msra.mxu0 0.0
        %1766 = vmatprep.subr.mxu0 0.0
        %1767 = vmatpush2.msra.mxu0 0.0
        %1768 = vmatprep.subr.mxu0 0.0
        %1769 = vmatpush2.msra.mxu0 0.0
        %1770 = vmatprep.subr.mxu0 0.0
        %1771 = vmatpush2.msra.mxu0 0.0
        %1772 = vmatprep.subr.mxu0 0.0
        %1773 = vmatpush2.msra.mxu0 0.0
        %1774 = vmatprep.subr.mxu0 0.0
        %1775 = vmatpush2.msra.mxu0 0.0
        %1776 = vmatprep.subr.mxu0 0.0
        %1777 = vmatpush2.msra.mxu0 0.0
        %1778 = vmatprep.subr.mxu0 0.0
        %1779 = vmatpush2.msra.mxu0 0.0
        %1780 = vmatprep.subr.mxu0 0.0
        %1781 = vmatpush2.msra.mxu0 0.0
        %1782 = vmatprep.subr.mxu0 0.0
        %1783 = vmatpush2.msra.mxu0 0.0
        %1784 = vmatprep.mubr.f32.mxu0 0.0
        %1785 = vmatmul.mubr.f32.gmra.mxu0 %v1697
        %v1786 = vpop.f32.mrf.mxu0
        %v1787 = vadd.f32 0.0, %v1786
        %v1788 = vpop.f32.mrf.mxu0
        %1789 = vmatprep.mubr.f32.mxu0 0.0
        %1790 = vmatmul.mubr.f32.gmra.mxu0 %v1700
        %v1791 = vpop.f32.mrf.mxu0
        %v1792 = vadd.f32 0.0, %v1791
        %v1793 = vpop.f32.mrf.mxu0
        %1794 = vmatprep.mubr.f32.mxu0 0.0
        %1795 = vmatmul.mubr.f32.gmra.mxu0 %v1703
        %v1796 = vpop.f32.mrf.mxu0
        %v1797 = vadd.f32 0.0, %v1796
        %v1798 = vpop.f32.mrf.mxu0
        %1799 = vmatprep.mubr.f32.mxu0 0.0
        %1800 = vmatmul.mubr.f32.gmra.mxu0 %v1706
        %v1801 = vpop.f32.mrf.mxu0
        %v1802 = vadd.f32 0.0, %v1801
        %v1803 = vpop.f32.mrf.mxu0
        %1804 = vmatprep.mubr.f32.mxu0 0.0
        %1805 = vmatmul.mubr.f32.gmra.mxu0 %v1709
        %v1806 = vpop.f32.mrf.mxu0
        %v1807 = vadd.f32 0.0, %v1806
        %v1808 = vpop.f32.mrf.mxu0
        %1809 = vmatprep.mubr.f32.mxu0 0.0
        %1810 = vmatmul.mubr.f32.gmra.mxu0 %v1712
        %v1811 = vpop.f32.mrf.mxu0
        %v1812 = vadd.f32 0.0, %v1811
        %v1813 = vpop.f32.mrf.mxu0
        %1814 = vmatprep.mubr.f32.mxu0 0.0
        %1815 = vmatmul.mubr.f32.gmra.mxu0 %v1715
        %v1816 = vpop.f32.mrf.mxu0
        %v1817 = vadd.f32 0.0, %v1816
        %v1818 = vpop.f32.mrf.mxu0
        %1819 = vmatprep.mubr.f32.mxu0 0.0
        %1820 = vmatmul.mubr.f32.gmra.mxu0 %v1718
        %v1821 = vpop.f32.mrf.mxu0
        %v1822 = vadd.f32 0.0, %v1821
        %v1823 = vpop.f32.mrf.mxu0
        %1824 = vdwg.mxu0
        %v1825 = vadd.f32 %v1678, %v1787
        %v1826 = vadd.f32 %v1679, %v1792
        %v1827 = vadd.f32 %v1680, %v1797
        %v1828 = vadd.f32 %v1681, %v1802
        %v1829 = vadd.f32 %v1682, %v1807
        %v1830 = vadd.f32 %v1683, %v1812
        %v1831 = vadd.f32 %v1684, %v1817
        %v1832 = vadd.f32 %v1685, %v1822
        %v1833 = vld [vmem:[%s420] sm:$0xff]
        %v1834 = vld [vmem:[%s420 + $0x10] sm:$0xff]
        %v1835 = vld [vmem:[%s420 + $0x20] sm:$0xff]
        %v1836 = vld [vmem:[%s420 + $0x30] sm:$0xff]
        %v1837 = vld [vmem:[%s420 + $0x40] sm:$0xff]
        %v1838 = vld [vmem:[%s420 + $0x50] sm:$0xff]
        %v1839 = vld [vmem:[%s420 + $0x60] sm:$0xff]
        %v1840 = vld [vmem:[%s420 + $0x70] sm:$0xff]
        %s1841 = scalar_lea.vmem %s3, 72
        %v1842 = vld [vmem:[%s1841] sm:$0xff]
        %v1844 = vsel %vm543, %v1833, 0
        %v1847 = vsel %vm543, %v1834, 0
        %v1850 = vsel %vm543, %v1835, 0
        %v1853 = vsel %vm543, %v1836, 0
        %v1856 = vsel %vm543, %v1837, 0
        %v1859 = vsel %vm543, %v1838, 0
        %v1862 = vsel %vm543, %v1839, 0
        %v1865 = vsel %vm543, %v1840, 0
        %1867 = vmatprep.subr.mxu0 0.0
        %1868 = vmatpush1.msra.mxu0 0.0
        %1869 = vmatprep.subr.mxu0 0.0
        %1870 = vmatpush1.msra.mxu0 0.0
        %1871 = vmatprep.subr.mxu0 0.0
        %1872 = vmatpush1.msra.mxu0 0.0
        %1873 = vmatprep.subr.mxu0 0.0
        %1874 = vmatpush1.msra.mxu0 0.0
        %1875 = vmatprep.subr.mxu0 0.0
        %1876 = vmatpush1.msra.mxu0 0.0
        %1877 = vmatprep.subr.mxu0 0.0
        %1878 = vmatpush1.msra.mxu0 0.0
        %1879 = vmatprep.subr.mxu0 0.0
        %1880 = vmatpush1.msra.mxu0 0.0
        %1881 = vmatprep.subr.mxu0 0.0
        %1882 = vmatpush1.msra.mxu0 0.0
        %1883 = vmatprep.subr.mxu0 0.0
        %1884 = vmatpush1.msra.mxu0 0.0
        %1885 = vmatprep.subr.mxu0 0.0
        %1886 = vmatpush1.msra.mxu0 0.0
        %1887 = vmatprep.subr.mxu0 0.0
        %1888 = vmatpush1.msra.mxu0 0.0
        %1889 = vmatprep.subr.mxu0 0.0
        %1890 = vmatpush1.msra.mxu0 0.0
        %1891 = vmatprep.subr.mxu0 0.0
        %1892 = vmatpush1.msra.mxu0 0.0
        %1893 = vmatprep.subr.mxu0 0.0
        %1894 = vmatpush1.msra.mxu0 0.0
        %1895 = vmatprep.subr.mxu0 0.0
        %1896 = vmatpush1.msra.mxu0 0.0
        %1897 = vmatprep.subr.mxu0 0.0
        %1898 = vmatpush1.msra.mxu0 %v1842
        %1899 = vmatprep.subr.mxu0 0.0
        %1900 = vmatpush2.msra.mxu0 0.0
        %1901 = vmatprep.subr.mxu0 0.0
        %1902 = vmatpush2.msra.mxu0 0.0
        %1903 = vmatprep.subr.mxu0 0.0
        %1904 = vmatpush2.msra.mxu0 0.0
        %1905 = vmatprep.subr.mxu0 0.0
        %1906 = vmatpush2.msra.mxu0 0.0
        %1907 = vmatprep.subr.mxu0 0.0
        %1908 = vmatpush2.msra.mxu0 0.0
        %1909 = vmatprep.subr.mxu0 0.0
        %1910 = vmatpush2.msra.mxu0 0.0
        %1911 = vmatprep.subr.mxu0 0.0
        %1912 = vmatpush2.msra.mxu0 0.0
        %1913 = vmatprep.subr.mxu0 0.0
        %1914 = vmatpush2.msra.mxu0 0.0
        %1915 = vmatprep.subr.mxu0 0.0
        %1916 = vmatpush2.msra.mxu0 0.0
        %1917 = vmatprep.subr.mxu0 0.0
        %1918 = vmatpush2.msra.mxu0 0.0
        %1919 = vmatprep.subr.mxu0 0.0
        %1920 = vmatpush2.msra.mxu0 0.0
        %1921 = vmatprep.subr.mxu0 0.0
        %1922 = vmatpush2.msra.mxu0 0.0
        %1923 = vmatprep.subr.mxu0 0.0
        %1924 = vmatpush2.msra.mxu0 0.0
        %1925 = vmatprep.subr.mxu0 0.0
        %1926 = vmatpush2.msra.mxu0 0.0
        %1927 = vmatprep.subr.mxu0 0.0
        %1928 = vmatpush2.msra.mxu0 0.0
        %1929 = vmatprep.subr.mxu0 0.0
        %1930 = vmatpush2.msra.mxu0 0.0
        %1931 = vmatprep.mubr.f32.mxu0 0.0
        %1932 = vmatmul.mubr.f32.gmra.mxu0 %v1844
        %v1933 = vpop.f32.mrf.mxu0
        %v1934 = vadd.f32 0.0, %v1933
        %v1935 = vpop.f32.mrf.mxu0
        %1936 = vmatprep.mubr.f32.mxu0 0.0
        %1937 = vmatmul.mubr.f32.gmra.mxu0 %v1847
        %v1938 = vpop.f32.mrf.mxu0
        %v1939 = vadd.f32 0.0, %v1938
        %v1940 = vpop.f32.mrf.mxu0
        %1941 = vmatprep.mubr.f32.mxu0 0.0
        %1942 = vmatmul.mubr.f32.gmra.mxu0 %v1850
        %v1943 = vpop.f32.mrf.mxu0
        %v1944 = vadd.f32 0.0, %v1943
        %v1945 = vpop.f32.mrf.mxu0
        %1946 = vmatprep.mubr.f32.mxu0 0.0
        %1947 = vmatmul.mubr.f32.gmra.mxu0 %v1853
        %v1948 = vpop.f32.mrf.mxu0
        %v1949 = vadd.f32 0.0, %v1948
        %v1950 = vpop.f32.mrf.mxu0
        %1951 = vmatprep.mubr.f32.mxu0 0.0
        %1952 = vmatmul.mubr.f32.gmra.mxu0 %v1856
        %v1953 = vpop.f32.mrf.mxu0
        %v1954 = vadd.f32 0.0, %v1953
        %v1955 = vpop.f32.mrf.mxu0
        %1956 = vmatprep.mubr.f32.mxu0 0.0
        %1957 = vmatmul.mubr.f32.gmra.mxu0 %v1859
        %v1958 = vpop.f32.mrf.mxu0
        %v1959 = vadd.f32 0.0, %v1958
        %v1960 = vpop.f32.mrf.mxu0
        %1961 = vmatprep.mubr.f32.mxu0 0.0
        %1962 = vmatmul.mubr.f32.gmra.mxu0 %v1862
        %v1963 = vpop.f32.mrf.mxu0
        %v1964 = vadd.f32 0.0, %v1963
        %v1965 = vpop.f32.mrf.mxu0
        %1966 = vmatprep.mubr.f32.mxu0 0.0
        %1967 = vmatmul.mubr.f32.gmra.mxu0 %v1865
        %v1968 = vpop.f32.mrf.mxu0
        %v1969 = vadd.f32 0.0, %v1968
        %v1970 = vpop.f32.mrf.mxu0
        %1971 = vdwg.mxu0
        %v1972 = vadd.f32 %v1825, %v1934
        %v1973 = vadd.f32 %v1826, %v1939
        %v1974 = vadd.f32 %v1827, %v1944
        %v1975 = vadd.f32 %v1828, %v1949
        %v1976 = vadd.f32 %v1829, %v1954
        %v1977 = vadd.f32 %v1830, %v1959
        %v1978 = vadd.f32 %v1831, %v1964
        %v1979 = vadd.f32 %v1832, %v1969
        %v1980 = vld [vmem:[%s420 + $0x1] sm:$0xff]
        %v1981 = vld [vmem:[%s420 + $0x11] sm:$0xff]
        %v1982 = vld [vmem:[%s420 + $0x21] sm:$0xff]
        %v1983 = vld [vmem:[%s420 + $0x31] sm:$0xff]
        %v1984 = vld [vmem:[%s420 + $0x41] sm:$0xff]
        %v1985 = vld [vmem:[%s420 + $0x51] sm:$0xff]
        %v1986 = vld [vmem:[%s420 + $0x61] sm:$0xff]
        %v1987 = vld [vmem:[%s420 + $0x71] sm:$0xff]
        %s1988 = scalar_lea.vmem %s3, 80
        %v1989 = vld [vmem:[%s1988] sm:$0xff]
        %v1991 = vsel %vm543, %v1980, 0
        %v1994 = vsel %vm543, %v1981, 0
        %v1997 = vsel %vm543, %v1982, 0
        %v2000 = vsel %vm543, %v1983, 0
        %v2003 = vsel %vm543, %v1984, 0
        %v2006 = vsel %vm543, %v1985, 0
        %v2009 = vsel %vm543, %v1986, 0
        %v2012 = vsel %vm543, %v1987, 0
        %2014 = vmatprep.subr.mxu0 0.0
        %2015 = vmatpush1.msra.mxu0 0.0
        %2016 = vmatprep.subr.mxu0 0.0
        %2017 = vmatpush1.msra.mxu0 0.0
        %2018 = vmatprep.subr.mxu0 0.0
        %2019 = vmatpush1.msra.mxu0 0.0
        %2020 = vmatprep.subr.mxu0 0.0
        %2021 = vmatpush1.msra.mxu0 0.0
        %2022 = vmatprep.subr.mxu0 0.0
        %2023 = vmatpush1.msra.mxu0 0.0
        %2024 = vmatprep.subr.mxu0 0.0
        %2025 = vmatpush1.msra.mxu0 0.0
        %2026 = vmatprep.subr.mxu0 0.0
        %2027 = vmatpush1.msra.mxu0 0.0
        %2028 = vmatprep.subr.mxu0 0.0
        %2029 = vmatpush1.msra.mxu0 0.0
        %2030 = vmatprep.subr.mxu0 0.0
        %2031 = vmatpush1.msra.mxu0 0.0
        %2032 = vmatprep.subr.mxu0 0.0
        %2033 = vmatpush1.msra.mxu0 0.0
        %2034 = vmatprep.subr.mxu0 0.0
        %2035 = vmatpush1.msra.mxu0 0.0
        %2036 = vmatprep.subr.mxu0 0.0
        %2037 = vmatpush1.msra.mxu0 0.0
        %2038 = vmatprep.subr.mxu0 0.0
        %2039 = vmatpush1.msra.mxu0 0.0
        %2040 = vmatprep.subr.mxu0 0.0
        %2041 = vmatpush1.msra.mxu0 0.0
        %2042 = vmatprep.subr.mxu0 0.0
        %2043 = vmatpush1.msra.mxu0 0.0
        %2044 = vmatprep.subr.mxu0 0.0
        %2045 = vmatpush1.msra.mxu0 %v1989
        %2046 = vmatprep.subr.mxu0 0.0
        %2047 = vmatpush2.msra.mxu0 0.0
        %2048 = vmatprep.subr.mxu0 0.0
        %2049 = vmatpush2.msra.mxu0 0.0
        %2050 = vmatprep.subr.mxu0 0.0
        %2051 = vmatpush2.msra.mxu0 0.0
        %2052 = vmatprep.subr.mxu0 0.0
        %2053 = vmatpush2.msra.mxu0 0.0
        %2054 = vmatprep.subr.mxu0 0.0
        %2055 = vmatpush2.msra.mxu0 0.0
        %2056 = vmatprep.subr.mxu0 0.0
        %2057 = vmatpush2.msra.mxu0 0.0
        %2058 = vmatprep.subr.mxu0 0.0
        %2059 = vmatpush2.msra.mxu0 0.0
        %2060 = vmatprep.subr.mxu0 0.0
        %2061 = vmatpush2.msra.mxu0 0.0
        %2062 = vmatprep.subr.mxu0 0.0
        %2063 = vmatpush2.msra.mxu0 0.0
        %2064 = vmatprep.subr.mxu0 0.0
        %2065 = vmatpush2.msra.mxu0 0.0
        %2066 = vmatprep.subr.mxu0 0.0
        %2067 = vmatpush2.msra.mxu0 0.0
        %2068 = vmatprep.subr.mxu0 0.0
        %2069 = vmatpush2.msra.mxu0 0.0
        %2070 = vmatprep.subr.mxu0 0.0
        %2071 = vmatpush2.msra.mxu0 0.0
        %2072 = vmatprep.subr.mxu0 0.0
        %2073 = vmatpush2.msra.mxu0 0.0
        %2074 = vmatprep.subr.mxu0 0.0
        %2075 = vmatpush2.msra.mxu0 0.0
        %2076 = vmatprep.subr.mxu0 0.0
        %2077 = vmatpush2.msra.mxu0 0.0
        %2078 = vmatprep.mubr.f32.mxu0 0.0
        %2079 = vmatmul.mubr.f32.gmra.mxu0 %v1991
        %v2080 = vpop.f32.mrf.mxu0
        %v2081 = vadd.f32 0.0, %v2080
        %v2082 = vpop.f32.mrf.mxu0
        %2083 = vmatprep.mubr.f32.mxu0 0.0
        %2084 = vmatmul.mubr.f32.gmra.mxu0 %v1994
        %v2085 = vpop.f32.mrf.mxu0
        %v2086 = vadd.f32 0.0, %v2085
        %v2087 = vpop.f32.mrf.mxu0
        %2088 = vmatprep.mubr.f32.mxu0 0.0
        %2089 = vmatmul.mubr.f32.gmra.mxu0 %v1997
        %v2090 = vpop.f32.mrf.mxu0
        %v2091 = vadd.f32 0.0, %v2090
        %v2092 = vpop.f32.mrf.mxu0
        %2093 = vmatprep.mubr.f32.mxu0 0.0
        %2094 = vmatmul.mubr.f32.gmra.mxu0 %v2000
        %v2095 = vpop.f32.mrf.mxu0
        %v2096 = vadd.f32 0.0, %v2095
        %v2097 = vpop.f32.mrf.mxu0
        %2098 = vmatprep.mubr.f32.mxu0 0.0
        %2099 = vmatmul.mubr.f32.gmra.mxu0 %v2003
        %v2100 = vpop.f32.mrf.mxu0
        %v2101 = vadd.f32 0.0, %v2100
        %v2102 = vpop.f32.mrf.mxu0
        %2103 = vmatprep.mubr.f32.mxu0 0.0
        %2104 = vmatmul.mubr.f32.gmra.mxu0 %v2006
        %v2105 = vpop.f32.mrf.mxu0
        %v2106 = vadd.f32 0.0, %v2105
        %v2107 = vpop.f32.mrf.mxu0
        %2108 = vmatprep.mubr.f32.mxu0 0.0
        %2109 = vmatmul.mubr.f32.gmra.mxu0 %v2009
        %v2110 = vpop.f32.mrf.mxu0
        %v2111 = vadd.f32 0.0, %v2110
        %v2112 = vpop.f32.mrf.mxu0
        %2113 = vmatprep.mubr.f32.mxu0 0.0
        %2114 = vmatmul.mubr.f32.gmra.mxu0 %v2012
        %v2115 = vpop.f32.mrf.mxu0
        %v2116 = vadd.f32 0.0, %v2115
        %v2117 = vpop.f32.mrf.mxu0
        %2118 = vdwg.mxu0
        %v2119 = vadd.f32 %v1972, %v2081
        %v2120 = vadd.f32 %v1973, %v2086
        %v2121 = vadd.f32 %v1974, %v2091
        %v2122 = vadd.f32 %v1975, %v2096
        %v2123 = vadd.f32 %v1976, %v2101
        %v2124 = vadd.f32 %v1977, %v2106
        %v2125 = vadd.f32 %v1978, %v2111
        %v2126 = vadd.f32 %v1979, %v2116
        %v2127 = vld [vmem:[%s420 + $0x2] sm:$0xff]
        %v2128 = vld [vmem:[%s420 + $0x12] sm:$0xff]
        %v2129 = vld [vmem:[%s420 + $0x22] sm:$0xff]
        %v2130 = vld [vmem:[%s420 + $0x32] sm:$0xff]
        %v2131 = vld [vmem:[%s420 + $0x42] sm:$0xff]
        %v2132 = vld [vmem:[%s420 + $0x52] sm:$0xff]
        %v2133 = vld [vmem:[%s420 + $0x62] sm:$0xff]
        %v2134 = vld [vmem:[%s420 + $0x72] sm:$0xff]
        %s2135 = scalar_lea.vmem %s3, 88
        %v2136 = vld [vmem:[%s2135] sm:$0xff]
        %v2138 = vsel %vm543, %v2127, 0
        %v2141 = vsel %vm543, %v2128, 0
        %v2144 = vsel %vm543, %v2129, 0
        %v2147 = vsel %vm543, %v2130, 0
        %v2150 = vsel %vm543, %v2131, 0
        %v2153 = vsel %vm543, %v2132, 0
        %v2156 = vsel %vm543, %v2133, 0
        %v2159 = vsel %vm543, %v2134, 0
        %2161 = vmatprep.subr.mxu0 0.0
        %2162 = vmatpush1.msra.mxu0 0.0
        %2163 = vmatprep.subr.mxu0 0.0
        %2164 = vmatpush1.msra.mxu0 0.0
        %2165 = vmatprep.subr.mxu0 0.0
        %2166 = vmatpush1.msra.mxu0 0.0
        %2167 = vmatprep.subr.mxu0 0.0
        %2168 = vmatpush1.msra.mxu0 0.0
        %2169 = vmatprep.subr.mxu0 0.0
        %2170 = vmatpush1.msra.mxu0 0.0
        %2171 = vmatprep.subr.mxu0 0.0
        %2172 = vmatpush1.msra.mxu0 0.0
        %2173 = vmatprep.subr.mxu0 0.0
        %2174 = vmatpush1.msra.mxu0 0.0
        %2175 = vmatprep.subr.mxu0 0.0
        %2176 = vmatpush1.msra.mxu0 0.0
        %2177 = vmatprep.subr.mxu0 0.0
        %2178 = vmatpush1.msra.mxu0 0.0
        %2179 = vmatprep.subr.mxu0 0.0
        %2180 = vmatpush1.msra.mxu0 0.0
        %2181 = vmatprep.subr.mxu0 0.0
        %2182 = vmatpush1.msra.mxu0 0.0
        %2183 = vmatprep.subr.mxu0 0.0
        %2184 = vmatpush1.msra.mxu0 0.0
        %2185 = vmatprep.subr.mxu0 0.0
        %2186 = vmatpush1.msra.mxu0 0.0
        %2187 = vmatprep.subr.mxu0 0.0
        %2188 = vmatpush1.msra.mxu0 0.0
        %2189 = vmatprep.subr.mxu0 0.0
        %2190 = vmatpush1.msra.mxu0 0.0
        %2191 = vmatprep.subr.mxu0 0.0
        %2192 = vmatpush1.msra.mxu0 %v2136
        %2193 = vmatprep.subr.mxu0 0.0
        %2194 = vmatpush2.msra.mxu0 0.0
        %2195 = vmatprep.subr.mxu0 0.0
        %2196 = vmatpush2.msra.mxu0 0.0
        %2197 = vmatprep.subr.mxu0 0.0
        %2198 = vmatpush2.msra.mxu0 0.0
        %2199 = vmatprep.subr.mxu0 0.0
        %2200 = vmatpush2.msra.mxu0 0.0
        %2201 = vmatprep.subr.mxu0 0.0
        %2202 = vmatpush2.msra.mxu0 0.0
        %2203 = vmatprep.subr.mxu0 0.0
        %2204 = vmatpush2.msra.mxu0 0.0
        %2205 = vmatprep.subr.mxu0 0.0
        %2206 = vmatpush2.msra.mxu0 0.0
        %2207 = vmatprep.subr.mxu0 0.0
        %2208 = vmatpush2.msra.mxu0 0.0
        %2209 = vmatprep.subr.mxu0 0.0
        %2210 = vmatpush2.msra.mxu0 0.0
        %2211 = vmatprep.subr.mxu0 0.0
        %2212 = vmatpush2.msra.mxu0 0.0
        %2213 = vmatprep.subr.mxu0 0.0
        %2214 = vmatpush2.msra.mxu0 0.0
        %2215 = vmatprep.subr.mxu0 0.0
        %2216 = vmatpush2.msra.mxu0 0.0
        %2217 = vmatprep.subr.mxu0 0.0
        %2218 = vmatpush2.msra.mxu0 0.0
        %2219 = vmatprep.subr.mxu0 0.0
        %2220 = vmatpush2.msra.mxu0 0.0
        %2221 = vmatprep.subr.mxu0 0.0
        %2222 = vmatpush2.msra.mxu0 0.0
        %2223 = vmatprep.subr.mxu0 0.0
        %2224 = vmatpush2.msra.mxu0 0.0
        %2225 = vmatprep.mubr.f32.mxu0 0.0
        %2226 = vmatmul.mubr.f32.gmra.mxu0 %v2138
        %v2227 = vpop.f32.mrf.mxu0
        %v2228 = vadd.f32 0.0, %v2227
        %v2229 = vpop.f32.mrf.mxu0
        %2230 = vmatprep.mubr.f32.mxu0 0.0
        %2231 = vmatmul.mubr.f32.gmra.mxu0 %v2141
        %v2232 = vpop.f32.mrf.mxu0
        %v2233 = vadd.f32 0.0, %v2232
        %v2234 = vpop.f32.mrf.mxu0
        %2235 = vmatprep.mubr.f32.mxu0 0.0
        %2236 = vmatmul.mubr.f32.gmra.mxu0 %v2144
        %v2237 = vpop.f32.mrf.mxu0
        %v2238 = vadd.f32 0.0, %v2237
        %v2239 = vpop.f32.mrf.mxu0
        %2240 = vmatprep.mubr.f32.mxu0 0.0
        %2241 = vmatmul.mubr.f32.gmra.mxu0 %v2147
        %v2242 = vpop.f32.mrf.mxu0
        %v2243 = vadd.f32 0.0, %v2242
        %v2244 = vpop.f32.mrf.mxu0
        %2245 = vmatprep.mubr.f32.mxu0 0.0
        %2246 = vmatmul.mubr.f32.gmra.mxu0 %v2150
        %v2247 = vpop.f32.mrf.mxu0
        %v2248 = vadd.f32 0.0, %v2247
        %v2249 = vpop.f32.mrf.mxu0
        %2250 = vmatprep.mubr.f32.mxu0 0.0
        %2251 = vmatmul.mubr.f32.gmra.mxu0 %v2153
        %v2252 = vpop.f32.mrf.mxu0
        %v2253 = vadd.f32 0.0, %v2252
        %v2254 = vpop.f32.mrf.mxu0
        %2255 = vmatprep.mubr.f32.mxu0 0.0
        %2256 = vmatmul.mubr.f32.gmra.mxu0 %v2156
        %v2257 = vpop.f32.mrf.mxu0
        %v2258 = vadd.f32 0.0, %v2257
        %v2259 = vpop.f32.mrf.mxu0
        %2260 = vmatprep.mubr.f32.mxu0 0.0
        %2261 = vmatmul.mubr.f32.gmra.mxu0 %v2159
        %v2262 = vpop.f32.mrf.mxu0
        %v2263 = vadd.f32 0.0, %v2262
        %v2264 = vpop.f32.mrf.mxu0
        %2265 = vdwg.mxu0
        %v2266 = vadd.f32 %v2119, %v2228
        %v2267 = vadd.f32 %v2120, %v2233
        %v2268 = vadd.f32 %v2121, %v2238
        %v2269 = vadd.f32 %v2122, %v2243
        %v2270 = vadd.f32 %v2123, %v2248
        %v2271 = vadd.f32 %v2124, %v2253
        %v2272 = vadd.f32 %v2125, %v2258
        %v2273 = vadd.f32 %v2126, %v2263
        %s2274 = scalar_lea.vmem %s420, 16
        %v2275 = vld [vmem:[%s2274] sm:$0xff]
        %v2276 = vld [vmem:[%s2274 + $0x10] sm:$0xff]
        %v2277 = vld [vmem:[%s2274 + $0x20] sm:$0xff]
        %v2278 = vld [vmem:[%s2274 + $0x30] sm:$0xff]
        %v2279 = vld [vmem:[%s2274 + $0x40] sm:$0xff]
        %v2280 = vld [vmem:[%s2274 + $0x50] sm:$0xff]
        %v2281 = vld [vmem:[%s2274 + $0x60] sm:$0xff]
        %v2282 = vld [vmem:[%s2274 + $0x70] sm:$0xff]
        %s2283 = scalar_lea.vmem %s3, 96
        %v2284 = vld [vmem:[%s2283] sm:$0xff]
        %v2286 = vsel %vm543, %v2275, 0
        %v2289 = vsel %vm543, %v2276, 0
        %v2292 = vsel %vm543, %v2277, 0
        %v2295 = vsel %vm543, %v2278, 0
        %v2298 = vsel %vm543, %v2279, 0
        %v2301 = vsel %vm543, %v2280, 0
        %v2304 = vsel %vm543, %v2281, 0
        %v2307 = vsel %vm543, %v2282, 0
        %2309 = vmatprep.subr.mxu0 0.0
        %2310 = vmatpush1.msra.mxu0 0.0
        %2311 = vmatprep.subr.mxu0 0.0
        %2312 = vmatpush1.msra.mxu0 0.0
        %2313 = vmatprep.subr.mxu0 0.0
        %2314 = vmatpush1.msra.mxu0 0.0
        %2315 = vmatprep.subr.mxu0 0.0
        %2316 = vmatpush1.msra.mxu0 0.0
        %2317 = vmatprep.subr.mxu0 0.0
        %2318 = vmatpush1.msra.mxu0 0.0
        %2319 = vmatprep.subr.mxu0 0.0
        %2320 = vmatpush1.msra.mxu0 0.0
        %2321 = vmatprep.subr.mxu0 0.0
        %2322 = vmatpush1.msra.mxu0 0.0
        %2323 = vmatprep.subr.mxu0 0.0
        %2324 = vmatpush1.msra.mxu0 0.0
        %2325 = vmatprep.subr.mxu0 0.0
        %2326 = vmatpush1.msra.mxu0 0.0
        %2327 = vmatprep.subr.mxu0 0.0
        %2328 = vmatpush1.msra.mxu0 0.0
        %2329 = vmatprep.subr.mxu0 0.0
        %2330 = vmatpush1.msra.mxu0 0.0
        %2331 = vmatprep.subr.mxu0 0.0
        %2332 = vmatpush1.msra.mxu0 0.0
        %2333 = vmatprep.subr.mxu0 0.0
        %2334 = vmatpush1.msra.mxu0 0.0
        %2335 = vmatprep.subr.mxu0 0.0
        %2336 = vmatpush1.msra.mxu0 0.0
        %2337 = vmatprep.subr.mxu0 0.0
        %2338 = vmatpush1.msra.mxu0 0.0
        %2339 = vmatprep.subr.mxu0 0.0
        %2340 = vmatpush1.msra.mxu0 %v2284
        %2341 = vmatprep.subr.mxu0 0.0
        %2342 = vmatpush2.msra.mxu0 0.0
        %2343 = vmatprep.subr.mxu0 0.0
        %2344 = vmatpush2.msra.mxu0 0.0
        %2345 = vmatprep.subr.mxu0 0.0
        %2346 = vmatpush2.msra.mxu0 0.0
        %2347 = vmatprep.subr.mxu0 0.0
        %2348 = vmatpush2.msra.mxu0 0.0
        %2349 = vmatprep.subr.mxu0 0.0
        %2350 = vmatpush2.msra.mxu0 0.0
        %2351 = vmatprep.subr.mxu0 0.0
        %2352 = vmatpush2.msra.mxu0 0.0
        %2353 = vmatprep.subr.mxu0 0.0
        %2354 = vmatpush2.msra.mxu0 0.0
        %2355 = vmatprep.subr.mxu0 0.0
        %2356 = vmatpush2.msra.mxu0 0.0
        %2357 = vmatprep.subr.mxu0 0.0
        %2358 = vmatpush2.msra.mxu0 0.0
        %2359 = vmatprep.subr.mxu0 0.0
        %2360 = vmatpush2.msra.mxu0 0.0
        %2361 = vmatprep.subr.mxu0 0.0
        %2362 = vmatpush2.msra.mxu0 0.0
        %2363 = vmatprep.subr.mxu0 0.0
        %2364 = vmatpush2.msra.mxu0 0.0
        %2365 = vmatprep.subr.mxu0 0.0
        %2366 = vmatpush2.msra.mxu0 0.0
        %2367 = vmatprep.subr.mxu0 0.0
        %2368 = vmatpush2.msra.mxu0 0.0
        %2369 = vmatprep.subr.mxu0 0.0
        %2370 = vmatpush2.msra.mxu0 0.0
        %2371 = vmatprep.subr.mxu0 0.0
        %2372 = vmatpush2.msra.mxu0 0.0
        %2373 = vmatprep.mubr.f32.mxu0 0.0
        %2374 = vmatmul.mubr.f32.gmra.mxu0 %v2286
        %v2375 = vpop.f32.mrf.mxu0
        %v2376 = vadd.f32 0.0, %v2375
        %v2377 = vpop.f32.mrf.mxu0
        %2378 = vmatprep.mubr.f32.mxu0 0.0
        %2379 = vmatmul.mubr.f32.gmra.mxu0 %v2289
        %v2380 = vpop.f32.mrf.mxu0
        %v2381 = vadd.f32 0.0, %v2380
        %v2382 = vpop.f32.mrf.mxu0
        %2383 = vmatprep.mubr.f32.mxu0 0.0
        %2384 = vmatmul.mubr.f32.gmra.mxu0 %v2292
        %v2385 = vpop.f32.mrf.mxu0
        %v2386 = vadd.f32 0.0, %v2385
        %v2387 = vpop.f32.mrf.mxu0
        %2388 = vmatprep.mubr.f32.mxu0 0.0
        %2389 = vmatmul.mubr.f32.gmra.mxu0 %v2295
        %v2390 = vpop.f32.mrf.mxu0
        %v2391 = vadd.f32 0.0, %v2390
        %v2392 = vpop.f32.mrf.mxu0
        %2393 = vmatprep.mubr.f32.mxu0 0.0
        %2394 = vmatmul.mubr.f32.gmra.mxu0 %v2298
        %v2395 = vpop.f32.mrf.mxu0
        %v2396 = vadd.f32 0.0, %v2395
        %v2397 = vpop.f32.mrf.mxu0
        %2398 = vmatprep.mubr.f32.mxu0 0.0
        %2399 = vmatmul.mubr.f32.gmra.mxu0 %v2301
        %v2400 = vpop.f32.mrf.mxu0
        %v2401 = vadd.f32 0.0, %v2400
        %v2402 = vpop.f32.mrf.mxu0
        %2403 = vmatprep.mubr.f32.mxu0 0.0
        %2404 = vmatmul.mubr.f32.gmra.mxu0 %v2304
        %v2405 = vpop.f32.mrf.mxu0
        %v2406 = vadd.f32 0.0, %v2405
        %v2407 = vpop.f32.mrf.mxu0
        %2408 = vmatprep.mubr.f32.mxu0 0.0
        %2409 = vmatmul.mubr.f32.gmra.mxu0 %v2307
        %v2410 = vpop.f32.mrf.mxu0
        %v2411 = vadd.f32 0.0, %v2410
        %v2412 = vpop.f32.mrf.mxu0
        %2413 = vdwg.mxu0
        %v2414 = vadd.f32 %v2266, %v2376
        %v2415 = vadd.f32 %v2267, %v2381
        %v2416 = vadd.f32 %v2268, %v2386
        %v2417 = vadd.f32 %v2269, %v2391
        %v2418 = vadd.f32 %v2270, %v2396
        %v2419 = vadd.f32 %v2271, %v2401
        %v2420 = vadd.f32 %v2272, %v2406
        %v2421 = vadd.f32 %v2273, %v2411
        %v2422 = vld [vmem:[%s2274 + $0x1] sm:$0xff]
        %v2423 = vld [vmem:[%s2274 + $0x11] sm:$0xff]
        %v2424 = vld [vmem:[%s2274 + $0x21] sm:$0xff]
        %v2425 = vld [vmem:[%s2274 + $0x31] sm:$0xff]
        %v2426 = vld [vmem:[%s2274 + $0x41] sm:$0xff]
        %v2427 = vld [vmem:[%s2274 + $0x51] sm:$0xff]
        %v2428 = vld [vmem:[%s2274 + $0x61] sm:$0xff]
        %v2429 = vld [vmem:[%s2274 + $0x71] sm:$0xff]
        %s2430 = scalar_lea.vmem %s3, 104
        %v2431 = vld [vmem:[%s2430] sm:$0xff]
        %v2433 = vsel %vm543, %v2422, 0
        %v2436 = vsel %vm543, %v2423, 0
        %v2439 = vsel %vm543, %v2424, 0
        %v2442 = vsel %vm543, %v2425, 0
        %v2445 = vsel %vm543, %v2426, 0
        %v2448 = vsel %vm543, %v2427, 0
        %v2451 = vsel %vm543, %v2428, 0
        %v2454 = vsel %vm543, %v2429, 0
        %2456 = vmatprep.subr.mxu0 0.0
        %2457 = vmatpush1.msra.mxu0 0.0
        %2458 = vmatprep.subr.mxu0 0.0
        %2459 = vmatpush1.msra.mxu0 0.0
        %2460 = vmatprep.subr.mxu0 0.0
        %2461 = vmatpush1.msra.mxu0 0.0
        %2462 = vmatprep.subr.mxu0 0.0
        %2463 = vmatpush1.msra.mxu0 0.0
        %2464 = vmatprep.subr.mxu0 0.0
        %2465 = vmatpush1.msra.mxu0 0.0
        %2466 = vmatprep.subr.mxu0 0.0
        %2467 = vmatpush1.msra.mxu0 0.0
        %2468 = vmatprep.subr.mxu0 0.0
        %2469 = vmatpush1.msra.mxu0 0.0
        %2470 = vmatprep.subr.mxu0 0.0
        %2471 = vmatpush1.msra.mxu0 0.0
        %2472 = vmatprep.subr.mxu0 0.0
        %2473 = vmatpush1.msra.mxu0 0.0
        %2474 = vmatprep.subr.mxu0 0.0
        %2475 = vmatpush1.msra.mxu0 0.0
        %2476 = vmatprep.subr.mxu0 0.0
        %2477 = vmatpush1.msra.mxu0 0.0
        %2478 = vmatprep.subr.mxu0 0.0
        %2479 = vmatpush1.msra.mxu0 0.0
        %2480 = vmatprep.subr.mxu0 0.0
        %2481 = vmatpush1.msra.mxu0 0.0
        %2482 = vmatprep.subr.mxu0 0.0
        %2483 = vmatpush1.msra.mxu0 0.0
        %2484 = vmatprep.subr.mxu0 0.0
        %2485 = vmatpush1.msra.mxu0 0.0
        %2486 = vmatprep.subr.mxu0 0.0
        %2487 = vmatpush1.msra.mxu0 %v2431
        %2488 = vmatprep.subr.mxu0 0.0
        %2489 = vmatpush2.msra.mxu0 0.0
        %2490 = vmatprep.subr.mxu0 0.0
        %2491 = vmatpush2.msra.mxu0 0.0
        %2492 = vmatprep.subr.mxu0 0.0
        %2493 = vmatpush2.msra.mxu0 0.0
        %2494 = vmatprep.subr.mxu0 0.0
        %2495 = vmatpush2.msra.mxu0 0.0
        %2496 = vmatprep.subr.mxu0 0.0
        %2497 = vmatpush2.msra.mxu0 0.0
        %2498 = vmatprep.subr.mxu0 0.0
        %2499 = vmatpush2.msra.mxu0 0.0
        %2500 = vmatprep.subr.mxu0 0.0
        %2501 = vmatpush2.msra.mxu0 0.0
        %2502 = vmatprep.subr.mxu0 0.0
        %2503 = vmatpush2.msra.mxu0 0.0
        %2504 = vmatprep.subr.mxu0 0.0
        %2505 = vmatpush2.msra.mxu0 0.0
        %2506 = vmatprep.subr.mxu0 0.0
        %2507 = vmatpush2.msra.mxu0 0.0
        %2508 = vmatprep.subr.mxu0 0.0
        %2509 = vmatpush2.msra.mxu0 0.0
        %2510 = vmatprep.subr.mxu0 0.0
        %2511 = vmatpush2.msra.mxu0 0.0
        %2512 = vmatprep.subr.mxu0 0.0
        %2513 = vmatpush2.msra.mxu0 0.0
        %2514 = vmatprep.subr.mxu0 0.0
        %2515 = vmatpush2.msra.mxu0 0.0
        %2516 = vmatprep.subr.mxu0 0.0
        %2517 = vmatpush2.msra.mxu0 0.0
        %2518 = vmatprep.subr.mxu0 0.0
        %2519 = vmatpush2.msra.mxu0 0.0
        %2520 = vmatprep.mubr.f32.mxu0 0.0
        %2521 = vmatmul.mubr.f32.gmra.mxu0 %v2433
        %v2522 = vpop.f32.mrf.mxu0
        %v2523 = vadd.f32 0.0, %v2522
        %v2524 = vpop.f32.mrf.mxu0
        %2525 = vmatprep.mubr.f32.mxu0 0.0
        %2526 = vmatmul.mubr.f32.gmra.mxu0 %v2436
        %v2527 = vpop.f32.mrf.mxu0
        %v2528 = vadd.f32 0.0, %v2527
        %v2529 = vpop.f32.mrf.mxu0
        %2530 = vmatprep.mubr.f32.mxu0 0.0
        %2531 = vmatmul.mubr.f32.gmra.mxu0 %v2439
        %v2532 = vpop.f32.mrf.mxu0
        %v2533 = vadd.f32 0.0, %v2532
        %v2534 = vpop.f32.mrf.mxu0
        %2535 = vmatprep.mubr.f32.mxu0 0.0
        %2536 = vmatmul.mubr.f32.gmra.mxu0 %v2442
        %v2537 = vpop.f32.mrf.mxu0
        %v2538 = vadd.f32 0.0, %v2537
        %v2539 = vpop.f32.mrf.mxu0
        %2540 = vmatprep.mubr.f32.mxu0 0.0
        %2541 = vmatmul.mubr.f32.gmra.mxu0 %v2445
        %v2542 = vpop.f32.mrf.mxu0
        %v2543 = vadd.f32 0.0, %v2542
        %v2544 = vpop.f32.mrf.mxu0
        %2545 = vmatprep.mubr.f32.mxu0 0.0
        %2546 = vmatmul.mubr.f32.gmra.mxu0 %v2448
        %v2547 = vpop.f32.mrf.mxu0
        %v2548 = vadd.f32 0.0, %v2547
        %v2549 = vpop.f32.mrf.mxu0
        %2550 = vmatprep.mubr.f32.mxu0 0.0
        %2551 = vmatmul.mubr.f32.gmra.mxu0 %v2451
        %v2552 = vpop.f32.mrf.mxu0
        %v2553 = vadd.f32 0.0, %v2552
        %v2554 = vpop.f32.mrf.mxu0
        %2555 = vmatprep.mubr.f32.mxu0 0.0
        %2556 = vmatmul.mubr.f32.gmra.mxu0 %v2454
        %v2557 = vpop.f32.mrf.mxu0
        %v2558 = vadd.f32 0.0, %v2557
        %v2559 = vpop.f32.mrf.mxu0
        %2560 = vdwg.mxu0
        %v2561 = vadd.f32 %v2414, %v2523
        %v2562 = vadd.f32 %v2415, %v2528
        %v2563 = vadd.f32 %v2416, %v2533
        %v2564 = vadd.f32 %v2417, %v2538
        %v2565 = vadd.f32 %v2418, %v2543
        %v2566 = vadd.f32 %v2419, %v2548
        %v2567 = vadd.f32 %v2420, %v2553
        %v2568 = vadd.f32 %v2421, %v2558
        %v2569 = vld [vmem:[%s2274 + $0x2] sm:$0xff]
        %v2570 = vld [vmem:[%s2274 + $0x12] sm:$0xff]
        %v2571 = vld [vmem:[%s2274 + $0x22] sm:$0xff]
        %v2572 = vld [vmem:[%s2274 + $0x32] sm:$0xff]
        %v2573 = vld [vmem:[%s2274 + $0x42] sm:$0xff]
        %v2574 = vld [vmem:[%s2274 + $0x52] sm:$0xff]
        %v2575 = vld [vmem:[%s2274 + $0x62] sm:$0xff]
        %v2576 = vld [vmem:[%s2274 + $0x72] sm:$0xff]
        %s2577 = scalar_lea.vmem %s3, 112
        %v2578 = vld [vmem:[%s2577] sm:$0xff]
        %v2580 = vsel %vm543, %v2569, 0
        %v2583 = vsel %vm543, %v2570, 0
        %v2586 = vsel %vm543, %v2571, 0
        %v2589 = vsel %vm543, %v2572, 0
        %v2592 = vsel %vm543, %v2573, 0
        %v2595 = vsel %vm543, %v2574, 0
        %v2598 = vsel %vm543, %v2575, 0
        %v2601 = vsel %vm543, %v2576, 0
        %2603 = vmatprep.subr.mxu0 0.0
        %2604 = vmatpush1.msra.mxu0 0.0
        %2605 = vmatprep.subr.mxu0 0.0
        %2606 = vmatpush1.msra.mxu0 0.0
        %2607 = vmatprep.subr.mxu0 0.0
        %2608 = vmatpush1.msra.mxu0 0.0
        %2609 = vmatprep.subr.mxu0 0.0
        %2610 = vmatpush1.msra.mxu0 0.0
        %2611 = vmatprep.subr.mxu0 0.0
        %2612 = vmatpush1.msra.mxu0 0.0
        %2613 = vmatprep.subr.mxu0 0.0
        %2614 = vmatpush1.msra.mxu0 0.0
        %2615 = vmatprep.subr.mxu0 0.0
        %2616 = vmatpush1.msra.mxu0 0.0
        %2617 = vmatprep.subr.mxu0 0.0
        %2618 = vmatpush1.msra.mxu0 0.0
        %2619 = vmatprep.subr.mxu0 0.0
        %2620 = vmatpush1.msra.mxu0 0.0
        %2621 = vmatprep.subr.mxu0 0.0
        %2622 = vmatpush1.msra.mxu0 0.0
        %2623 = vmatprep.subr.mxu0 0.0
        %2624 = vmatpush1.msra.mxu0 0.0
        %2625 = vmatprep.subr.mxu0 0.0
        %2626 = vmatpush1.msra.mxu0 0.0
        %2627 = vmatprep.subr.mxu0 0.0
        %2628 = vmatpush1.msra.mxu0 0.0
        %2629 = vmatprep.subr.mxu0 0.0
        %2630 = vmatpush1.msra.mxu0 0.0
        %2631 = vmatprep.subr.mxu0 0.0
        %2632 = vmatpush1.msra.mxu0 0.0
        %2633 = vmatprep.subr.mxu0 0.0
        %2634 = vmatpush1.msra.mxu0 %v2578
        %2635 = vmatprep.subr.mxu0 0.0
        %2636 = vmatpush2.msra.mxu0 0.0
        %2637 = vmatprep.subr.mxu0 0.0
        %2638 = vmatpush2.msra.mxu0 0.0
        %2639 = vmatprep.subr.mxu0 0.0
        %2640 = vmatpush2.msra.mxu0 0.0
        %2641 = vmatprep.subr.mxu0 0.0
        %2642 = vmatpush2.msra.mxu0 0.0
        %2643 = vmatprep.subr.mxu0 0.0
        %2644 = vmatpush2.msra.mxu0 0.0
        %2645 = vmatprep.subr.mxu0 0.0
        %2646 = vmatpush2.msra.mxu0 0.0
        %2647 = vmatprep.subr.mxu0 0.0
        %2648 = vmatpush2.msra.mxu0 0.0
        %2649 = vmatprep.subr.mxu0 0.0
        %2650 = vmatpush2.msra.mxu0 0.0
        %2651 = vmatprep.subr.mxu0 0.0
        %2652 = vmatpush2.msra.mxu0 0.0
        %2653 = vmatprep.subr.mxu0 0.0
        %2654 = vmatpush2.msra.mxu0 0.0
        %2655 = vmatprep.subr.mxu0 0.0
        %2656 = vmatpush2.msra.mxu0 0.0
        %2657 = vmatprep.subr.mxu0 0.0
        %2658 = vmatpush2.msra.mxu0 0.0
        %2659 = vmatprep.subr.mxu0 0.0
        %2660 = vmatpush2.msra.mxu0 0.0
        %2661 = vmatprep.subr.mxu0 0.0
        %2662 = vmatpush2.msra.mxu0 0.0
        %2663 = vmatprep.subr.mxu0 0.0
        %2664 = vmatpush2.msra.mxu0 0.0
        %2665 = vmatprep.subr.mxu0 0.0
        %2666 = vmatpush2.msra.mxu0 0.0
        %2667 = vmatprep.mubr.f32.mxu0 0.0
        %2668 = vmatmul.mubr.f32.gmra.mxu0 %v2580
        %v2669 = vpop.f32.mrf.mxu0
        %v2670 = vadd.f32 0.0, %v2669
        %v2671 = vpop.f32.mrf.mxu0
        %2672 = vmatprep.mubr.f32.mxu0 0.0
        %2673 = vmatmul.mubr.f32.gmra.mxu0 %v2583
        %v2674 = vpop.f32.mrf.mxu0
        %v2675 = vadd.f32 0.0, %v2674
        %v2676 = vpop.f32.mrf.mxu0
        %2677 = vmatprep.mubr.f32.mxu0 0.0
        %2678 = vmatmul.mubr.f32.gmra.mxu0 %v2586
        %v2679 = vpop.f32.mrf.mxu0
        %v2680 = vadd.f32 0.0, %v2679
        %v2681 = vpop.f32.mrf.mxu0
        %2682 = vmatprep.mubr.f32.mxu0 0.0
        %2683 = vmatmul.mubr.f32.gmra.mxu0 %v2589
        %v2684 = vpop.f32.mrf.mxu0
        %v2685 = vadd.f32 0.0, %v2684
        %v2686 = vpop.f32.mrf.mxu0
        %2687 = vmatprep.mubr.f32.mxu0 0.0
        %2688 = vmatmul.mubr.f32.gmra.mxu0 %v2592
        %v2689 = vpop.f32.mrf.mxu0
        %v2690 = vadd.f32 0.0, %v2689
        %v2691 = vpop.f32.mrf.mxu0
        %2692 = vmatprep.mubr.f32.mxu0 0.0
        %2693 = vmatmul.mubr.f32.gmra.mxu0 %v2595
        %v2694 = vpop.f32.mrf.mxu0
        %v2695 = vadd.f32 0.0, %v2694
        %v2696 = vpop.f32.mrf.mxu0
        %2697 = vmatprep.mubr.f32.mxu0 0.0
        %2698 = vmatmul.mubr.f32.gmra.mxu0 %v2598
        %v2699 = vpop.f32.mrf.mxu0
        %v2700 = vadd.f32 0.0, %v2699
        %v2701 = vpop.f32.mrf.mxu0
        %2702 = vmatprep.mubr.f32.mxu0 0.0
        %2703 = vmatmul.mubr.f32.gmra.mxu0 %v2601
        %v2704 = vpop.f32.mrf.mxu0
        %v2705 = vadd.f32 0.0, %v2704
        %v2706 = vpop.f32.mrf.mxu0
        %2707 = vdwg.mxu0
        %v2708 = vadd.f32 %v2561, %v2670
        %v2709 = vadd.f32 %v2562, %v2675
        %v2710 = vadd.f32 %v2563, %v2680
        %v2711 = vadd.f32 %v2564, %v2685
        %v2712 = vadd.f32 %v2565, %v2690
        %v2713 = vadd.f32 %v2566, %v2695
        %v2714 = vadd.f32 %v2567, %v2700
        %v2715 = vadd.f32 %v2568, %v2705
        %s2716 = scalar_lea.vmem %s420, 32
        %v2717 = vld [vmem:[%s2716] sm:$0xff]
        %v2718 = vld [vmem:[%s2716 + $0x10] sm:$0xff]
        %v2719 = vld [vmem:[%s2716 + $0x20] sm:$0xff]
        %v2720 = vld [vmem:[%s2716 + $0x30] sm:$0xff]
        %v2721 = vld [vmem:[%s2716 + $0x40] sm:$0xff]
        %v2722 = vld [vmem:[%s2716 + $0x50] sm:$0xff]
        %v2723 = vld [vmem:[%s2716 + $0x60] sm:$0xff]
        %v2724 = vld [vmem:[%s2716 + $0x70] sm:$0xff]
        %s2725 = scalar_lea.vmem %s3, 120
        %v2726 = vld [vmem:[%s2725] sm:$0xff]
        %v2728 = vsel %vm543, %v2717, 0
        %v2731 = vsel %vm543, %v2718, 0
        %v2734 = vsel %vm543, %v2719, 0
        %v2737 = vsel %vm543, %v2720, 0
        %v2740 = vsel %vm543, %v2721, 0
        %v2743 = vsel %vm543, %v2722, 0
        %v2746 = vsel %vm543, %v2723, 0
        %v2749 = vsel %vm543, %v2724, 0
        %2751 = vmatprep.subr.mxu0 0.0
        %2752 = vmatpush1.msra.mxu0 0.0
        %2753 = vmatprep.subr.mxu0 0.0
        %2754 = vmatpush1.msra.mxu0 0.0
        %2755 = vmatprep.subr.mxu0 0.0
        %2756 = vmatpush1.msra.mxu0 0.0
        %2757 = vmatprep.subr.mxu0 0.0
        %2758 = vmatpush1.msra.mxu0 0.0
        %2759 = vmatprep.subr.mxu0 0.0
        %2760 = vmatpush1.msra.mxu0 0.0
        %2761 = vmatprep.subr.mxu0 0.0
        %2762 = vmatpush1.msra.mxu0 0.0
        %2763 = vmatprep.subr.mxu0 0.0
        %2764 = vmatpush1.msra.mxu0 0.0
        %2765 = vmatprep.subr.mxu0 0.0
        %2766 = vmatpush1.msra.mxu0 0.0
        %2767 = vmatprep.subr.mxu0 0.0
        %2768 = vmatpush1.msra.mxu0 0.0
        %2769 = vmatprep.subr.mxu0 0.0
        %2770 = vmatpush1.msra.mxu0 0.0
        %2771 = vmatprep.subr.mxu0 0.0
        %2772 = vmatpush1.msra.mxu0 0.0
        %2773 = vmatprep.subr.mxu0 0.0
        %2774 = vmatpush1.msra.mxu0 0.0
        %2775 = vmatprep.subr.mxu0 0.0
        %2776 = vmatpush1.msra.mxu0 0.0
        %2777 = vmatprep.subr.mxu0 0.0
        %2778 = vmatpush1.msra.mxu0 0.0
        %2779 = vmatprep.subr.mxu0 0.0
        %2780 = vmatpush1.msra.mxu0 0.0
        %2781 = vmatprep.subr.mxu0 0.0
        %2782 = vmatpush1.msra.mxu0 %v2726
        %2783 = vmatprep.subr.mxu0 0.0
        %2784 = vmatpush2.msra.mxu0 0.0
        %2785 = vmatprep.subr.mxu0 0.0
        %2786 = vmatpush2.msra.mxu0 0.0
        %2787 = vmatprep.subr.mxu0 0.0
        %2788 = vmatpush2.msra.mxu0 0.0
        %2789 = vmatprep.subr.mxu0 0.0
        %2790 = vmatpush2.msra.mxu0 0.0
        %2791 = vmatprep.subr.mxu0 0.0
        %2792 = vmatpush2.msra.mxu0 0.0
        %2793 = vmatprep.subr.mxu0 0.0
        %2794 = vmatpush2.msra.mxu0 0.0
        %2795 = vmatprep.subr.mxu0 0.0
        %2796 = vmatpush2.msra.mxu0 0.0
        %2797 = vmatprep.subr.mxu0 0.0
        %2798 = vmatpush2.msra.mxu0 0.0
        %2799 = vmatprep.subr.mxu0 0.0
        %2800 = vmatpush2.msra.mxu0 0.0
        %2801 = vmatprep.subr.mxu0 0.0
        %2802 = vmatpush2.msra.mxu0 0.0
        %2803 = vmatprep.subr.mxu0 0.0
        %2804 = vmatpush2.msra.mxu0 0.0
        %2805 = vmatprep.subr.mxu0 0.0
        %2806 = vmatpush2.msra.mxu0 0.0
        %2807 = vmatprep.subr.mxu0 0.0
        %2808 = vmatpush2.msra.mxu0 0.0
        %2809 = vmatprep.subr.mxu0 0.0
        %2810 = vmatpush2.msra.mxu0 0.0
        %2811 = vmatprep.subr.mxu0 0.0
        %2812 = vmatpush2.msra.mxu0 0.0
        %2813 = vmatprep.subr.mxu0 0.0
        %2814 = vmatpush2.msra.mxu0 0.0
        %2815 = vmatprep.mubr.f32.mxu0 0.0
        %2816 = vmatmul.mubr.f32.gmra.mxu0 %v2728
        %v2817 = vpop.f32.mrf.mxu0
        %v2818 = vadd.f32 0.0, %v2817
        %v2819 = vpop.f32.mrf.mxu0
        %2820 = vmatprep.mubr.f32.mxu0 0.0
        %2821 = vmatmul.mubr.f32.gmra.mxu0 %v2731
        %v2822 = vpop.f32.mrf.mxu0
        %v2823 = vadd.f32 0.0, %v2822
        %v2824 = vpop.f32.mrf.mxu0
        %2825 = vmatprep.mubr.f32.mxu0 0.0
        %2826 = vmatmul.mubr.f32.gmra.mxu0 %v2734
        %v2827 = vpop.f32.mrf.mxu0
        %v2828 = vadd.f32 0.0, %v2827
        %v2829 = vpop.f32.mrf.mxu0
        %2830 = vmatprep.mubr.f32.mxu0 0.0
        %2831 = vmatmul.mubr.f32.gmra.mxu0 %v2737
        %v2832 = vpop.f32.mrf.mxu0
        %v2833 = vadd.f32 0.0, %v2832
        %v2834 = vpop.f32.mrf.mxu0
        %2835 = vmatprep.mubr.f32.mxu0 0.0
        %2836 = vmatmul.mubr.f32.gmra.mxu0 %v2740
        %v2837 = vpop.f32.mrf.mxu0
        %v2838 = vadd.f32 0.0, %v2837
        %v2839 = vpop.f32.mrf.mxu0
        %2840 = vmatprep.mubr.f32.mxu0 0.0
        %2841 = vmatmul.mubr.f32.gmra.mxu0 %v2743
        %v2842 = vpop.f32.mrf.mxu0
        %v2843 = vadd.f32 0.0, %v2842
        %v2844 = vpop.f32.mrf.mxu0
        %2845 = vmatprep.mubr.f32.mxu0 0.0
        %2846 = vmatmul.mubr.f32.gmra.mxu0 %v2746
        %v2847 = vpop.f32.mrf.mxu0
        %v2848 = vadd.f32 0.0, %v2847
        %v2849 = vpop.f32.mrf.mxu0
        %2850 = vmatprep.mubr.f32.mxu0 0.0
        %2851 = vmatmul.mubr.f32.gmra.mxu0 %v2749
        %v2852 = vpop.f32.mrf.mxu0
        %v2853 = vadd.f32 0.0, %v2852
        %v2854 = vpop.f32.mrf.mxu0
        %2855 = vdwg.mxu0
        %v2856 = vadd.f32 %v2708, %v2818
        %v2857 = vadd.f32 %v2709, %v2823
        %v2858 = vadd.f32 %v2710, %v2828
        %v2859 = vadd.f32 %v2711, %v2833
        %v2860 = vadd.f32 %v2712, %v2838
        %v2861 = vadd.f32 %v2713, %v2843
        %v2862 = vadd.f32 %v2714, %v2848
        %v2863 = vadd.f32 %v2715, %v2853
        %v2864 = vld [vmem:[%s2716 + $0x1] sm:$0xff]
        %v2865 = vld [vmem:[%s2716 + $0x11] sm:$0xff]
        %v2866 = vld [vmem:[%s2716 + $0x21] sm:$0xff]
        %v2867 = vld [vmem:[%s2716 + $0x31] sm:$0xff]
        %v2868 = vld [vmem:[%s2716 + $0x41] sm:$0xff]
        %v2869 = vld [vmem:[%s2716 + $0x51] sm:$0xff]
        %v2870 = vld [vmem:[%s2716 + $0x61] sm:$0xff]
        %v2871 = vld [vmem:[%s2716 + $0x71] sm:$0xff]
        %s2872 = scalar_lea.vmem %s3, 128
        %v2873 = vld [vmem:[%s2872] sm:$0xff]
        %v2875 = vsel %vm543, %v2864, 0
        %v2878 = vsel %vm543, %v2865, 0
        %v2881 = vsel %vm543, %v2866, 0
        %v2884 = vsel %vm543, %v2867, 0
        %v2887 = vsel %vm543, %v2868, 0
        %v2890 = vsel %vm543, %v2869, 0
        %v2893 = vsel %vm543, %v2870, 0
        %v2896 = vsel %vm543, %v2871, 0
        %2898 = vmatprep.subr.mxu0 0.0
        %2899 = vmatpush1.msra.mxu0 0.0
        %2900 = vmatprep.subr.mxu0 0.0
        %2901 = vmatpush1.msra.mxu0 0.0
        %2902 = vmatprep.subr.mxu0 0.0
        %2903 = vmatpush1.msra.mxu0 0.0
        %2904 = vmatprep.subr.mxu0 0.0
        %2905 = vmatpush1.msra.mxu0 0.0
        %2906 = vmatprep.subr.mxu0 0.0
        %2907 = vmatpush1.msra.mxu0 0.0
        %2908 = vmatprep.subr.mxu0 0.0
        %2909 = vmatpush1.msra.mxu0 0.0
        %2910 = vmatprep.subr.mxu0 0.0
        %2911 = vmatpush1.msra.mxu0 0.0
        %2912 = vmatprep.subr.mxu0 0.0
        %2913 = vmatpush1.msra.mxu0 0.0
        %2914 = vmatprep.subr.mxu0 0.0
        %2915 = vmatpush1.msra.mxu0 0.0
        %2916 = vmatprep.subr.mxu0 0.0
        %2917 = vmatpush1.msra.mxu0 0.0
        %2918 = vmatprep.subr.mxu0 0.0
        %2919 = vmatpush1.msra.mxu0 0.0
        %2920 = vmatprep.subr.mxu0 0.0
        %2921 = vmatpush1.msra.mxu0 0.0
        %2922 = vmatprep.subr.mxu0 0.0
        %2923 = vmatpush1.msra.mxu0 0.0
        %2924 = vmatprep.subr.mxu0 0.0
        %2925 = vmatpush1.msra.mxu0 0.0
        %2926 = vmatprep.subr.mxu0 0.0
        %2927 = vmatpush1.msra.mxu0 0.0
        %2928 = vmatprep.subr.mxu0 0.0
        %2929 = vmatpush1.msra.mxu0 %v2873
        %2930 = vmatprep.subr.mxu0 0.0
        %2931 = vmatpush2.msra.mxu0 0.0
        %2932 = vmatprep.subr.mxu0 0.0
        %2933 = vmatpush2.msra.mxu0 0.0
        %2934 = vmatprep.subr.mxu0 0.0
        %2935 = vmatpush2.msra.mxu0 0.0
        %2936 = vmatprep.subr.mxu0 0.0
        %2937 = vmatpush2.msra.mxu0 0.0
        %2938 = vmatprep.subr.mxu0 0.0
        %2939 = vmatpush2.msra.mxu0 0.0
        %2940 = vmatprep.subr.mxu0 0.0
        %2941 = vmatpush2.msra.mxu0 0.0
        %2942 = vmatprep.subr.mxu0 0.0
        %2943 = vmatpush2.msra.mxu0 0.0
        %2944 = vmatprep.subr.mxu0 0.0
        %2945 = vmatpush2.msra.mxu0 0.0
        %2946 = vmatprep.subr.mxu0 0.0
        %2947 = vmatpush2.msra.mxu0 0.0
        %2948 = vmatprep.subr.mxu0 0.0
        %2949 = vmatpush2.msra.mxu0 0.0
        %2950 = vmatprep.subr.mxu0 0.0
        %2951 = vmatpush2.msra.mxu0 0.0
        %2952 = vmatprep.subr.mxu0 0.0
        %2953 = vmatpush2.msra.mxu0 0.0
        %2954 = vmatprep.subr.mxu0 0.0
        %2955 = vmatpush2.msra.mxu0 0.0
        %2956 = vmatprep.subr.mxu0 0.0
        %2957 = vmatpush2.msra.mxu0 0.0
        %2958 = vmatprep.subr.mxu0 0.0
        %2959 = vmatpush2.msra.mxu0 0.0
        %2960 = vmatprep.subr.mxu0 0.0
        %2961 = vmatpush2.msra.mxu0 0.0
        %2962 = vmatprep.mubr.f32.mxu0 0.0
        %2963 = vmatmul.mubr.f32.gmra.mxu0 %v2875
        %v2964 = vpop.f32.mrf.mxu0
        %v2965 = vadd.f32 0.0, %v2964
        %v2966 = vpop.f32.mrf.mxu0
        %2967 = vmatprep.mubr.f32.mxu0 0.0
        %2968 = vmatmul.mubr.f32.gmra.mxu0 %v2878
        %v2969 = vpop.f32.mrf.mxu0
        %v2970 = vadd.f32 0.0, %v2969
        %v2971 = vpop.f32.mrf.mxu0
        %2972 = vmatprep.mubr.f32.mxu0 0.0
        %2973 = vmatmul.mubr.f32.gmra.mxu0 %v2881
        %v2974 = vpop.f32.mrf.mxu0
        %v2975 = vadd.f32 0.0, %v2974
        %v2976 = vpop.f32.mrf.mxu0
        %2977 = vmatprep.mubr.f32.mxu0 0.0
        %2978 = vmatmul.mubr.f32.gmra.mxu0 %v2884
        %v2979 = vpop.f32.mrf.mxu0
        %v2980 = vadd.f32 0.0, %v2979
        %v2981 = vpop.f32.mrf.mxu0
        %2982 = vmatprep.mubr.f32.mxu0 0.0
        %2983 = vmatmul.mubr.f32.gmra.mxu0 %v2887
        %v2984 = vpop.f32.mrf.mxu0
        %v2985 = vadd.f32 0.0, %v2984
        %v2986 = vpop.f32.mrf.mxu0
        %2987 = vmatprep.mubr.f32.mxu0 0.0
        %2988 = vmatmul.mubr.f32.gmra.mxu0 %v2890
        %v2989 = vpop.f32.mrf.mxu0
        %v2990 = vadd.f32 0.0, %v2989
        %v2991 = vpop.f32.mrf.mxu0
        %2992 = vmatprep.mubr.f32.mxu0 0.0
        %2993 = vmatmul.mubr.f32.gmra.mxu0 %v2893
        %v2994 = vpop.f32.mrf.mxu0
        %v2995 = vadd.f32 0.0, %v2994
        %v2996 = vpop.f32.mrf.mxu0
        %2997 = vmatprep.mubr.f32.mxu0 0.0
        %2998 = vmatmul.mubr.f32.gmra.mxu0 %v2896
        %v2999 = vpop.f32.mrf.mxu0
        %v3000 = vadd.f32 0.0, %v2999
        %v3001 = vpop.f32.mrf.mxu0
        %3002 = vdwg.mxu0
        %v3003 = vadd.f32 %v2856, %v2965
        %v3004 = vadd.f32 %v2857, %v2970
        %v3005 = vadd.f32 %v2858, %v2975
        %v3006 = vadd.f32 %v2859, %v2980
        %v3007 = vadd.f32 %v2860, %v2985
        %v3008 = vadd.f32 %v2861, %v2990
        %v3009 = vadd.f32 %v2862, %v2995
        %v3010 = vadd.f32 %v2863, %v3000
        %v3011 = vld [vmem:[%s2716 + $0x2] sm:$0xff]
        %v3012 = vld [vmem:[%s2716 + $0x12] sm:$0xff]
        %v3013 = vld [vmem:[%s2716 + $0x22] sm:$0xff]
        %v3014 = vld [vmem:[%s2716 + $0x32] sm:$0xff]
        %v3015 = vld [vmem:[%s2716 + $0x42] sm:$0xff]
        %v3016 = vld [vmem:[%s2716 + $0x52] sm:$0xff]
        %v3017 = vld [vmem:[%s2716 + $0x62] sm:$0xff]
        %v3018 = vld [vmem:[%s2716 + $0x72] sm:$0xff]
        %s3019 = scalar_lea.vmem %s3, 136
        %v3020 = vld [vmem:[%s3019] sm:$0xff]
        %v3022 = vsel %vm543, %v3011, 0
        %v3025 = vsel %vm543, %v3012, 0
        %v3028 = vsel %vm543, %v3013, 0
        %v3031 = vsel %vm543, %v3014, 0
        %v3034 = vsel %vm543, %v3015, 0
        %v3037 = vsel %vm543, %v3016, 0
        %v3040 = vsel %vm543, %v3017, 0
        %v3043 = vsel %vm543, %v3018, 0
        %3045 = vmatprep.subr.mxu0 0.0
        %3046 = vmatpush1.msra.mxu0 0.0
        %3047 = vmatprep.subr.mxu0 0.0
        %3048 = vmatpush1.msra.mxu0 0.0
        %3049 = vmatprep.subr.mxu0 0.0
        %3050 = vmatpush1.msra.mxu0 0.0
        %3051 = vmatprep.subr.mxu0 0.0
        %3052 = vmatpush1.msra.mxu0 0.0
        %3053 = vmatprep.subr.mxu0 0.0
        %3054 = vmatpush1.msra.mxu0 0.0
        %3055 = vmatprep.subr.mxu0 0.0
        %3056 = vmatpush1.msra.mxu0 0.0
        %3057 = vmatprep.subr.mxu0 0.0
        %3058 = vmatpush1.msra.mxu0 0.0
        %3059 = vmatprep.subr.mxu0 0.0
        %3060 = vmatpush1.msra.mxu0 0.0
        %3061 = vmatprep.subr.mxu0 0.0
        %3062 = vmatpush1.msra.mxu0 0.0
        %3063 = vmatprep.subr.mxu0 0.0
        %3064 = vmatpush1.msra.mxu0 0.0
        %3065 = vmatprep.subr.mxu0 0.0
        %3066 = vmatpush1.msra.mxu0 0.0
        %3067 = vmatprep.subr.mxu0 0.0
        %3068 = vmatpush1.msra.mxu0 0.0
        %3069 = vmatprep.subr.mxu0 0.0
        %3070 = vmatpush1.msra.mxu0 0.0
        %3071 = vmatprep.subr.mxu0 0.0
        %3072 = vmatpush1.msra.mxu0 0.0
        %3073 = vmatprep.subr.mxu0 0.0
        %3074 = vmatpush1.msra.mxu0 0.0
        %3075 = vmatprep.subr.mxu0 0.0
        %3076 = vmatpush1.msra.mxu0 %v3020
        %3077 = vmatprep.subr.mxu0 0.0
        %3078 = vmatpush2.msra.mxu0 0.0
        %3079 = vmatprep.subr.mxu0 0.0
        %3080 = vmatpush2.msra.mxu0 0.0
        %3081 = vmatprep.subr.mxu0 0.0
        %3082 = vmatpush2.msra.mxu0 0.0
        %3083 = vmatprep.subr.mxu0 0.0
        %3084 = vmatpush2.msra.mxu0 0.0
        %3085 = vmatprep.subr.mxu0 0.0
        %3086 = vmatpush2.msra.mxu0 0.0
        %3087 = vmatprep.subr.mxu0 0.0
        %3088 = vmatpush2.msra.mxu0 0.0
        %3089 = vmatprep.subr.mxu0 0.0
        %3090 = vmatpush2.msra.mxu0 0.0
        %3091 = vmatprep.subr.mxu0 0.0
        %3092 = vmatpush2.msra.mxu0 0.0
        %3093 = vmatprep.subr.mxu0 0.0
        %3094 = vmatpush2.msra.mxu0 0.0
        %3095 = vmatprep.subr.mxu0 0.0
        %3096 = vmatpush2.msra.mxu0 0.0
        %3097 = vmatprep.subr.mxu0 0.0
        %3098 = vmatpush2.msra.mxu0 0.0
        %3099 = vmatprep.subr.mxu0 0.0
        %3100 = vmatpush2.msra.mxu0 0.0
        %3101 = vmatprep.subr.mxu0 0.0
        %3102 = vmatpush2.msra.mxu0 0.0
        %3103 = vmatprep.subr.mxu0 0.0
        %3104 = vmatpush2.msra.mxu0 0.0
        %3105 = vmatprep.subr.mxu0 0.0
        %3106 = vmatpush2.msra.mxu0 0.0
        %3107 = vmatprep.subr.mxu0 0.0
        %3108 = vmatpush2.msra.mxu0 0.0
        %3109 = vmatprep.mubr.f32.mxu0 0.0
        %3110 = vmatmul.mubr.f32.gmra.mxu0 %v3022
        %v3111 = vpop.f32.mrf.mxu0
        %v3112 = vadd.f32 0.0, %v3111
        %v3113 = vpop.f32.mrf.mxu0
        %3114 = vmatprep.mubr.f32.mxu0 0.0
        %3115 = vmatmul.mubr.f32.gmra.mxu0 %v3025
        %v3116 = vpop.f32.mrf.mxu0
        %v3117 = vadd.f32 0.0, %v3116
        %v3118 = vpop.f32.mrf.mxu0
        %3119 = vmatprep.mubr.f32.mxu0 0.0
        %3120 = vmatmul.mubr.f32.gmra.mxu0 %v3028
        %v3121 = vpop.f32.mrf.mxu0
        %v3122 = vadd.f32 0.0, %v3121
        %v3123 = vpop.f32.mrf.mxu0
        %3124 = vmatprep.mubr.f32.mxu0 0.0
        %3125 = vmatmul.mubr.f32.gmra.mxu0 %v3031
        %v3126 = vpop.f32.mrf.mxu0
        %v3127 = vadd.f32 0.0, %v3126
        %v3128 = vpop.f32.mrf.mxu0
        %3129 = vmatprep.mubr.f32.mxu0 0.0
        %3130 = vmatmul.mubr.f32.gmra.mxu0 %v3034
        %v3131 = vpop.f32.mrf.mxu0
        %v3132 = vadd.f32 0.0, %v3131
        %v3133 = vpop.f32.mrf.mxu0
        %3134 = vmatprep.mubr.f32.mxu0 0.0
        %3135 = vmatmul.mubr.f32.gmra.mxu0 %v3037
        %v3136 = vpop.f32.mrf.mxu0
        %v3137 = vadd.f32 0.0, %v3136
        %v3138 = vpop.f32.mrf.mxu0
        %3139 = vmatprep.mubr.f32.mxu0 0.0
        %3140 = vmatmul.mubr.f32.gmra.mxu0 %v3040
        %v3141 = vpop.f32.mrf.mxu0
        %v3142 = vadd.f32 0.0, %v3141
        %v3143 = vpop.f32.mrf.mxu0
        %3144 = vmatprep.mubr.f32.mxu0 0.0
        %3145 = vmatmul.mubr.f32.gmra.mxu0 %v3043
        %v3146 = vpop.f32.mrf.mxu0
        %v3147 = vadd.f32 0.0, %v3146
        %v3148 = vpop.f32.mrf.mxu0
        %3149 = vdwg.mxu0
        %v3150 = vadd.f32 %v3003, %v3112
        %v3151 = vadd.f32 %v3004, %v3117
        %v3152 = vadd.f32 %v3005, %v3122
        %v3153 = vadd.f32 %v3006, %v3127
        %v3154 = vadd.f32 %v3007, %v3132
        %v3155 = vadd.f32 %v3008, %v3137
        %v3156 = vadd.f32 %v3009, %v3142
        %v3157 = vadd.f32 %v3010, %v3147
        %v3158 = vld [vmem:[%s435] sm:$0xff]
        %v3159 = vld [vmem:[%s435 + $0x10] sm:$0xff]
        %v3160 = vld [vmem:[%s435 + $0x20] sm:$0xff]
        %v3161 = vld [vmem:[%s435 + $0x30] sm:$0xff]
        %v3162 = vld [vmem:[%s435 + $0x40] sm:$0xff]
        %v3163 = vld [vmem:[%s435 + $0x50] sm:$0xff]
        %v3164 = vld [vmem:[%s435 + $0x60] sm:$0xff]
        %v3165 = vld [vmem:[%s435 + $0x70] sm:$0xff]
        %s3166 = scalar_lea.vmem %s3, 144
        %v3167 = vld [vmem:[%s3166] sm:$0xff]
        %v3169 = vsel %vm543, %v3158, 0
        %v3172 = vsel %vm543, %v3159, 0
        %v3175 = vsel %vm543, %v3160, 0
        %v3178 = vsel %vm543, %v3161, 0
        %v3181 = vsel %vm543, %v3162, 0
        %v3184 = vsel %vm543, %v3163, 0
        %v3187 = vsel %vm543, %v3164, 0
        %v3190 = vsel %vm543, %v3165, 0
        %3192 = vmatprep.subr.mxu0 0.0
        %3193 = vmatpush1.msra.mxu0 0.0
        %3194 = vmatprep.subr.mxu0 0.0
        %3195 = vmatpush1.msra.mxu0 0.0
        %3196 = vmatprep.subr.mxu0 0.0
        %3197 = vmatpush1.msra.mxu0 0.0
        %3198 = vmatprep.subr.mxu0 0.0
        %3199 = vmatpush1.msra.mxu0 0.0
        %3200 = vmatprep.subr.mxu0 0.0
        %3201 = vmatpush1.msra.mxu0 0.0
        %3202 = vmatprep.subr.mxu0 0.0
        %3203 = vmatpush1.msra.mxu0 0.0
        %3204 = vmatprep.subr.mxu0 0.0
        %3205 = vmatpush1.msra.mxu0 0.0
        %3206 = vmatprep.subr.mxu0 0.0
        %3207 = vmatpush1.msra.mxu0 0.0
        %3208 = vmatprep.subr.mxu0 0.0
        %3209 = vmatpush1.msra.mxu0 0.0
        %3210 = vmatprep.subr.mxu0 0.0
        %3211 = vmatpush1.msra.mxu0 0.0
        %3212 = vmatprep.subr.mxu0 0.0
        %3213 = vmatpush1.msra.mxu0 0.0
        %3214 = vmatprep.subr.mxu0 0.0
        %3215 = vmatpush1.msra.mxu0 0.0
        %3216 = vmatprep.subr.mxu0 0.0
        %3217 = vmatpush1.msra.mxu0 0.0
        %3218 = vmatprep.subr.mxu0 0.0
        %3219 = vmatpush1.msra.mxu0 0.0
        %3220 = vmatprep.subr.mxu0 0.0
        %3221 = vmatpush1.msra.mxu0 0.0
        %3222 = vmatprep.subr.mxu0 0.0
        %3223 = vmatpush1.msra.mxu0 %v3167
        %3224 = vmatprep.subr.mxu0 0.0
        %3225 = vmatpush2.msra.mxu0 0.0
        %3226 = vmatprep.subr.mxu0 0.0
        %3227 = vmatpush2.msra.mxu0 0.0
        %3228 = vmatprep.subr.mxu0 0.0
        %3229 = vmatpush2.msra.mxu0 0.0
        %3230 = vmatprep.subr.mxu0 0.0
        %3231 = vmatpush2.msra.mxu0 0.0
        %3232 = vmatprep.subr.mxu0 0.0
        %3233 = vmatpush2.msra.mxu0 0.0
        %3234 = vmatprep.subr.mxu0 0.0
        %3235 = vmatpush2.msra.mxu0 0.0
        %3236 = vmatprep.subr.mxu0 0.0
        %3237 = vmatpush2.msra.mxu0 0.0
        %3238 = vmatprep.subr.mxu0 0.0
        %3239 = vmatpush2.msra.mxu0 0.0
        %3240 = vmatprep.subr.mxu0 0.0
        %3241 = vmatpush2.msra.mxu0 0.0
        %3242 = vmatprep.subr.mxu0 0.0
        %3243 = vmatpush2.msra.mxu0 0.0
        %3244 = vmatprep.subr.mxu0 0.0
        %3245 = vmatpush2.msra.mxu0 0.0
        %3246 = vmatprep.subr.mxu0 0.0
        %3247 = vmatpush2.msra.mxu0 0.0
        %3248 = vmatprep.subr.mxu0 0.0
        %3249 = vmatpush2.msra.mxu0 0.0
        %3250 = vmatprep.subr.mxu0 0.0
        %3251 = vmatpush2.msra.mxu0 0.0
        %3252 = vmatprep.subr.mxu0 0.0
        %3253 = vmatpush2.msra.mxu0 0.0
        %3254 = vmatprep.subr.mxu0 0.0
        %3255 = vmatpush2.msra.mxu0 0.0
        %3256 = vmatprep.mubr.f32.mxu0 0.0
        %3257 = vmatmul.mubr.f32.gmra.mxu0 %v3169
        %v3258 = vpop.f32.mrf.mxu0
        %v3259 = vadd.f32 0.0, %v3258
        %v3260 = vpop.f32.mrf.mxu0
        %3261 = vmatprep.mubr.f32.mxu0 0.0
        %3262 = vmatmul.mubr.f32.gmra.mxu0 %v3172
        %v3263 = vpop.f32.mrf.mxu0
        %v3264 = vadd.f32 0.0, %v3263
        %v3265 = vpop.f32.mrf.mxu0
        %3266 = vmatprep.mubr.f32.mxu0 0.0
        %3267 = vmatmul.mubr.f32.gmra.mxu0 %v3175
        %v3268 = vpop.f32.mrf.mxu0
        %v3269 = vadd.f32 0.0, %v3268
        %v3270 = vpop.f32.mrf.mxu0
        %3271 = vmatprep.mubr.f32.mxu0 0.0
        %3272 = vmatmul.mubr.f32.gmra.mxu0 %v3178
        %v3273 = vpop.f32.mrf.mxu0
        %v3274 = vadd.f32 0.0, %v3273
        %v3275 = vpop.f32.mrf.mxu0
        %3276 = vmatprep.mubr.f32.mxu0 0.0
        %3277 = vmatmul.mubr.f32.gmra.mxu0 %v3181
        %v3278 = vpop.f32.mrf.mxu0
        %v3279 = vadd.f32 0.0, %v3278
        %v3280 = vpop.f32.mrf.mxu0
        %3281 = vmatprep.mubr.f32.mxu0 0.0
        %3282 = vmatmul.mubr.f32.gmra.mxu0 %v3184
        %v3283 = vpop.f32.mrf.mxu0
        %v3284 = vadd.f32 0.0, %v3283
        %v3285 = vpop.f32.mrf.mxu0
        %3286 = vmatprep.mubr.f32.mxu0 0.0
        %3287 = vmatmul.mubr.f32.gmra.mxu0 %v3187
        %v3288 = vpop.f32.mrf.mxu0
        %v3289 = vadd.f32 0.0, %v3288
        %v3290 = vpop.f32.mrf.mxu0
        %3291 = vmatprep.mubr.f32.mxu0 0.0
        %3292 = vmatmul.mubr.f32.gmra.mxu0 %v3190
        %v3293 = vpop.f32.mrf.mxu0
        %v3294 = vadd.f32 0.0, %v3293
        %v3295 = vpop.f32.mrf.mxu0
        %3296 = vdwg.mxu0
        %v3297 = vadd.f32 %v3150, %v3259
        %v3298 = vadd.f32 %v3151, %v3264
        %v3299 = vadd.f32 %v3152, %v3269
        %v3300 = vadd.f32 %v3153, %v3274
        %v3301 = vadd.f32 %v3154, %v3279
        %v3302 = vadd.f32 %v3155, %v3284
        %v3303 = vadd.f32 %v3156, %v3289
        %v3304 = vadd.f32 %v3157, %v3294
        %v3305 = vld [vmem:[%s435 + $0x1] sm:$0xff]
        %v3306 = vld [vmem:[%s435 + $0x11] sm:$0xff]
        %v3307 = vld [vmem:[%s435 + $0x21] sm:$0xff]
        %v3308 = vld [vmem:[%s435 + $0x31] sm:$0xff]
        %v3309 = vld [vmem:[%s435 + $0x41] sm:$0xff]
        %v3310 = vld [vmem:[%s435 + $0x51] sm:$0xff]
        %v3311 = vld [vmem:[%s435 + $0x61] sm:$0xff]
        %v3312 = vld [vmem:[%s435 + $0x71] sm:$0xff]
        %s3313 = scalar_lea.vmem %s3, 152
        %v3314 = vld [vmem:[%s3313] sm:$0xff]
        %v3316 = vsel %vm543, %v3305, 0
        %v3319 = vsel %vm543, %v3306, 0
        %v3322 = vsel %vm543, %v3307, 0
        %v3325 = vsel %vm543, %v3308, 0
        %v3328 = vsel %vm543, %v3309, 0
        %v3331 = vsel %vm543, %v3310, 0
        %v3334 = vsel %vm543, %v3311, 0
        %v3337 = vsel %vm543, %v3312, 0
        %3339 = vmatprep.subr.mxu0 0.0
        %3340 = vmatpush1.msra.mxu0 0.0
        %3341 = vmatprep.subr.mxu0 0.0
        %3342 = vmatpush1.msra.mxu0 0.0
        %3343 = vmatprep.subr.mxu0 0.0
        %3344 = vmatpush1.msra.mxu0 0.0
        %3345 = vmatprep.subr.mxu0 0.0
        %3346 = vmatpush1.msra.mxu0 0.0
        %3347 = vmatprep.subr.mxu0 0.0
        %3348 = vmatpush1.msra.mxu0 0.0
        %3349 = vmatprep.subr.mxu0 0.0
        %3350 = vmatpush1.msra.mxu0 0.0
        %3351 = vmatprep.subr.mxu0 0.0
        %3352 = vmatpush1.msra.mxu0 0.0
        %3353 = vmatprep.subr.mxu0 0.0
        %3354 = vmatpush1.msra.mxu0 0.0
        %3355 = vmatprep.subr.mxu0 0.0
        %3356 = vmatpush1.msra.mxu0 0.0
        %3357 = vmatprep.subr.mxu0 0.0
        %3358 = vmatpush1.msra.mxu0 0.0
        %3359 = vmatprep.subr.mxu0 0.0
        %3360 = vmatpush1.msra.mxu0 0.0
        %3361 = vmatprep.subr.mxu0 0.0
        %3362 = vmatpush1.msra.mxu0 0.0
        %3363 = vmatprep.subr.mxu0 0.0
        %3364 = vmatpush1.msra.mxu0 0.0
        %3365 = vmatprep.subr.mxu0 0.0
        %3366 = vmatpush1.msra.mxu0 0.0
        %3367 = vmatprep.subr.mxu0 0.0
        %3368 = vmatpush1.msra.mxu0 0.0
        %3369 = vmatprep.subr.mxu0 0.0
        %3370 = vmatpush1.msra.mxu0 %v3314
        %3371 = vmatprep.subr.mxu0 0.0
        %3372 = vmatpush2.msra.mxu0 0.0
        %3373 = vmatprep.subr.mxu0 0.0
        %3374 = vmatpush2.msra.mxu0 0.0
        %3375 = vmatprep.subr.mxu0 0.0
        %3376 = vmatpush2.msra.mxu0 0.0
        %3377 = vmatprep.subr.mxu0 0.0
        %3378 = vmatpush2.msra.mxu0 0.0
        %3379 = vmatprep.subr.mxu0 0.0
        %3380 = vmatpush2.msra.mxu0 0.0
        %3381 = vmatprep.subr.mxu0 0.0
        %3382 = vmatpush2.msra.mxu0 0.0
        %3383 = vmatprep.subr.mxu0 0.0
        %3384 = vmatpush2.msra.mxu0 0.0
        %3385 = vmatprep.subr.mxu0 0.0
        %3386 = vmatpush2.msra.mxu0 0.0
        %3387 = vmatprep.subr.mxu0 0.0
        %3388 = vmatpush2.msra.mxu0 0.0
        %3389 = vmatprep.subr.mxu0 0.0
        %3390 = vmatpush2.msra.mxu0 0.0
        %3391 = vmatprep.subr.mxu0 0.0
        %3392 = vmatpush2.msra.mxu0 0.0
        %3393 = vmatprep.subr.mxu0 0.0
        %3394 = vmatpush2.msra.mxu0 0.0
        %3395 = vmatprep.subr.mxu0 0.0
        %3396 = vmatpush2.msra.mxu0 0.0
        %3397 = vmatprep.subr.mxu0 0.0
        %3398 = vmatpush2.msra.mxu0 0.0
        %3399 = vmatprep.subr.mxu0 0.0
        %3400 = vmatpush2.msra.mxu0 0.0
        %3401 = vmatprep.subr.mxu0 0.0
        %3402 = vmatpush2.msra.mxu0 0.0
        %3403 = vmatprep.mubr.f32.mxu0 0.0
        %3404 = vmatmul.mubr.f32.gmra.mxu0 %v3316
        %v3405 = vpop.f32.mrf.mxu0
        %v3406 = vadd.f32 0.0, %v3405
        %v3407 = vpop.f32.mrf.mxu0
        %3408 = vmatprep.mubr.f32.mxu0 0.0
        %3409 = vmatmul.mubr.f32.gmra.mxu0 %v3319
        %v3410 = vpop.f32.mrf.mxu0
        %v3411 = vadd.f32 0.0, %v3410
        %v3412 = vpop.f32.mrf.mxu0
        %3413 = vmatprep.mubr.f32.mxu0 0.0
        %3414 = vmatmul.mubr.f32.gmra.mxu0 %v3322
        %v3415 = vpop.f32.mrf.mxu0
        %v3416 = vadd.f32 0.0, %v3415
        %v3417 = vpop.f32.mrf.mxu0
        %3418 = vmatprep.mubr.f32.mxu0 0.0
        %3419 = vmatmul.mubr.f32.gmra.mxu0 %v3325
        %v3420 = vpop.f32.mrf.mxu0
        %v3421 = vadd.f32 0.0, %v3420
        %v3422 = vpop.f32.mrf.mxu0
        %3423 = vmatprep.mubr.f32.mxu0 0.0
        %3424 = vmatmul.mubr.f32.gmra.mxu0 %v3328
        %v3425 = vpop.f32.mrf.mxu0
        %v3426 = vadd.f32 0.0, %v3425
        %v3427 = vpop.f32.mrf.mxu0
        %3428 = vmatprep.mubr.f32.mxu0 0.0
        %3429 = vmatmul.mubr.f32.gmra.mxu0 %v3331
        %v3430 = vpop.f32.mrf.mxu0
        %v3431 = vadd.f32 0.0, %v3430
        %v3432 = vpop.f32.mrf.mxu0
        %3433 = vmatprep.mubr.f32.mxu0 0.0
        %3434 = vmatmul.mubr.f32.gmra.mxu0 %v3334
        %v3435 = vpop.f32.mrf.mxu0
        %v3436 = vadd.f32 0.0, %v3435
        %v3437 = vpop.f32.mrf.mxu0
        %3438 = vmatprep.mubr.f32.mxu0 0.0
        %3439 = vmatmul.mubr.f32.gmra.mxu0 %v3337
        %v3440 = vpop.f32.mrf.mxu0
        %v3441 = vadd.f32 0.0, %v3440
        %v3442 = vpop.f32.mrf.mxu0
        %3443 = vdwg.mxu0
        %v3444 = vadd.f32 %v3297, %v3406
        %v3445 = vadd.f32 %v3298, %v3411
        %v3446 = vadd.f32 %v3299, %v3416
        %v3447 = vadd.f32 %v3300, %v3421
        %v3448 = vadd.f32 %v3301, %v3426
        %v3449 = vadd.f32 %v3302, %v3431
        %v3450 = vadd.f32 %v3303, %v3436
        %v3451 = vadd.f32 %v3304, %v3441
        %v3452 = vld [vmem:[%s435 + $0x2] sm:$0xff]
        %v3453 = vld [vmem:[%s435 + $0x12] sm:$0xff]
        %v3454 = vld [vmem:[%s435 + $0x22] sm:$0xff]
        %v3455 = vld [vmem:[%s435 + $0x32] sm:$0xff]
        %v3456 = vld [vmem:[%s435 + $0x42] sm:$0xff]
        %v3457 = vld [vmem:[%s435 + $0x52] sm:$0xff]
        %v3458 = vld [vmem:[%s435 + $0x62] sm:$0xff]
        %v3459 = vld [vmem:[%s435 + $0x72] sm:$0xff]
        %s3460 = scalar_lea.vmem %s3, 160
        %v3461 = vld [vmem:[%s3460] sm:$0xff]
        %v3463 = vsel %vm543, %v3452, 0
        %v3466 = vsel %vm543, %v3453, 0
        %v3469 = vsel %vm543, %v3454, 0
        %v3472 = vsel %vm543, %v3455, 0
        %v3475 = vsel %vm543, %v3456, 0
        %v3478 = vsel %vm543, %v3457, 0
        %v3481 = vsel %vm543, %v3458, 0
        %v3484 = vsel %vm543, %v3459, 0
        %3486 = vmatprep.subr.mxu0 0.0
        %3487 = vmatpush1.msra.mxu0 0.0
        %3488 = vmatprep.subr.mxu0 0.0
        %3489 = vmatpush1.msra.mxu0 0.0
        %3490 = vmatprep.subr.mxu0 0.0
        %3491 = vmatpush1.msra.mxu0 0.0
        %3492 = vmatprep.subr.mxu0 0.0
        %3493 = vmatpush1.msra.mxu0 0.0
        %3494 = vmatprep.subr.mxu0 0.0
        %3495 = vmatpush1.msra.mxu0 0.0
        %3496 = vmatprep.subr.mxu0 0.0
        %3497 = vmatpush1.msra.mxu0 0.0
        %3498 = vmatprep.subr.mxu0 0.0
        %3499 = vmatpush1.msra.mxu0 0.0
        %3500 = vmatprep.subr.mxu0 0.0
        %3501 = vmatpush1.msra.mxu0 0.0
        %3502 = vmatprep.subr.mxu0 0.0
        %3503 = vmatpush1.msra.mxu0 0.0
        %3504 = vmatprep.subr.mxu0 0.0
        %3505 = vmatpush1.msra.mxu0 0.0
        %3506 = vmatprep.subr.mxu0 0.0
        %3507 = vmatpush1.msra.mxu0 0.0
        %3508 = vmatprep.subr.mxu0 0.0
        %3509 = vmatpush1.msra.mxu0 0.0
        %3510 = vmatprep.subr.mxu0 0.0
        %3511 = vmatpush1.msra.mxu0 0.0
        %3512 = vmatprep.subr.mxu0 0.0
        %3513 = vmatpush1.msra.mxu0 0.0
        %3514 = vmatprep.subr.mxu0 0.0
        %3515 = vmatpush1.msra.mxu0 0.0
        %3516 = vmatprep.subr.mxu0 0.0
        %3517 = vmatpush1.msra.mxu0 %v3461
        %3518 = vmatprep.subr.mxu0 0.0
        %3519 = vmatpush2.msra.mxu0 0.0
        %3520 = vmatprep.subr.mxu0 0.0
        %3521 = vmatpush2.msra.mxu0 0.0
        %3522 = vmatprep.subr.mxu0 0.0
        %3523 = vmatpush2.msra.mxu0 0.0
        %3524 = vmatprep.subr.mxu0 0.0
        %3525 = vmatpush2.msra.mxu0 0.0
        %3526 = vmatprep.subr.mxu0 0.0
        %3527 = vmatpush2.msra.mxu0 0.0
        %3528 = vmatprep.subr.mxu0 0.0
        %3529 = vmatpush2.msra.mxu0 0.0
        %3530 = vmatprep.subr.mxu0 0.0
        %3531 = vmatpush2.msra.mxu0 0.0
        %3532 = vmatprep.subr.mxu0 0.0
        %3533 = vmatpush2.msra.mxu0 0.0
        %3534 = vmatprep.subr.mxu0 0.0
        %3535 = vmatpush2.msra.mxu0 0.0
        %3536 = vmatprep.subr.mxu0 0.0
        %3537 = vmatpush2.msra.mxu0 0.0
        %3538 = vmatprep.subr.mxu0 0.0
        %3539 = vmatpush2.msra.mxu0 0.0
        %3540 = vmatprep.subr.mxu0 0.0
        %3541 = vmatpush2.msra.mxu0 0.0
        %3542 = vmatprep.subr.mxu0 0.0
        %3543 = vmatpush2.msra.mxu0 0.0
        %3544 = vmatprep.subr.mxu0 0.0
        %3545 = vmatpush2.msra.mxu0 0.0
        %3546 = vmatprep.subr.mxu0 0.0
        %3547 = vmatpush2.msra.mxu0 0.0
        %3548 = vmatprep.subr.mxu0 0.0
        %3549 = vmatpush2.msra.mxu0 0.0
        %3550 = vmatprep.mubr.f32.mxu0 0.0
        %3551 = vmatmul.mubr.f32.gmra.mxu0 %v3463
        %v3552 = vpop.f32.mrf.mxu0
        %v3553 = vadd.f32 0.0, %v3552
        %v3554 = vpop.f32.mrf.mxu0
        %3555 = vmatprep.mubr.f32.mxu0 0.0
        %3556 = vmatmul.mubr.f32.gmra.mxu0 %v3466
        %v3557 = vpop.f32.mrf.mxu0
        %v3558 = vadd.f32 0.0, %v3557
        %v3559 = vpop.f32.mrf.mxu0
        %3560 = vmatprep.mubr.f32.mxu0 0.0
        %3561 = vmatmul.mubr.f32.gmra.mxu0 %v3469
        %v3562 = vpop.f32.mrf.mxu0
        %v3563 = vadd.f32 0.0, %v3562
        %v3564 = vpop.f32.mrf.mxu0
        %3565 = vmatprep.mubr.f32.mxu0 0.0
        %3566 = vmatmul.mubr.f32.gmra.mxu0 %v3472
        %v3567 = vpop.f32.mrf.mxu0
        %v3568 = vadd.f32 0.0, %v3567
        %v3569 = vpop.f32.mrf.mxu0
        %3570 = vmatprep.mubr.f32.mxu0 0.0
        %3571 = vmatmul.mubr.f32.gmra.mxu0 %v3475
        %v3572 = vpop.f32.mrf.mxu0
        %v3573 = vadd.f32 0.0, %v3572
        %v3574 = vpop.f32.mrf.mxu0
        %3575 = vmatprep.mubr.f32.mxu0 0.0
        %3576 = vmatmul.mubr.f32.gmra.mxu0 %v3478
        %v3577 = vpop.f32.mrf.mxu0
        %v3578 = vadd.f32 0.0, %v3577
        %v3579 = vpop.f32.mrf.mxu0
        %3580 = vmatprep.mubr.f32.mxu0 0.0
        %3581 = vmatmul.mubr.f32.gmra.mxu0 %v3481
        %v3582 = vpop.f32.mrf.mxu0
        %v3583 = vadd.f32 0.0, %v3582
        %v3584 = vpop.f32.mrf.mxu0
        %3585 = vmatprep.mubr.f32.mxu0 0.0
        %3586 = vmatmul.mubr.f32.gmra.mxu0 %v3484
        %v3587 = vpop.f32.mrf.mxu0
        %v3588 = vadd.f32 0.0, %v3587
        %v3589 = vpop.f32.mrf.mxu0
        %3590 = vdwg.mxu0
        %v3591 = vadd.f32 %v3444, %v3553
        %v3592 = vadd.f32 %v3445, %v3558
        %v3593 = vadd.f32 %v3446, %v3563
        %v3594 = vadd.f32 %v3447, %v3568
        %v3595 = vadd.f32 %v3448, %v3573
        %v3596 = vadd.f32 %v3449, %v3578
        %v3597 = vadd.f32 %v3450, %v3583
        %v3598 = vadd.f32 %v3451, %v3588
        %s3599 = scalar_lea.vmem %s435, 16
        %v3600 = vld [vmem:[%s3599] sm:$0xff]
        %v3601 = vld [vmem:[%s3599 + $0x10] sm:$0xff]
        %v3602 = vld [vmem:[%s3599 + $0x20] sm:$0xff]
        %v3603 = vld [vmem:[%s3599 + $0x30] sm:$0xff]
        %v3604 = vld [vmem:[%s3599 + $0x40] sm:$0xff]
        %v3605 = vld [vmem:[%s3599 + $0x50] sm:$0xff]
        %v3606 = vld [vmem:[%s3599 + $0x60] sm:$0xff]
        %v3607 = vld [vmem:[%s3599 + $0x70] sm:$0xff]
        %s3608 = scalar_lea.vmem %s3, 168
        %v3609 = vld [vmem:[%s3608] sm:$0xff]
        %v3611 = vsel %vm543, %v3600, 0
        %v3614 = vsel %vm543, %v3601, 0
        %v3617 = vsel %vm543, %v3602, 0
        %v3620 = vsel %vm543, %v3603, 0
        %v3623 = vsel %vm543, %v3604, 0
        %v3626 = vsel %vm543, %v3605, 0
        %v3629 = vsel %vm543, %v3606, 0
        %v3632 = vsel %vm543, %v3607, 0
        %3634 = vmatprep.subr.mxu0 0.0
        %3635 = vmatpush1.msra.mxu0 0.0
        %3636 = vmatprep.subr.mxu0 0.0
        %3637 = vmatpush1.msra.mxu0 0.0
        %3638 = vmatprep.subr.mxu0 0.0
        %3639 = vmatpush1.msra.mxu0 0.0
        %3640 = vmatprep.subr.mxu0 0.0
        %3641 = vmatpush1.msra.mxu0 0.0
        %3642 = vmatprep.subr.mxu0 0.0
        %3643 = vmatpush1.msra.mxu0 0.0
        %3644 = vmatprep.subr.mxu0 0.0
        %3645 = vmatpush1.msra.mxu0 0.0
        %3646 = vmatprep.subr.mxu0 0.0
        %3647 = vmatpush1.msra.mxu0 0.0
        %3648 = vmatprep.subr.mxu0 0.0
        %3649 = vmatpush1.msra.mxu0 0.0
        %3650 = vmatprep.subr.mxu0 0.0
        %3651 = vmatpush1.msra.mxu0 0.0
        %3652 = vmatprep.subr.mxu0 0.0
        %3653 = vmatpush1.msra.mxu0 0.0
        %3654 = vmatprep.subr.mxu0 0.0
        %3655 = vmatpush1.msra.mxu0 0.0
        %3656 = vmatprep.subr.mxu0 0.0
        %3657 = vmatpush1.msra.mxu0 0.0
        %3658 = vmatprep.subr.mxu0 0.0
        %3659 = vmatpush1.msra.mxu0 0.0
        %3660 = vmatprep.subr.mxu0 0.0
        %3661 = vmatpush1.msra.mxu0 0.0
        %3662 = vmatprep.subr.mxu0 0.0
        %3663 = vmatpush1.msra.mxu0 0.0
        %3664 = vmatprep.subr.mxu0 0.0
        %3665 = vmatpush1.msra.mxu0 %v3609
        %3666 = vmatprep.subr.mxu0 0.0
        %3667 = vmatpush2.msra.mxu0 0.0
        %3668 = vmatprep.subr.mxu0 0.0
        %3669 = vmatpush2.msra.mxu0 0.0
        %3670 = vmatprep.subr.mxu0 0.0
        %3671 = vmatpush2.msra.mxu0 0.0
        %3672 = vmatprep.subr.mxu0 0.0
        %3673 = vmatpush2.msra.mxu0 0.0
        %3674 = vmatprep.subr.mxu0 0.0
        %3675 = vmatpush2.msra.mxu0 0.0
        %3676 = vmatprep.subr.mxu0 0.0
        %3677 = vmatpush2.msra.mxu0 0.0
        %3678 = vmatprep.subr.mxu0 0.0
        %3679 = vmatpush2.msra.mxu0 0.0
        %3680 = vmatprep.subr.mxu0 0.0
        %3681 = vmatpush2.msra.mxu0 0.0
        %3682 = vmatprep.subr.mxu0 0.0
        %3683 = vmatpush2.msra.mxu0 0.0
        %3684 = vmatprep.subr.mxu0 0.0
        %3685 = vmatpush2.msra.mxu0 0.0
        %3686 = vmatprep.subr.mxu0 0.0
        %3687 = vmatpush2.msra.mxu0 0.0
        %3688 = vmatprep.subr.mxu0 0.0
        %3689 = vmatpush2.msra.mxu0 0.0
        %3690 = vmatprep.subr.mxu0 0.0
        %3691 = vmatpush2.msra.mxu0 0.0
        %3692 = vmatprep.subr.mxu0 0.0
        %3693 = vmatpush2.msra.mxu0 0.0
        %3694 = vmatprep.subr.mxu0 0.0
        %3695 = vmatpush2.msra.mxu0 0.0
        %3696 = vmatprep.subr.mxu0 0.0
        %3697 = vmatpush2.msra.mxu0 0.0
        %3698 = vmatprep.mubr.f32.mxu0 0.0
        %3699 = vmatmul.mubr.f32.gmra.mxu0 %v3611
        %v3700 = vpop.f32.mrf.mxu0
        %v3701 = vadd.f32 0.0, %v3700
        %v3702 = vpop.f32.mrf.mxu0
        %3703 = vmatprep.mubr.f32.mxu0 0.0
        %3704 = vmatmul.mubr.f32.gmra.mxu0 %v3614
        %v3705 = vpop.f32.mrf.mxu0
        %v3706 = vadd.f32 0.0, %v3705
        %v3707 = vpop.f32.mrf.mxu0
        %3708 = vmatprep.mubr.f32.mxu0 0.0
        %3709 = vmatmul.mubr.f32.gmra.mxu0 %v3617
        %v3710 = vpop.f32.mrf.mxu0
        %v3711 = vadd.f32 0.0, %v3710
        %v3712 = vpop.f32.mrf.mxu0
        %3713 = vmatprep.mubr.f32.mxu0 0.0
        %3714 = vmatmul.mubr.f32.gmra.mxu0 %v3620
        %v3715 = vpop.f32.mrf.mxu0
        %v3716 = vadd.f32 0.0, %v3715
        %v3717 = vpop.f32.mrf.mxu0
        %3718 = vmatprep.mubr.f32.mxu0 0.0
        %3719 = vmatmul.mubr.f32.gmra.mxu0 %v3623
        %v3720 = vpop.f32.mrf.mxu0
        %v3721 = vadd.f32 0.0, %v3720
        %v3722 = vpop.f32.mrf.mxu0
        %3723 = vmatprep.mubr.f32.mxu0 0.0
        %3724 = vmatmul.mubr.f32.gmra.mxu0 %v3626
        %v3725 = vpop.f32.mrf.mxu0
        %v3726 = vadd.f32 0.0, %v3725
        %v3727 = vpop.f32.mrf.mxu0
        %3728 = vmatprep.mubr.f32.mxu0 0.0
        %3729 = vmatmul.mubr.f32.gmra.mxu0 %v3629
        %v3730 = vpop.f32.mrf.mxu0
        %v3731 = vadd.f32 0.0, %v3730
        %v3732 = vpop.f32.mrf.mxu0
        %3733 = vmatprep.mubr.f32.mxu0 0.0
        %3734 = vmatmul.mubr.f32.gmra.mxu0 %v3632
        %v3735 = vpop.f32.mrf.mxu0
        %v3736 = vadd.f32 0.0, %v3735
        %v3737 = vpop.f32.mrf.mxu0
        %3738 = vdwg.mxu0
        %v3739 = vadd.f32 %v3591, %v3701
        %v3740 = vadd.f32 %v3592, %v3706
        %v3741 = vadd.f32 %v3593, %v3711
        %v3742 = vadd.f32 %v3594, %v3716
        %v3743 = vadd.f32 %v3595, %v3721
        %v3744 = vadd.f32 %v3596, %v3726
        %v3745 = vadd.f32 %v3597, %v3731
        %v3746 = vadd.f32 %v3598, %v3736
        %v3747 = vld [vmem:[%s3599 + $0x1] sm:$0xff]
        %v3748 = vld [vmem:[%s3599 + $0x11] sm:$0xff]
        %v3749 = vld [vmem:[%s3599 + $0x21] sm:$0xff]
        %v3750 = vld [vmem:[%s3599 + $0x31] sm:$0xff]
        %v3751 = vld [vmem:[%s3599 + $0x41] sm:$0xff]
        %v3752 = vld [vmem:[%s3599 + $0x51] sm:$0xff]
        %v3753 = vld [vmem:[%s3599 + $0x61] sm:$0xff]
        %v3754 = vld [vmem:[%s3599 + $0x71] sm:$0xff]
        %s3755 = scalar_lea.vmem %s3, 176
        %v3756 = vld [vmem:[%s3755] sm:$0xff]
        %v3758 = vsel %vm543, %v3747, 0
        %v3761 = vsel %vm543, %v3748, 0
        %v3764 = vsel %vm543, %v3749, 0
        %v3767 = vsel %vm543, %v3750, 0
        %v3770 = vsel %vm543, %v3751, 0
        %v3773 = vsel %vm543, %v3752, 0
        %v3776 = vsel %vm543, %v3753, 0
        %v3779 = vsel %vm543, %v3754, 0
        %3781 = vmatprep.subr.mxu0 0.0
        %3782 = vmatpush1.msra.mxu0 0.0
        %3783 = vmatprep.subr.mxu0 0.0
        %3784 = vmatpush1.msra.mxu0 0.0
        %3785 = vmatprep.subr.mxu0 0.0
        %3786 = vmatpush1.msra.mxu0 0.0
        %3787 = vmatprep.subr.mxu0 0.0
        %3788 = vmatpush1.msra.mxu0 0.0
        %3789 = vmatprep.subr.mxu0 0.0
        %3790 = vmatpush1.msra.mxu0 0.0
        %3791 = vmatprep.subr.mxu0 0.0
        %3792 = vmatpush1.msra.mxu0 0.0
        %3793 = vmatprep.subr.mxu0 0.0
        %3794 = vmatpush1.msra.mxu0 0.0
        %3795 = vmatprep.subr.mxu0 0.0
        %3796 = vmatpush1.msra.mxu0 0.0
        %3797 = vmatprep.subr.mxu0 0.0
        %3798 = vmatpush1.msra.mxu0 0.0
        %3799 = vmatprep.subr.mxu0 0.0
        %3800 = vmatpush1.msra.mxu0 0.0
        %3801 = vmatprep.subr.mxu0 0.0
        %3802 = vmatpush1.msra.mxu0 0.0
        %3803 = vmatprep.subr.mxu0 0.0
        %3804 = vmatpush1.msra.mxu0 0.0
        %3805 = vmatprep.subr.mxu0 0.0
        %3806 = vmatpush1.msra.mxu0 0.0
        %3807 = vmatprep.subr.mxu0 0.0
        %3808 = vmatpush1.msra.mxu0 0.0
        %3809 = vmatprep.subr.mxu0 0.0
        %3810 = vmatpush1.msra.mxu0 0.0
        %3811 = vmatprep.subr.mxu0 0.0
        %3812 = vmatpush1.msra.mxu0 %v3756
        %3813 = vmatprep.subr.mxu0 0.0
        %3814 = vmatpush2.msra.mxu0 0.0
        %3815 = vmatprep.subr.mxu0 0.0
        %3816 = vmatpush2.msra.mxu0 0.0
        %3817 = vmatprep.subr.mxu0 0.0
        %3818 = vmatpush2.msra.mxu0 0.0
        %3819 = vmatprep.subr.mxu0 0.0
        %3820 = vmatpush2.msra.mxu0 0.0
        %3821 = vmatprep.subr.mxu0 0.0
        %3822 = vmatpush2.msra.mxu0 0.0
        %3823 = vmatprep.subr.mxu0 0.0
        %3824 = vmatpush2.msra.mxu0 0.0
        %3825 = vmatprep.subr.mxu0 0.0
        %3826 = vmatpush2.msra.mxu0 0.0
        %3827 = vmatprep.subr.mxu0 0.0
        %3828 = vmatpush2.msra.mxu0 0.0
        %3829 = vmatprep.subr.mxu0 0.0
        %3830 = vmatpush2.msra.mxu0 0.0
        %3831 = vmatprep.subr.mxu0 0.0
        %3832 = vmatpush2.msra.mxu0 0.0
        %3833 = vmatprep.subr.mxu0 0.0
        %3834 = vmatpush2.msra.mxu0 0.0
        %3835 = vmatprep.subr.mxu0 0.0
        %3836 = vmatpush2.msra.mxu0 0.0
        %3837 = vmatprep.subr.mxu0 0.0
        %3838 = vmatpush2.msra.mxu0 0.0
        %3839 = vmatprep.subr.mxu0 0.0
        %3840 = vmatpush2.msra.mxu0 0.0
        %3841 = vmatprep.subr.mxu0 0.0
        %3842 = vmatpush2.msra.mxu0 0.0
        %3843 = vmatprep.subr.mxu0 0.0
        %3844 = vmatpush2.msra.mxu0 0.0
        %3845 = vmatprep.mubr.f32.mxu0 0.0
        %3846 = vmatmul.mubr.f32.gmra.mxu0 %v3758
        %v3847 = vpop.f32.mrf.mxu0
        %v3848 = vadd.f32 0.0, %v3847
        %v3849 = vpop.f32.mrf.mxu0
        %3850 = vmatprep.mubr.f32.mxu0 0.0
        %3851 = vmatmul.mubr.f32.gmra.mxu0 %v3761
        %v3852 = vpop.f32.mrf.mxu0
        %v3853 = vadd.f32 0.0, %v3852
        %v3854 = vpop.f32.mrf.mxu0
        %3855 = vmatprep.mubr.f32.mxu0 0.0
        %3856 = vmatmul.mubr.f32.gmra.mxu0 %v3764
        %v3857 = vpop.f32.mrf.mxu0
        %v3858 = vadd.f32 0.0, %v3857
        %v3859 = vpop.f32.mrf.mxu0
        %3860 = vmatprep.mubr.f32.mxu0 0.0
        %3861 = vmatmul.mubr.f32.gmra.mxu0 %v3767
        %v3862 = vpop.f32.mrf.mxu0
        %v3863 = vadd.f32 0.0, %v3862
        %v3864 = vpop.f32.mrf.mxu0
        %3865 = vmatprep.mubr.f32.mxu0 0.0
        %3866 = vmatmul.mubr.f32.gmra.mxu0 %v3770
        %v3867 = vpop.f32.mrf.mxu0
        %v3868 = vadd.f32 0.0, %v3867
        %v3869 = vpop.f32.mrf.mxu0
        %3870 = vmatprep.mubr.f32.mxu0 0.0
        %3871 = vmatmul.mubr.f32.gmra.mxu0 %v3773
        %v3872 = vpop.f32.mrf.mxu0
        %v3873 = vadd.f32 0.0, %v3872
        %v3874 = vpop.f32.mrf.mxu0
        %3875 = vmatprep.mubr.f32.mxu0 0.0
        %3876 = vmatmul.mubr.f32.gmra.mxu0 %v3776
        %v3877 = vpop.f32.mrf.mxu0
        %v3878 = vadd.f32 0.0, %v3877
        %v3879 = vpop.f32.mrf.mxu0
        %3880 = vmatprep.mubr.f32.mxu0 0.0
        %3881 = vmatmul.mubr.f32.gmra.mxu0 %v3779
        %v3882 = vpop.f32.mrf.mxu0
        %v3883 = vadd.f32 0.0, %v3882
        %v3884 = vpop.f32.mrf.mxu0
        %3885 = vdwg.mxu0
        %v3886 = vadd.f32 %v3739, %v3848
        %v3887 = vadd.f32 %v3740, %v3853
        %v3888 = vadd.f32 %v3741, %v3858
        %v3889 = vadd.f32 %v3742, %v3863
        %v3890 = vadd.f32 %v3743, %v3868
        %v3891 = vadd.f32 %v3744, %v3873
        %v3892 = vadd.f32 %v3745, %v3878
        %v3893 = vadd.f32 %v3746, %v3883
        %v3894 = vld [vmem:[%s3599 + $0x2] sm:$0xff]
        %v3895 = vld [vmem:[%s3599 + $0x12] sm:$0xff]
        %v3896 = vld [vmem:[%s3599 + $0x22] sm:$0xff]
        %v3897 = vld [vmem:[%s3599 + $0x32] sm:$0xff]
        %v3898 = vld [vmem:[%s3599 + $0x42] sm:$0xff]
        %v3899 = vld [vmem:[%s3599 + $0x52] sm:$0xff]
        %v3900 = vld [vmem:[%s3599 + $0x62] sm:$0xff]
        %v3901 = vld [vmem:[%s3599 + $0x72] sm:$0xff]
        %s3902 = scalar_lea.vmem %s3, 184
        %v3903 = vld [vmem:[%s3902] sm:$0xff]
        %v3905 = vsel %vm543, %v3894, 0
        %v3908 = vsel %vm543, %v3895, 0
        %v3911 = vsel %vm543, %v3896, 0
        %v3914 = vsel %vm543, %v3897, 0
        %v3917 = vsel %vm543, %v3898, 0
        %v3920 = vsel %vm543, %v3899, 0
        %v3923 = vsel %vm543, %v3900, 0
        %v3926 = vsel %vm543, %v3901, 0
        %3928 = vmatprep.subr.mxu0 0.0
        %3929 = vmatpush1.msra.mxu0 0.0
        %3930 = vmatprep.subr.mxu0 0.0
        %3931 = vmatpush1.msra.mxu0 0.0
        %3932 = vmatprep.subr.mxu0 0.0
        %3933 = vmatpush1.msra.mxu0 0.0
        %3934 = vmatprep.subr.mxu0 0.0
        %3935 = vmatpush1.msra.mxu0 0.0
        %3936 = vmatprep.subr.mxu0 0.0
        %3937 = vmatpush1.msra.mxu0 0.0
        %3938 = vmatprep.subr.mxu0 0.0
        %3939 = vmatpush1.msra.mxu0 0.0
        %3940 = vmatprep.subr.mxu0 0.0
        %3941 = vmatpush1.msra.mxu0 0.0
        %3942 = vmatprep.subr.mxu0 0.0
        %3943 = vmatpush1.msra.mxu0 0.0
        %3944 = vmatprep.subr.mxu0 0.0
        %3945 = vmatpush1.msra.mxu0 0.0
        %3946 = vmatprep.subr.mxu0 0.0
        %3947 = vmatpush1.msra.mxu0 0.0
        %3948 = vmatprep.subr.mxu0 0.0
        %3949 = vmatpush1.msra.mxu0 0.0
        %3950 = vmatprep.subr.mxu0 0.0
        %3951 = vmatpush1.msra.mxu0 0.0
        %3952 = vmatprep.subr.mxu0 0.0
        %3953 = vmatpush1.msra.mxu0 0.0
        %3954 = vmatprep.subr.mxu0 0.0
        %3955 = vmatpush1.msra.mxu0 0.0
        %3956 = vmatprep.subr.mxu0 0.0
        %3957 = vmatpush1.msra.mxu0 0.0
        %3958 = vmatprep.subr.mxu0 0.0
        %3959 = vmatpush1.msra.mxu0 %v3903
        %3960 = vmatprep.subr.mxu0 0.0
        %3961 = vmatpush2.msra.mxu0 0.0
        %3962 = vmatprep.subr.mxu0 0.0
        %3963 = vmatpush2.msra.mxu0 0.0
        %3964 = vmatprep.subr.mxu0 0.0
        %3965 = vmatpush2.msra.mxu0 0.0
        %3966 = vmatprep.subr.mxu0 0.0
        %3967 = vmatpush2.msra.mxu0 0.0
        %3968 = vmatprep.subr.mxu0 0.0
        %3969 = vmatpush2.msra.mxu0 0.0
        %3970 = vmatprep.subr.mxu0 0.0
        %3971 = vmatpush2.msra.mxu0 0.0
        %3972 = vmatprep.subr.mxu0 0.0
        %3973 = vmatpush2.msra.mxu0 0.0
        %3974 = vmatprep.subr.mxu0 0.0
        %3975 = vmatpush2.msra.mxu0 0.0
        %3976 = vmatprep.subr.mxu0 0.0
        %3977 = vmatpush2.msra.mxu0 0.0
        %3978 = vmatprep.subr.mxu0 0.0
        %3979 = vmatpush2.msra.mxu0 0.0
        %3980 = vmatprep.subr.mxu0 0.0
        %3981 = vmatpush2.msra.mxu0 0.0
        %3982 = vmatprep.subr.mxu0 0.0
        %3983 = vmatpush2.msra.mxu0 0.0
        %3984 = vmatprep.subr.mxu0 0.0
        %3985 = vmatpush2.msra.mxu0 0.0
        %3986 = vmatprep.subr.mxu0 0.0
        %3987 = vmatpush2.msra.mxu0 0.0
        %3988 = vmatprep.subr.mxu0 0.0
        %3989 = vmatpush2.msra.mxu0 0.0
        %3990 = vmatprep.subr.mxu0 0.0
        %3991 = vmatpush2.msra.mxu0 0.0
        %3992 = vmatprep.mubr.f32.mxu0 0.0
        %3993 = vmatmul.mubr.f32.gmra.mxu0 %v3905
        %v3994 = vpop.f32.mrf.mxu0
        %v3995 = vadd.f32 0.0, %v3994
        %v3996 = vpop.f32.mrf.mxu0
        %3997 = vmatprep.mubr.f32.mxu0 0.0
        %3998 = vmatmul.mubr.f32.gmra.mxu0 %v3908
        %v3999 = vpop.f32.mrf.mxu0
        %v4000 = vadd.f32 0.0, %v3999
        %v4001 = vpop.f32.mrf.mxu0
        %4002 = vmatprep.mubr.f32.mxu0 0.0
        %4003 = vmatmul.mubr.f32.gmra.mxu0 %v3911
        %v4004 = vpop.f32.mrf.mxu0
        %v4005 = vadd.f32 0.0, %v4004
        %v4006 = vpop.f32.mrf.mxu0
        %4007 = vmatprep.mubr.f32.mxu0 0.0
        %4008 = vmatmul.mubr.f32.gmra.mxu0 %v3914
        %v4009 = vpop.f32.mrf.mxu0
        %v4010 = vadd.f32 0.0, %v4009
        %v4011 = vpop.f32.mrf.mxu0
        %4012 = vmatprep.mubr.f32.mxu0 0.0
        %4013 = vmatmul.mubr.f32.gmra.mxu0 %v3917
        %v4014 = vpop.f32.mrf.mxu0
        %v4015 = vadd.f32 0.0, %v4014
        %v4016 = vpop.f32.mrf.mxu0
        %4017 = vmatprep.mubr.f32.mxu0 0.0
        %4018 = vmatmul.mubr.f32.gmra.mxu0 %v3920
        %v4019 = vpop.f32.mrf.mxu0
        %v4020 = vadd.f32 0.0, %v4019
        %v4021 = vpop.f32.mrf.mxu0
        %4022 = vmatprep.mubr.f32.mxu0 0.0
        %4023 = vmatmul.mubr.f32.gmra.mxu0 %v3923
        %v4024 = vpop.f32.mrf.mxu0
        %v4025 = vadd.f32 0.0, %v4024
        %v4026 = vpop.f32.mrf.mxu0
        %4027 = vmatprep.mubr.f32.mxu0 0.0
        %4028 = vmatmul.mubr.f32.gmra.mxu0 %v3926
        %v4029 = vpop.f32.mrf.mxu0
        %v4030 = vadd.f32 0.0, %v4029
        %v4031 = vpop.f32.mrf.mxu0
        %4032 = vdwg.mxu0
        %v4033 = vadd.f32 %v3886, %v3995
        %v4034 = vadd.f32 %v3887, %v4000
        %v4035 = vadd.f32 %v3888, %v4005
        %v4036 = vadd.f32 %v3889, %v4010
        %v4037 = vadd.f32 %v3890, %v4015
        %v4038 = vadd.f32 %v3891, %v4020
        %v4039 = vadd.f32 %v3892, %v4025
        %v4040 = vadd.f32 %v3893, %v4030
        %s4041 = scalar_lea.vmem %s435, 32
        %v4042 = vld [vmem:[%s4041] sm:$0xff]
        %v4043 = vld [vmem:[%s4041 + $0x10] sm:$0xff]
        %v4044 = vld [vmem:[%s4041 + $0x20] sm:$0xff]
        %v4045 = vld [vmem:[%s4041 + $0x30] sm:$0xff]
        %v4046 = vld [vmem:[%s4041 + $0x40] sm:$0xff]
        %v4047 = vld [vmem:[%s4041 + $0x50] sm:$0xff]
        %v4048 = vld [vmem:[%s4041 + $0x60] sm:$0xff]
        %v4049 = vld [vmem:[%s4041 + $0x70] sm:$0xff]
        %s4050 = scalar_lea.vmem %s3, 192
        %v4051 = vld [vmem:[%s4050] sm:$0xff]
        %v4053 = vsel %vm543, %v4042, 0
        %v4056 = vsel %vm543, %v4043, 0
        %v4059 = vsel %vm543, %v4044, 0
        %v4062 = vsel %vm543, %v4045, 0
        %v4065 = vsel %vm543, %v4046, 0
        %v4068 = vsel %vm543, %v4047, 0
        %v4071 = vsel %vm543, %v4048, 0
        %v4074 = vsel %vm543, %v4049, 0
        %4076 = vmatprep.subr.mxu0 0.0
        %4077 = vmatpush1.msra.mxu0 0.0
        %4078 = vmatprep.subr.mxu0 0.0
        %4079 = vmatpush1.msra.mxu0 0.0
        %4080 = vmatprep.subr.mxu0 0.0
        %4081 = vmatpush1.msra.mxu0 0.0
        %4082 = vmatprep.subr.mxu0 0.0
        %4083 = vmatpush1.msra.mxu0 0.0
        %4084 = vmatprep.subr.mxu0 0.0
        %4085 = vmatpush1.msra.mxu0 0.0
        %4086 = vmatprep.subr.mxu0 0.0
        %4087 = vmatpush1.msra.mxu0 0.0
        %4088 = vmatprep.subr.mxu0 0.0
        %4089 = vmatpush1.msra.mxu0 0.0
        %4090 = vmatprep.subr.mxu0 0.0
        %4091 = vmatpush1.msra.mxu0 0.0
        %4092 = vmatprep.subr.mxu0 0.0
        %4093 = vmatpush1.msra.mxu0 0.0
        %4094 = vmatprep.subr.mxu0 0.0
        %4095 = vmatpush1.msra.mxu0 0.0
        %4096 = vmatprep.subr.mxu0 0.0
        %4097 = vmatpush1.msra.mxu0 0.0
        %4098 = vmatprep.subr.mxu0 0.0
        %4099 = vmatpush1.msra.mxu0 0.0
        %4100 = vmatprep.subr.mxu0 0.0
        %4101 = vmatpush1.msra.mxu0 0.0
        %4102 = vmatprep.subr.mxu0 0.0
        %4103 = vmatpush1.msra.mxu0 0.0
        %4104 = vmatprep.subr.mxu0 0.0
        %4105 = vmatpush1.msra.mxu0 0.0
        %4106 = vmatprep.subr.mxu0 0.0
        %4107 = vmatpush1.msra.mxu0 %v4051
        %4108 = vmatprep.subr.mxu0 0.0
        %4109 = vmatpush2.msra.mxu0 0.0
        %4110 = vmatprep.subr.mxu0 0.0
        %4111 = vmatpush2.msra.mxu0 0.0
        %4112 = vmatprep.subr.mxu0 0.0
        %4113 = vmatpush2.msra.mxu0 0.0
        %4114 = vmatprep.subr.mxu0 0.0
        %4115 = vmatpush2.msra.mxu0 0.0
        %4116 = vmatprep.subr.mxu0 0.0
        %4117 = vmatpush2.msra.mxu0 0.0
        %4118 = vmatprep.subr.mxu0 0.0
        %4119 = vmatpush2.msra.mxu0 0.0
        %4120 = vmatprep.subr.mxu0 0.0
        %4121 = vmatpush2.msra.mxu0 0.0
        %4122 = vmatprep.subr.mxu0 0.0
        %4123 = vmatpush2.msra.mxu0 0.0
        %4124 = vmatprep.subr.mxu0 0.0
        %4125 = vmatpush2.msra.mxu0 0.0
        %4126 = vmatprep.subr.mxu0 0.0
        %4127 = vmatpush2.msra.mxu0 0.0
        %4128 = vmatprep.subr.mxu0 0.0
        %4129 = vmatpush2.msra.mxu0 0.0
        %4130 = vmatprep.subr.mxu0 0.0
        %4131 = vmatpush2.msra.mxu0 0.0
        %4132 = vmatprep.subr.mxu0 0.0
        %4133 = vmatpush2.msra.mxu0 0.0
        %4134 = vmatprep.subr.mxu0 0.0
        %4135 = vmatpush2.msra.mxu0 0.0
        %4136 = vmatprep.subr.mxu0 0.0
        %4137 = vmatpush2.msra.mxu0 0.0
        %4138 = vmatprep.subr.mxu0 0.0
        %4139 = vmatpush2.msra.mxu0 0.0
        %4140 = vmatprep.mubr.f32.mxu0 0.0
        %4141 = vmatmul.mubr.f32.gmra.mxu0 %v4053
        %v4142 = vpop.f32.mrf.mxu0
        %v4143 = vadd.f32 0.0, %v4142
        %v4144 = vpop.f32.mrf.mxu0
        %4145 = vmatprep.mubr.f32.mxu0 0.0
        %4146 = vmatmul.mubr.f32.gmra.mxu0 %v4056
        %v4147 = vpop.f32.mrf.mxu0
        %v4148 = vadd.f32 0.0, %v4147
        %v4149 = vpop.f32.mrf.mxu0
        %4150 = vmatprep.mubr.f32.mxu0 0.0
        %4151 = vmatmul.mubr.f32.gmra.mxu0 %v4059
        %v4152 = vpop.f32.mrf.mxu0
        %v4153 = vadd.f32 0.0, %v4152
        %v4154 = vpop.f32.mrf.mxu0
        %4155 = vmatprep.mubr.f32.mxu0 0.0
        %4156 = vmatmul.mubr.f32.gmra.mxu0 %v4062
        %v4157 = vpop.f32.mrf.mxu0
        %v4158 = vadd.f32 0.0, %v4157
        %v4159 = vpop.f32.mrf.mxu0
        %4160 = vmatprep.mubr.f32.mxu0 0.0
        %4161 = vmatmul.mubr.f32.gmra.mxu0 %v4065
        %v4162 = vpop.f32.mrf.mxu0
        %v4163 = vadd.f32 0.0, %v4162
        %v4164 = vpop.f32.mrf.mxu0
        %4165 = vmatprep.mubr.f32.mxu0 0.0
        %4166 = vmatmul.mubr.f32.gmra.mxu0 %v4068
        %v4167 = vpop.f32.mrf.mxu0
        %v4168 = vadd.f32 0.0, %v4167
        %v4169 = vpop.f32.mrf.mxu0
        %4170 = vmatprep.mubr.f32.mxu0 0.0
        %4171 = vmatmul.mubr.f32.gmra.mxu0 %v4071
        %v4172 = vpop.f32.mrf.mxu0
        %v4173 = vadd.f32 0.0, %v4172
        %v4174 = vpop.f32.mrf.mxu0
        %4175 = vmatprep.mubr.f32.mxu0 0.0
        %4176 = vmatmul.mubr.f32.gmra.mxu0 %v4074
        %v4177 = vpop.f32.mrf.mxu0
        %v4178 = vadd.f32 0.0, %v4177
        %v4179 = vpop.f32.mrf.mxu0
        %4180 = vdwg.mxu0
        %v4181 = vadd.f32 %v4033, %v4143
        %v4182 = vadd.f32 %v4034, %v4148
        %v4183 = vadd.f32 %v4035, %v4153
        %v4184 = vadd.f32 %v4036, %v4158
        %v4185 = vadd.f32 %v4037, %v4163
        %v4186 = vadd.f32 %v4038, %v4168
        %v4187 = vadd.f32 %v4039, %v4173
        %v4188 = vadd.f32 %v4040, %v4178
        %v4189 = vld [vmem:[%s4041 + $0x1] sm:$0xff]
        %v4190 = vld [vmem:[%s4041 + $0x11] sm:$0xff]
        %v4191 = vld [vmem:[%s4041 + $0x21] sm:$0xff]
        %v4192 = vld [vmem:[%s4041 + $0x31] sm:$0xff]
        %v4193 = vld [vmem:[%s4041 + $0x41] sm:$0xff]
        %v4194 = vld [vmem:[%s4041 + $0x51] sm:$0xff]
        %v4195 = vld [vmem:[%s4041 + $0x61] sm:$0xff]
        %v4196 = vld [vmem:[%s4041 + $0x71] sm:$0xff]
        %s4197 = scalar_lea.vmem %s3, 200
        %v4198 = vld [vmem:[%s4197] sm:$0xff]
        %v4200 = vsel %vm543, %v4189, 0
        %v4203 = vsel %vm543, %v4190, 0
        %v4206 = vsel %vm543, %v4191, 0
        %v4209 = vsel %vm543, %v4192, 0
        %v4212 = vsel %vm543, %v4193, 0
        %v4215 = vsel %vm543, %v4194, 0
        %v4218 = vsel %vm543, %v4195, 0
        %v4221 = vsel %vm543, %v4196, 0
        %4223 = vmatprep.subr.mxu0 0.0
        %4224 = vmatpush1.msra.mxu0 0.0
        %4225 = vmatprep.subr.mxu0 0.0
        %4226 = vmatpush1.msra.mxu0 0.0
        %4227 = vmatprep.subr.mxu0 0.0
        %4228 = vmatpush1.msra.mxu0 0.0
        %4229 = vmatprep.subr.mxu0 0.0
        %4230 = vmatpush1.msra.mxu0 0.0
        %4231 = vmatprep.subr.mxu0 0.0
        %4232 = vmatpush1.msra.mxu0 0.0
        %4233 = vmatprep.subr.mxu0 0.0
        %4234 = vmatpush1.msra.mxu0 0.0
        %4235 = vmatprep.subr.mxu0 0.0
        %4236 = vmatpush1.msra.mxu0 0.0
        %4237 = vmatprep.subr.mxu0 0.0
        %4238 = vmatpush1.msra.mxu0 0.0
        %4239 = vmatprep.subr.mxu0 0.0
        %4240 = vmatpush1.msra.mxu0 0.0
        %4241 = vmatprep.subr.mxu0 0.0
        %4242 = vmatpush1.msra.mxu0 0.0
        %4243 = vmatprep.subr.mxu0 0.0
        %4244 = vmatpush1.msra.mxu0 0.0
        %4245 = vmatprep.subr.mxu0 0.0
        %4246 = vmatpush1.msra.mxu0 0.0
        %4247 = vmatprep.subr.mxu0 0.0
        %4248 = vmatpush1.msra.mxu0 0.0
        %4249 = vmatprep.subr.mxu0 0.0
        %4250 = vmatpush1.msra.mxu0 0.0
        %4251 = vmatprep.subr.mxu0 0.0
        %4252 = vmatpush1.msra.mxu0 0.0
        %4253 = vmatprep.subr.mxu0 0.0
        %4254 = vmatpush1.msra.mxu0 %v4198
        %4255 = vmatprep.subr.mxu0 0.0
        %4256 = vmatpush2.msra.mxu0 0.0
        %4257 = vmatprep.subr.mxu0 0.0
        %4258 = vmatpush2.msra.mxu0 0.0
        %4259 = vmatprep.subr.mxu0 0.0
        %4260 = vmatpush2.msra.mxu0 0.0
        %4261 = vmatprep.subr.mxu0 0.0
        %4262 = vmatpush2.msra.mxu0 0.0
        %4263 = vmatprep.subr.mxu0 0.0
        %4264 = vmatpush2.msra.mxu0 0.0
        %4265 = vmatprep.subr.mxu0 0.0
        %4266 = vmatpush2.msra.mxu0 0.0
        %4267 = vmatprep.subr.mxu0 0.0
        %4268 = vmatpush2.msra.mxu0 0.0
        %4269 = vmatprep.subr.mxu0 0.0
        %4270 = vmatpush2.msra.mxu0 0.0
        %4271 = vmatprep.subr.mxu0 0.0
        %4272 = vmatpush2.msra.mxu0 0.0
        %4273 = vmatprep.subr.mxu0 0.0
        %4274 = vmatpush2.msra.mxu0 0.0
        %4275 = vmatprep.subr.mxu0 0.0
        %4276 = vmatpush2.msra.mxu0 0.0
        %4277 = vmatprep.subr.mxu0 0.0
        %4278 = vmatpush2.msra.mxu0 0.0
        %4279 = vmatprep.subr.mxu0 0.0
        %4280 = vmatpush2.msra.mxu0 0.0
        %4281 = vmatprep.subr.mxu0 0.0
        %4282 = vmatpush2.msra.mxu0 0.0
        %4283 = vmatprep.subr.mxu0 0.0
        %4284 = vmatpush2.msra.mxu0 0.0
        %4285 = vmatprep.subr.mxu0 0.0
        %4286 = vmatpush2.msra.mxu0 0.0
        %4287 = vmatprep.mubr.f32.mxu0 0.0
        %4288 = vmatmul.mubr.f32.gmra.mxu0 %v4200
        %v4289 = vpop.f32.mrf.mxu0
        %v4290 = vadd.f32 0.0, %v4289
        %v4291 = vpop.f32.mrf.mxu0
        %4292 = vmatprep.mubr.f32.mxu0 0.0
        %4293 = vmatmul.mubr.f32.gmra.mxu0 %v4203
        %v4294 = vpop.f32.mrf.mxu0
        %v4295 = vadd.f32 0.0, %v4294
        %v4296 = vpop.f32.mrf.mxu0
        %4297 = vmatprep.mubr.f32.mxu0 0.0
        %4298 = vmatmul.mubr.f32.gmra.mxu0 %v4206
        %v4299 = vpop.f32.mrf.mxu0
        %v4300 = vadd.f32 0.0, %v4299
        %v4301 = vpop.f32.mrf.mxu0
        %4302 = vmatprep.mubr.f32.mxu0 0.0
        %4303 = vmatmul.mubr.f32.gmra.mxu0 %v4209
        %v4304 = vpop.f32.mrf.mxu0
        %v4305 = vadd.f32 0.0, %v4304
        %v4306 = vpop.f32.mrf.mxu0
        %4307 = vmatprep.mubr.f32.mxu0 0.0
        %4308 = vmatmul.mubr.f32.gmra.mxu0 %v4212
        %v4309 = vpop.f32.mrf.mxu0
        %v4310 = vadd.f32 0.0, %v4309
        %v4311 = vpop.f32.mrf.mxu0
        %4312 = vmatprep.mubr.f32.mxu0 0.0
        %4313 = vmatmul.mubr.f32.gmra.mxu0 %v4215
        %v4314 = vpop.f32.mrf.mxu0
        %v4315 = vadd.f32 0.0, %v4314
        %v4316 = vpop.f32.mrf.mxu0
        %4317 = vmatprep.mubr.f32.mxu0 0.0
        %4318 = vmatmul.mubr.f32.gmra.mxu0 %v4218
        %v4319 = vpop.f32.mrf.mxu0
        %v4320 = vadd.f32 0.0, %v4319
        %v4321 = vpop.f32.mrf.mxu0
        %4322 = vmatprep.mubr.f32.mxu0 0.0
        %4323 = vmatmul.mubr.f32.gmra.mxu0 %v4221
        %v4324 = vpop.f32.mrf.mxu0
        %v4325 = vadd.f32 0.0, %v4324
        %v4326 = vpop.f32.mrf.mxu0
        %4327 = vdwg.mxu0
        %v4328 = vadd.f32 %v4181, %v4290
        %v4329 = vadd.f32 %v4182, %v4295
        %v4330 = vadd.f32 %v4183, %v4300
        %v4331 = vadd.f32 %v4184, %v4305
        %v4332 = vadd.f32 %v4185, %v4310
        %v4333 = vadd.f32 %v4186, %v4315
        %v4334 = vadd.f32 %v4187, %v4320
        %v4335 = vadd.f32 %v4188, %v4325
        %v4336 = vld [vmem:[%s4041 + $0x2] sm:$0xff]
        %v4337 = vld [vmem:[%s4041 + $0x12] sm:$0xff]
        %v4338 = vld [vmem:[%s4041 + $0x22] sm:$0xff]
        %v4339 = vld [vmem:[%s4041 + $0x32] sm:$0xff]
        %v4340 = vld [vmem:[%s4041 + $0x42] sm:$0xff]
        %v4341 = vld [vmem:[%s4041 + $0x52] sm:$0xff]
        %v4342 = vld [vmem:[%s4041 + $0x62] sm:$0xff]
        %v4343 = vld [vmem:[%s4041 + $0x72] sm:$0xff]
        %s4344 = scalar_lea.vmem %s3, 208
        %v4345 = vld [vmem:[%s4344] sm:$0xff]
        %v4347 = vsel %vm543, %v4336, 0
        %v4350 = vsel %vm543, %v4337, 0
        %v4353 = vsel %vm543, %v4338, 0
        %v4356 = vsel %vm543, %v4339, 0
        %v4359 = vsel %vm543, %v4340, 0
        %v4362 = vsel %vm543, %v4341, 0
        %v4365 = vsel %vm543, %v4342, 0
        %v4368 = vsel %vm543, %v4343, 0
        %4370 = vmatprep.subr.mxu0 0.0
        %4371 = vmatpush1.msra.mxu0 0.0
        %4372 = vmatprep.subr.mxu0 0.0
        %4373 = vmatpush1.msra.mxu0 0.0
        %4374 = vmatprep.subr.mxu0 0.0
        %4375 = vmatpush1.msra.mxu0 0.0
        %4376 = vmatprep.subr.mxu0 0.0
        %4377 = vmatpush1.msra.mxu0 0.0
        %4378 = vmatprep.subr.mxu0 0.0
        %4379 = vmatpush1.msra.mxu0 0.0
        %4380 = vmatprep.subr.mxu0 0.0
        %4381 = vmatpush1.msra.mxu0 0.0
        %4382 = vmatprep.subr.mxu0 0.0
        %4383 = vmatpush1.msra.mxu0 0.0
        %4384 = vmatprep.subr.mxu0 0.0
        %4385 = vmatpush1.msra.mxu0 0.0
        %4386 = vmatprep.subr.mxu0 0.0
        %4387 = vmatpush1.msra.mxu0 0.0
        %4388 = vmatprep.subr.mxu0 0.0
        %4389 = vmatpush1.msra.mxu0 0.0
        %4390 = vmatprep.subr.mxu0 0.0
        %4391 = vmatpush1.msra.mxu0 0.0
        %4392 = vmatprep.subr.mxu0 0.0
        %4393 = vmatpush1.msra.mxu0 0.0
        %4394 = vmatprep.subr.mxu0 0.0
        %4395 = vmatpush1.msra.mxu0 0.0
        %4396 = vmatprep.subr.mxu0 0.0
        %4397 = vmatpush1.msra.mxu0 0.0
        %4398 = vmatprep.subr.mxu0 0.0
        %4399 = vmatpush1.msra.mxu0 0.0
        %4400 = vmatprep.subr.mxu0 0.0
        %4401 = vmatpush1.msra.mxu0 %v4345
        %4402 = vmatprep.subr.mxu0 0.0
        %4403 = vmatpush2.msra.mxu0 0.0
        %4404 = vmatprep.subr.mxu0 0.0
        %4405 = vmatpush2.msra.mxu0 0.0
        %4406 = vmatprep.subr.mxu0 0.0
        %4407 = vmatpush2.msra.mxu0 0.0
        %4408 = vmatprep.subr.mxu0 0.0
        %4409 = vmatpush2.msra.mxu0 0.0
        %4410 = vmatprep.subr.mxu0 0.0
        %4411 = vmatpush2.msra.mxu0 0.0
        %4412 = vmatprep.subr.mxu0 0.0
        %4413 = vmatpush2.msra.mxu0 0.0
        %4414 = vmatprep.subr.mxu0 0.0
        %4415 = vmatpush2.msra.mxu0 0.0
        %4416 = vmatprep.subr.mxu0 0.0
        %4417 = vmatpush2.msra.mxu0 0.0
        %4418 = vmatprep.subr.mxu0 0.0
        %4419 = vmatpush2.msra.mxu0 0.0
        %4420 = vmatprep.subr.mxu0 0.0
        %4421 = vmatpush2.msra.mxu0 0.0
        %4422 = vmatprep.subr.mxu0 0.0
        %4423 = vmatpush2.msra.mxu0 0.0
        %4424 = vmatprep.subr.mxu0 0.0
        %4425 = vmatpush2.msra.mxu0 0.0
        %4426 = vmatprep.subr.mxu0 0.0
        %4427 = vmatpush2.msra.mxu0 0.0
        %4428 = vmatprep.subr.mxu0 0.0
        %4429 = vmatpush2.msra.mxu0 0.0
        %4430 = vmatprep.subr.mxu0 0.0
        %4431 = vmatpush2.msra.mxu0 0.0
        %4432 = vmatprep.subr.mxu0 0.0
        %4433 = vmatpush2.msra.mxu0 0.0
        %4434 = vmatprep.mubr.f32.mxu0 0.0
        %4435 = vmatmul.mubr.f32.gmra.mxu0 %v4347
        %v4436 = vpop.f32.mrf.mxu0
        %v4437 = vadd.f32 0.0, %v4436
        %v4438 = vpop.f32.mrf.mxu0
        %4439 = vmatprep.mubr.f32.mxu0 0.0
        %4440 = vmatmul.mubr.f32.gmra.mxu0 %v4350
        %v4441 = vpop.f32.mrf.mxu0
        %v4442 = vadd.f32 0.0, %v4441
        %v4443 = vpop.f32.mrf.mxu0
        %4444 = vmatprep.mubr.f32.mxu0 0.0
        %4445 = vmatmul.mubr.f32.gmra.mxu0 %v4353
        %v4446 = vpop.f32.mrf.mxu0
        %v4447 = vadd.f32 0.0, %v4446
        %v4448 = vpop.f32.mrf.mxu0
        %4449 = vmatprep.mubr.f32.mxu0 0.0
        %4450 = vmatmul.mubr.f32.gmra.mxu0 %v4356
        %v4451 = vpop.f32.mrf.mxu0
        %v4452 = vadd.f32 0.0, %v4451
        %v4453 = vpop.f32.mrf.mxu0
        %4454 = vmatprep.mubr.f32.mxu0 0.0
        %4455 = vmatmul.mubr.f32.gmra.mxu0 %v4359
        %v4456 = vpop.f32.mrf.mxu0
        %v4457 = vadd.f32 0.0, %v4456
        %v4458 = vpop.f32.mrf.mxu0
        %4459 = vmatprep.mubr.f32.mxu0 0.0
        %4460 = vmatmul.mubr.f32.gmra.mxu0 %v4362
        %v4461 = vpop.f32.mrf.mxu0
        %v4462 = vadd.f32 0.0, %v4461
        %v4463 = vpop.f32.mrf.mxu0
        %4464 = vmatprep.mubr.f32.mxu0 0.0
        %4465 = vmatmul.mubr.f32.gmra.mxu0 %v4365
        %v4466 = vpop.f32.mrf.mxu0
        %v4467 = vadd.f32 0.0, %v4466
        %v4468 = vpop.f32.mrf.mxu0
        %4469 = vmatprep.mubr.f32.mxu0 0.0
        %4470 = vmatmul.mubr.f32.gmra.mxu0 %v4368
        %v4471 = vpop.f32.mrf.mxu0
        %v4472 = vadd.f32 0.0, %v4471
        %v4473 = vpop.f32.mrf.mxu0
        %4474 = vdwg.mxu0
        %v4475 = vadd.f32 %v4328, %v4437
        %v4476 = vadd.f32 %v4329, %v4442
        %v4477 = vadd.f32 %v4330, %v4447
        %v4478 = vadd.f32 %v4331, %v4452
        %v4479 = vadd.f32 %v4332, %v4457
        %v4480 = vadd.f32 %v4333, %v4462
        %v4481 = vadd.f32 %v4334, %v4467
        %v4482 = vadd.f32 %v4335, %v4472
        %v4483 = vld [vmem:[%s4] sm:$0x1]
        %v4485 = vlaneseq
        %v4486 = vshrl.u32 %v4485, 7
        %v4487 = vsub.s32 0, %v4486
        %v4488 = vrot.slane %v4483, %v4487
        %v4490 = vadd.f32 %v4475, %v4488
        %v4491 = vadd.f32 %v4476, %v4488
        %v4492 = vadd.f32 %v4477, %v4488
        %v4493 = vadd.f32 %v4478, %v4488
        %v4494 = vadd.f32 %v4479, %v4488
        %v4495 = vadd.f32 %v4480, %v4488
        %v4496 = vadd.f32 %v4481, %v4488
        %v4497 = vadd.f32 %v4482, %v4488
        %v4498 = vmax.f32 %v4490, 0.0
        %v4499 = vmax.f32 %v4491, 0.0
        %v4500 = vmax.f32 %v4492, 0.0
        %v4501 = vmax.f32 %v4493, 0.0
        %v4502 = vmax.f32 %v4494, 0.0
        %v4503 = vmax.f32 %v4495, 0.0
        %v4504 = vmax.f32 %v4496, 0.0
        %v4505 = vmax.f32 %v4497, 0.0
        %p4506 = scmp.lt.s32.totalorder %s23, 0
        %s4507 = ssub.s32 0, %s23
        %s4508 = scalar_select %p4506, %s4507, %s23
        %s4509 = sdiv.u32.pop %s4508, 3
        %s4510 = srem.u32.pop %s4508, 3
        %s4511 = ssub.s32 0, %s4510
        %s4512 = scalar_select %p4506, %s4511, %s4510
        %s4513 = smul.u32 %s4512, 160
        %s4514 = sadd.s32 16, %s4513
        %s4515 = scalar_lea.vmem [#allocation2], %s4514
        %vm4516 = vcmask 130048
        %4517 = vst.msk [vmem:[%s4515 + $0x1] sm:$0xff] %vm4516, %v4498
        %4518 = vst.msk [vmem:[%s4515 + $0x11] sm:$0xff] %vm4516, %v4499
        %4519 = vst.msk [vmem:[%s4515 + $0x21] sm:$0xff] %vm4516, %v4500
        %4520 = vst.msk [vmem:[%s4515 + $0x31] sm:$0xff] %vm4516, %v4501
        %4521 = vst.msk [vmem:[%s4515 + $0x41] sm:$0xff] %vm4516, %v4502
        %4522 = vst.msk [vmem:[%s4515 + $0x51] sm:$0xff] %vm4516, %v4503
        %4523 = vst.msk [vmem:[%s4515 + $0x61] sm:$0xff] %vm4516, %v4504
        %4524 = vst.msk [vmem:[%s4515 + $0x71] sm:$0xff] %vm4516, %v4505
      $region56: #{flowhead3d_forward.1} parent=47 // pred_fallthru
        _
      %p4525 = scmp.eq.s32.totalorder %s23, 8
      // Predicated region
      $region57: #{flowhead3d_forward.1} parent=47 // pred_check
        %p4526 = pneg %p4525
      $region58: #{flowhead3d_forward.1} parent=47 // pred_check_branch
        %4528 = sbr.rel (%p4526) target = $region60
      $region59: #{flowhead3d_forward.1} parent=47 // pred_region
        %p4529 = scmp.lt.s32.totalorder %s23, 0
        %s4530 = ssub.s32 0, %s23
        %s4531 = scalar_select %p4529, %s4530, %s23
        %s4532 = sdiv.u32.pop %s4531, 3
        %s4533 = srem.u32.pop %s4531, 3
        %s4534 = ssub.s32 0, %s4533
        %s4535 = scalar_select %p4529, %s4534, %s4533
        %s4536 = smul.u32 %s4535, 160
        %s4537 = sadd.s32 16, %s4536
        %s4538 = scalar_lea.vmem [#allocation2], %s4537
        %vm4539 = vcmask 130048
        %4540 = vst.msk [vmem:[%s4538 + $0x1] sm:$0xff] %vm4539, 0.0
        %4541 = vst.msk [vmem:[%s4538 + $0x11] sm:$0xff] %vm4539, 0.0
        %4542 = vst.msk [vmem:[%s4538 + $0x21] sm:$0xff] %vm4539, 0.0
        %4543 = vst.msk [vmem:[%s4538 + $0x31] sm:$0xff] %vm4539, 0.0
        %4544 = vst.msk [vmem:[%s4538 + $0x41] sm:$0xff] %vm4539, 0.0
        %4545 = vst.msk [vmem:[%s4538 + $0x51] sm:$0xff] %vm4539, 0.0
        %4546 = vst.msk [vmem:[%s4538 + $0x61] sm:$0xff] %vm4539, 0.0
        %4547 = vst.msk [vmem:[%s4538 + $0x71] sm:$0xff] %vm4539, 0.0
      $region60: #{flowhead3d_forward.1} parent=47 // pred_fallthru
        _
      %p4548 = scmp.ge.s32.totalorder %s23, 1
      // Predicated region
      $region61: #{flowhead3d_forward.1} parent=47 // pred_check
        %p4549 = pneg %p4548
      $region62: #{flowhead3d_forward.1} parent=47 // pred_check_branch
        %4551 = sbr.rel (%p4549) target = $region64
      $region63: #{flowhead3d_forward.1} parent=47 // pred_region
        %s4552 = sadd.s32 %s23, 1
        %p4553 = scmp.lt.s32.totalorder %s4552, 0
        %s4554 = ssub.s32 0, %s4552
        %s4555 = scalar_select %p4553, %s4554, %s4552
        %s4556 = sdiv.u32.pop %s4555, 3
        %s4557 = srem.u32.pop %s4555, 3
        %s4558 = ssub.s32 0, %s4557
        %s4559 = scalar_select %p4553, %s4558, %s4557
        %s4560 = sadd.s32 %s23, 2
        %p4561 = scmp.lt.s32.totalorder %s4560, 0
        %s4562 = ssub.s32 0, %s4560
        %s4563 = scalar_select %p4561, %s4562, %s4560
        %s4564 = sdiv.u32.pop %s4563, 3
        %s4565 = srem.u32.pop %s4563, 3
        %s4566 = ssub.s32 0, %s4565
        %s4567 = scalar_select %p4561, %s4566, %s4565
        %p4568 = scmp.lt.s32.totalorder %s23, 0
        %s4569 = ssub.s32 0, %s23
        %s4570 = scalar_select %p4568, %s4569, %s23
        %s4571 = sdiv.u32.pop %s4570, 3
        %s4572 = srem.u32.pop %s4570, 3
        %s4573 = ssub.s32 0, %s4572
        %s4574 = scalar_select %p4568, %s4573, %s4572
        %s4575 = smul.u32 %s4559, 160
        %s4576 = scalar_lea.vmem [#allocation2], %s4575
        %v4577 = vld [vmem:[%s4576] sm:$0xff]
        %v4578 = vld [vmem:[%s4576 + $0x10] sm:$0xff]
        %v4579 = vld [vmem:[%s4576 + $0x20] sm:$0xff]
        %v4580 = vld [vmem:[%s4576 + $0x30] sm:$0xff]
        %v4581 = vld [vmem:[%s4576 + $0x40] sm:$0xff]
        %v4582 = vld [vmem:[%s4576 + $0x50] sm:$0xff]
        %v4583 = vld [vmem:[%s4576 + $0x60] sm:$0xff]
        %v4584 = vld [vmem:[%s4576 + $0x70] sm:$0xff]
        %v4585 = vld [vmem:[%s5] sm:$0xff]
        %v4586 = vld [vmem:[%s5 + $0x8] sm:$0xff]
        %v4587 = vld [vmem:[%s4576 + $0x1] sm:$0xff]
        %v4588 = vld [vmem:[%s4576 + $0x11] sm:$0xff]
        %v4589 = vld [vmem:[%s4576 + $0x21] sm:$0xff]
        %v4590 = vld [vmem:[%s4576 + $0x31] sm:$0xff]
        %v4591 = vld [vmem:[%s4576 + $0x41] sm:$0xff]
        %v4592 = vld [vmem:[%s4576 + $0x51] sm:$0xff]
        %v4593 = vld [vmem:[%s4576 + $0x61] sm:$0xff]
        %v4594 = vld [vmem:[%s4576 + $0x71] sm:$0xff]
        %s4595 = scalar_lea.vmem %s5, 16
        %v4596 = vld [vmem:[%s4595] sm:$0xff]
        %v4597 = vld [vmem:[%s4595 + $0x8] sm:$0xff]
        %vm4598 = vcmask 130048
        %v4600 = vsel %vm4598, %v4587, 0
        %v4603 = vsel %vm4598, %v4588, 0
        %v4606 = vsel %vm4598, %v4589, 0
        %v4609 = vsel %vm4598, %v4590, 0
        %v4612 = vsel %vm4598, %v4591, 0
        %v4615 = vsel %vm4598, %v4592, 0
        %v4618 = vsel %vm4598, %v4593, 0
        %v4621 = vsel %vm4598, %v4594, 0
        %4623 = vmatprep.subr.mxu0 0.0
        %4624 = vmatpush1.msra.mxu0 0.0
        %4625 = vmatprep.subr.mxu0 0.0
        %4626 = vmatpush1.msra.mxu0 0.0
        %4627 = vmatprep.subr.mxu0 0.0
        %4628 = vmatpush1.msra.mxu0 0.0
        %4629 = vmatprep.subr.mxu0 0.0
        %4630 = vmatpush1.msra.mxu0 0.0
        %4631 = vmatprep.subr.mxu0 0.0
        %4632 = vmatpush1.msra.mxu0 0.0
        %4633 = vmatprep.subr.mxu0 0.0
        %4634 = vmatpush1.msra.mxu0 0.0
        %4635 = vmatprep.subr.mxu0 0.0
        %4636 = vmatpush1.msra.mxu0 0.0
        %4637 = vmatprep.subr.mxu0 0.0
        %4638 = vmatpush1.msra.mxu0 0.0
        %4639 = vmatprep.subr.mxu0 0.0
        %4640 = vmatpush1.msra.mxu0 0.0
        %4641 = vmatprep.subr.mxu0 0.0
        %4642 = vmatpush1.msra.mxu0 0.0
        %4643 = vmatprep.subr.mxu0 0.0
        %4644 = vmatpush1.msra.mxu0 0.0
        %4645 = vmatprep.subr.mxu0 0.0
        %4646 = vmatpush1.msra.mxu0 0.0
        %4647 = vmatprep.subr.mxu0 0.0
        %4648 = vmatpush1.msra.mxu0 0.0
        %4649 = vmatprep.subr.mxu0 0.0
        %4650 = vmatpush1.msra.mxu0 0.0
        %4651 = vmatprep.subr.mxu0 0.0
        %4652 = vmatpush1.msra.mxu0 %v4597
        %4653 = vmatprep.subr.mxu0 0.0
        %4654 = vmatpush1.msra.mxu0 %v4596
        %4655 = vmatprep.subr.mxu0 0.0
        %4656 = vmatpush2.msra.mxu0 0.0
        %4657 = vmatprep.subr.mxu0 0.0
        %4658 = vmatpush2.msra.mxu0 0.0
        %4659 = vmatprep.subr.mxu0 0.0
        %4660 = vmatpush2.msra.mxu0 0.0
        %4661 = vmatprep.subr.mxu0 0.0
        %4662 = vmatpush2.msra.mxu0 0.0
        %4663 = vmatprep.subr.mxu0 0.0
        %4664 = vmatpush2.msra.mxu0 0.0
        %4665 = vmatprep.subr.mxu0 0.0
        %4666 = vmatpush2.msra.mxu0 0.0
        %4667 = vmatprep.subr.mxu0 0.0
        %4668 = vmatpush2.msra.mxu0 0.0
        %4669 = vmatprep.subr.mxu0 0.0
        %4670 = vmatpush2.msra.mxu0 0.0
        %4671 = vmatprep.subr.mxu0 0.0
        %4672 = vmatpush2.msra.mxu0 0.0
        %4673 = vmatprep.subr.mxu0 0.0
        %4674 = vmatpush2.msra.mxu0 0.0
        %4675 = vmatprep.subr.mxu0 0.0
        %4676 = vmatpush2.msra.mxu0 0.0
        %4677 = vmatprep.subr.mxu0 0.0
        %4678 = vmatpush2.msra.mxu0 0.0
        %4679 = vmatprep.subr.mxu0 0.0
        %4680 = vmatpush2.msra.mxu0 0.0
        %4681 = vmatprep.subr.mxu0 0.0
        %4682 = vmatpush2.msra.mxu0 0.0
        %4683 = vmatprep.subr.mxu0 0.0
        %4684 = vmatpush2.msra.mxu0 0.0
        %4685 = vmatprep.subr.mxu0 0.0
        %4686 = vmatpush2.msra.mxu0 0.0
        %4687 = vmatprep.mubr.f32.mxu0 0.0
        %4688 = vmatmul.mubr.f32.gmra.mxu0 %v4600
        %v4689 = vpop.f32.mrf.mxu0
        %v4690 = vadd.f32 0.0, %v4689
        %v4691 = vpop.f32.mrf.mxu0
        %4692 = vmatprep.mubr.f32.mxu0 0.0
        %4693 = vmatmul.mubr.f32.gmra.mxu0 %v4603
        %v4694 = vpop.f32.mrf.mxu0
        %v4695 = vadd.f32 0.0, %v4694
        %v4696 = vpop.f32.mrf.mxu0
        %4697 = vmatprep.mubr.f32.mxu0 0.0
        %4698 = vmatmul.mubr.f32.gmra.mxu0 %v4606
        %v4699 = vpop.f32.mrf.mxu0
        %v4700 = vadd.f32 0.0, %v4699
        %v4701 = vpop.f32.mrf.mxu0
        %4702 = vmatprep.mubr.f32.mxu0 0.0
        %4703 = vmatmul.mubr.f32.gmra.mxu0 %v4609
        %v4704 = vpop.f32.mrf.mxu0
        %v4705 = vadd.f32 0.0, %v4704
        %v4706 = vpop.f32.mrf.mxu0
        %4707 = vmatprep.mubr.f32.mxu0 0.0
        %4708 = vmatmul.mubr.f32.gmra.mxu0 %v4612
        %v4709 = vpop.f32.mrf.mxu0
        %v4710 = vadd.f32 0.0, %v4709
        %v4711 = vpop.f32.mrf.mxu0
        %4712 = vmatprep.mubr.f32.mxu0 0.0
        %4713 = vmatmul.mubr.f32.gmra.mxu0 %v4615
        %v4714 = vpop.f32.mrf.mxu0
        %v4715 = vadd.f32 0.0, %v4714
        %v4716 = vpop.f32.mrf.mxu0
        %4717 = vmatprep.mubr.f32.mxu0 0.0
        %4718 = vmatmul.mubr.f32.gmra.mxu0 %v4618
        %v4719 = vpop.f32.mrf.mxu0
        %v4720 = vadd.f32 0.0, %v4719
        %v4721 = vpop.f32.mrf.mxu0
        %4722 = vmatprep.mubr.f32.mxu0 0.0
        %4723 = vmatmul.mubr.f32.gmra.mxu0 %v4621
        %v4724 = vpop.f32.mrf.mxu0
        %v4725 = vadd.f32 0.0, %v4724
        %v4726 = vpop.f32.mrf.mxu0
        %4727 = vdwg.mxu0
        %v4729 = vsel %vm4598, %v4577, 0
        %v4732 = vsel %vm4598, %v4578, 0
        %v4735 = vsel %vm4598, %v4579, 0
        %v4738 = vsel %vm4598, %v4580, 0
        %v4741 = vsel %vm4598, %v4581, 0
        %v4744 = vsel %vm4598, %v4582, 0
        %v4747 = vsel %vm4598, %v4583, 0
        %v4750 = vsel %vm4598, %v4584, 0
        %4752 = vmatprep.subr.mxu0 0.0
        %4753 = vmatpush1.msra.mxu0 0.0
        %4754 = vmatprep.subr.mxu0 0.0
        %4755 = vmatpush1.msra.mxu0 0.0
        %4756 = vmatprep.subr.mxu0 0.0
        %4757 = vmatpush1.msra.mxu0 0.0
        %4758 = vmatprep.subr.mxu0 0.0
        %4759 = vmatpush1.msra.mxu0 0.0
        %4760 = vmatprep.subr.mxu0 0.0
        %4761 = vmatpush1.msra.mxu0 0.0
        %4762 = vmatprep.subr.mxu0 0.0
        %4763 = vmatpush1.msra.mxu0 0.0
        %4764 = vmatprep.subr.mxu0 0.0
        %4765 = vmatpush1.msra.mxu0 0.0
        %4766 = vmatprep.subr.mxu0 0.0
        %4767 = vmatpush1.msra.mxu0 0.0
        %4768 = vmatprep.subr.mxu0 0.0
        %4769 = vmatpush1.msra.mxu0 0.0
        %4770 = vmatprep.subr.mxu0 0.0
        %4771 = vmatpush1.msra.mxu0 0.0
        %4772 = vmatprep.subr.mxu0 0.0
        %4773 = vmatpush1.msra.mxu0 0.0
        %4774 = vmatprep.subr.mxu0 0.0
        %4775 = vmatpush1.msra.mxu0 0.0
        %4776 = vmatprep.subr.mxu0 0.0
        %4777 = vmatpush1.msra.mxu0 0.0
        %4778 = vmatprep.subr.mxu0 0.0
        %4779 = vmatpush1.msra.mxu0 0.0
        %4780 = vmatprep.subr.mxu0 0.0
        %4781 = vmatpush1.msra.mxu0 %v4586
        %4782 = vmatprep.subr.mxu0 0.0
        %4783 = vmatpush1.msra.mxu0 %v4585
        %4784 = vmatprep.subr.mxu0 0.0
        %4785 = vmatpush2.msra.mxu0 0.0
        %4786 = vmatprep.subr.mxu0 0.0
        %4787 = vmatpush2.msra.mxu0 0.0
        %4788 = vmatprep.subr.mxu0 0.0
        %4789 = vmatpush2.msra.mxu0 0.0
        %4790 = vmatprep.subr.mxu0 0.0
        %4791 = vmatpush2.msra.mxu0 0.0
        %4792 = vmatprep.subr.mxu0 0.0
        %4793 = vmatpush2.msra.mxu0 0.0
        %4794 = vmatprep.subr.mxu0 0.0
        %4795 = vmatpush2.msra.mxu0 0.0
        %4796 = vmatprep.subr.mxu0 0.0
        %4797 = vmatpush2.msra.mxu0 0.0
        %4798 = vmatprep.subr.mxu0 0.0
        %4799 = vmatpush2.msra.mxu0 0.0
        %4800 = vmatprep.subr.mxu0 0.0
        %4801 = vmatpush2.msra.mxu0 0.0
        %4802 = vmatprep.subr.mxu0 0.0
        %4803 = vmatpush2.msra.mxu0 0.0
        %4804 = vmatprep.subr.mxu0 0.0
        %4805 = vmatpush2.msra.mxu0 0.0
        %4806 = vmatprep.subr.mxu0 0.0
        %4807 = vmatpush2.msra.mxu0 0.0
        %4808 = vmatprep.subr.mxu0 0.0
        %4809 = vmatpush2.msra.mxu0 0.0
        %4810 = vmatprep.subr.mxu0 0.0
        %4811 = vmatpush2.msra.mxu0 0.0
        %4812 = vmatprep.subr.mxu0 0.0
        %4813 = vmatpush2.msra.mxu0 0.0
        %4814 = vmatprep.subr.mxu0 0.0
        %4815 = vmatpush2.msra.mxu0 0.0
        %4816 = vmatprep.mubr.f32.mxu0 0.0
        %4817 = vmatmul.mubr.f32.gmra.mxu0 %v4729
        %v4818 = vpop.f32.mrf.mxu0
        %v4819 = vadd.f32 %v4690, %v4818
        %v4820 = vpop.f32.mrf.mxu0
        %4821 = vmatprep.mubr.f32.mxu0 0.0
        %4822 = vmatmul.mubr.f32.gmra.mxu0 %v4732
        %v4823 = vpop.f32.mrf.mxu0
        %v4824 = vadd.f32 %v4695, %v4823
        %v4825 = vpop.f32.mrf.mxu0
        %4826 = vmatprep.mubr.f32.mxu0 0.0
        %4827 = vmatmul.mubr.f32.gmra.mxu0 %v4735
        %v4828 = vpop.f32.mrf.mxu0
        %v4829 = vadd.f32 %v4700, %v4828
        %v4830 = vpop.f32.mrf.mxu0
        %4831 = vmatprep.mubr.f32.mxu0 0.0
        %4832 = vmatmul.mubr.f32.gmra.mxu0 %v4738
        %v4833 = vpop.f32.mrf.mxu0
        %v4834 = vadd.f32 %v4705, %v4833
        %v4835 = vpop.f32.mrf.mxu0
        %4836 = vmatprep.mubr.f32.mxu0 0.0
        %4837 = vmatmul.mubr.f32.gmra.mxu0 %v4741
        %v4838 = vpop.f32.mrf.mxu0
        %v4839 = vadd.f32 %v4710, %v4838
        %v4840 = vpop.f32.mrf.mxu0
        %4841 = vmatprep.mubr.f32.mxu0 0.0
        %4842 = vmatmul.mubr.f32.gmra.mxu0 %v4744
        %v4843 = vpop.f32.mrf.mxu0
        %v4844 = vadd.f32 %v4715, %v4843
        %v4845 = vpop.f32.mrf.mxu0
        %4846 = vmatprep.mubr.f32.mxu0 0.0
        %4847 = vmatmul.mubr.f32.gmra.mxu0 %v4747
        %v4848 = vpop.f32.mrf.mxu0
        %v4849 = vadd.f32 %v4720, %v4848
        %v4850 = vpop.f32.mrf.mxu0
        %4851 = vmatprep.mubr.f32.mxu0 0.0
        %4852 = vmatmul.mubr.f32.gmra.mxu0 %v4750
        %v4853 = vpop.f32.mrf.mxu0
        %v4854 = vadd.f32 %v4725, %v4853
        %v4855 = vpop.f32.mrf.mxu0
        %4856 = vdwg.mxu0
        %v4857 = vld [vmem:[%s4576 + $0x2] sm:$0xff]
        %v4858 = vld [vmem:[%s4576 + $0x12] sm:$0xff]
        %v4859 = vld [vmem:[%s4576 + $0x22] sm:$0xff]
        %v4860 = vld [vmem:[%s4576 + $0x32] sm:$0xff]
        %v4861 = vld [vmem:[%s4576 + $0x42] sm:$0xff]
        %v4862 = vld [vmem:[%s4576 + $0x52] sm:$0xff]
        %v4863 = vld [vmem:[%s4576 + $0x62] sm:$0xff]
        %v4864 = vld [vmem:[%s4576 + $0x72] sm:$0xff]
        %s4865 = scalar_lea.vmem %s5, 32
        %v4866 = vld [vmem:[%s4865] sm:$0xff]
        %v4867 = vld [vmem:[%s4865 + $0x8] sm:$0xff]
        %v4869 = vsel %vm4598, %v4857, 0
        %v4872 = vsel %vm4598, %v4858, 0
        %v4875 = vsel %vm4598, %v4859, 0
        %v4878 = vsel %vm4598, %v4860, 0
        %v4881 = vsel %vm4598, %v4861, 0
        %v4884 = vsel %vm4598, %v4862, 0
        %v4887 = vsel %vm4598, %v4863, 0
        %v4890 = vsel %vm4598, %v4864, 0
        %4892 = vmatprep.subr.mxu0 0.0
        %4893 = vmatpush1.msra.mxu0 0.0
        %4894 = vmatprep.subr.mxu0 0.0
        %4895 = vmatpush1.msra.mxu0 0.0
        %4896 = vmatprep.subr.mxu0 0.0
        %4897 = vmatpush1.msra.mxu0 0.0
        %4898 = vmatprep.subr.mxu0 0.0
        %4899 = vmatpush1.msra.mxu0 0.0
        %4900 = vmatprep.subr.mxu0 0.0
        %4901 = vmatpush1.msra.mxu0 0.0
        %4902 = vmatprep.subr.mxu0 0.0
        %4903 = vmatpush1.msra.mxu0 0.0
        %4904 = vmatprep.subr.mxu0 0.0
        %4905 = vmatpush1.msra.mxu0 0.0
        %4906 = vmatprep.subr.mxu0 0.0
        %4907 = vmatpush1.msra.mxu0 0.0
        %4908 = vmatprep.subr.mxu0 0.0
        %4909 = vmatpush1.msra.mxu0 0.0
        %4910 = vmatprep.subr.mxu0 0.0
        %4911 = vmatpush1.msra.mxu0 0.0
        %4912 = vmatprep.subr.mxu0 0.0
        %4913 = vmatpush1.msra.mxu0 0.0
        %4914 = vmatprep.subr.mxu0 0.0
        %4915 = vmatpush1.msra.mxu0 0.0
        %4916 = vmatprep.subr.mxu0 0.0
        %4917 = vmatpush1.msra.mxu0 0.0
        %4918 = vmatprep.subr.mxu0 0.0
        %4919 = vmatpush1.msra.mxu0 0.0
        %4920 = vmatprep.subr.mxu0 0.0
        %4921 = vmatpush1.msra.mxu0 %v4867
        %4922 = vmatprep.subr.mxu0 0.0
        %4923 = vmatpush1.msra.mxu0 %v4866
        %4924 = vmatprep.subr.mxu0 0.0
        %4925 = vmatpush2.msra.mxu0 0.0
        %4926 = vmatprep.subr.mxu0 0.0
        %4927 = vmatpush2.msra.mxu0 0.0
        %4928 = vmatprep.subr.mxu0 0.0
        %4929 = vmatpush2.msra.mxu0 0.0
        %4930 = vmatprep.subr.mxu0 0.0
        %4931 = vmatpush2.msra.mxu0 0.0
        %4932 = vmatprep.subr.mxu0 0.0
        %4933 = vmatpush2.msra.mxu0 0.0
        %4934 = vmatprep.subr.mxu0 0.0
        %4935 = vmatpush2.msra.mxu0 0.0
        %4936 = vmatprep.subr.mxu0 0.0
        %4937 = vmatpush2.msra.mxu0 0.0
        %4938 = vmatprep.subr.mxu0 0.0
        %4939 = vmatpush2.msra.mxu0 0.0
        %4940 = vmatprep.subr.mxu0 0.0
        %4941 = vmatpush2.msra.mxu0 0.0
        %4942 = vmatprep.subr.mxu0 0.0
        %4943 = vmatpush2.msra.mxu0 0.0
        %4944 = vmatprep.subr.mxu0 0.0
        %4945 = vmatpush2.msra.mxu0 0.0
        %4946 = vmatprep.subr.mxu0 0.0
        %4947 = vmatpush2.msra.mxu0 0.0
        %4948 = vmatprep.subr.mxu0 0.0
        %4949 = vmatpush2.msra.mxu0 0.0
        %4950 = vmatprep.subr.mxu0 0.0
        %4951 = vmatpush2.msra.mxu0 0.0
        %4952 = vmatprep.subr.mxu0 0.0
        %4953 = vmatpush2.msra.mxu0 0.0
        %4954 = vmatprep.subr.mxu0 0.0
        %4955 = vmatpush2.msra.mxu0 0.0
        %4956 = vmatprep.mubr.f32.mxu0 0.0
        %4957 = vmatmul.mubr.f32.gmra.mxu0 %v4869
        %v4958 = vpop.f32.mrf.mxu0
        %v4959 = vadd.f32 0.0, %v4958
        %v4960 = vpop.f32.mrf.mxu0
        %4961 = vmatprep.mubr.f32.mxu0 0.0
        %4962 = vmatmul.mubr.f32.gmra.mxu0 %v4872
        %v4963 = vpop.f32.mrf.mxu0
        %v4964 = vadd.f32 0.0, %v4963
        %v4965 = vpop.f32.mrf.mxu0
        %4966 = vmatprep.mubr.f32.mxu0 0.0
        %4967 = vmatmul.mubr.f32.gmra.mxu0 %v4875
        %v4968 = vpop.f32.mrf.mxu0
        %v4969 = vadd.f32 0.0, %v4968
        %v4970 = vpop.f32.mrf.mxu0
        %4971 = vmatprep.mubr.f32.mxu0 0.0
        %4972 = vmatmul.mubr.f32.gmra.mxu0 %v4878
        %v4973 = vpop.f32.mrf.mxu0
        %v4974 = vadd.f32 0.0, %v4973
        %v4975 = vpop.f32.mrf.mxu0
        %4976 = vmatprep.mubr.f32.mxu0 0.0
        %4977 = vmatmul.mubr.f32.gmra.mxu0 %v4881
        %v4978 = vpop.f32.mrf.mxu0
        %v4979 = vadd.f32 0.0, %v4978
        %v4980 = vpop.f32.mrf.mxu0
        %4981 = vmatprep.mubr.f32.mxu0 0.0
        %4982 = vmatmul.mubr.f32.gmra.mxu0 %v4884
        %v4983 = vpop.f32.mrf.mxu0
        %v4984 = vadd.f32 0.0, %v4983
        %v4985 = vpop.f32.mrf.mxu0
        %4986 = vmatprep.mubr.f32.mxu0 0.0
        %4987 = vmatmul.mubr.f32.gmra.mxu0 %v4887
        %v4988 = vpop.f32.mrf.mxu0
        %v4989 = vadd.f32 0.0, %v4988
        %v4990 = vpop.f32.mrf.mxu0
        %4991 = vmatprep.mubr.f32.mxu0 0.0
        %4992 = vmatmul.mubr.f32.gmra.mxu0 %v4890
        %v4993 = vpop.f32.mrf.mxu0
        %v4994 = vadd.f32 0.0, %v4993
        %v4995 = vpop.f32.mrf.mxu0
        %4996 = vdwg.mxu0
        %v4997 = vadd.f32 %v4819, %v4959
        %v4998 = vadd.f32 %v4824, %v4964
        %v4999 = vadd.f32 %v4829, %v4969
        %v5000 = vadd.f32 %v4834, %v4974
        %v5001 = vadd.f32 %v4839, %v4979
        %v5002 = vadd.f32 %v4844, %v4984
        %v5003 = vadd.f32 %v4849, %v4989
        %v5004 = vadd.f32 %v4854, %v4994
        %s5005 = sadd.s32 16, %s4575
        %s5006 = scalar_lea.vmem [#allocation2], %s5005
        %v5007 = vld [vmem:[%s5006] sm:$0xff]
        %v5008 = vld [vmem:[%s5006 + $0x10] sm:$0xff]
        %v5009 = vld [vmem:[%s5006 + $0x20] sm:$0xff]
        %v5010 = vld [vmem:[%s5006 + $0x30] sm:$0xff]
        %v5011 = vld [vmem:[%s5006 + $0x40] sm:$0xff]
        %v5012 = vld [vmem:[%s5006 + $0x50] sm:$0xff]
        %v5013 = vld [vmem:[%s5006 + $0x60] sm:$0xff]
        %v5014 = vld [vmem:[%s5006 + $0x70] sm:$0xff]
        %s5015 = scalar_lea.vmem %s5, 48
        %v5016 = vld [vmem:[%s5015] sm:$0xff]
        %v5017 = vld [vmem:[%s5015 + $0x8] sm:$0xff]
        %v5019 = vsel %vm4598, %v5007, 0
        %v5022 = vsel %vm4598, %v5008, 0
        %v5025 = vsel %vm4598, %v5009, 0
        %v5028 = vsel %vm4598, %v5010, 0
        %v5031 = vsel %vm4598, %v5011, 0
        %v5034 = vsel %vm4598, %v5012, 0
        %v5037 = vsel %vm4598, %v5013, 0
        %v5040 = vsel %vm4598, %v5014, 0
        %5042 = vmatprep.subr.mxu0 0.0
        %5043 = vmatpush1.msra.mxu0 0.0
        %5044 = vmatprep.subr.mxu0 0.0
        %5045 = vmatpush1.msra.mxu0 0.0
        %5046 = vmatprep.subr.mxu0 0.0
        %5047 = vmatpush1.msra.mxu0 0.0
        %5048 = vmatprep.subr.mxu0 0.0
        %5049 = vmatpush1.msra.mxu0 0.0
        %5050 = vmatprep.subr.mxu0 0.0
        %5051 = vmatpush1.msra.mxu0 0.0
        %5052 = vmatprep.subr.mxu0 0.0
        %5053 = vmatpush1.msra.mxu0 0.0
        %5054 = vmatprep.subr.mxu0 0.0
        %5055 = vmatpush1.msra.mxu0 0.0
        %5056 = vmatprep.subr.mxu0 0.0
        %5057 = vmatpush1.msra.mxu0 0.0
        %5058 = vmatprep.subr.mxu0 0.0
        %5059 = vmatpush1.msra.mxu0 0.0
        %5060 = vmatprep.subr.mxu0 0.0
        %5061 = vmatpush1.msra.mxu0 0.0
        %5062 = vmatprep.subr.mxu0 0.0
        %5063 = vmatpush1.msra.mxu0 0.0
        %5064 = vmatprep.subr.mxu0 0.0
        %5065 = vmatpush1.msra.mxu0 0.0
        %5066 = vmatprep.subr.mxu0 0.0
        %5067 = vmatpush1.msra.mxu0 0.0
        %5068 = vmatprep.subr.mxu0 0.0
        %5069 = vmatpush1.msra.mxu0 0.0
        %5070 = vmatprep.subr.mxu0 0.0
        %5071 = vmatpush1.msra.mxu0 %v5017
        %5072 = vmatprep.subr.mxu0 0.0
        %5073 = vmatpush1.msra.mxu0 %v5016
        %5074 = vmatprep.subr.mxu0 0.0
        %5075 = vmatpush2.msra.mxu0 0.0
        %5076 = vmatprep.subr.mxu0 0.0
        %5077 = vmatpush2.msra.mxu0 0.0
        %5078 = vmatprep.subr.mxu0 0.0
        %5079 = vmatpush2.msra.mxu0 0.0
        %5080 = vmatprep.subr.mxu0 0.0
        %5081 = vmatpush2.msra.mxu0 0.0
        %5082 = vmatprep.subr.mxu0 0.0
        %5083 = vmatpush2.msra.mxu0 0.0
        %5084 = vmatprep.subr.mxu0 0.0
        %5085 = vmatpush2.msra.mxu0 0.0
        %5086 = vmatprep.subr.mxu0 0.0
        %5087 = vmatpush2.msra.mxu0 0.0
        %5088 = vmatprep.subr.mxu0 0.0
        %5089 = vmatpush2.msra.mxu0 0.0
        %5090 = vmatprep.subr.mxu0 0.0
        %5091 = vmatpush2.msra.mxu0 0.0
        %5092 = vmatprep.subr.mxu0 0.0
        %5093 = vmatpush2.msra.mxu0 0.0
        %5094 = vmatprep.subr.mxu0 0.0
        %5095 = vmatpush2.msra.mxu0 0.0
        %5096 = vmatprep.subr.mxu0 0.0
        %5097 = vmatpush2.msra.mxu0 0.0
        %5098 = vmatprep.subr.mxu0 0.0
        %5099 = vmatpush2.msra.mxu0 0.0
        %5100 = vmatprep.subr.mxu0 0.0
        %5101 = vmatpush2.msra.mxu0 0.0
        %5102 = vmatprep.subr.mxu0 0.0
        %5103 = vmatpush2.msra.mxu0 0.0
        %5104 = vmatprep.subr.mxu0 0.0
        %5105 = vmatpush2.msra.mxu0 0.0
        %5106 = vmatprep.mubr.f32.mxu0 0.0
        %5107 = vmatmul.mubr.f32.gmra.mxu0 %v5019
        %v5108 = vpop.f32.mrf.mxu0
        %v5109 = vadd.f32 0.0, %v5108
        %v5110 = vpop.f32.mrf.mxu0
        %5111 = vmatprep.mubr.f32.mxu0 0.0
        %5112 = vmatmul.mubr.f32.gmra.mxu0 %v5022
        %v5113 = vpop.f32.mrf.mxu0
        %v5114 = vadd.f32 0.0, %v5113
        %v5115 = vpop.f32.mrf.mxu0
        %5116 = vmatprep.mubr.f32.mxu0 0.0
        %5117 = vmatmul.mubr.f32.gmra.mxu0 %v5025
        %v5118 = vpop.f32.mrf.mxu0
        %v5119 = vadd.f32 0.0, %v5118
        %v5120 = vpop.f32.mrf.mxu0
        %5121 = vmatprep.mubr.f32.mxu0 0.0
        %5122 = vmatmul.mubr.f32.gmra.mxu0 %v5028
        %v5123 = vpop.f32.mrf.mxu0
        %v5124 = vadd.f32 0.0, %v5123
        %v5125 = vpop.f32.mrf.mxu0
        %5126 = vmatprep.mubr.f32.mxu0 0.0
        %5127 = vmatmul.mubr.f32.gmra.mxu0 %v5031
        %v5128 = vpop.f32.mrf.mxu0
        %v5129 = vadd.f32 0.0, %v5128
        %v5130 = vpop.f32.mrf.mxu0
        %5131 = vmatprep.mubr.f32.mxu0 0.0
        %5132 = vmatmul.mubr.f32.gmra.mxu0 %v5034
        %v5133 = vpop.f32.mrf.mxu0
        %v5134 = vadd.f32 0.0, %v5133
        %v5135 = vpop.f32.mrf.mxu0
        %5136 = vmatprep.mubr.f32.mxu0 0.0
        %5137 = vmatmul.mubr.f32.gmra.mxu0 %v5037
        %v5138 = vpop.f32.mrf.mxu0
        %v5139 = vadd.f32 0.0, %v5138
        %v5140 = vpop.f32.mrf.mxu0
        %5141 = vmatprep.mubr.f32.mxu0 0.0
        %5142 = vmatmul.mubr.f32.gmra.mxu0 %v5040
        %v5143 = vpop.f32.mrf.mxu0
        %v5144 = vadd.f32 0.0, %v5143
        %v5145 = vpop.f32.mrf.mxu0
        %5146 = vdwg.mxu0
        %v5147 = vadd.f32 %v4997, %v5109
        %v5148 = vadd.f32 %v4998, %v5114
        %v5149 = vadd.f32 %v4999, %v5119
        %v5150 = vadd.f32 %v5000, %v5124
        %v5151 = vadd.f32 %v5001, %v5129
        %v5152 = vadd.f32 %v5002, %v5134
        %v5153 = vadd.f32 %v5003, %v5139
        %v5154 = vadd.f32 %v5004, %v5144
        %v5155 = vld [vmem:[%s5006 + $0x1] sm:$0xff]
        %v5156 = vld [vmem:[%s5006 + $0x11] sm:$0xff]
        %v5157 = vld [vmem:[%s5006 + $0x21] sm:$0xff]
        %v5158 = vld [vmem:[%s5006 + $0x31] sm:$0xff]
        %v5159 = vld [vmem:[%s5006 + $0x41] sm:$0xff]
        %v5160 = vld [vmem:[%s5006 + $0x51] sm:$0xff]
        %v5161 = vld [vmem:[%s5006 + $0x61] sm:$0xff]
        %v5162 = vld [vmem:[%s5006 + $0x71] sm:$0xff]
        %s5163 = scalar_lea.vmem %s5, 64
        %v5164 = vld [vmem:[%s5163] sm:$0xff]
        %v5165 = vld [vmem:[%s5163 + $0x8] sm:$0xff]
        %v5167 = vsel %vm4598, %v5155, 0
        %v5170 = vsel %vm4598, %v5156, 0
        %v5173 = vsel %vm4598, %v5157, 0
        %v5176 = vsel %vm4598, %v5158, 0
        %v5179 = vsel %vm4598, %v5159, 0
        %v5182 = vsel %vm4598, %v5160, 0
        %v5185 = vsel %vm4598, %v5161, 0
        %v5188 = vsel %vm4598, %v5162, 0
        %5190 = vmatprep.subr.mxu0 0.0
        %5191 = vmatpush1.msra.mxu0 0.0
        %5192 = vmatprep.subr.mxu0 0.0
        %5193 = vmatpush1.msra.mxu0 0.0
        %5194 = vmatprep.subr.mxu0 0.0
        %5195 = vmatpush1.msra.mxu0 0.0
        %5196 = vmatprep.subr.mxu0 0.0
        %5197 = vmatpush1.msra.mxu0 0.0
        %5198 = vmatprep.subr.mxu0 0.0
        %5199 = vmatpush1.msra.mxu0 0.0
        %5200 = vmatprep.subr.mxu0 0.0
        %5201 = vmatpush1.msra.mxu0 0.0
        %5202 = vmatprep.subr.mxu0 0.0
        %5203 = vmatpush1.msra.mxu0 0.0
        %5204 = vmatprep.subr.mxu0 0.0
        %5205 = vmatpush1.msra.mxu0 0.0
        %5206 = vmatprep.subr.mxu0 0.0
        %5207 = vmatpush1.msra.mxu0 0.0
        %5208 = vmatprep.subr.mxu0 0.0
        %5209 = vmatpush1.msra.mxu0 0.0
        %5210 = vmatprep.subr.mxu0 0.0
        %5211 = vmatpush1.msra.mxu0 0.0
        %5212 = vmatprep.subr.mxu0 0.0
        %5213 = vmatpush1.msra.mxu0 0.0
        %5214 = vmatprep.subr.mxu0 0.0
        %5215 = vmatpush1.msra.mxu0 0.0
        %5216 = vmatprep.subr.mxu0 0.0
        %5217 = vmatpush1.msra.mxu0 0.0
        %5218 = vmatprep.subr.mxu0 0.0
        %5219 = vmatpush1.msra.mxu0 %v5165
        %5220 = vmatprep.subr.mxu0 0.0
        %5221 = vmatpush1.msra.mxu0 %v5164
        %5222 = vmatprep.subr.mxu0 0.0
        %5223 = vmatpush2.msra.mxu0 0.0
        %5224 = vmatprep.subr.mxu0 0.0
        %5225 = vmatpush2.msra.mxu0 0.0
        %5226 = vmatprep.subr.mxu0 0.0
        %5227 = vmatpush2.msra.mxu0 0.0
        %5228 = vmatprep.subr.mxu0 0.0
        %5229 = vmatpush2.msra.mxu0 0.0
        %5230 = vmatprep.subr.mxu0 0.0
        %5231 = vmatpush2.msra.mxu0 0.0
        %5232 = vmatprep.subr.mxu0 0.0
        %5233 = vmatpush2.msra.mxu0 0.0
        %5234 = vmatprep.subr.mxu0 0.0
        %5235 = vmatpush2.msra.mxu0 0.0
        %5236 = vmatprep.subr.mxu0 0.0
        %5237 = vmatpush2.msra.mxu0 0.0
        %5238 = vmatprep.subr.mxu0 0.0
        %5239 = vmatpush2.msra.mxu0 0.0
        %5240 = vmatprep.subr.mxu0 0.0
        %5241 = vmatpush2.msra.mxu0 0.0
        %5242 = vmatprep.subr.mxu0 0.0
        %5243 = vmatpush2.msra.mxu0 0.0
        %5244 = vmatprep.subr.mxu0 0.0
        %5245 = vmatpush2.msra.mxu0 0.0
        %5246 = vmatprep.subr.mxu0 0.0
        %5247 = vmatpush2.msra.mxu0 0.0
        %5248 = vmatprep.subr.mxu0 0.0
        %5249 = vmatpush2.msra.mxu0 0.0
        %5250 = vmatprep.subr.mxu0 0.0
        %5251 = vmatpush2.msra.mxu0 0.0
        %5252 = vmatprep.subr.mxu0 0.0
        %5253 = vmatpush2.msra.mxu0 0.0
        %5254 = vmatprep.mubr.f32.mxu0 0.0
        %5255 = vmatmul.mubr.f32.gmra.mxu0 %v5167
        %v5256 = vpop.f32.mrf.mxu0
        %v5257 = vadd.f32 0.0, %v5256
        %v5258 = vpop.f32.mrf.mxu0
        %5259 = vmatprep.mubr.f32.mxu0 0.0
        %5260 = vmatmul.mubr.f32.gmra.mxu0 %v5170
        %v5261 = vpop.f32.mrf.mxu0
        %v5262 = vadd.f32 0.0, %v5261
        %v5263 = vpop.f32.mrf.mxu0
        %5264 = vmatprep.mubr.f32.mxu0 0.0
        %5265 = vmatmul.mubr.f32.gmra.mxu0 %v5173
        %v5266 = vpop.f32.mrf.mxu0
        %v5267 = vadd.f32 0.0, %v5266
        %v5268 = vpop.f32.mrf.mxu0
        %5269 = vmatprep.mubr.f32.mxu0 0.0
        %5270 = vmatmul.mubr.f32.gmra.mxu0 %v5176
        %v5271 = vpop.f32.mrf.mxu0
        %v5272 = vadd.f32 0.0, %v5271
        %v5273 = vpop.f32.mrf.mxu0
        %5274 = vmatprep.mubr.f32.mxu0 0.0
        %5275 = vmatmul.mubr.f32.gmra.mxu0 %v5179
        %v5276 = vpop.f32.mrf.mxu0
        %v5277 = vadd.f32 0.0, %v5276
        %v5278 = vpop.f32.mrf.mxu0
        %5279 = vmatprep.mubr.f32.mxu0 0.0
        %5280 = vmatmul.mubr.f32.gmra.mxu0 %v5182
        %v5281 = vpop.f32.mrf.mxu0
        %v5282 = vadd.f32 0.0, %v5281
        %v5283 = vpop.f32.mrf.mxu0
        %5284 = vmatprep.mubr.f32.mxu0 0.0
        %5285 = vmatmul.mubr.f32.gmra.mxu0 %v5185
        %v5286 = vpop.f32.mrf.mxu0
        %v5287 = vadd.f32 0.0, %v5286
        %v5288 = vpop.f32.mrf.mxu0
        %5289 = vmatprep.mubr.f32.mxu0 0.0
        %5290 = vmatmul.mubr.f32.gmra.mxu0 %v5188
        %v5291 = vpop.f32.mrf.mxu0
        %v5292 = vadd.f32 0.0, %v5291
        %v5293 = vpop.f32.mrf.mxu0
        %5294 = vdwg.mxu0
        %v5295 = vadd.f32 %v5147, %v5257
        %v5296 = vadd.f32 %v5148, %v5262
        %v5297 = vadd.f32 %v5149, %v5267
        %v5298 = vadd.f32 %v5150, %v5272
        %v5299 = vadd.f32 %v5151, %v5277
        %v5300 = vadd.f32 %v5152, %v5282
        %v5301 = vadd.f32 %v5153, %v5287
        %v5302 = vadd.f32 %v5154, %v5292
        %v5303 = vld [vmem:[%s5006 + $0x2] sm:$0xff]
        %v5304 = vld [vmem:[%s5006 + $0x12] sm:$0xff]
        %v5305 = vld [vmem:[%s5006 + $0x22] sm:$0xff]
        %v5306 = vld [vmem:[%s5006 + $0x32] sm:$0xff]
        %v5307 = vld [vmem:[%s5006 + $0x42] sm:$0xff]
        %v5308 = vld [vmem:[%s5006 + $0x52] sm:$0xff]
        %v5309 = vld [vmem:[%s5006 + $0x62] sm:$0xff]
        %v5310 = vld [vmem:[%s5006 + $0x72] sm:$0xff]
        %s5311 = scalar_lea.vmem %s5, 80
        %v5312 = vld [vmem:[%s5311] sm:$0xff]
        %v5313 = vld [vmem:[%s5311 + $0x8] sm:$0xff]
        %v5315 = vsel %vm4598, %v5303, 0
        %v5318 = vsel %vm4598, %v5304, 0
        %v5321 = vsel %vm4598, %v5305, 0
        %v5324 = vsel %vm4598, %v5306, 0
        %v5327 = vsel %vm4598, %v5307, 0
        %v5330 = vsel %vm4598, %v5308, 0
        %v5333 = vsel %vm4598, %v5309, 0
        %v5336 = vsel %vm4598, %v5310, 0
        %5338 = vmatprep.subr.mxu0 0.0
        %5339 = vmatpush1.msra.mxu0 0.0
        %5340 = vmatprep.subr.mxu0 0.0
        %5341 = vmatpush1.msra.mxu0 0.0
        %5342 = vmatprep.subr.mxu0 0.0
        %5343 = vmatpush1.msra.mxu0 0.0
        %5344 = vmatprep.subr.mxu0 0.0
        %5345 = vmatpush1.msra.mxu0 0.0
        %5346 = vmatprep.subr.mxu0 0.0
        %5347 = vmatpush1.msra.mxu0 0.0
        %5348 = vmatprep.subr.mxu0 0.0
        %5349 = vmatpush1.msra.mxu0 0.0
        %5350 = vmatprep.subr.mxu0 0.0
        %5351 = vmatpush1.msra.mxu0 0.0
        %5352 = vmatprep.subr.mxu0 0.0
        %5353 = vmatpush1.msra.mxu0 0.0
        %5354 = vmatprep.subr.mxu0 0.0
        %5355 = vmatpush1.msra.mxu0 0.0
        %5356 = vmatprep.subr.mxu0 0.0
        %5357 = vmatpush1.msra.mxu0 0.0
        %5358 = vmatprep.subr.mxu0 0.0
        %5359 = vmatpush1.msra.mxu0 0.0
        %5360 = vmatprep.subr.mxu0 0.0
        %5361 = vmatpush1.msra.mxu0 0.0
        %5362 = vmatprep.subr.mxu0 0.0
        %5363 = vmatpush1.msra.mxu0 0.0
        %5364 = vmatprep.subr.mxu0 0.0
        %5365 = vmatpush1.msra.mxu0 0.0
        %5366 = vmatprep.subr.mxu0 0.0
        %5367 = vmatpush1.msra.mxu0 %v5313
        %5368 = vmatprep.subr.mxu0 0.0
        %5369 = vmatpush1.msra.mxu0 %v5312
        %5370 = vmatprep.subr.mxu0 0.0
        %5371 = vmatpush2.msra.mxu0 0.0
        %5372 = vmatprep.subr.mxu0 0.0
        %5373 = vmatpush2.msra.mxu0 0.0
        %5374 = vmatprep.subr.mxu0 0.0
        %5375 = vmatpush2.msra.mxu0 0.0
        %5376 = vmatprep.subr.mxu0 0.0
        %5377 = vmatpush2.msra.mxu0 0.0
        %5378 = vmatprep.subr.mxu0 0.0
        %5379 = vmatpush2.msra.mxu0 0.0
        %5380 = vmatprep.subr.mxu0 0.0
        %5381 = vmatpush2.msra.mxu0 0.0
        %5382 = vmatprep.subr.mxu0 0.0
        %5383 = vmatpush2.msra.mxu0 0.0
        %5384 = vmatprep.subr.mxu0 0.0
        %5385 = vmatpush2.msra.mxu0 0.0
        %5386 = vmatprep.subr.mxu0 0.0
        %5387 = vmatpush2.msra.mxu0 0.0
        %5388 = vmatprep.subr.mxu0 0.0
        %5389 = vmatpush2.msra.mxu0 0.0
        %5390 = vmatprep.subr.mxu0 0.0
        %5391 = vmatpush2.msra.mxu0 0.0
        %5392 = vmatprep.subr.mxu0 0.0
        %5393 = vmatpush2.msra.mxu0 0.0
        %5394 = vmatprep.subr.mxu0 0.0
        %5395 = vmatpush2.msra.mxu0 0.0
        %5396 = vmatprep.subr.mxu0 0.0
        %5397 = vmatpush2.msra.mxu0 0.0
        %5398 = vmatprep.subr.mxu0 0.0
        %5399 = vmatpush2.msra.mxu0 0.0
        %5400 = vmatprep.subr.mxu0 0.0
        %5401 = vmatpush2.msra.mxu0 0.0
        %5402 = vmatprep.mubr.f32.mxu0 0.0
        %5403 = vmatmul.mubr.f32.gmra.mxu0 %v5315
        %v5404 = vpop.f32.mrf.mxu0
        %v5405 = vadd.f32 0.0, %v5404
        %v5406 = vpop.f32.mrf.mxu0
        %5407 = vmatprep.mubr.f32.mxu0 0.0
        %5408 = vmatmul.mubr.f32.gmra.mxu0 %v5318
        %v5409 = vpop.f32.mrf.mxu0
        %v5410 = vadd.f32 0.0, %v5409
        %v5411 = vpop.f32.mrf.mxu0
        %5412 = vmatprep.mubr.f32.mxu0 0.0
        %5413 = vmatmul.mubr.f32.gmra.mxu0 %v5321
        %v5414 = vpop.f32.mrf.mxu0
        %v5415 = vadd.f32 0.0, %v5414
        %v5416 = vpop.f32.mrf.mxu0
        %5417 = vmatprep.mubr.f32.mxu0 0.0
        %5418 = vmatmul.mubr.f32.gmra.mxu0 %v5324
        %v5419 = vpop.f32.mrf.mxu0
        %v5420 = vadd.f32 0.0, %v5419
        %v5421 = vpop.f32.mrf.mxu0
        %5422 = vmatprep.mubr.f32.mxu0 0.0
        %5423 = vmatmul.mubr.f32.gmra.mxu0 %v5327
        %v5424 = vpop.f32.mrf.mxu0
        %v5425 = vadd.f32 0.0, %v5424
        %v5426 = vpop.f32.mrf.mxu0
        %5427 = vmatprep.mubr.f32.mxu0 0.0
        %5428 = vmatmul.mubr.f32.gmra.mxu0 %v5330
        %v5429 = vpop.f32.mrf.mxu0
        %v5430 = vadd.f32 0.0, %v5429
        %v5431 = vpop.f32.mrf.mxu0
        %5432 = vmatprep.mubr.f32.mxu0 0.0
        %5433 = vmatmul.mubr.f32.gmra.mxu0 %v5333
        %v5434 = vpop.f32.mrf.mxu0
        %v5435 = vadd.f32 0.0, %v5434
        %v5436 = vpop.f32.mrf.mxu0
        %5437 = vmatprep.mubr.f32.mxu0 0.0
        %5438 = vmatmul.mubr.f32.gmra.mxu0 %v5336
        %v5439 = vpop.f32.mrf.mxu0
        %v5440 = vadd.f32 0.0, %v5439
        %v5441 = vpop.f32.mrf.mxu0
        %5442 = vdwg.mxu0
        %v5443 = vadd.f32 %v5295, %v5405
        %v5444 = vadd.f32 %v5296, %v5410
        %v5445 = vadd.f32 %v5297, %v5415
        %v5446 = vadd.f32 %v5298, %v5420
        %v5447 = vadd.f32 %v5299, %v5425
        %v5448 = vadd.f32 %v5300, %v5430
        %v5449 = vadd.f32 %v5301, %v5435
        %v5450 = vadd.f32 %v5302, %v5440
        %s5451 = sadd.s32 32, %s4575
        %s5452 = scalar_lea.vmem [#allocation2], %s5451
        %v5453 = vld [vmem:[%s5452] sm:$0xff]
        %v5454 = vld [vmem:[%s5452 + $0x10] sm:$0xff]
        %v5455 = vld [vmem:[%s5452 + $0x20] sm:$0xff]
        %v5456 = vld [vmem:[%s5452 + $0x30] sm:$0xff]
        %v5457 = vld [vmem:[%s5452 + $0x40] sm:$0xff]
        %v5458 = vld [vmem:[%s5452 + $0x50] sm:$0xff]
        %v5459 = vld [vmem:[%s5452 + $0x60] sm:$0xff]
        %v5460 = vld [vmem:[%s5452 + $0x70] sm:$0xff]
        %s5461 = scalar_lea.vmem %s5, 96
        %v5462 = vld [vmem:[%s5461] sm:$0xff]
        %v5463 = vld [vmem:[%s5461 + $0x8] sm:$0xff]
        %v5465 = vsel %vm4598, %v5453, 0
        %v5468 = vsel %vm4598, %v5454, 0
        %v5471 = vsel %vm4598, %v5455, 0
        %v5474 = vsel %vm4598, %v5456, 0
        %v5477 = vsel %vm4598, %v5457, 0
        %v5480 = vsel %vm4598, %v5458, 0
        %v5483 = vsel %vm4598, %v5459, 0
        %v5486 = vsel %vm4598, %v5460, 0
        %5488 = vmatprep.subr.mxu0 0.0
        %5489 = vmatpush1.msra.mxu0 0.0
        %5490 = vmatprep.subr.mxu0 0.0
        %5491 = vmatpush1.msra.mxu0 0.0
        %5492 = vmatprep.subr.mxu0 0.0
        %5493 = vmatpush1.msra.mxu0 0.0
        %5494 = vmatprep.subr.mxu0 0.0
        %5495 = vmatpush1.msra.mxu0 0.0
        %5496 = vmatprep.subr.mxu0 0.0
        %5497 = vmatpush1.msra.mxu0 0.0
        %5498 = vmatprep.subr.mxu0 0.0
        %5499 = vmatpush1.msra.mxu0 0.0
        %5500 = vmatprep.subr.mxu0 0.0
        %5501 = vmatpush1.msra.mxu0 0.0
        %5502 = vmatprep.subr.mxu0 0.0
        %5503 = vmatpush1.msra.mxu0 0.0
        %5504 = vmatprep.subr.mxu0 0.0
        %5505 = vmatpush1.msra.mxu0 0.0
        %5506 = vmatprep.subr.mxu0 0.0
        %5507 = vmatpush1.msra.mxu0 0.0
        %5508 = vmatprep.subr.mxu0 0.0
        %5509 = vmatpush1.msra.mxu0 0.0
        %5510 = vmatprep.subr.mxu0 0.0
        %5511 = vmatpush1.msra.mxu0 0.0
        %5512 = vmatprep.subr.mxu0 0.0
        %5513 = vmatpush1.msra.mxu0 0.0
        %5514 = vmatprep.subr.mxu0 0.0
        %5515 = vmatpush1.msra.mxu0 0.0
        %5516 = vmatprep.subr.mxu0 0.0
        %5517 = vmatpush1.msra.mxu0 %v5463
        %5518 = vmatprep.subr.mxu0 0.0
        %5519 = vmatpush1.msra.mxu0 %v5462
        %5520 = vmatprep.subr.mxu0 0.0
        %5521 = vmatpush2.msra.mxu0 0.0
        %5522 = vmatprep.subr.mxu0 0.0
        %5523 = vmatpush2.msra.mxu0 0.0
        %5524 = vmatprep.subr.mxu0 0.0
        %5525 = vmatpush2.msra.mxu0 0.0
        %5526 = vmatprep.subr.mxu0 0.0
        %5527 = vmatpush2.msra.mxu0 0.0
        %5528 = vmatprep.subr.mxu0 0.0
        %5529 = vmatpush2.msra.mxu0 0.0
        %5530 = vmatprep.subr.mxu0 0.0
        %5531 = vmatpush2.msra.mxu0 0.0
        %5532 = vmatprep.subr.mxu0 0.0
        %5533 = vmatpush2.msra.mxu0 0.0
        %5534 = vmatprep.subr.mxu0 0.0
        %5535 = vmatpush2.msra.mxu0 0.0
        %5536 = vmatprep.subr.mxu0 0.0
        %5537 = vmatpush2.msra.mxu0 0.0
        %5538 = vmatprep.subr.mxu0 0.0
        %5539 = vmatpush2.msra.mxu0 0.0
        %5540 = vmatprep.subr.mxu0 0.0
        %5541 = vmatpush2.msra.mxu0 0.0
        %5542 = vmatprep.subr.mxu0 0.0
        %5543 = vmatpush2.msra.mxu0 0.0
        %5544 = vmatprep.subr.mxu0 0.0
        %5545 = vmatpush2.msra.mxu0 0.0
        %5546 = vmatprep.subr.mxu0 0.0
        %5547 = vmatpush2.msra.mxu0 0.0
        %5548 = vmatprep.subr.mxu0 0.0
        %5549 = vmatpush2.msra.mxu0 0.0
        %5550 = vmatprep.subr.mxu0 0.0
        %5551 = vmatpush2.msra.mxu0 0.0
        %5552 = vmatprep.mubr.f32.mxu0 0.0
        %5553 = vmatmul.mubr.f32.gmra.mxu0 %v5465
        %v5554 = vpop.f32.mrf.mxu0
        %v5555 = vadd.f32 0.0, %v5554
        %v5556 = vpop.f32.mrf.mxu0
        %5557 = vmatprep.mubr.f32.mxu0 0.0
        %5558 = vmatmul.mubr.f32.gmra.mxu0 %v5468
        %v5559 = vpop.f32.mrf.mxu0
        %v5560 = vadd.f32 0.0, %v5559
        %v5561 = vpop.f32.mrf.mxu0
        %5562 = vmatprep.mubr.f32.mxu0 0.0
        %5563 = vmatmul.mubr.f32.gmra.mxu0 %v5471
        %v5564 = vpop.f32.mrf.mxu0
        %v5565 = vadd.f32 0.0, %v5564
        %v5566 = vpop.f32.mrf.mxu0
        %5567 = vmatprep.mubr.f32.mxu0 0.0
        %5568 = vmatmul.mubr.f32.gmra.mxu0 %v5474
        %v5569 = vpop.f32.mrf.mxu0
        %v5570 = vadd.f32 0.0, %v5569
        %v5571 = vpop.f32.mrf.mxu0
        %5572 = vmatprep.mubr.f32.mxu0 0.0
        %5573 = vmatmul.mubr.f32.gmra.mxu0 %v5477
        %v5574 = vpop.f32.mrf.mxu0
        %v5575 = vadd.f32 0.0, %v5574
        %v5576 = vpop.f32.mrf.mxu0
        %5577 = vmatprep.mubr.f32.mxu0 0.0
        %5578 = vmatmul.mubr.f32.gmra.mxu0 %v5480
        %v5579 = vpop.f32.mrf.mxu0
        %v5580 = vadd.f32 0.0, %v5579
        %v5581 = vpop.f32.mrf.mxu0
        %5582 = vmatprep.mubr.f32.mxu0 0.0
        %5583 = vmatmul.mubr.f32.gmra.mxu0 %v5483
        %v5584 = vpop.f32.mrf.mxu0
        %v5585 = vadd.f32 0.0, %v5584
        %v5586 = vpop.f32.mrf.mxu0
        %5587 = vmatprep.mubr.f32.mxu0 0.0
        %5588 = vmatmul.mubr.f32.gmra.mxu0 %v5486
        %v5589 = vpop.f32.mrf.mxu0
        %v5590 = vadd.f32 0.0, %v5589
        %v5591 = vpop.f32.mrf.mxu0
        %5592 = vdwg.mxu0
        %v5593 = vadd.f32 %v5443, %v5555
        %v5594 = vadd.f32 %v5444, %v5560
        %v5595 = vadd.f32 %v5445, %v5565
        %v5596 = vadd.f32 %v5446, %v5570
        %v5597 = vadd.f32 %v5447, %v5575
        %v5598 = vadd.f32 %v5448, %v5580
        %v5599 = vadd.f32 %v5449, %v5585
        %v5600 = vadd.f32 %v5450, %v5590
        %v5601 = vld [vmem:[%s5452 + $0x1] sm:$0xff]
        %v5602 = vld [vmem:[%s5452 + $0x11] sm:$0xff]
        %v5603 = vld [vmem:[%s5452 + $0x21] sm:$0xff]
        %v5604 = vld [vmem:[%s5452 + $0x31] sm:$0xff]
        %v5605 = vld [vmem:[%s5452 + $0x41] sm:$0xff]
        %v5606 = vld [vmem:[%s5452 + $0x51] sm:$0xff]
        %v5607 = vld [vmem:[%s5452 + $0x61] sm:$0xff]
        %v5608 = vld [vmem:[%s5452 + $0x71] sm:$0xff]
        %s5609 = scalar_lea.vmem %s5, 112
        %v5610 = vld [vmem:[%s5609] sm:$0xff]
        %v5611 = vld [vmem:[%s5609 + $0x8] sm:$0xff]
        %v5613 = vsel %vm4598, %v5601, 0
        %v5616 = vsel %vm4598, %v5602, 0
        %v5619 = vsel %vm4598, %v5603, 0
        %v5622 = vsel %vm4598, %v5604, 0
        %v5625 = vsel %vm4598, %v5605, 0
        %v5628 = vsel %vm4598, %v5606, 0
        %v5631 = vsel %vm4598, %v5607, 0
        %v5634 = vsel %vm4598, %v5608, 0
        %5636 = vmatprep.subr.mxu0 0.0
        %5637 = vmatpush1.msra.mxu0 0.0
        %5638 = vmatprep.subr.mxu0 0.0
        %5639 = vmatpush1.msra.mxu0 0.0
        %5640 = vmatprep.subr.mxu0 0.0
        %5641 = vmatpush1.msra.mxu0 0.0
        %5642 = vmatprep.subr.mxu0 0.0
        %5643 = vmatpush1.msra.mxu0 0.0
        %5644 = vmatprep.subr.mxu0 0.0
        %5645 = vmatpush1.msra.mxu0 0.0
        %5646 = vmatprep.subr.mxu0 0.0
        %5647 = vmatpush1.msra.mxu0 0.0
        %5648 = vmatprep.subr.mxu0 0.0
        %5649 = vmatpush1.msra.mxu0 0.0
        %5650 = vmatprep.subr.mxu0 0.0
        %5651 = vmatpush1.msra.mxu0 0.0
        %5652 = vmatprep.subr.mxu0 0.0
        %5653 = vmatpush1.msra.mxu0 0.0
        %5654 = vmatprep.subr.mxu0 0.0
        %5655 = vmatpush1.msra.mxu0 0.0
        %5656 = vmatprep.subr.mxu0 0.0
        %5657 = vmatpush1.msra.mxu0 0.0
        %5658 = vmatprep.subr.mxu0 0.0
        %5659 = vmatpush1.msra.mxu0 0.0
        %5660 = vmatprep.subr.mxu0 0.0
        %5661 = vmatpush1.msra.mxu0 0.0
        %5662 = vmatprep.subr.mxu0 0.0
        %5663 = vmatpush1.msra.mxu0 0.0
        %5664 = vmatprep.subr.mxu0 0.0
        %5665 = vmatpush1.msra.mxu0 %v5611
        %5666 = vmatprep.subr.mxu0 0.0
        %5667 = vmatpush1.msra.mxu0 %v5610
        %5668 = vmatprep.subr.mxu0 0.0
        %5669 = vmatpush2.msra.mxu0 0.0
        %5670 = vmatprep.subr.mxu0 0.0
        %5671 = vmatpush2.msra.mxu0 0.0
        %5672 = vmatprep.subr.mxu0 0.0
        %5673 = vmatpush2.msra.mxu0 0.0
        %5674 = vmatprep.subr.mxu0 0.0
        %5675 = vmatpush2.msra.mxu0 0.0
        %5676 = vmatprep.subr.mxu0 0.0
        %5677 = vmatpush2.msra.mxu0 0.0
        %5678 = vmatprep.subr.mxu0 0.0
        %5679 = vmatpush2.msra.mxu0 0.0
        %5680 = vmatprep.subr.mxu0 0.0
        %5681 = vmatpush2.msra.mxu0 0.0
        %5682 = vmatprep.subr.mxu0 0.0
        %5683 = vmatpush2.msra.mxu0 0.0
        %5684 = vmatprep.subr.mxu0 0.0
        %5685 = vmatpush2.msra.mxu0 0.0
        %5686 = vmatprep.subr.mxu0 0.0
        %5687 = vmatpush2.msra.mxu0 0.0
        %5688 = vmatprep.subr.mxu0 0.0
        %5689 = vmatpush2.msra.mxu0 0.0
        %5690 = vmatprep.subr.mxu0 0.0
        %5691 = vmatpush2.msra.mxu0 0.0
        %5692 = vmatprep.subr.mxu0 0.0
        %5693 = vmatpush2.msra.mxu0 0.0
        %5694 = vmatprep.subr.mxu0 0.0
        %5695 = vmatpush2.msra.mxu0 0.0
        %5696 = vmatprep.subr.mxu0 0.0
        %5697 = vmatpush2.msra.mxu0 0.0
        %5698 = vmatprep.subr.mxu0 0.0
        %5699 = vmatpush2.msra.mxu0 0.0
        %5700 = vmatprep.mubr.f32.mxu0 0.0
        %5701 = vmatmul.mubr.f32.gmra.mxu0 %v5613
        %v5702 = vpop.f32.mrf.mxu0
        %v5703 = vadd.f32 0.0, %v5702
        %v5704 = vpop.f32.mrf.mxu0
        %5705 = vmatprep.mubr.f32.mxu0 0.0
        %5706 = vmatmul.mubr.f32.gmra.mxu0 %v5616
        %v5707 = vpop.f32.mrf.mxu0
        %v5708 = vadd.f32 0.0, %v5707
        %v5709 = vpop.f32.mrf.mxu0
        %5710 = vmatprep.mubr.f32.mxu0 0.0
        %5711 = vmatmul.mubr.f32.gmra.mxu0 %v5619
        %v5712 = vpop.f32.mrf.mxu0
        %v5713 = vadd.f32 0.0, %v5712
        %v5714 = vpop.f32.mrf.mxu0
        %5715 = vmatprep.mubr.f32.mxu0 0.0
        %5716 = vmatmul.mubr.f32.gmra.mxu0 %v5622
        %v5717 = vpop.f32.mrf.mxu0
        %v5718 = vadd.f32 0.0, %v5717
        %v5719 = vpop.f32.mrf.mxu0
        %5720 = vmatprep.mubr.f32.mxu0 0.0
        %5721 = vmatmul.mubr.f32.gmra.mxu0 %v5625
        %v5722 = vpop.f32.mrf.mxu0
        %v5723 = vadd.f32 0.0, %v5722
        %v5724 = vpop.f32.mrf.mxu0
        %5725 = vmatprep.mubr.f32.mxu0 0.0
        %5726 = vmatmul.mubr.f32.gmra.mxu0 %v5628
        %v5727 = vpop.f32.mrf.mxu0
        %v5728 = vadd.f32 0.0, %v5727
        %v5729 = vpop.f32.mrf.mxu0
        %5730 = vmatprep.mubr.f32.mxu0 0.0
        %5731 = vmatmul.mubr.f32.gmra.mxu0 %v5631
        %v5732 = vpop.f32.mrf.mxu0
        %v5733 = vadd.f32 0.0, %v5732
        %v5734 = vpop.f32.mrf.mxu0
        %5735 = vmatprep.mubr.f32.mxu0 0.0
        %5736 = vmatmul.mubr.f32.gmra.mxu0 %v5634
        %v5737 = vpop.f32.mrf.mxu0
        %v5738 = vadd.f32 0.0, %v5737
        %v5739 = vpop.f32.mrf.mxu0
        %5740 = vdwg.mxu0
        %v5741 = vadd.f32 %v5593, %v5703
        %v5742 = vadd.f32 %v5594, %v5708
        %v5743 = vadd.f32 %v5595, %v5713
        %v5744 = vadd.f32 %v5596, %v5718
        %v5745 = vadd.f32 %v5597, %v5723
        %v5746 = vadd.f32 %v5598, %v5728
        %v5747 = vadd.f32 %v5599, %v5733
        %v5748 = vadd.f32 %v5600, %v5738
        %v5749 = vld [vmem:[%s5452 + $0x2] sm:$0xff]
        %v5750 = vld [vmem:[%s5452 + $0x12] sm:$0xff]
        %v5751 = vld [vmem:[%s5452 + $0x22] sm:$0xff]
        %v5752 = vld [vmem:[%s5452 + $0x32] sm:$0xff]
        %v5753 = vld [vmem:[%s5452 + $0x42] sm:$0xff]
        %v5754 = vld [vmem:[%s5452 + $0x52] sm:$0xff]
        %v5755 = vld [vmem:[%s5452 + $0x62] sm:$0xff]
        %v5756 = vld [vmem:[%s5452 + $0x72] sm:$0xff]
        %s5757 = scalar_lea.vmem %s5, 128
        %v5758 = vld [vmem:[%s5757] sm:$0xff]
        %v5759 = vld [vmem:[%s5757 + $0x8] sm:$0xff]
        %v5761 = vsel %vm4598, %v5749, 0
        %v5764 = vsel %vm4598, %v5750, 0
        %v5767 = vsel %vm4598, %v5751, 0
        %v5770 = vsel %vm4598, %v5752, 0
        %v5773 = vsel %vm4598, %v5753, 0
        %v5776 = vsel %vm4598, %v5754, 0
        %v5779 = vsel %vm4598, %v5755, 0
        %v5782 = vsel %vm4598, %v5756, 0
        %5784 = vmatprep.subr.mxu0 0.0
        %5785 = vmatpush1.msra.mxu0 0.0
        %5786 = vmatprep.subr.mxu0 0.0
        %5787 = vmatpush1.msra.mxu0 0.0
        %5788 = vmatprep.subr.mxu0 0.0
        %5789 = vmatpush1.msra.mxu0 0.0
        %5790 = vmatprep.subr.mxu0 0.0
        %5791 = vmatpush1.msra.mxu0 0.0
        %5792 = vmatprep.subr.mxu0 0.0
        %5793 = vmatpush1.msra.mxu0 0.0
        %5794 = vmatprep.subr.mxu0 0.0
        %5795 = vmatpush1.msra.mxu0 0.0
        %5796 = vmatprep.subr.mxu0 0.0
        %5797 = vmatpush1.msra.mxu0 0.0
        %5798 = vmatprep.subr.mxu0 0.0
        %5799 = vmatpush1.msra.mxu0 0.0
        %5800 = vmatprep.subr.mxu0 0.0
        %5801 = vmatpush1.msra.mxu0 0.0
        %5802 = vmatprep.subr.mxu0 0.0
        %5803 = vmatpush1.msra.mxu0 0.0
        %5804 = vmatprep.subr.mxu0 0.0
        %5805 = vmatpush1.msra.mxu0 0.0
        %5806 = vmatprep.subr.mxu0 0.0
        %5807 = vmatpush1.msra.mxu0 0.0
        %5808 = vmatprep.subr.mxu0 0.0
        %5809 = vmatpush1.msra.mxu0 0.0
        %5810 = vmatprep.subr.mxu0 0.0
        %5811 = vmatpush1.msra.mxu0 0.0
        %5812 = vmatprep.subr.mxu0 0.0
        %5813 = vmatpush1.msra.mxu0 %v5759
        %5814 = vmatprep.subr.mxu0 0.0
        %5815 = vmatpush1.msra.mxu0 %v5758
        %5816 = vmatprep.subr.mxu0 0.0
        %5817 = vmatpush2.msra.mxu0 0.0
        %5818 = vmatprep.subr.mxu0 0.0
        %5819 = vmatpush2.msra.mxu0 0.0
        %5820 = vmatprep.subr.mxu0 0.0
        %5821 = vmatpush2.msra.mxu0 0.0
        %5822 = vmatprep.subr.mxu0 0.0
        %5823 = vmatpush2.msra.mxu0 0.0
        %5824 = vmatprep.subr.mxu0 0.0
        %5825 = vmatpush2.msra.mxu0 0.0
        %5826 = vmatprep.subr.mxu0 0.0
        %5827 = vmatpush2.msra.mxu0 0.0
        %5828 = vmatprep.subr.mxu0 0.0
        %5829 = vmatpush2.msra.mxu0 0.0
        %5830 = vmatprep.subr.mxu0 0.0
        %5831 = vmatpush2.msra.mxu0 0.0
        %5832 = vmatprep.subr.mxu0 0.0
        %5833 = vmatpush2.msra.mxu0 0.0
        %5834 = vmatprep.subr.mxu0 0.0
        %5835 = vmatpush2.msra.mxu0 0.0
        %5836 = vmatprep.subr.mxu0 0.0
        %5837 = vmatpush2.msra.mxu0 0.0
        %5838 = vmatprep.subr.mxu0 0.0
        %5839 = vmatpush2.msra.mxu0 0.0
        %5840 = vmatprep.subr.mxu0 0.0
        %5841 = vmatpush2.msra.mxu0 0.0
        %5842 = vmatprep.subr.mxu0 0.0
        %5843 = vmatpush2.msra.mxu0 0.0
        %5844 = vmatprep.subr.mxu0 0.0
        %5845 = vmatpush2.msra.mxu0 0.0
        %5846 = vmatprep.subr.mxu0 0.0
        %5847 = vmatpush2.msra.mxu0 0.0
        %5848 = vmatprep.mubr.f32.mxu0 0.0
        %5849 = vmatmul.mubr.f32.gmra.mxu0 %v5761
        %v5850 = vpop.f32.mrf.mxu0
        %v5851 = vadd.f32 0.0, %v5850
        %v5852 = vpop.f32.mrf.mxu0
        %5853 = vmatprep.mubr.f32.mxu0 0.0
        %5854 = vmatmul.mubr.f32.gmra.mxu0 %v5764
        %v5855 = vpop.f32.mrf.mxu0
        %v5856 = vadd.f32 0.0, %v5855
        %v5857 = vpop.f32.mrf.mxu0
        %5858 = vmatprep.mubr.f32.mxu0 0.0
        %5859 = vmatmul.mubr.f32.gmra.mxu0 %v5767
        %v5860 = vpop.f32.mrf.mxu0
        %v5861 = vadd.f32 0.0, %v5860
        %v5862 = vpop.f32.mrf.mxu0
        %5863 = vmatprep.mubr.f32.mxu0 0.0
        %5864 = vmatmul.mubr.f32.gmra.mxu0 %v5770
        %v5865 = vpop.f32.mrf.mxu0
        %v5866 = vadd.f32 0.0, %v5865
        %v5867 = vpop.f32.mrf.mxu0
        %5868 = vmatprep.mubr.f32.mxu0 0.0
        %5869 = vmatmul.mubr.f32.gmra.mxu0 %v5773
        %v5870 = vpop.f32.mrf.mxu0
        %v5871 = vadd.f32 0.0, %v5870
        %v5872 = vpop.f32.mrf.mxu0
        %5873 = vmatprep.mubr.f32.mxu0 0.0
        %5874 = vmatmul.mubr.f32.gmra.mxu0 %v5776
        %v5875 = vpop.f32.mrf.mxu0
        %v5876 = vadd.f32 0.0, %v5875
        %v5877 = vpop.f32.mrf.mxu0
        %5878 = vmatprep.mubr.f32.mxu0 0.0
        %5879 = vmatmul.mubr.f32.gmra.mxu0 %v5779
        %v5880 = vpop.f32.mrf.mxu0
        %v5881 = vadd.f32 0.0, %v5880
        %v5882 = vpop.f32.mrf.mxu0
        %5883 = vmatprep.mubr.f32.mxu0 0.0
        %5884 = vmatmul.mubr.f32.gmra.mxu0 %v5782
        %v5885 = vpop.f32.mrf.mxu0
        %v5886 = vadd.f32 0.0, %v5885
        %v5887 = vpop.f32.mrf.mxu0
        %5888 = vdwg.mxu0
        %v5889 = vadd.f32 %v5741, %v5851
        %v5890 = vadd.f32 %v5742, %v5856
        %v5891 = vadd.f32 %v5743, %v5861
        %v5892 = vadd.f32 %v5744, %v5866
        %v5893 = vadd.f32 %v5745, %v5871
        %v5894 = vadd.f32 %v5746, %v5876
        %v5895 = vadd.f32 %v5747, %v5881
        %v5896 = vadd.f32 %v5748, %v5886
        %s5897 = smul.u32 %s4567, 160
        %s5898 = scalar_lea.vmem [#allocation2], %s5897
        %v5899 = vld [vmem:[%s5898] sm:$0xff]
        %v5900 = vld [vmem:[%s5898 + $0x10] sm:$0xff]
        %v5901 = vld [vmem:[%s5898 + $0x20] sm:$0xff]
        %v5902 = vld [vmem:[%s5898 + $0x30] sm:$0xff]
        %v5903 = vld [vmem:[%s5898 + $0x40] sm:$0xff]
        %v5904 = vld [vmem:[%s5898 + $0x50] sm:$0xff]
        %v5905 = vld [vmem:[%s5898 + $0x60] sm:$0xff]
        %v5906 = vld [vmem:[%s5898 + $0x70] sm:$0xff]
        %s5907 = scalar_lea.vmem %s5, 144
        %v5908 = vld [vmem:[%s5907] sm:$0xff]
        %v5909 = vld [vmem:[%s5907 + $0x8] sm:$0xff]
        %v5911 = vsel %vm4598, %v5899, 0
        %v5914 = vsel %vm4598, %v5900, 0
        %v5917 = vsel %vm4598, %v5901, 0
        %v5920 = vsel %vm4598, %v5902, 0
        %v5923 = vsel %vm4598, %v5903, 0
        %v5926 = vsel %vm4598, %v5904, 0
        %v5929 = vsel %vm4598, %v5905, 0
        %v5932 = vsel %vm4598, %v5906, 0
        %5934 = vmatprep.subr.mxu0 0.0
        %5935 = vmatpush1.msra.mxu0 0.0
        %5936 = vmatprep.subr.mxu0 0.0
        %5937 = vmatpush1.msra.mxu0 0.0
        %5938 = vmatprep.subr.mxu0 0.0
        %5939 = vmatpush1.msra.mxu0 0.0
        %5940 = vmatprep.subr.mxu0 0.0
        %5941 = vmatpush1.msra.mxu0 0.0
        %5942 = vmatprep.subr.mxu0 0.0
        %5943 = vmatpush1.msra.mxu0 0.0
        %5944 = vmatprep.subr.mxu0 0.0
        %5945 = vmatpush1.msra.mxu0 0.0
        %5946 = vmatprep.subr.mxu0 0.0
        %5947 = vmatpush1.msra.mxu0 0.0
        %5948 = vmatprep.subr.mxu0 0.0
        %5949 = vmatpush1.msra.mxu0 0.0
        %5950 = vmatprep.subr.mxu0 0.0
        %5951 = vmatpush1.msra.mxu0 0.0
        %5952 = vmatprep.subr.mxu0 0.0
        %5953 = vmatpush1.msra.mxu0 0.0
        %5954 = vmatprep.subr.mxu0 0.0
        %5955 = vmatpush1.msra.mxu0 0.0
        %5956 = vmatprep.subr.mxu0 0.0
        %5957 = vmatpush1.msra.mxu0 0.0
        %5958 = vmatprep.subr.mxu0 0.0
        %5959 = vmatpush1.msra.mxu0 0.0
        %5960 = vmatprep.subr.mxu0 0.0
        %5961 = vmatpush1.msra.mxu0 0.0
        %5962 = vmatprep.subr.mxu0 0.0
        %5963 = vmatpush1.msra.mxu0 %v5909
        %5964 = vmatprep.subr.mxu0 0.0
        %5965 = vmatpush1.msra.mxu0 %v5908
        %5966 = vmatprep.subr.mxu0 0.0
        %5967 = vmatpush2.msra.mxu0 0.0
        %5968 = vmatprep.subr.mxu0 0.0
        %5969 = vmatpush2.msra.mxu0 0.0
        %5970 = vmatprep.subr.mxu0 0.0
        %5971 = vmatpush2.msra.mxu0 0.0
        %5972 = vmatprep.subr.mxu0 0.0
        %5973 = vmatpush2.msra.mxu0 0.0
        %5974 = vmatprep.subr.mxu0 0.0
        %5975 = vmatpush2.msra.mxu0 0.0
        %5976 = vmatprep.subr.mxu0 0.0
        %5977 = vmatpush2.msra.mxu0 0.0
        %5978 = vmatprep.subr.mxu0 0.0
        %5979 = vmatpush2.msra.mxu0 0.0
        %5980 = vmatprep.subr.mxu0 0.0
        %5981 = vmatpush2.msra.mxu0 0.0
        %5982 = vmatprep.subr.mxu0 0.0
        %5983 = vmatpush2.msra.mxu0 0.0
        %5984 = vmatprep.subr.mxu0 0.0
        %5985 = vmatpush2.msra.mxu0 0.0
        %5986 = vmatprep.subr.mxu0 0.0
        %5987 = vmatpush2.msra.mxu0 0.0
        %5988 = vmatprep.subr.mxu0 0.0
        %5989 = vmatpush2.msra.mxu0 0.0
        %5990 = vmatprep.subr.mxu0 0.0
        %5991 = vmatpush2.msra.mxu0 0.0
        %5992 = vmatprep.subr.mxu0 0.0
        %5993 = vmatpush2.msra.mxu0 0.0
        %5994 = vmatprep.subr.mxu0 0.0
        %5995 = vmatpush2.msra.mxu0 0.0
        %5996 = vmatprep.subr.mxu0 0.0
        %5997 = vmatpush2.msra.mxu0 0.0
        %5998 = vmatprep.mubr.f32.mxu0 0.0
        %5999 = vmatmul.mubr.f32.gmra.mxu0 %v5911
        %v6000 = vpop.f32.mrf.mxu0
        %v6001 = vadd.f32 0.0, %v6000
        %v6002 = vpop.f32.mrf.mxu0
        %6003 = vmatprep.mubr.f32.mxu0 0.0
        %6004 = vmatmul.mubr.f32.gmra.mxu0 %v5914
        %v6005 = vpop.f32.mrf.mxu0
        %v6006 = vadd.f32 0.0, %v6005
        %v6007 = vpop.f32.mrf.mxu0
        %6008 = vmatprep.mubr.f32.mxu0 0.0
        %6009 = vmatmul.mubr.f32.gmra.mxu0 %v5917
        %v6010 = vpop.f32.mrf.mxu0
        %v6011 = vadd.f32 0.0, %v6010
        %v6012 = vpop.f32.mrf.mxu0
        %6013 = vmatprep.mubr.f32.mxu0 0.0
        %6014 = vmatmul.mubr.f32.gmra.mxu0 %v5920
        %v6015 = vpop.f32.mrf.mxu0
        %v6016 = vadd.f32 0.0, %v6015
        %v6017 = vpop.f32.mrf.mxu0
        %6018 = vmatprep.mubr.f32.mxu0 0.0
        %6019 = vmatmul.mubr.f32.gmra.mxu0 %v5923
        %v6020 = vpop.f32.mrf.mxu0
        %v6021 = vadd.f32 0.0, %v6020
        %v6022 = vpop.f32.mrf.mxu0
        %6023 = vmatprep.mubr.f32.mxu0 0.0
        %6024 = vmatmul.mubr.f32.gmra.mxu0 %v5926
        %v6025 = vpop.f32.mrf.mxu0
        %v6026 = vadd.f32 0.0, %v6025
        %v6027 = vpop.f32.mrf.mxu0
        %6028 = vmatprep.mubr.f32.mxu0 0.0
        %6029 = vmatmul.mubr.f32.gmra.mxu0 %v5929
        %v6030 = vpop.f32.mrf.mxu0
        %v6031 = vadd.f32 0.0, %v6030
        %v6032 = vpop.f32.mrf.mxu0
        %6033 = vmatprep.mubr.f32.mxu0 0.0
        %6034 = vmatmul.mubr.f32.gmra.mxu0 %v5932
        %v6035 = vpop.f32.mrf.mxu0
        %v6036 = vadd.f32 0.0, %v6035
        %v6037 = vpop.f32.mrf.mxu0
        %6038 = vdwg.mxu0
        %v6039 = vadd.f32 %v5889, %v6001
        %v6040 = vadd.f32 %v5890, %v6006
        %v6041 = vadd.f32 %v5891, %v6011
        %v6042 = vadd.f32 %v5892, %v6016
        %v6043 = vadd.f32 %v5893, %v6021
        %v6044 = vadd.f32 %v5894, %v6026
        %v6045 = vadd.f32 %v5895, %v6031
        %v6046 = vadd.f32 %v5896, %v6036
        %v6047 = vld [vmem:[%s5898 + $0x1] sm:$0xff]
        %v6048 = vld [vmem:[%s5898 + $0x11] sm:$0xff]
        %v6049 = vld [vmem:[%s5898 + $0x21] sm:$0xff]
        %v6050 = vld [vmem:[%s5898 + $0x31] sm:$0xff]
        %v6051 = vld [vmem:[%s5898 + $0x41] sm:$0xff]
        %v6052 = vld [vmem:[%s5898 + $0x51] sm:$0xff]
        %v6053 = vld [vmem:[%s5898 + $0x61] sm:$0xff]
        %v6054 = vld [vmem:[%s5898 + $0x71] sm:$0xff]
        %s6055 = scalar_lea.vmem %s5, 160
        %v6056 = vld [vmem:[%s6055] sm:$0xff]
        %v6057 = vld [vmem:[%s6055 + $0x8] sm:$0xff]
        %v6059 = vsel %vm4598, %v6047, 0
        %v6062 = vsel %vm4598, %v6048, 0
        %v6065 = vsel %vm4598, %v6049, 0
        %v6068 = vsel %vm4598, %v6050, 0
        %v6071 = vsel %vm4598, %v6051, 0
        %v6074 = vsel %vm4598, %v6052, 0
        %v6077 = vsel %vm4598, %v6053, 0
        %v6080 = vsel %vm4598, %v6054, 0
        %6082 = vmatprep.subr.mxu0 0.0
        %6083 = vmatpush1.msra.mxu0 0.0
        %6084 = vmatprep.subr.mxu0 0.0
        %6085 = vmatpush1.msra.mxu0 0.0
        %6086 = vmatprep.subr.mxu0 0.0
        %6087 = vmatpush1.msra.mxu0 0.0
        %6088 = vmatprep.subr.mxu0 0.0
        %6089 = vmatpush1.msra.mxu0 0.0
        %6090 = vmatprep.subr.mxu0 0.0
        %6091 = vmatpush1.msra.mxu0 0.0
        %6092 = vmatprep.subr.mxu0 0.0
        %6093 = vmatpush1.msra.mxu0 0.0
        %6094 = vmatprep.subr.mxu0 0.0
        %6095 = vmatpush1.msra.mxu0 0.0
        %6096 = vmatprep.subr.mxu0 0.0
        %6097 = vmatpush1.msra.mxu0 0.0
        %6098 = vmatprep.subr.mxu0 0.0
        %6099 = vmatpush1.msra.mxu0 0.0
        %6100 = vmatprep.subr.mxu0 0.0
        %6101 = vmatpush1.msra.mxu0 0.0
        %6102 = vmatprep.subr.mxu0 0.0
        %6103 = vmatpush1.msra.mxu0 0.0
        %6104 = vmatprep.subr.mxu0 0.0
        %6105 = vmatpush1.msra.mxu0 0.0
        %6106 = vmatprep.subr.mxu0 0.0
        %6107 = vmatpush1.msra.mxu0 0.0
        %6108 = vmatprep.subr.mxu0 0.0
        %6109 = vmatpush1.msra.mxu0 0.0
        %6110 = vmatprep.subr.mxu0 0.0
        %6111 = vmatpush1.msra.mxu0 %v6057
        %6112 = vmatprep.subr.mxu0 0.0
        %6113 = vmatpush1.msra.mxu0 %v6056
        %6114 = vmatprep.subr.mxu0 0.0
        %6115 = vmatpush2.msra.mxu0 0.0
        %6116 = vmatprep.subr.mxu0 0.0
        %6117 = vmatpush2.msra.mxu0 0.0
        %6118 = vmatprep.subr.mxu0 0.0
        %6119 = vmatpush2.msra.mxu0 0.0
        %6120 = vmatprep.subr.mxu0 0.0
        %6121 = vmatpush2.msra.mxu0 0.0
        %6122 = vmatprep.subr.mxu0 0.0
        %6123 = vmatpush2.msra.mxu0 0.0
        %6124 = vmatprep.subr.mxu0 0.0
        %6125 = vmatpush2.msra.mxu0 0.0
        %6126 = vmatprep.subr.mxu0 0.0
        %6127 = vmatpush2.msra.mxu0 0.0
        %6128 = vmatprep.subr.mxu0 0.0
        %6129 = vmatpush2.msra.mxu0 0.0
        %6130 = vmatprep.subr.mxu0 0.0
        %6131 = vmatpush2.msra.mxu0 0.0
        %6132 = vmatprep.subr.mxu0 0.0
        %6133 = vmatpush2.msra.mxu0 0.0
        %6134 = vmatprep.subr.mxu0 0.0
        %6135 = vmatpush2.msra.mxu0 0.0
        %6136 = vmatprep.subr.mxu0 0.0
        %6137 = vmatpush2.msra.mxu0 0.0
        %6138 = vmatprep.subr.mxu0 0.0
        %6139 = vmatpush2.msra.mxu0 0.0
        %6140 = vmatprep.subr.mxu0 0.0
        %6141 = vmatpush2.msra.mxu0 0.0
        %6142 = vmatprep.subr.mxu0 0.0
        %6143 = vmatpush2.msra.mxu0 0.0
        %6144 = vmatprep.subr.mxu0 0.0
        %6145 = vmatpush2.msra.mxu0 0.0
        %6146 = vmatprep.mubr.f32.mxu0 0.0
        %6147 = vmatmul.mubr.f32.gmra.mxu0 %v6059
        %v6148 = vpop.f32.mrf.mxu0
        %v6149 = vadd.f32 0.0, %v6148
        %v6150 = vpop.f32.mrf.mxu0
        %6151 = vmatprep.mubr.f32.mxu0 0.0
        %6152 = vmatmul.mubr.f32.gmra.mxu0 %v6062
        %v6153 = vpop.f32.mrf.mxu0
        %v6154 = vadd.f32 0.0, %v6153
        %v6155 = vpop.f32.mrf.mxu0
        %6156 = vmatprep.mubr.f32.mxu0 0.0
        %6157 = vmatmul.mubr.f32.gmra.mxu0 %v6065
        %v6158 = vpop.f32.mrf.mxu0
        %v6159 = vadd.f32 0.0, %v6158
        %v6160 = vpop.f32.mrf.mxu0
        %6161 = vmatprep.mubr.f32.mxu0 0.0
        %6162 = vmatmul.mubr.f32.gmra.mxu0 %v6068
        %v6163 = vpop.f32.mrf.mxu0
        %v6164 = vadd.f32 0.0, %v6163
        %v6165 = vpop.f32.mrf.mxu0
        %6166 = vmatprep.mubr.f32.mxu0 0.0
        %6167 = vmatmul.mubr.f32.gmra.mxu0 %v6071
        %v6168 = vpop.f32.mrf.mxu0
        %v6169 = vadd.f32 0.0, %v6168
        %v6170 = vpop.f32.mrf.mxu0
        %6171 = vmatprep.mubr.f32.mxu0 0.0
        %6172 = vmatmul.mubr.f32.gmra.mxu0 %v6074
        %v6173 = vpop.f32.mrf.mxu0
        %v6174 = vadd.f32 0.0, %v6173
        %v6175 = vpop.f32.mrf.mxu0
        %6176 = vmatprep.mubr.f32.mxu0 0.0
        %6177 = vmatmul.mubr.f32.gmra.mxu0 %v6077
        %v6178 = vpop.f32.mrf.mxu0
        %v6179 = vadd.f32 0.0, %v6178
        %v6180 = vpop.f32.mrf.mxu0
        %6181 = vmatprep.mubr.f32.mxu0 0.0
        %6182 = vmatmul.mubr.f32.gmra.mxu0 %v6080
        %v6183 = vpop.f32.mrf.mxu0
        %v6184 = vadd.f32 0.0, %v6183
        %v6185 = vpop.f32.mrf.mxu0
        %6186 = vdwg.mxu0
        %v6187 = vadd.f32 %v6039, %v6149
        %v6188 = vadd.f32 %v6040, %v6154
        %v6189 = vadd.f32 %v6041, %v6159
        %v6190 = vadd.f32 %v6042, %v6164
        %v6191 = vadd.f32 %v6043, %v6169
        %v6192 = vadd.f32 %v6044, %v6174
        %v6193 = vadd.f32 %v6045, %v6179
        %v6194 = vadd.f32 %v6046, %v6184
        %v6195 = vld [vmem:[%s5898 + $0x2] sm:$0xff]
        %v6196 = vld [vmem:[%s5898 + $0x12] sm:$0xff]
        %v6197 = vld [vmem:[%s5898 + $0x22] sm:$0xff]
        %v6198 = vld [vmem:[%s5898 + $0x32] sm:$0xff]
        %v6199 = vld [vmem:[%s5898 + $0x42] sm:$0xff]
        %v6200 = vld [vmem:[%s5898 + $0x52] sm:$0xff]
        %v6201 = vld [vmem:[%s5898 + $0x62] sm:$0xff]
        %v6202 = vld [vmem:[%s5898 + $0x72] sm:$0xff]
        %s6203 = scalar_lea.vmem %s5, 176
        %v6204 = vld [vmem:[%s6203] sm:$0xff]
        %v6205 = vld [vmem:[%s6203 + $0x8] sm:$0xff]
        %v6207 = vsel %vm4598, %v6195, 0
        %v6210 = vsel %vm4598, %v6196, 0
        %v6213 = vsel %vm4598, %v6197, 0
        %v6216 = vsel %vm4598, %v6198, 0
        %v6219 = vsel %vm4598, %v6199, 0
        %v6222 = vsel %vm4598, %v6200, 0
        %v6225 = vsel %vm4598, %v6201, 0
        %v6228 = vsel %vm4598, %v6202, 0
        %6230 = vmatprep.subr.mxu0 0.0
        %6231 = vmatpush1.msra.mxu0 0.0
        %6232 = vmatprep.subr.mxu0 0.0
        %6233 = vmatpush1.msra.mxu0 0.0
        %6234 = vmatprep.subr.mxu0 0.0
        %6235 = vmatpush1.msra.mxu0 0.0
        %6236 = vmatprep.subr.mxu0 0.0
        %6237 = vmatpush1.msra.mxu0 0.0
        %6238 = vmatprep.subr.mxu0 0.0
        %6239 = vmatpush1.msra.mxu0 0.0
        %6240 = vmatprep.subr.mxu0 0.0
        %6241 = vmatpush1.msra.mxu0 0.0
        %6242 = vmatprep.subr.mxu0 0.0
        %6243 = vmatpush1.msra.mxu0 0.0
        %6244 = vmatprep.subr.mxu0 0.0
        %6245 = vmatpush1.msra.mxu0 0.0
        %6246 = vmatprep.subr.mxu0 0.0
        %6247 = vmatpush1.msra.mxu0 0.0
        %6248 = vmatprep.subr.mxu0 0.0
        %6249 = vmatpush1.msra.mxu0 0.0
        %6250 = vmatprep.subr.mxu0 0.0
        %6251 = vmatpush1.msra.mxu0 0.0
        %6252 = vmatprep.subr.mxu0 0.0
        %6253 = vmatpush1.msra.mxu0 0.0
        %6254 = vmatprep.subr.mxu0 0.0
        %6255 = vmatpush1.msra.mxu0 0.0
        %6256 = vmatprep.subr.mxu0 0.0
        %6257 = vmatpush1.msra.mxu0 0.0
        %6258 = vmatprep.subr.mxu0 0.0
        %6259 = vmatpush1.msra.mxu0 %v6205
        %6260 = vmatprep.subr.mxu0 0.0
        %6261 = vmatpush1.msra.mxu0 %v6204
        %6262 = vmatprep.subr.mxu0 0.0
        %6263 = vmatpush2.msra.mxu0 0.0
        %6264 = vmatprep.subr.mxu0 0.0
        %6265 = vmatpush2.msra.mxu0 0.0
        %6266 = vmatprep.subr.mxu0 0.0
        %6267 = vmatpush2.msra.mxu0 0.0
        %6268 = vmatprep.subr.mxu0 0.0
        %6269 = vmatpush2.msra.mxu0 0.0
        %6270 = vmatprep.subr.mxu0 0.0
        %6271 = vmatpush2.msra.mxu0 0.0
        %6272 = vmatprep.subr.mxu0 0.0
        %6273 = vmatpush2.msra.mxu0 0.0
        %6274 = vmatprep.subr.mxu0 0.0
        %6275 = vmatpush2.msra.mxu0 0.0
        %6276 = vmatprep.subr.mxu0 0.0
        %6277 = vmatpush2.msra.mxu0 0.0
        %6278 = vmatprep.subr.mxu0 0.0
        %6279 = vmatpush2.msra.mxu0 0.0
        %6280 = vmatprep.subr.mxu0 0.0
        %6281 = vmatpush2.msra.mxu0 0.0
        %6282 = vmatprep.subr.mxu0 0.0
        %6283 = vmatpush2.msra.mxu0 0.0
        %6284 = vmatprep.subr.mxu0 0.0
        %6285 = vmatpush2.msra.mxu0 0.0
        %6286 = vmatprep.subr.mxu0 0.0
        %6287 = vmatpush2.msra.mxu0 0.0
        %6288 = vmatprep.subr.mxu0 0.0
        %6289 = vmatpush2.msra.mxu0 0.0
        %6290 = vmatprep.subr.mxu0 0.0
        %6291 = vmatpush2.msra.mxu0 0.0
        %6292 = vmatprep.subr.mxu0 0.0
        %6293 = vmatpush2.msra.mxu0 0.0
        %6294 = vmatprep.mubr.f32.mxu0 0.0
        %6295 = vmatmul.mubr.f32.gmra.mxu0 %v6207
        %v6296 = vpop.f32.mrf.mxu0
        %v6297 = vadd.f32 0.0, %v6296
        %v6298 = vpop.f32.mrf.mxu0
        %6299 = vmatprep.mubr.f32.mxu0 0.0
        %6300 = vmatmul.mubr.f32.gmra.mxu0 %v6210
        %v6301 = vpop.f32.mrf.mxu0
        %v6302 = vadd.f32 0.0, %v6301
        %v6303 = vpop.f32.mrf.mxu0
        %6304 = vmatprep.mubr.f32.mxu0 0.0
        %6305 = vmatmul.mubr.f32.gmra.mxu0 %v6213
        %v6306 = vpop.f32.mrf.mxu0
        %v6307 = vadd.f32 0.0, %v6306
        %v6308 = vpop.f32.mrf.mxu0
        %6309 = vmatprep.mubr.f32.mxu0 0.0
        %6310 = vmatmul.mubr.f32.gmra.mxu0 %v6216
        %v6311 = vpop.f32.mrf.mxu0
        %v6312 = vadd.f32 0.0, %v6311
        %v6313 = vpop.f32.mrf.mxu0
        %6314 = vmatprep.mubr.f32.mxu0 0.0
        %6315 = vmatmul.mubr.f32.gmra.mxu0 %v6219
        %v6316 = vpop.f32.mrf.mxu0
        %v6317 = vadd.f32 0.0, %v6316
        %v6318 = vpop.f32.mrf.mxu0
        %6319 = vmatprep.mubr.f32.mxu0 0.0
        %6320 = vmatmul.mubr.f32.gmra.mxu0 %v6222
        %v6321 = vpop.f32.mrf.mxu0
        %v6322 = vadd.f32 0.0, %v6321
        %v6323 = vpop.f32.mrf.mxu0
        %6324 = vmatprep.mubr.f32.mxu0 0.0
        %6325 = vmatmul.mubr.f32.gmra.mxu0 %v6225
        %v6326 = vpop.f32.mrf.mxu0
        %v6327 = vadd.f32 0.0, %v6326
        %v6328 = vpop.f32.mrf.mxu0
        %6329 = vmatprep.mubr.f32.mxu0 0.0
        %6330 = vmatmul.mubr.f32.gmra.mxu0 %v6228
        %v6331 = vpop.f32.mrf.mxu0
        %v6332 = vadd.f32 0.0, %v6331
        %v6333 = vpop.f32.mrf.mxu0
        %6334 = vdwg.mxu0
        %v6335 = vadd.f32 %v6187, %v6297
        %v6336 = vadd.f32 %v6188, %v6302
        %v6337 = vadd.f32 %v6189, %v6307
        %v6338 = vadd.f32 %v6190, %v6312
        %v6339 = vadd.f32 %v6191, %v6317
        %v6340 = vadd.f32 %v6192, %v6322
        %v6341 = vadd.f32 %v6193, %v6327
        %v6342 = vadd.f32 %v6194, %v6332
        %s6343 = sadd.s32 16, %s5897
        %s6344 = scalar_lea.vmem [#allocation2], %s6343
        %v6345 = vld [vmem:[%s6344] sm:$0xff]
        %v6346 = vld [vmem:[%s6344 + $0x10] sm:$0xff]
        %v6347 = vld [vmem:[%s6344 + $0x20] sm:$0xff]
        %v6348 = vld [vmem:[%s6344 + $0x30] sm:$0xff]
        %v6349 = vld [vmem:[%s6344 + $0x40] sm:$0xff]
        %v6350 = vld [vmem:[%s6344 + $0x50] sm:$0xff]
        %v6351 = vld [vmem:[%s6344 + $0x60] sm:$0xff]
        %v6352 = vld [vmem:[%s6344 + $0x70] sm:$0xff]
        %s6353 = scalar_lea.vmem %s5, 192
        %v6354 = vld [vmem:[%s6353] sm:$0xff]
        %v6355 = vld [vmem:[%s6353 + $0x8] sm:$0xff]
        %v6357 = vsel %vm4598, %v6345, 0
        %v6360 = vsel %vm4598, %v6346, 0
        %v6363 = vsel %vm4598, %v6347, 0
        %v6366 = vsel %vm4598, %v6348, 0
        %v6369 = vsel %vm4598, %v6349, 0
        %v6372 = vsel %vm4598, %v6350, 0
        %v6375 = vsel %vm4598, %v6351, 0
        %v6378 = vsel %vm4598, %v6352, 0
        %6380 = vmatprep.subr.mxu0 0.0
        %6381 = vmatpush1.msra.mxu0 0.0
        %6382 = vmatprep.subr.mxu0 0.0
        %6383 = vmatpush1.msra.mxu0 0.0
        %6384 = vmatprep.subr.mxu0 0.0
        %6385 = vmatpush1.msra.mxu0 0.0
        %6386 = vmatprep.subr.mxu0 0.0
        %6387 = vmatpush1.msra.mxu0 0.0
        %6388 = vmatprep.subr.mxu0 0.0
        %6389 = vmatpush1.msra.mxu0 0.0
        %6390 = vmatprep.subr.mxu0 0.0
        %6391 = vmatpush1.msra.mxu0 0.0
        %6392 = vmatprep.subr.mxu0 0.0
        %6393 = vmatpush1.msra.mxu0 0.0
        %6394 = vmatprep.subr.mxu0 0.0
        %6395 = vmatpush1.msra.mxu0 0.0
        %6396 = vmatprep.subr.mxu0 0.0
        %6397 = vmatpush1.msra.mxu0 0.0
        %6398 = vmatprep.subr.mxu0 0.0
        %6399 = vmatpush1.msra.mxu0 0.0
        %6400 = vmatprep.subr.mxu0 0.0
        %6401 = vmatpush1.msra.mxu0 0.0
        %6402 = vmatprep.subr.mxu0 0.0
        %6403 = vmatpush1.msra.mxu0 0.0
        %6404 = vmatprep.subr.mxu0 0.0
        %6405 = vmatpush1.msra.mxu0 0.0
        %6406 = vmatprep.subr.mxu0 0.0
        %6407 = vmatpush1.msra.mxu0 0.0
        %6408 = vmatprep.subr.mxu0 0.0
        %6409 = vmatpush1.msra.mxu0 %v6355
        %6410 = vmatprep.subr.mxu0 0.0
        %6411 = vmatpush1.msra.mxu0 %v6354
        %6412 = vmatprep.subr.mxu0 0.0
        %6413 = vmatpush2.msra.mxu0 0.0
        %6414 = vmatprep.subr.mxu0 0.0
        %6415 = vmatpush2.msra.mxu0 0.0
        %6416 = vmatprep.subr.mxu0 0.0
        %6417 = vmatpush2.msra.mxu0 0.0
        %6418 = vmatprep.subr.mxu0 0.0
        %6419 = vmatpush2.msra.mxu0 0.0
        %6420 = vmatprep.subr.mxu0 0.0
        %6421 = vmatpush2.msra.mxu0 0.0
        %6422 = vmatprep.subr.mxu0 0.0
        %6423 = vmatpush2.msra.mxu0 0.0
        %6424 = vmatprep.subr.mxu0 0.0
        %6425 = vmatpush2.msra.mxu0 0.0
        %6426 = vmatprep.subr.mxu0 0.0
        %6427 = vmatpush2.msra.mxu0 0.0
        %6428 = vmatprep.subr.mxu0 0.0
        %6429 = vmatpush2.msra.mxu0 0.0
        %6430 = vmatprep.subr.mxu0 0.0
        %6431 = vmatpush2.msra.mxu0 0.0
        %6432 = vmatprep.subr.mxu0 0.0
        %6433 = vmatpush2.msra.mxu0 0.0
        %6434 = vmatprep.subr.mxu0 0.0
        %6435 = vmatpush2.msra.mxu0 0.0
        %6436 = vmatprep.subr.mxu0 0.0
        %6437 = vmatpush2.msra.mxu0 0.0
        %6438 = vmatprep.subr.mxu0 0.0
        %6439 = vmatpush2.msra.mxu0 0.0
        %6440 = vmatprep.subr.mxu0 0.0
        %6441 = vmatpush2.msra.mxu0 0.0
        %6442 = vmatprep.subr.mxu0 0.0
        %6443 = vmatpush2.msra.mxu0 0.0
        %6444 = vmatprep.mubr.f32.mxu0 0.0
        %6445 = vmatmul.mubr.f32.gmra.mxu0 %v6357
        %v6446 = vpop.f32.mrf.mxu0
        %v6447 = vadd.f32 0.0, %v6446
        %v6448 = vpop.f32.mrf.mxu0
        %6449 = vmatprep.mubr.f32.mxu0 0.0
        %6450 = vmatmul.mubr.f32.gmra.mxu0 %v6360
        %v6451 = vpop.f32.mrf.mxu0
        %v6452 = vadd.f32 0.0, %v6451
        %v6453 = vpop.f32.mrf.mxu0
        %6454 = vmatprep.mubr.f32.mxu0 0.0
        %6455 = vmatmul.mubr.f32.gmra.mxu0 %v6363
        %v6456 = vpop.f32.mrf.mxu0
        %v6457 = vadd.f32 0.0, %v6456
        %v6458 = vpop.f32.mrf.mxu0
        %6459 = vmatprep.mubr.f32.mxu0 0.0
        %6460 = vmatmul.mubr.f32.gmra.mxu0 %v6366
        %v6461 = vpop.f32.mrf.mxu0
        %v6462 = vadd.f32 0.0, %v6461
        %v6463 = vpop.f32.mrf.mxu0
        %6464 = vmatprep.mubr.f32.mxu0 0.0
        %6465 = vmatmul.mubr.f32.gmra.mxu0 %v6369
        %v6466 = vpop.f32.mrf.mxu0
        %v6467 = vadd.f32 0.0, %v6466
        %v6468 = vpop.f32.mrf.mxu0
        %6469 = vmatprep.mubr.f32.mxu0 0.0
        %6470 = vmatmul.mubr.f32.gmra.mxu0 %v6372
        %v6471 = vpop.f32.mrf.mxu0
        %v6472 = vadd.f32 0.0, %v6471
        %v6473 = vpop.f32.mrf.mxu0
        %6474 = vmatprep.mubr.f32.mxu0 0.0
        %6475 = vmatmul.mubr.f32.gmra.mxu0 %v6375
        %v6476 = vpop.f32.mrf.mxu0
        %v6477 = vadd.f32 0.0, %v6476
        %v6478 = vpop.f32.mrf.mxu0
        %6479 = vmatprep.mubr.f32.mxu0 0.0
        %6480 = vmatmul.mubr.f32.gmra.mxu0 %v6378
        %v6481 = vpop.f32.mrf.mxu0
        %v6482 = vadd.f32 0.0, %v6481
        %v6483 = vpop.f32.mrf.mxu0
        %6484 = vdwg.mxu0
        %v6485 = vadd.f32 %v6335, %v6447
        %v6486 = vadd.f32 %v6336, %v6452
        %v6487 = vadd.f32 %v6337, %v6457
        %v6488 = vadd.f32 %v6338, %v6462
        %v6489 = vadd.f32 %v6339, %v6467
        %v6490 = vadd.f32 %v6340, %v6472
        %v6491 = vadd.f32 %v6341, %v6477
        %v6492 = vadd.f32 %v6342, %v6482
        %v6493 = vld [vmem:[%s6344 + $0x1] sm:$0xff]
        %v6494 = vld [vmem:[%s6344 + $0x11] sm:$0xff]
        %v6495 = vld [vmem:[%s6344 + $0x21] sm:$0xff]
        %v6496 = vld [vmem:[%s6344 + $0x31] sm:$0xff]
        %v6497 = vld [vmem:[%s6344 + $0x41] sm:$0xff]
        %v6498 = vld [vmem:[%s6344 + $0x51] sm:$0xff]
        %v6499 = vld [vmem:[%s6344 + $0x61] sm:$0xff]
        %v6500 = vld [vmem:[%s6344 + $0x71] sm:$0xff]
        %s6501 = scalar_lea.vmem %s5, 208
        %v6502 = vld [vmem:[%s6501] sm:$0xff]
        %v6503 = vld [vmem:[%s6501 + $0x8] sm:$0xff]
        %v6505 = vsel %vm4598, %v6493, 0
        %v6508 = vsel %vm4598, %v6494, 0
        %v6511 = vsel %vm4598, %v6495, 0
        %v6514 = vsel %vm4598, %v6496, 0
        %v6517 = vsel %vm4598, %v6497, 0
        %v6520 = vsel %vm4598, %v6498, 0
        %v6523 = vsel %vm4598, %v6499, 0
        %v6526 = vsel %vm4598, %v6500, 0
        %6528 = vmatprep.subr.mxu0 0.0
        %6529 = vmatpush1.msra.mxu0 0.0
        %6530 = vmatprep.subr.mxu0 0.0
        %6531 = vmatpush1.msra.mxu0 0.0
        %6532 = vmatprep.subr.mxu0 0.0
        %6533 = vmatpush1.msra.mxu0 0.0
        %6534 = vmatprep.subr.mxu0 0.0
        %6535 = vmatpush1.msra.mxu0 0.0
        %6536 = vmatprep.subr.mxu0 0.0
        %6537 = vmatpush1.msra.mxu0 0.0
        %6538 = vmatprep.subr.mxu0 0.0
        %6539 = vmatpush1.msra.mxu0 0.0
        %6540 = vmatprep.subr.mxu0 0.0
        %6541 = vmatpush1.msra.mxu0 0.0
        %6542 = vmatprep.subr.mxu0 0.0
        %6543 = vmatpush1.msra.mxu0 0.0
        %6544 = vmatprep.subr.mxu0 0.0
        %6545 = vmatpush1.msra.mxu0 0.0
        %6546 = vmatprep.subr.mxu0 0.0
        %6547 = vmatpush1.msra.mxu0 0.0
        %6548 = vmatprep.subr.mxu0 0.0
        %6549 = vmatpush1.msra.mxu0 0.0
        %6550 = vmatprep.subr.mxu0 0.0
        %6551 = vmatpush1.msra.mxu0 0.0
        %6552 = vmatprep.subr.mxu0 0.0
        %6553 = vmatpush1.msra.mxu0 0.0
        %6554 = vmatprep.subr.mxu0 0.0
        %6555 = vmatpush1.msra.mxu0 0.0
        %6556 = vmatprep.subr.mxu0 0.0
        %6557 = vmatpush1.msra.mxu0 %v6503
        %6558 = vmatprep.subr.mxu0 0.0
        %6559 = vmatpush1.msra.mxu0 %v6502
        %6560 = vmatprep.subr.mxu0 0.0
        %6561 = vmatpush2.msra.mxu0 0.0
        %6562 = vmatprep.subr.mxu0 0.0
        %6563 = vmatpush2.msra.mxu0 0.0
        %6564 = vmatprep.subr.mxu0 0.0
        %6565 = vmatpush2.msra.mxu0 0.0
        %6566 = vmatprep.subr.mxu0 0.0
        %6567 = vmatpush2.msra.mxu0 0.0
        %6568 = vmatprep.subr.mxu0 0.0
        %6569 = vmatpush2.msra.mxu0 0.0
        %6570 = vmatprep.subr.mxu0 0.0
        %6571 = vmatpush2.msra.mxu0 0.0
        %6572 = vmatprep.subr.mxu0 0.0
        %6573 = vmatpush2.msra.mxu0 0.0
        %6574 = vmatprep.subr.mxu0 0.0
        %6575 = vmatpush2.msra.mxu0 0.0
        %6576 = vmatprep.subr.mxu0 0.0
        %6577 = vmatpush2.msra.mxu0 0.0
        %6578 = vmatprep.subr.mxu0 0.0
        %6579 = vmatpush2.msra.mxu0 0.0
        %6580 = vmatprep.subr.mxu0 0.0
        %6581 = vmatpush2.msra.mxu0 0.0
        %6582 = vmatprep.subr.mxu0 0.0
        %6583 = vmatpush2.msra.mxu0 0.0
        %6584 = vmatprep.subr.mxu0 0.0
        %6585 = vmatpush2.msra.mxu0 0.0
        %6586 = vmatprep.subr.mxu0 0.0
        %6587 = vmatpush2.msra.mxu0 0.0
        %6588 = vmatprep.subr.mxu0 0.0
        %6589 = vmatpush2.msra.mxu0 0.0
        %6590 = vmatprep.subr.mxu0 0.0
        %6591 = vmatpush2.msra.mxu0 0.0
        %6592 = vmatprep.mubr.f32.mxu0 0.0
        %6593 = vmatmul.mubr.f32.gmra.mxu0 %v6505
        %v6594 = vpop.f32.mrf.mxu0
        %v6595 = vadd.f32 0.0, %v6594
        %v6596 = vpop.f32.mrf.mxu0
        %6597 = vmatprep.mubr.f32.mxu0 0.0
        %6598 = vmatmul.mubr.f32.gmra.mxu0 %v6508
        %v6599 = vpop.f32.mrf.mxu0
        %v6600 = vadd.f32 0.0, %v6599
        %v6601 = vpop.f32.mrf.mxu0
        %6602 = vmatprep.mubr.f32.mxu0 0.0
        %6603 = vmatmul.mubr.f32.gmra.mxu0 %v6511
        %v6604 = vpop.f32.mrf.mxu0
        %v6605 = vadd.f32 0.0, %v6604
        %v6606 = vpop.f32.mrf.mxu0
        %6607 = vmatprep.mubr.f32.mxu0 0.0
        %6608 = vmatmul.mubr.f32.gmra.mxu0 %v6514
        %v6609 = vpop.f32.mrf.mxu0
        %v6610 = vadd.f32 0.0, %v6609
        %v6611 = vpop.f32.mrf.mxu0
        %6612 = vmatprep.mubr.f32.mxu0 0.0
        %6613 = vmatmul.mubr.f32.gmra.mxu0 %v6517
        %v6614 = vpop.f32.mrf.mxu0
        %v6615 = vadd.f32 0.0, %v6614
        %v6616 = vpop.f32.mrf.mxu0
        %6617 = vmatprep.mubr.f32.mxu0 0.0
        %6618 = vmatmul.mubr.f32.gmra.mxu0 %v6520
        %v6619 = vpop.f32.mrf.mxu0
        %v6620 = vadd.f32 0.0, %v6619
        %v6621 = vpop.f32.mrf.mxu0
        %6622 = vmatprep.mubr.f32.mxu0 0.0
        %6623 = vmatmul.mubr.f32.gmra.mxu0 %v6523
        %v6624 = vpop.f32.mrf.mxu0
        %v6625 = vadd.f32 0.0, %v6624
        %v6626 = vpop.f32.mrf.mxu0
        %6627 = vmatprep.mubr.f32.mxu0 0.0
        %6628 = vmatmul.mubr.f32.gmra.mxu0 %v6526
        %v6629 = vpop.f32.mrf.mxu0
        %v6630 = vadd.f32 0.0, %v6629
        %v6631 = vpop.f32.mrf.mxu0
        %6632 = vdwg.mxu0
        %v6633 = vadd.f32 %v6485, %v6595
        %v6634 = vadd.f32 %v6486, %v6600
        %v6635 = vadd.f32 %v6487, %v6605
        %v6636 = vadd.f32 %v6488, %v6610
        %v6637 = vadd.f32 %v6489, %v6615
        %v6638 = vadd.f32 %v6490, %v6620
        %v6639 = vadd.f32 %v6491, %v6625
        %v6640 = vadd.f32 %v6492, %v6630
        %v6641 = vld [vmem:[%s6344 + $0x2] sm:$0xff]
        %v6642 = vld [vmem:[%s6344 + $0x12] sm:$0xff]
        %v6643 = vld [vmem:[%s6344 + $0x22] sm:$0xff]
        %v6644 = vld [vmem:[%s6344 + $0x32] sm:$0xff]
        %v6645 = vld [vmem:[%s6344 + $0x42] sm:$0xff]
        %v6646 = vld [vmem:[%s6344 + $0x52] sm:$0xff]
        %v6647 = vld [vmem:[%s6344 + $0x62] sm:$0xff]
        %v6648 = vld [vmem:[%s6344 + $0x72] sm:$0xff]
        %s6649 = scalar_lea.vmem %s5, 224
        %v6650 = vld [vmem:[%s6649] sm:$0xff]
        %v6651 = vld [vmem:[%s6649 + $0x8] sm:$0xff]
        %v6653 = vsel %vm4598, %v6641, 0
        %v6656 = vsel %vm4598, %v6642, 0
        %v6659 = vsel %vm4598, %v6643, 0
        %v6662 = vsel %vm4598, %v6644, 0
        %v6665 = vsel %vm4598, %v6645, 0
        %v6668 = vsel %vm4598, %v6646, 0
        %v6671 = vsel %vm4598, %v6647, 0
        %v6674 = vsel %vm4598, %v6648, 0
        %6676 = vmatprep.subr.mxu0 0.0
        %6677 = vmatpush1.msra.mxu0 0.0
        %6678 = vmatprep.subr.mxu0 0.0
        %6679 = vmatpush1.msra.mxu0 0.0
        %6680 = vmatprep.subr.mxu0 0.0
        %6681 = vmatpush1.msra.mxu0 0.0
        %6682 = vmatprep.subr.mxu0 0.0
        %6683 = vmatpush1.msra.mxu0 0.0
        %6684 = vmatprep.subr.mxu0 0.0
        %6685 = vmatpush1.msra.mxu0 0.0
        %6686 = vmatprep.subr.mxu0 0.0
        %6687 = vmatpush1.msra.mxu0 0.0
        %6688 = vmatprep.subr.mxu0 0.0
        %6689 = vmatpush1.msra.mxu0 0.0
        %6690 = vmatprep.subr.mxu0 0.0
        %6691 = vmatpush1.msra.mxu0 0.0
        %6692 = vmatprep.subr.mxu0 0.0
        %6693 = vmatpush1.msra.mxu0 0.0
        %6694 = vmatprep.subr.mxu0 0.0
        %6695 = vmatpush1.msra.mxu0 0.0
        %6696 = vmatprep.subr.mxu0 0.0
        %6697 = vmatpush1.msra.mxu0 0.0
        %6698 = vmatprep.subr.mxu0 0.0
        %6699 = vmatpush1.msra.mxu0 0.0
        %6700 = vmatprep.subr.mxu0 0.0
        %6701 = vmatpush1.msra.mxu0 0.0
        %6702 = vmatprep.subr.mxu0 0.0
        %6703 = vmatpush1.msra.mxu0 0.0
        %6704 = vmatprep.subr.mxu0 0.0
        %6705 = vmatpush1.msra.mxu0 %v6651
        %6706 = vmatprep.subr.mxu0 0.0
        %6707 = vmatpush1.msra.mxu0 %v6650
        %6708 = vmatprep.subr.mxu0 0.0
        %6709 = vmatpush2.msra.mxu0 0.0
        %6710 = vmatprep.subr.mxu0 0.0
        %6711 = vmatpush2.msra.mxu0 0.0
        %6712 = vmatprep.subr.mxu0 0.0
        %6713 = vmatpush2.msra.mxu0 0.0
        %6714 = vmatprep.subr.mxu0 0.0
        %6715 = vmatpush2.msra.mxu0 0.0
        %6716 = vmatprep.subr.mxu0 0.0
        %6717 = vmatpush2.msra.mxu0 0.0
        %6718 = vmatprep.subr.mxu0 0.0
        %6719 = vmatpush2.msra.mxu0 0.0
        %6720 = vmatprep.subr.mxu0 0.0
        %6721 = vmatpush2.msra.mxu0 0.0
        %6722 = vmatprep.subr.mxu0 0.0
        %6723 = vmatpush2.msra.mxu0 0.0
        %6724 = vmatprep.subr.mxu0 0.0
        %6725 = vmatpush2.msra.mxu0 0.0
        %6726 = vmatprep.subr.mxu0 0.0
        %6727 = vmatpush2.msra.mxu0 0.0
        %6728 = vmatprep.subr.mxu0 0.0
        %6729 = vmatpush2.msra.mxu0 0.0
        %6730 = vmatprep.subr.mxu0 0.0
        %6731 = vmatpush2.msra.mxu0 0.0
        %6732 = vmatprep.subr.mxu0 0.0
        %6733 = vmatpush2.msra.mxu0 0.0
        %6734 = vmatprep.subr.mxu0 0.0
        %6735 = vmatpush2.msra.mxu0 0.0
        %6736 = vmatprep.subr.mxu0 0.0
        %6737 = vmatpush2.msra.mxu0 0.0
        %6738 = vmatprep.subr.mxu0 0.0
        %6739 = vmatpush2.msra.mxu0 0.0
        %6740 = vmatprep.mubr.f32.mxu0 0.0
        %6741 = vmatmul.mubr.f32.gmra.mxu0 %v6653
        %v6742 = vpop.f32.mrf.mxu0
        %v6743 = vadd.f32 0.0, %v6742
        %v6744 = vpop.f32.mrf.mxu0
        %6745 = vmatprep.mubr.f32.mxu0 0.0
        %6746 = vmatmul.mubr.f32.gmra.mxu0 %v6656
        %v6747 = vpop.f32.mrf.mxu0
        %v6748 = vadd.f32 0.0, %v6747
        %v6749 = vpop.f32.mrf.mxu0
        %6750 = vmatprep.mubr.f32.mxu0 0.0
        %6751 = vmatmul.mubr.f32.gmra.mxu0 %v6659
        %v6752 = vpop.f32.mrf.mxu0
        %v6753 = vadd.f32 0.0, %v6752
        %v6754 = vpop.f32.mrf.mxu0
        %6755 = vmatprep.mubr.f32.mxu0 0.0
        %6756 = vmatmul.mubr.f32.gmra.mxu0 %v6662
        %v6757 = vpop.f32.mrf.mxu0
        %v6758 = vadd.f32 0.0, %v6757
        %v6759 = vpop.f32.mrf.mxu0
        %6760 = vmatprep.mubr.f32.mxu0 0.0
        %6761 = vmatmul.mubr.f32.gmra.mxu0 %v6665
        %v6762 = vpop.f32.mrf.mxu0
        %v6763 = vadd.f32 0.0, %v6762
        %v6764 = vpop.f32.mrf.mxu0
        %6765 = vmatprep.mubr.f32.mxu0 0.0
        %6766 = vmatmul.mubr.f32.gmra.mxu0 %v6668
        %v6767 = vpop.f32.mrf.mxu0
        %v6768 = vadd.f32 0.0, %v6767
        %v6769 = vpop.f32.mrf.mxu0
        %6770 = vmatprep.mubr.f32.mxu0 0.0
        %6771 = vmatmul.mubr.f32.gmra.mxu0 %v6671
        %v6772 = vpop.f32.mrf.mxu0
        %v6773 = vadd.f32 0.0, %v6772
        %v6774 = vpop.f32.mrf.mxu0
        %6775 = vmatprep.mubr.f32.mxu0 0.0
        %6776 = vmatmul.mubr.f32.gmra.mxu0 %v6674
        %v6777 = vpop.f32.mrf.mxu0
        %v6778 = vadd.f32 0.0, %v6777
        %v6779 = vpop.f32.mrf.mxu0
        %6780 = vdwg.mxu0
        %v6781 = vadd.f32 %v6633, %v6743
        %v6782 = vadd.f32 %v6634, %v6748
        %v6783 = vadd.f32 %v6635, %v6753
        %v6784 = vadd.f32 %v6636, %v6758
        %v6785 = vadd.f32 %v6637, %v6763
        %v6786 = vadd.f32 %v6638, %v6768
        %v6787 = vadd.f32 %v6639, %v6773
        %v6788 = vadd.f32 %v6640, %v6778
        %s6789 = sadd.s32 32, %s5897
        %s6790 = scalar_lea.vmem [#allocation2], %s6789
        %v6791 = vld [vmem:[%s6790] sm:$0xff]
        %v6792 = vld [vmem:[%s6790 + $0x10] sm:$0xff]
        %v6793 = vld [vmem:[%s6790 + $0x20] sm:$0xff]
        %v6794 = vld [vmem:[%s6790 + $0x30] sm:$0xff]
        %v6795 = vld [vmem:[%s6790 + $0x40] sm:$0xff]
        %v6796 = vld [vmem:[%s6790 + $0x50] sm:$0xff]
        %v6797 = vld [vmem:[%s6790 + $0x60] sm:$0xff]
        %v6798 = vld [vmem:[%s6790 + $0x70] sm:$0xff]
        %s6799 = scalar_lea.vmem %s5, 240
        %v6800 = vld [vmem:[%s6799] sm:$0xff]
        %v6801 = vld [vmem:[%s6799 + $0x8] sm:$0xff]
        %v6803 = vsel %vm4598, %v6791, 0
        %v6806 = vsel %vm4598, %v6792, 0
        %v6809 = vsel %vm4598, %v6793, 0
        %v6812 = vsel %vm4598, %v6794, 0
        %v6815 = vsel %vm4598, %v6795, 0
        %v6818 = vsel %vm4598, %v6796, 0
        %v6821 = vsel %vm4598, %v6797, 0
        %v6824 = vsel %vm4598, %v6798, 0
        %6826 = vmatprep.subr.mxu0 0.0
        %6827 = vmatpush1.msra.mxu0 0.0
        %6828 = vmatprep.subr.mxu0 0.0
        %6829 = vmatpush1.msra.mxu0 0.0
        %6830 = vmatprep.subr.mxu0 0.0
        %6831 = vmatpush1.msra.mxu0 0.0
        %6832 = vmatprep.subr.mxu0 0.0
        %6833 = vmatpush1.msra.mxu0 0.0
        %6834 = vmatprep.subr.mxu0 0.0
        %6835 = vmatpush1.msra.mxu0 0.0
        %6836 = vmatprep.subr.mxu0 0.0
        %6837 = vmatpush1.msra.mxu0 0.0
        %6838 = vmatprep.subr.mxu0 0.0
        %6839 = vmatpush1.msra.mxu0 0.0
        %6840 = vmatprep.subr.mxu0 0.0
        %6841 = vmatpush1.msra.mxu0 0.0
        %6842 = vmatprep.subr.mxu0 0.0
        %6843 = vmatpush1.msra.mxu0 0.0
        %6844 = vmatprep.subr.mxu0 0.0
        %6845 = vmatpush1.msra.mxu0 0.0
        %6846 = vmatprep.subr.mxu0 0.0
        %6847 = vmatpush1.msra.mxu0 0.0
        %6848 = vmatprep.subr.mxu0 0.0
        %6849 = vmatpush1.msra.mxu0 0.0
        %6850 = vmatprep.subr.mxu0 0.0
        %6851 = vmatpush1.msra.mxu0 0.0
        %6852 = vmatprep.subr.mxu0 0.0
        %6853 = vmatpush1.msra.mxu0 0.0
        %6854 = vmatprep.subr.mxu0 0.0
        %6855 = vmatpush1.msra.mxu0 %v6801
        %6856 = vmatprep.subr.mxu0 0.0
        %6857 = vmatpush1.msra.mxu0 %v6800
        %6858 = vmatprep.subr.mxu0 0.0
        %6859 = vmatpush2.msra.mxu0 0.0
        %6860 = vmatprep.subr.mxu0 0.0
        %6861 = vmatpush2.msra.mxu0 0.0
        %6862 = vmatprep.subr.mxu0 0.0
        %6863 = vmatpush2.msra.mxu0 0.0
        %6864 = vmatprep.subr.mxu0 0.0
        %6865 = vmatpush2.msra.mxu0 0.0
        %6866 = vmatprep.subr.mxu0 0.0
        %6867 = vmatpush2.msra.mxu0 0.0
        %6868 = vmatprep.subr.mxu0 0.0
        %6869 = vmatpush2.msra.mxu0 0.0
        %6870 = vmatprep.subr.mxu0 0.0
        %6871 = vmatpush2.msra.mxu0 0.0
        %6872 = vmatprep.subr.mxu0 0.0
        %6873 = vmatpush2.msra.mxu0 0.0
        %6874 = vmatprep.subr.mxu0 0.0
        %6875 = vmatpush2.msra.mxu0 0.0
        %6876 = vmatprep.subr.mxu0 0.0
        %6877 = vmatpush2.msra.mxu0 0.0
        %6878 = vmatprep.subr.mxu0 0.0
        %6879 = vmatpush2.msra.mxu0 0.0
        %6880 = vmatprep.subr.mxu0 0.0
        %6881 = vmatpush2.msra.mxu0 0.0
        %6882 = vmatprep.subr.mxu0 0.0
        %6883 = vmatpush2.msra.mxu0 0.0
        %6884 = vmatprep.subr.mxu0 0.0
        %6885 = vmatpush2.msra.mxu0 0.0
        %6886 = vmatprep.subr.mxu0 0.0
        %6887 = vmatpush2.msra.mxu0 0.0
        %6888 = vmatprep.subr.mxu0 0.0
        %6889 = vmatpush2.msra.mxu0 0.0
        %6890 = vmatprep.mubr.f32.mxu0 0.0
        %6891 = vmatmul.mubr.f32.gmra.mxu0 %v6803
        %v6892 = vpop.f32.mrf.mxu0
        %v6893 = vadd.f32 0.0, %v6892
        %v6894 = vpop.f32.mrf.mxu0
        %6895 = vmatprep.mubr.f32.mxu0 0.0
        %6896 = vmatmul.mubr.f32.gmra.mxu0 %v6806
        %v6897 = vpop.f32.mrf.mxu0
        %v6898 = vadd.f32 0.0, %v6897
        %v6899 = vpop.f32.mrf.mxu0
        %6900 = vmatprep.mubr.f32.mxu0 0.0
        %6901 = vmatmul.mubr.f32.gmra.mxu0 %v6809
        %v6902 = vpop.f32.mrf.mxu0
        %v6903 = vadd.f32 0.0, %v6902
        %v6904 = vpop.f32.mrf.mxu0
        %6905 = vmatprep.mubr.f32.mxu0 0.0
        %6906 = vmatmul.mubr.f32.gmra.mxu0 %v6812
        %v6907 = vpop.f32.mrf.mxu0
        %v6908 = vadd.f32 0.0, %v6907
        %v6909 = vpop.f32.mrf.mxu0
        %6910 = vmatprep.mubr.f32.mxu0 0.0
        %6911 = vmatmul.mubr.f32.gmra.mxu0 %v6815
        %v6912 = vpop.f32.mrf.mxu0
        %v6913 = vadd.f32 0.0, %v6912
        %v6914 = vpop.f32.mrf.mxu0
        %6915 = vmatprep.mubr.f32.mxu0 0.0
        %6916 = vmatmul.mubr.f32.gmra.mxu0 %v6818
        %v6917 = vpop.f32.mrf.mxu0
        %v6918 = vadd.f32 0.0, %v6917
        %v6919 = vpop.f32.mrf.mxu0
        %6920 = vmatprep.mubr.f32.mxu0 0.0
        %6921 = vmatmul.mubr.f32.gmra.mxu0 %v6821
        %v6922 = vpop.f32.mrf.mxu0
        %v6923 = vadd.f32 0.0, %v6922
        %v6924 = vpop.f32.mrf.mxu0
        %6925 = vmatprep.mubr.f32.mxu0 0.0
        %6926 = vmatmul.mubr.f32.gmra.mxu0 %v6824
        %v6927 = vpop.f32.mrf.mxu0
        %v6928 = vadd.f32 0.0, %v6927
        %v6929 = vpop.f32.mrf.mxu0
        %6930 = vdwg.mxu0
        %v6931 = vadd.f32 %v6781, %v6893
        %v6932 = vadd.f32 %v6782, %v6898
        %v6933 = vadd.f32 %v6783, %v6903
        %v6934 = vadd.f32 %v6784, %v6908
        %v6935 = vadd.f32 %v6785, %v6913
        %v6936 = vadd.f32 %v6786, %v6918
        %v6937 = vadd.f32 %v6787, %v6923
        %v6938 = vadd.f32 %v6788, %v6928
        %v6939 = vld [vmem:[%s6790 + $0x1] sm:$0xff]
        %v6940 = vld [vmem:[%s6790 + $0x11] sm:$0xff]
        %v6941 = vld [vmem:[%s6790 + $0x21] sm:$0xff]
        %v6942 = vld [vmem:[%s6790 + $0x31] sm:$0xff]
        %v6943 = vld [vmem:[%s6790 + $0x41] sm:$0xff]
        %v6944 = vld [vmem:[%s6790 + $0x51] sm:$0xff]
        %v6945 = vld [vmem:[%s6790 + $0x61] sm:$0xff]
        %v6946 = vld [vmem:[%s6790 + $0x71] sm:$0xff]
        %s6947 = scalar_lea.vmem %s5, 256
        %v6948 = vld [vmem:[%s6947] sm:$0xff]
        %v6949 = vld [vmem:[%s6947 + $0x8] sm:$0xff]
        %v6951 = vsel %vm4598, %v6939, 0
        %v6954 = vsel %vm4598, %v6940, 0
        %v6957 = vsel %vm4598, %v6941, 0
        %v6960 = vsel %vm4598, %v6942, 0
        %v6963 = vsel %vm4598, %v6943, 0
        %v6966 = vsel %vm4598, %v6944, 0
        %v6969 = vsel %vm4598, %v6945, 0
        %v6972 = vsel %vm4598, %v6946, 0
        %6974 = vmatprep.subr.mxu0 0.0
        %6975 = vmatpush1.msra.mxu0 0.0
        %6976 = vmatprep.subr.mxu0 0.0
        %6977 = vmatpush1.msra.mxu0 0.0
        %6978 = vmatprep.subr.mxu0 0.0
        %6979 = vmatpush1.msra.mxu0 0.0
        %6980 = vmatprep.subr.mxu0 0.0
        %6981 = vmatpush1.msra.mxu0 0.0
        %6982 = vmatprep.subr.mxu0 0.0
        %6983 = vmatpush1.msra.mxu0 0.0
        %6984 = vmatprep.subr.mxu0 0.0
        %6985 = vmatpush1.msra.mxu0 0.0
        %6986 = vmatprep.subr.mxu0 0.0
        %6987 = vmatpush1.msra.mxu0 0.0
        %6988 = vmatprep.subr.mxu0 0.0
        %6989 = vmatpush1.msra.mxu0 0.0
        %6990 = vmatprep.subr.mxu0 0.0
        %6991 = vmatpush1.msra.mxu0 0.0
        %6992 = vmatprep.subr.mxu0 0.0
        %6993 = vmatpush1.msra.mxu0 0.0
        %6994 = vmatprep.subr.mxu0 0.0
        %6995 = vmatpush1.msra.mxu0 0.0
        %6996 = vmatprep.subr.mxu0 0.0
        %6997 = vmatpush1.msra.mxu0 0.0
        %6998 = vmatprep.subr.mxu0 0.0
        %6999 = vmatpush1.msra.mxu0 0.0
        %7000 = vmatprep.subr.mxu0 0.0
        %7001 = vmatpush1.msra.mxu0 0.0
        %7002 = vmatprep.subr.mxu0 0.0
        %7003 = vmatpush1.msra.mxu0 %v6949
        %7004 = vmatprep.subr.mxu0 0.0
        %7005 = vmatpush1.msra.mxu0 %v6948
        %7006 = vmatprep.subr.mxu0 0.0
        %7007 = vmatpush2.msra.mxu0 0.0
        %7008 = vmatprep.subr.mxu0 0.0
        %7009 = vmatpush2.msra.mxu0 0.0
        %7010 = vmatprep.subr.mxu0 0.0
        %7011 = vmatpush2.msra.mxu0 0.0
        %7012 = vmatprep.subr.mxu0 0.0
        %7013 = vmatpush2.msra.mxu0 0.0
        %7014 = vmatprep.subr.mxu0 0.0
        %7015 = vmatpush2.msra.mxu0 0.0
        %7016 = vmatprep.subr.mxu0 0.0
        %7017 = vmatpush2.msra.mxu0 0.0
        %7018 = vmatprep.subr.mxu0 0.0
        %7019 = vmatpush2.msra.mxu0 0.0
        %7020 = vmatprep.subr.mxu0 0.0
        %7021 = vmatpush2.msra.mxu0 0.0
        %7022 = vmatprep.subr.mxu0 0.0
        %7023 = vmatpush2.msra.mxu0 0.0
        %7024 = vmatprep.subr.mxu0 0.0
        %7025 = vmatpush2.msra.mxu0 0.0
        %7026 = vmatprep.subr.mxu0 0.0
        %7027 = vmatpush2.msra.mxu0 0.0
        %7028 = vmatprep.subr.mxu0 0.0
        %7029 = vmatpush2.msra.mxu0 0.0
        %7030 = vmatprep.subr.mxu0 0.0
        %7031 = vmatpush2.msra.mxu0 0.0
        %7032 = vmatprep.subr.mxu0 0.0
        %7033 = vmatpush2.msra.mxu0 0.0
        %7034 = vmatprep.subr.mxu0 0.0
        %7035 = vmatpush2.msra.mxu0 0.0
        %7036 = vmatprep.subr.mxu0 0.0
        %7037 = vmatpush2.msra.mxu0 0.0
        %7038 = vmatprep.mubr.f32.mxu0 0.0
        %7039 = vmatmul.mubr.f32.gmra.mxu0 %v6951
        %v7040 = vpop.f32.mrf.mxu0
        %v7041 = vadd.f32 0.0, %v7040
        %v7042 = vpop.f32.mrf.mxu0
        %7043 = vmatprep.mubr.f32.mxu0 0.0
        %7044 = vmatmul.mubr.f32.gmra.mxu0 %v6954
        %v7045 = vpop.f32.mrf.mxu0
        %v7046 = vadd.f32 0.0, %v7045
        %v7047 = vpop.f32.mrf.mxu0
        %7048 = vmatprep.mubr.f32.mxu0 0.0
        %7049 = vmatmul.mubr.f32.gmra.mxu0 %v6957
        %v7050 = vpop.f32.mrf.mxu0
        %v7051 = vadd.f32 0.0, %v7050
        %v7052 = vpop.f32.mrf.mxu0
        %7053 = vmatprep.mubr.f32.mxu0 0.0
        %7054 = vmatmul.mubr.f32.gmra.mxu0 %v6960
        %v7055 = vpop.f32.mrf.mxu0
        %v7056 = vadd.f32 0.0, %v7055
        %v7057 = vpop.f32.mrf.mxu0
        %7058 = vmatprep.mubr.f32.mxu0 0.0
        %7059 = vmatmul.mubr.f32.gmra.mxu0 %v6963
        %v7060 = vpop.f32.mrf.mxu0
        %v7061 = vadd.f32 0.0, %v7060
        %v7062 = vpop.f32.mrf.mxu0
        %7063 = vmatprep.mubr.f32.mxu0 0.0
        %7064 = vmatmul.mubr.f32.gmra.mxu0 %v6966
        %v7065 = vpop.f32.mrf.mxu0
        %v7066 = vadd.f32 0.0, %v7065
        %v7067 = vpop.f32.mrf.mxu0
        %7068 = vmatprep.mubr.f32.mxu0 0.0
        %7069 = vmatmul.mubr.f32.gmra.mxu0 %v6969
        %v7070 = vpop.f32.mrf.mxu0
        %v7071 = vadd.f32 0.0, %v7070
        %v7072 = vpop.f32.mrf.mxu0
        %7073 = vmatprep.mubr.f32.mxu0 0.0
        %7074 = vmatmul.mubr.f32.gmra.mxu0 %v6972
        %v7075 = vpop.f32.mrf.mxu0
        %v7076 = vadd.f32 0.0, %v7075
        %v7077 = vpop.f32.mrf.mxu0
        %7078 = vdwg.mxu0
        %v7079 = vadd.f32 %v6931, %v7041
        %v7080 = vadd.f32 %v6932, %v7046
        %v7081 = vadd.f32 %v6933, %v7051
        %v7082 = vadd.f32 %v6934, %v7056
        %v7083 = vadd.f32 %v6935, %v7061
        %v7084 = vadd.f32 %v6936, %v7066
        %v7085 = vadd.f32 %v6937, %v7071
        %v7086 = vadd.f32 %v6938, %v7076
        %v7087 = vld [vmem:[%s6790 + $0x2] sm:$0xff]
        %v7088 = vld [vmem:[%s6790 + $0x12] sm:$0xff]
        %v7089 = vld [vmem:[%s6790 + $0x22] sm:$0xff]
        %v7090 = vld [vmem:[%s6790 + $0x32] sm:$0xff]
        %v7091 = vld [vmem:[%s6790 + $0x42] sm:$0xff]
        %v7092 = vld [vmem:[%s6790 + $0x52] sm:$0xff]
        %v7093 = vld [vmem:[%s6790 + $0x62] sm:$0xff]
        %v7094 = vld [vmem:[%s6790 + $0x72] sm:$0xff]
        %s7095 = scalar_lea.vmem %s5, 272
        %v7096 = vld [vmem:[%s7095] sm:$0xff]
        %v7097 = vld [vmem:[%s7095 + $0x8] sm:$0xff]
        %v7099 = vsel %vm4598, %v7087, 0
        %v7102 = vsel %vm4598, %v7088, 0
        %v7105 = vsel %vm4598, %v7089, 0
        %v7108 = vsel %vm4598, %v7090, 0
        %v7111 = vsel %vm4598, %v7091, 0
        %v7114 = vsel %vm4598, %v7092, 0
        %v7117 = vsel %vm4598, %v7093, 0
        %v7120 = vsel %vm4598, %v7094, 0
        %7122 = vmatprep.subr.mxu0 0.0
        %7123 = vmatpush1.msra.mxu0 0.0
        %7124 = vmatprep.subr.mxu0 0.0
        %7125 = vmatpush1.msra.mxu0 0.0
        %7126 = vmatprep.subr.mxu0 0.0
        %7127 = vmatpush1.msra.mxu0 0.0
        %7128 = vmatprep.subr.mxu0 0.0
        %7129 = vmatpush1.msra.mxu0 0.0
        %7130 = vmatprep.subr.mxu0 0.0
        %7131 = vmatpush1.msra.mxu0 0.0
        %7132 = vmatprep.subr.mxu0 0.0
        %7133 = vmatpush1.msra.mxu0 0.0
        %7134 = vmatprep.subr.mxu0 0.0
        %7135 = vmatpush1.msra.mxu0 0.0
        %7136 = vmatprep.subr.mxu0 0.0
        %7137 = vmatpush1.msra.mxu0 0.0
        %7138 = vmatprep.subr.mxu0 0.0
        %7139 = vmatpush1.msra.mxu0 0.0
        %7140 = vmatprep.subr.mxu0 0.0
        %7141 = vmatpush1.msra.mxu0 0.0
        %7142 = vmatprep.subr.mxu0 0.0
        %7143 = vmatpush1.msra.mxu0 0.0
        %7144 = vmatprep.subr.mxu0 0.0
        %7145 = vmatpush1.msra.mxu0 0.0
        %7146 = vmatprep.subr.mxu0 0.0
        %7147 = vmatpush1.msra.mxu0 0.0
        %7148 = vmatprep.subr.mxu0 0.0
        %7149 = vmatpush1.msra.mxu0 0.0
        %7150 = vmatprep.subr.mxu0 0.0
        %7151 = vmatpush1.msra.mxu0 %v7097
        %7152 = vmatprep.subr.mxu0 0.0
        %7153 = vmatpush1.msra.mxu0 %v7096
        %7154 = vmatprep.subr.mxu0 0.0
        %7155 = vmatpush2.msra.mxu0 0.0
        %7156 = vmatprep.subr.mxu0 0.0
        %7157 = vmatpush2.msra.mxu0 0.0
        %7158 = vmatprep.subr.mxu0 0.0
        %7159 = vmatpush2.msra.mxu0 0.0
        %7160 = vmatprep.subr.mxu0 0.0
        %7161 = vmatpush2.msra.mxu0 0.0
        %7162 = vmatprep.subr.mxu0 0.0
        %7163 = vmatpush2.msra.mxu0 0.0
        %7164 = vmatprep.subr.mxu0 0.0
        %7165 = vmatpush2.msra.mxu0 0.0
        %7166 = vmatprep.subr.mxu0 0.0
        %7167 = vmatpush2.msra.mxu0 0.0
        %7168 = vmatprep.subr.mxu0 0.0
        %7169 = vmatpush2.msra.mxu0 0.0
        %7170 = vmatprep.subr.mxu0 0.0
        %7171 = vmatpush2.msra.mxu0 0.0
        %7172 = vmatprep.subr.mxu0 0.0
        %7173 = vmatpush2.msra.mxu0 0.0
        %7174 = vmatprep.subr.mxu0 0.0
        %7175 = vmatpush2.msra.mxu0 0.0
        %7176 = vmatprep.subr.mxu0 0.0
        %7177 = vmatpush2.msra.mxu0 0.0
        %7178 = vmatprep.subr.mxu0 0.0
        %7179 = vmatpush2.msra.mxu0 0.0
        %7180 = vmatprep.subr.mxu0 0.0
        %7181 = vmatpush2.msra.mxu0 0.0
        %7182 = vmatprep.subr.mxu0 0.0
        %7183 = vmatpush2.msra.mxu0 0.0
        %7184 = vmatprep.subr.mxu0 0.0
        %7185 = vmatpush2.msra.mxu0 0.0
        %7186 = vmatprep.mubr.f32.mxu0 0.0
        %7187 = vmatmul.mubr.f32.gmra.mxu0 %v7099
        %v7188 = vpop.f32.mrf.mxu0
        %v7189 = vadd.f32 0.0, %v7188
        %v7190 = vpop.f32.mrf.mxu0
        %7191 = vmatprep.mubr.f32.mxu0 0.0
        %7192 = vmatmul.mubr.f32.gmra.mxu0 %v7102
        %v7193 = vpop.f32.mrf.mxu0
        %v7194 = vadd.f32 0.0, %v7193
        %v7195 = vpop.f32.mrf.mxu0
        %7196 = vmatprep.mubr.f32.mxu0 0.0
        %7197 = vmatmul.mubr.f32.gmra.mxu0 %v7105
        %v7198 = vpop.f32.mrf.mxu0
        %v7199 = vadd.f32 0.0, %v7198
        %v7200 = vpop.f32.mrf.mxu0
        %7201 = vmatprep.mubr.f32.mxu0 0.0
        %7202 = vmatmul.mubr.f32.gmra.mxu0 %v7108
        %v7203 = vpop.f32.mrf.mxu0
        %v7204 = vadd.f32 0.0, %v7203
        %v7205 = vpop.f32.mrf.mxu0
        %7206 = vmatprep.mubr.f32.mxu0 0.0
        %7207 = vmatmul.mubr.f32.gmra.mxu0 %v7111
        %v7208 = vpop.f32.mrf.mxu0
        %v7209 = vadd.f32 0.0, %v7208
        %v7210 = vpop.f32.mrf.mxu0
        %7211 = vmatprep.mubr.f32.mxu0 0.0
        %7212 = vmatmul.mubr.f32.gmra.mxu0 %v7114
        %v7213 = vpop.f32.mrf.mxu0
        %v7214 = vadd.f32 0.0, %v7213
        %v7215 = vpop.f32.mrf.mxu0
        %7216 = vmatprep.mubr.f32.mxu0 0.0
        %7217 = vmatmul.mubr.f32.gmra.mxu0 %v7117
        %v7218 = vpop.f32.mrf.mxu0
        %v7219 = vadd.f32 0.0, %v7218
        %v7220 = vpop.f32.mrf.mxu0
        %7221 = vmatprep.mubr.f32.mxu0 0.0
        %7222 = vmatmul.mubr.f32.gmra.mxu0 %v7120
        %v7223 = vpop.f32.mrf.mxu0
        %v7224 = vadd.f32 0.0, %v7223
        %v7225 = vpop.f32.mrf.mxu0
        %7226 = vdwg.mxu0
        %v7227 = vadd.f32 %v7079, %v7189
        %v7228 = vadd.f32 %v7080, %v7194
        %v7229 = vadd.f32 %v7081, %v7199
        %v7230 = vadd.f32 %v7082, %v7204
        %v7231 = vadd.f32 %v7083, %v7209
        %v7232 = vadd.f32 %v7084, %v7214
        %v7233 = vadd.f32 %v7085, %v7219
        %v7234 = vadd.f32 %v7086, %v7224
        %s7235 = smul.u32 %s4574, 160
        %s7236 = scalar_lea.vmem [#allocation2], %s7235
        %v7237 = vld [vmem:[%s7236] sm:$0xff]
        %v7238 = vld [vmem:[%s7236 + $0x10] sm:$0xff]
        %v7239 = vld [vmem:[%s7236 + $0x20] sm:$0xff]
        %v7240 = vld [vmem:[%s7236 + $0x30] sm:$0xff]
        %v7241 = vld [vmem:[%s7236 + $0x40] sm:$0xff]
        %v7242 = vld [vmem:[%s7236 + $0x50] sm:$0xff]
        %v7243 = vld [vmem:[%s7236 + $0x60] sm:$0xff]
        %v7244 = vld [vmem:[%s7236 + $0x70] sm:$0xff]
        %s7245 = scalar_lea.vmem %s5, 288
        %v7246 = vld [vmem:[%s7245] sm:$0xff]
        %v7247 = vld [vmem:[%s7245 + $0x8] sm:$0xff]
        %v7249 = vsel %vm4598, %v7237, 0
        %v7252 = vsel %vm4598, %v7238, 0
        %v7255 = vsel %vm4598, %v7239, 0
        %v7258 = vsel %vm4598, %v7240, 0
        %v7261 = vsel %vm4598, %v7241, 0
        %v7264 = vsel %vm4598, %v7242, 0
        %v7267 = vsel %vm4598, %v7243, 0
        %v7270 = vsel %vm4598, %v7244, 0
        %7272 = vmatprep.subr.mxu0 0.0
        %7273 = vmatpush1.msra.mxu0 0.0
        %7274 = vmatprep.subr.mxu0 0.0
        %7275 = vmatpush1.msra.mxu0 0.0
        %7276 = vmatprep.subr.mxu0 0.0
        %7277 = vmatpush1.msra.mxu0 0.0
        %7278 = vmatprep.subr.mxu0 0.0
        %7279 = vmatpush1.msra.mxu0 0.0
        %7280 = vmatprep.subr.mxu0 0.0
        %7281 = vmatpush1.msra.mxu0 0.0
        %7282 = vmatprep.subr.mxu0 0.0
        %7283 = vmatpush1.msra.mxu0 0.0
        %7284 = vmatprep.subr.mxu0 0.0
        %7285 = vmatpush1.msra.mxu0 0.0
        %7286 = vmatprep.subr.mxu0 0.0
        %7287 = vmatpush1.msra.mxu0 0.0
        %7288 = vmatprep.subr.mxu0 0.0
        %7289 = vmatpush1.msra.mxu0 0.0
        %7290 = vmatprep.subr.mxu0 0.0
        %7291 = vmatpush1.msra.mxu0 0.0
        %7292 = vmatprep.subr.mxu0 0.0
        %7293 = vmatpush1.msra.mxu0 0.0
        %7294 = vmatprep.subr.mxu0 0.0
        %7295 = vmatpush1.msra.mxu0 0.0
        %7296 = vmatprep.subr.mxu0 0.0
        %7297 = vmatpush1.msra.mxu0 0.0
        %7298 = vmatprep.subr.mxu0 0.0
        %7299 = vmatpush1.msra.mxu0 0.0
        %7300 = vmatprep.subr.mxu0 0.0
        %7301 = vmatpush1.msra.mxu0 %v7247
        %7302 = vmatprep.subr.mxu0 0.0
        %7303 = vmatpush1.msra.mxu0 %v7246
        %7304 = vmatprep.subr.mxu0 0.0
        %7305 = vmatpush2.msra.mxu0 0.0
        %7306 = vmatprep.subr.mxu0 0.0
        %7307 = vmatpush2.msra.mxu0 0.0
        %7308 = vmatprep.subr.mxu0 0.0
        %7309 = vmatpush2.msra.mxu0 0.0
        %7310 = vmatprep.subr.mxu0 0.0
        %7311 = vmatpush2.msra.mxu0 0.0
        %7312 = vmatprep.subr.mxu0 0.0
        %7313 = vmatpush2.msra.mxu0 0.0
        %7314 = vmatprep.subr.mxu0 0.0
        %7315 = vmatpush2.msra.mxu0 0.0
        %7316 = vmatprep.subr.mxu0 0.0
        %7317 = vmatpush2.msra.mxu0 0.0
        %7318 = vmatprep.subr.mxu0 0.0
        %7319 = vmatpush2.msra.mxu0 0.0
        %7320 = vmatprep.subr.mxu0 0.0
        %7321 = vmatpush2.msra.mxu0 0.0
        %7322 = vmatprep.subr.mxu0 0.0
        %7323 = vmatpush2.msra.mxu0 0.0
        %7324 = vmatprep.subr.mxu0 0.0
        %7325 = vmatpush2.msra.mxu0 0.0
        %7326 = vmatprep.subr.mxu0 0.0
        %7327 = vmatpush2.msra.mxu0 0.0
        %7328 = vmatprep.subr.mxu0 0.0
        %7329 = vmatpush2.msra.mxu0 0.0
        %7330 = vmatprep.subr.mxu0 0.0
        %7331 = vmatpush2.msra.mxu0 0.0
        %7332 = vmatprep.subr.mxu0 0.0
        %7333 = vmatpush2.msra.mxu0 0.0
        %7334 = vmatprep.subr.mxu0 0.0
        %7335 = vmatpush2.msra.mxu0 0.0
        %7336 = vmatprep.mubr.f32.mxu0 0.0
        %7337 = vmatmul.mubr.f32.gmra.mxu0 %v7249
        %v7338 = vpop.f32.mrf.mxu0
        %v7339 = vadd.f32 0.0, %v7338
        %v7340 = vpop.f32.mrf.mxu0
        %7341 = vmatprep.mubr.f32.mxu0 0.0
        %7342 = vmatmul.mubr.f32.gmra.mxu0 %v7252
        %v7343 = vpop.f32.mrf.mxu0
        %v7344 = vadd.f32 0.0, %v7343
        %v7345 = vpop.f32.mrf.mxu0
        %7346 = vmatprep.mubr.f32.mxu0 0.0
        %7347 = vmatmul.mubr.f32.gmra.mxu0 %v7255
        %v7348 = vpop.f32.mrf.mxu0
        %v7349 = vadd.f32 0.0, %v7348
        %v7350 = vpop.f32.mrf.mxu0
        %7351 = vmatprep.mubr.f32.mxu0 0.0
        %7352 = vmatmul.mubr.f32.gmra.mxu0 %v7258
        %v7353 = vpop.f32.mrf.mxu0
        %v7354 = vadd.f32 0.0, %v7353
        %v7355 = vpop.f32.mrf.mxu0
        %7356 = vmatprep.mubr.f32.mxu0 0.0
        %7357 = vmatmul.mubr.f32.gmra.mxu0 %v7261
        %v7358 = vpop.f32.mrf.mxu0
        %v7359 = vadd.f32 0.0, %v7358
        %v7360 = vpop.f32.mrf.mxu0
        %7361 = vmatprep.mubr.f32.mxu0 0.0
        %7362 = vmatmul.mubr.f32.gmra.mxu0 %v7264
        %v7363 = vpop.f32.mrf.mxu0
        %v7364 = vadd.f32 0.0, %v7363
        %v7365 = vpop.f32.mrf.mxu0
        %7366 = vmatprep.mubr.f32.mxu0 0.0
        %7367 = vmatmul.mubr.f32.gmra.mxu0 %v7267
        %v7368 = vpop.f32.mrf.mxu0
        %v7369 = vadd.f32 0.0, %v7368
        %v7370 = vpop.f32.mrf.mxu0
        %7371 = vmatprep.mubr.f32.mxu0 0.0
        %7372 = vmatmul.mubr.f32.gmra.mxu0 %v7270
        %v7373 = vpop.f32.mrf.mxu0
        %v7374 = vadd.f32 0.0, %v7373
        %v7375 = vpop.f32.mrf.mxu0
        %7376 = vdwg.mxu0
        %v7377 = vadd.f32 %v7227, %v7339
        %v7378 = vadd.f32 %v7228, %v7344
        %v7379 = vadd.f32 %v7229, %v7349
        %v7380 = vadd.f32 %v7230, %v7354
        %v7381 = vadd.f32 %v7231, %v7359
        %v7382 = vadd.f32 %v7232, %v7364
        %v7383 = vadd.f32 %v7233, %v7369
        %v7384 = vadd.f32 %v7234, %v7374
        %v7385 = vld [vmem:[%s7236 + $0x1] sm:$0xff]
        %v7386 = vld [vmem:[%s7236 + $0x11] sm:$0xff]
        %v7387 = vld [vmem:[%s7236 + $0x21] sm:$0xff]
        %v7388 = vld [vmem:[%s7236 + $0x31] sm:$0xff]
        %v7389 = vld [vmem:[%s7236 + $0x41] sm:$0xff]
        %v7390 = vld [vmem:[%s7236 + $0x51] sm:$0xff]
        %v7391 = vld [vmem:[%s7236 + $0x61] sm:$0xff]
        %v7392 = vld [vmem:[%s7236 + $0x71] sm:$0xff]
        %s7393 = scalar_lea.vmem %s5, 304
        %v7394 = vld [vmem:[%s7393] sm:$0xff]
        %v7395 = vld [vmem:[%s7393 + $0x8] sm:$0xff]
        %v7397 = vsel %vm4598, %v7385, 0
        %v7400 = vsel %vm4598, %v7386, 0
        %v7403 = vsel %vm4598, %v7387, 0
        %v7406 = vsel %vm4598, %v7388, 0
        %v7409 = vsel %vm4598, %v7389, 0
        %v7412 = vsel %vm4598, %v7390, 0
        %v7415 = vsel %vm4598, %v7391, 0
        %v7418 = vsel %vm4598, %v7392, 0
        %7420 = vmatprep.subr.mxu0 0.0
        %7421 = vmatpush1.msra.mxu0 0.0
        %7422 = vmatprep.subr.mxu0 0.0
        %7423 = vmatpush1.msra.mxu0 0.0
        %7424 = vmatprep.subr.mxu0 0.0
        %7425 = vmatpush1.msra.mxu0 0.0
        %7426 = vmatprep.subr.mxu0 0.0
        %7427 = vmatpush1.msra.mxu0 0.0
        %7428 = vmatprep.subr.mxu0 0.0
        %7429 = vmatpush1.msra.mxu0 0.0
        %7430 = vmatprep.subr.mxu0 0.0
        %7431 = vmatpush1.msra.mxu0 0.0
        %7432 = vmatprep.subr.mxu0 0.0
        %7433 = vmatpush1.msra.mxu0 0.0
        %7434 = vmatprep.subr.mxu0 0.0
        %7435 = vmatpush1.msra.mxu0 0.0
        %7436 = vmatprep.subr.mxu0 0.0
        %7437 = vmatpush1.msra.mxu0 0.0
        %7438 = vmatprep.subr.mxu0 0.0
        %7439 = vmatpush1.msra.mxu0 0.0
        %7440 = vmatprep.subr.mxu0 0.0
        %7441 = vmatpush1.msra.mxu0 0.0
        %7442 = vmatprep.subr.mxu0 0.0
        %7443 = vmatpush1.msra.mxu0 0.0
        %7444 = vmatprep.subr.mxu0 0.0
        %7445 = vmatpush1.msra.mxu0 0.0
        %7446 = vmatprep.subr.mxu0 0.0
        %7447 = vmatpush1.msra.mxu0 0.0
        %7448 = vmatprep.subr.mxu0 0.0
        %7449 = vmatpush1.msra.mxu0 %v7395
        %7450 = vmatprep.subr.mxu0 0.0
        %7451 = vmatpush1.msra.mxu0 %v7394
        %7452 = vmatprep.subr.mxu0 0.0
        %7453 = vmatpush2.msra.mxu0 0.0
        %7454 = vmatprep.subr.mxu0 0.0
        %7455 = vmatpush2.msra.mxu0 0.0
        %7456 = vmatprep.subr.mxu0 0.0
        %7457 = vmatpush2.msra.mxu0 0.0
        %7458 = vmatprep.subr.mxu0 0.0
        %7459 = vmatpush2.msra.mxu0 0.0
        %7460 = vmatprep.subr.mxu0 0.0
        %7461 = vmatpush2.msra.mxu0 0.0
        %7462 = vmatprep.subr.mxu0 0.0
        %7463 = vmatpush2.msra.mxu0 0.0
        %7464 = vmatprep.subr.mxu0 0.0
        %7465 = vmatpush2.msra.mxu0 0.0
        %7466 = vmatprep.subr.mxu0 0.0
        %7467 = vmatpush2.msra.mxu0 0.0
        %7468 = vmatprep.subr.mxu0 0.0
        %7469 = vmatpush2.msra.mxu0 0.0
        %7470 = vmatprep.subr.mxu0 0.0
        %7471 = vmatpush2.msra.mxu0 0.0
        %7472 = vmatprep.subr.mxu0 0.0
        %7473 = vmatpush2.msra.mxu0 0.0
        %7474 = vmatprep.subr.mxu0 0.0
        %7475 = vmatpush2.msra.mxu0 0.0
        %7476 = vmatprep.subr.mxu0 0.0
        %7477 = vmatpush2.msra.mxu0 0.0
        %7478 = vmatprep.subr.mxu0 0.0
        %7479 = vmatpush2.msra.mxu0 0.0
        %7480 = vmatprep.subr.mxu0 0.0
        %7481 = vmatpush2.msra.mxu0 0.0
        %7482 = vmatprep.subr.mxu0 0.0
        %7483 = vmatpush2.msra.mxu0 0.0
        %7484 = vmatprep.mubr.f32.mxu0 0.0
        %7485 = vmatmul.mubr.f32.gmra.mxu0 %v7397
        %v7486 = vpop.f32.mrf.mxu0
        %v7487 = vadd.f32 0.0, %v7486
        %v7488 = vpop.f32.mrf.mxu0
        %7489 = vmatprep.mubr.f32.mxu0 0.0
        %7490 = vmatmul.mubr.f32.gmra.mxu0 %v7400
        %v7491 = vpop.f32.mrf.mxu0
        %v7492 = vadd.f32 0.0, %v7491
        %v7493 = vpop.f32.mrf.mxu0
        %7494 = vmatprep.mubr.f32.mxu0 0.0
        %7495 = vmatmul.mubr.f32.gmra.mxu0 %v7403
        %v7496 = vpop.f32.mrf.mxu0
        %v7497 = vadd.f32 0.0, %v7496
        %v7498 = vpop.f32.mrf.mxu0
        %7499 = vmatprep.mubr.f32.mxu0 0.0
        %7500 = vmatmul.mubr.f32.gmra.mxu0 %v7406
        %v7501 = vpop.f32.mrf.mxu0
        %v7502 = vadd.f32 0.0, %v7501
        %v7503 = vpop.f32.mrf.mxu0
        %7504 = vmatprep.mubr.f32.mxu0 0.0
        %7505 = vmatmul.mubr.f32.gmra.mxu0 %v7409
        %v7506 = vpop.f32.mrf.mxu0
        %v7507 = vadd.f32 0.0, %v7506
        %v7508 = vpop.f32.mrf.mxu0
        %7509 = vmatprep.mubr.f32.mxu0 0.0
        %7510 = vmatmul.mubr.f32.gmra.mxu0 %v7412
        %v7511 = vpop.f32.mrf.mxu0
        %v7512 = vadd.f32 0.0, %v7511
        %v7513 = vpop.f32.mrf.mxu0
        %7514 = vmatprep.mubr.f32.mxu0 0.0
        %7515 = vmatmul.mubr.f32.gmra.mxu0 %v7415
        %v7516 = vpop.f32.mrf.mxu0
        %v7517 = vadd.f32 0.0, %v7516
        %v7518 = vpop.f32.mrf.mxu0
        %7519 = vmatprep.mubr.f32.mxu0 0.0
        %7520 = vmatmul.mubr.f32.gmra.mxu0 %v7418
        %v7521 = vpop.f32.mrf.mxu0
        %v7522 = vadd.f32 0.0, %v7521
        %v7523 = vpop.f32.mrf.mxu0
        %7524 = vdwg.mxu0
        %v7525 = vadd.f32 %v7377, %v7487
        %v7526 = vadd.f32 %v7378, %v7492
        %v7527 = vadd.f32 %v7379, %v7497
        %v7528 = vadd.f32 %v7380, %v7502
        %v7529 = vadd.f32 %v7381, %v7507
        %v7530 = vadd.f32 %v7382, %v7512
        %v7531 = vadd.f32 %v7383, %v7517
        %v7532 = vadd.f32 %v7384, %v7522
        %v7533 = vld [vmem:[%s7236 + $0x2] sm:$0xff]
        %v7534 = vld [vmem:[%s7236 + $0x12] sm:$0xff]
        %v7535 = vld [vmem:[%s7236 + $0x22] sm:$0xff]
        %v7536 = vld [vmem:[%s7236 + $0x32] sm:$0xff]
        %v7537 = vld [vmem:[%s7236 + $0x42] sm:$0xff]
        %v7538 = vld [vmem:[%s7236 + $0x52] sm:$0xff]
        %v7539 = vld [vmem:[%s7236 + $0x62] sm:$0xff]
        %v7540 = vld [vmem:[%s7236 + $0x72] sm:$0xff]
        %s7541 = scalar_lea.vmem %s5, 320
        %v7542 = vld [vmem:[%s7541] sm:$0xff]
        %v7543 = vld [vmem:[%s7541 + $0x8] sm:$0xff]
        %v7545 = vsel %vm4598, %v7533, 0
        %v7548 = vsel %vm4598, %v7534, 0
        %v7551 = vsel %vm4598, %v7535, 0
        %v7554 = vsel %vm4598, %v7536, 0
        %v7557 = vsel %vm4598, %v7537, 0
        %v7560 = vsel %vm4598, %v7538, 0
        %v7563 = vsel %vm4598, %v7539, 0
        %v7566 = vsel %vm4598, %v7540, 0
        %7568 = vmatprep.subr.mxu0 0.0
        %7569 = vmatpush1.msra.mxu0 0.0
        %7570 = vmatprep.subr.mxu0 0.0
        %7571 = vmatpush1.msra.mxu0 0.0
        %7572 = vmatprep.subr.mxu0 0.0
        %7573 = vmatpush1.msra.mxu0 0.0
        %7574 = vmatprep.subr.mxu0 0.0
        %7575 = vmatpush1.msra.mxu0 0.0
        %7576 = vmatprep.subr.mxu0 0.0
        %7577 = vmatpush1.msra.mxu0 0.0
        %7578 = vmatprep.subr.mxu0 0.0
        %7579 = vmatpush1.msra.mxu0 0.0
        %7580 = vmatprep.subr.mxu0 0.0
        %7581 = vmatpush1.msra.mxu0 0.0
        %7582 = vmatprep.subr.mxu0 0.0
        %7583 = vmatpush1.msra.mxu0 0.0
        %7584 = vmatprep.subr.mxu0 0.0
        %7585 = vmatpush1.msra.mxu0 0.0
        %7586 = vmatprep.subr.mxu0 0.0
        %7587 = vmatpush1.msra.mxu0 0.0
        %7588 = vmatprep.subr.mxu0 0.0
        %7589 = vmatpush1.msra.mxu0 0.0
        %7590 = vmatprep.subr.mxu0 0.0
        %7591 = vmatpush1.msra.mxu0 0.0
        %7592 = vmatprep.subr.mxu0 0.0
        %7593 = vmatpush1.msra.mxu0 0.0
        %7594 = vmatprep.subr.mxu0 0.0
        %7595 = vmatpush1.msra.mxu0 0.0
        %7596 = vmatprep.subr.mxu0 0.0
        %7597 = vmatpush1.msra.mxu0 %v7543
        %7598 = vmatprep.subr.mxu0 0.0
        %7599 = vmatpush1.msra.mxu0 %v7542
        %7600 = vmatprep.subr.mxu0 0.0
        %7601 = vmatpush2.msra.mxu0 0.0
        %7602 = vmatprep.subr.mxu0 0.0
        %7603 = vmatpush2.msra.mxu0 0.0
        %7604 = vmatprep.subr.mxu0 0.0
        %7605 = vmatpush2.msra.mxu0 0.0
        %7606 = vmatprep.subr.mxu0 0.0
        %7607 = vmatpush2.msra.mxu0 0.0
        %7608 = vmatprep.subr.mxu0 0.0
        %7609 = vmatpush2.msra.mxu0 0.0
        %7610 = vmatprep.subr.mxu0 0.0
        %7611 = vmatpush2.msra.mxu0 0.0
        %7612 = vmatprep.subr.mxu0 0.0
        %7613 = vmatpush2.msra.mxu0 0.0
        %7614 = vmatprep.subr.mxu0 0.0
        %7615 = vmatpush2.msra.mxu0 0.0
        %7616 = vmatprep.subr.mxu0 0.0
        %7617 = vmatpush2.msra.mxu0 0.0
        %7618 = vmatprep.subr.mxu0 0.0
        %7619 = vmatpush2.msra.mxu0 0.0
        %7620 = vmatprep.subr.mxu0 0.0
        %7621 = vmatpush2.msra.mxu0 0.0
        %7622 = vmatprep.subr.mxu0 0.0
        %7623 = vmatpush2.msra.mxu0 0.0
        %7624 = vmatprep.subr.mxu0 0.0
        %7625 = vmatpush2.msra.mxu0 0.0
        %7626 = vmatprep.subr.mxu0 0.0
        %7627 = vmatpush2.msra.mxu0 0.0
        %7628 = vmatprep.subr.mxu0 0.0
        %7629 = vmatpush2.msra.mxu0 0.0
        %7630 = vmatprep.subr.mxu0 0.0
        %7631 = vmatpush2.msra.mxu0 0.0
        %7632 = vmatprep.mubr.f32.mxu0 0.0
        %7633 = vmatmul.mubr.f32.gmra.mxu0 %v7545
        %v7634 = vpop.f32.mrf.mxu0
        %v7635 = vadd.f32 0.0, %v7634
        %v7636 = vpop.f32.mrf.mxu0
        %7637 = vmatprep.mubr.f32.mxu0 0.0
        %7638 = vmatmul.mubr.f32.gmra.mxu0 %v7548
        %v7639 = vpop.f32.mrf.mxu0
        %v7640 = vadd.f32 0.0, %v7639
        %v7641 = vpop.f32.mrf.mxu0
        %7642 = vmatprep.mubr.f32.mxu0 0.0
        %7643 = vmatmul.mubr.f32.gmra.mxu0 %v7551
        %v7644 = vpop.f32.mrf.mxu0
        %v7645 = vadd.f32 0.0, %v7644
        %v7646 = vpop.f32.mrf.mxu0
        %7647 = vmatprep.mubr.f32.mxu0 0.0
        %7648 = vmatmul.mubr.f32.gmra.mxu0 %v7554
        %v7649 = vpop.f32.mrf.mxu0
        %v7650 = vadd.f32 0.0, %v7649
        %v7651 = vpop.f32.mrf.mxu0
        %7652 = vmatprep.mubr.f32.mxu0 0.0
        %7653 = vmatmul.mubr.f32.gmra.mxu0 %v7557
        %v7654 = vpop.f32.mrf.mxu0
        %v7655 = vadd.f32 0.0, %v7654
        %v7656 = vpop.f32.mrf.mxu0
        %7657 = vmatprep.mubr.f32.mxu0 0.0
        %7658 = vmatmul.mubr.f32.gmra.mxu0 %v7560
        %v7659 = vpop.f32.mrf.mxu0
        %v7660 = vadd.f32 0.0, %v7659
        %v7661 = vpop.f32.mrf.mxu0
        %7662 = vmatprep.mubr.f32.mxu0 0.0
        %7663 = vmatmul.mubr.f32.gmra.mxu0 %v7563
        %v7664 = vpop.f32.mrf.mxu0
        %v7665 = vadd.f32 0.0, %v7664
        %v7666 = vpop.f32.mrf.mxu0
        %7667 = vmatprep.mubr.f32.mxu0 0.0
        %7668 = vmatmul.mubr.f32.gmra.mxu0 %v7566
        %v7669 = vpop.f32.mrf.mxu0
        %v7670 = vadd.f32 0.0, %v7669
        %v7671 = vpop.f32.mrf.mxu0
        %7672 = vdwg.mxu0
        %v7673 = vadd.f32 %v7525, %v7635
        %v7674 = vadd.f32 %v7526, %v7640
        %v7675 = vadd.f32 %v7527, %v7645
        %v7676 = vadd.f32 %v7528, %v7650
        %v7677 = vadd.f32 %v7529, %v7655
        %v7678 = vadd.f32 %v7530, %v7660
        %v7679 = vadd.f32 %v7531, %v7665
        %v7680 = vadd.f32 %v7532, %v7670
        %s7681 = sadd.s32 16, %s7235
        %s7682 = scalar_lea.vmem [#allocation2], %s7681
        %v7683 = vld [vmem:[%s7682] sm:$0xff]
        %v7684 = vld [vmem:[%s7682 + $0x10] sm:$0xff]
        %v7685 = vld [vmem:[%s7682 + $0x20] sm:$0xff]
        %v7686 = vld [vmem:[%s7682 + $0x30] sm:$0xff]
        %v7687 = vld [vmem:[%s7682 + $0x40] sm:$0xff]
        %v7688 = vld [vmem:[%s7682 + $0x50] sm:$0xff]
        %v7689 = vld [vmem:[%s7682 + $0x60] sm:$0xff]
        %v7690 = vld [vmem:[%s7682 + $0x70] sm:$0xff]
        %s7691 = scalar_lea.vmem %s5, 336
        %v7692 = vld [vmem:[%s7691] sm:$0xff]
        %v7693 = vld [vmem:[%s7691 + $0x8] sm:$0xff]
        %v7695 = vsel %vm4598, %v7683, 0
        %v7698 = vsel %vm4598, %v7684, 0
        %v7701 = vsel %vm4598, %v7685, 0
        %v7704 = vsel %vm4598, %v7686, 0
        %v7707 = vsel %vm4598, %v7687, 0
        %v7710 = vsel %vm4598, %v7688, 0
        %v7713 = vsel %vm4598, %v7689, 0
        %v7716 = vsel %vm4598, %v7690, 0
        %7718 = vmatprep.subr.mxu0 0.0
        %7719 = vmatpush1.msra.mxu0 0.0
        %7720 = vmatprep.subr.mxu0 0.0
        %7721 = vmatpush1.msra.mxu0 0.0
        %7722 = vmatprep.subr.mxu0 0.0
        %7723 = vmatpush1.msra.mxu0 0.0
        %7724 = vmatprep.subr.mxu0 0.0
        %7725 = vmatpush1.msra.mxu0 0.0
        %7726 = vmatprep.subr.mxu0 0.0
        %7727 = vmatpush1.msra.mxu0 0.0
        %7728 = vmatprep.subr.mxu0 0.0
        %7729 = vmatpush1.msra.mxu0 0.0
        %7730 = vmatprep.subr.mxu0 0.0
        %7731 = vmatpush1.msra.mxu0 0.0
        %7732 = vmatprep.subr.mxu0 0.0
        %7733 = vmatpush1.msra.mxu0 0.0
        %7734 = vmatprep.subr.mxu0 0.0
        %7735 = vmatpush1.msra.mxu0 0.0
        %7736 = vmatprep.subr.mxu0 0.0
        %7737 = vmatpush1.msra.mxu0 0.0
        %7738 = vmatprep.subr.mxu0 0.0
        %7739 = vmatpush1.msra.mxu0 0.0
        %7740 = vmatprep.subr.mxu0 0.0
        %7741 = vmatpush1.msra.mxu0 0.0
        %7742 = vmatprep.subr.mxu0 0.0
        %7743 = vmatpush1.msra.mxu0 0.0
        %7744 = vmatprep.subr.mxu0 0.0
        %7745 = vmatpush1.msra.mxu0 0.0
        %7746 = vmatprep.subr.mxu0 0.0
        %7747 = vmatpush1.msra.mxu0 %v7693
        %7748 = vmatprep.subr.mxu0 0.0
        %7749 = vmatpush1.msra.mxu0 %v7692
        %7750 = vmatprep.subr.mxu0 0.0
        %7751 = vmatpush2.msra.mxu0 0.0
        %7752 = vmatprep.subr.mxu0 0.0
        %7753 = vmatpush2.msra.mxu0 0.0
        %7754 = vmatprep.subr.mxu0 0.0
        %7755 = vmatpush2.msra.mxu0 0.0
        %7756 = vmatprep.subr.mxu0 0.0
        %7757 = vmatpush2.msra.mxu0 0.0
        %7758 = vmatprep.subr.mxu0 0.0
        %7759 = vmatpush2.msra.mxu0 0.0
        %7760 = vmatprep.subr.mxu0 0.0
        %7761 = vmatpush2.msra.mxu0 0.0
        %7762 = vmatprep.subr.mxu0 0.0
        %7763 = vmatpush2.msra.mxu0 0.0
        %7764 = vmatprep.subr.mxu0 0.0
        %7765 = vmatpush2.msra.mxu0 0.0
        %7766 = vmatprep.subr.mxu0 0.0
        %7767 = vmatpush2.msra.mxu0 0.0
        %7768 = vmatprep.subr.mxu0 0.0
        %7769 = vmatpush2.msra.mxu0 0.0
        %7770 = vmatprep.subr.mxu0 0.0
        %7771 = vmatpush2.msra.mxu0 0.0
        %7772 = vmatprep.subr.mxu0 0.0
        %7773 = vmatpush2.msra.mxu0 0.0
        %7774 = vmatprep.subr.mxu0 0.0
        %7775 = vmatpush2.msra.mxu0 0.0
        %7776 = vmatprep.subr.mxu0 0.0
        %7777 = vmatpush2.msra.mxu0 0.0
        %7778 = vmatprep.subr.mxu0 0.0
        %7779 = vmatpush2.msra.mxu0 0.0
        %7780 = vmatprep.subr.mxu0 0.0
        %7781 = vmatpush2.msra.mxu0 0.0
        %7782 = vmatprep.mubr.f32.mxu0 0.0
        %7783 = vmatmul.mubr.f32.gmra.mxu0 %v7695
        %v7784 = vpop.f32.mrf.mxu0
        %v7785 = vadd.f32 0.0, %v7784
        %v7786 = vpop.f32.mrf.mxu0
        %7787 = vmatprep.mubr.f32.mxu0 0.0
        %7788 = vmatmul.mubr.f32.gmra.mxu0 %v7698
        %v7789 = vpop.f32.mrf.mxu0
        %v7790 = vadd.f32 0.0, %v7789
        %v7791 = vpop.f32.mrf.mxu0
        %7792 = vmatprep.mubr.f32.mxu0 0.0
        %7793 = vmatmul.mubr.f32.gmra.mxu0 %v7701
        %v7794 = vpop.f32.mrf.mxu0
        %v7795 = vadd.f32 0.0, %v7794
        %v7796 = vpop.f32.mrf.mxu0
        %7797 = vmatprep.mubr.f32.mxu0 0.0
        %7798 = vmatmul.mubr.f32.gmra.mxu0 %v7704
        %v7799 = vpop.f32.mrf.mxu0
        %v7800 = vadd.f32 0.0, %v7799
        %v7801 = vpop.f32.mrf.mxu0
        %7802 = vmatprep.mubr.f32.mxu0 0.0
        %7803 = vmatmul.mubr.f32.gmra.mxu0 %v7707
        %v7804 = vpop.f32.mrf.mxu0
        %v7805 = vadd.f32 0.0, %v7804
        %v7806 = vpop.f32.mrf.mxu0
        %7807 = vmatprep.mubr.f32.mxu0 0.0
        %7808 = vmatmul.mubr.f32.gmra.mxu0 %v7710
        %v7809 = vpop.f32.mrf.mxu0
        %v7810 = vadd.f32 0.0, %v7809
        %v7811 = vpop.f32.mrf.mxu0
        %7812 = vmatprep.mubr.f32.mxu0 0.0
        %7813 = vmatmul.mubr.f32.gmra.mxu0 %v7713
        %v7814 = vpop.f32.mrf.mxu0
        %v7815 = vadd.f32 0.0, %v7814
        %v7816 = vpop.f32.mrf.mxu0
        %7817 = vmatprep.mubr.f32.mxu0 0.0
        %7818 = vmatmul.mubr.f32.gmra.mxu0 %v7716
        %v7819 = vpop.f32.mrf.mxu0
        %v7820 = vadd.f32 0.0, %v7819
        %v7821 = vpop.f32.mrf.mxu0
        %7822 = vdwg.mxu0
        %v7823 = vadd.f32 %v7673, %v7785
        %v7824 = vadd.f32 %v7674, %v7790
        %v7825 = vadd.f32 %v7675, %v7795
        %v7826 = vadd.f32 %v7676, %v7800
        %v7827 = vadd.f32 %v7677, %v7805
        %v7828 = vadd.f32 %v7678, %v7810
        %v7829 = vadd.f32 %v7679, %v7815
        %v7830 = vadd.f32 %v7680, %v7820
        %v7831 = vld [vmem:[%s7682 + $0x1] sm:$0xff]
        %v7832 = vld [vmem:[%s7682 + $0x11] sm:$0xff]
        %v7833 = vld [vmem:[%s7682 + $0x21] sm:$0xff]
        %v7834 = vld [vmem:[%s7682 + $0x31] sm:$0xff]
        %v7835 = vld [vmem:[%s7682 + $0x41] sm:$0xff]
        %v7836 = vld [vmem:[%s7682 + $0x51] sm:$0xff]
        %v7837 = vld [vmem:[%s7682 + $0x61] sm:$0xff]
        %v7838 = vld [vmem:[%s7682 + $0x71] sm:$0xff]
        %s7839 = scalar_lea.vmem %s5, 352
        %v7840 = vld [vmem:[%s7839] sm:$0xff]
        %v7841 = vld [vmem:[%s7839 + $0x8] sm:$0xff]
        %v7843 = vsel %vm4598, %v7831, 0
        %v7846 = vsel %vm4598, %v7832, 0
        %v7849 = vsel %vm4598, %v7833, 0
        %v7852 = vsel %vm4598, %v7834, 0
        %v7855 = vsel %vm4598, %v7835, 0
        %v7858 = vsel %vm4598, %v7836, 0
        %v7861 = vsel %vm4598, %v7837, 0
        %v7864 = vsel %vm4598, %v7838, 0
        %7866 = vmatprep.subr.mxu0 0.0
        %7867 = vmatpush1.msra.mxu0 0.0
        %7868 = vmatprep.subr.mxu0 0.0
        %7869 = vmatpush1.msra.mxu0 0.0
        %7870 = vmatprep.subr.mxu0 0.0
        %7871 = vmatpush1.msra.mxu0 0.0
        %7872 = vmatprep.subr.mxu0 0.0
        %7873 = vmatpush1.msra.mxu0 0.0
        %7874 = vmatprep.subr.mxu0 0.0
        %7875 = vmatpush1.msra.mxu0 0.0
        %7876 = vmatprep.subr.mxu0 0.0
        %7877 = vmatpush1.msra.mxu0 0.0
        %7878 = vmatprep.subr.mxu0 0.0
        %7879 = vmatpush1.msra.mxu0 0.0
        %7880 = vmatprep.subr.mxu0 0.0
        %7881 = vmatpush1.msra.mxu0 0.0
        %7882 = vmatprep.subr.mxu0 0.0
        %7883 = vmatpush1.msra.mxu0 0.0
        %7884 = vmatprep.subr.mxu0 0.0
        %7885 = vmatpush1.msra.mxu0 0.0
        %7886 = vmatprep.subr.mxu0 0.0
        %7887 = vmatpush1.msra.mxu0 0.0
        %7888 = vmatprep.subr.mxu0 0.0
        %7889 = vmatpush1.msra.mxu0 0.0
        %7890 = vmatprep.subr.mxu0 0.0
        %7891 = vmatpush1.msra.mxu0 0.0
        %7892 = vmatprep.subr.mxu0 0.0
        %7893 = vmatpush1.msra.mxu0 0.0
        %7894 = vmatprep.subr.mxu0 0.0
        %7895 = vmatpush1.msra.mxu0 %v7841
        %7896 = vmatprep.subr.mxu0 0.0
        %7897 = vmatpush1.msra.mxu0 %v7840
        %7898 = vmatprep.subr.mxu0 0.0
        %7899 = vmatpush2.msra.mxu0 0.0
        %7900 = vmatprep.subr.mxu0 0.0
        %7901 = vmatpush2.msra.mxu0 0.0
        %7902 = vmatprep.subr.mxu0 0.0
        %7903 = vmatpush2.msra.mxu0 0.0
        %7904 = vmatprep.subr.mxu0 0.0
        %7905 = vmatpush2.msra.mxu0 0.0
        %7906 = vmatprep.subr.mxu0 0.0
        %7907 = vmatpush2.msra.mxu0 0.0
        %7908 = vmatprep.subr.mxu0 0.0
        %7909 = vmatpush2.msra.mxu0 0.0
        %7910 = vmatprep.subr.mxu0 0.0
        %7911 = vmatpush2.msra.mxu0 0.0
        %7912 = vmatprep.subr.mxu0 0.0
        %7913 = vmatpush2.msra.mxu0 0.0
        %7914 = vmatprep.subr.mxu0 0.0
        %7915 = vmatpush2.msra.mxu0 0.0
        %7916 = vmatprep.subr.mxu0 0.0
        %7917 = vmatpush2.msra.mxu0 0.0
        %7918 = vmatprep.subr.mxu0 0.0
        %7919 = vmatpush2.msra.mxu0 0.0
        %7920 = vmatprep.subr.mxu0 0.0
        %7921 = vmatpush2.msra.mxu0 0.0
        %7922 = vmatprep.subr.mxu0 0.0
        %7923 = vmatpush2.msra.mxu0 0.0
        %7924 = vmatprep.subr.mxu0 0.0
        %7925 = vmatpush2.msra.mxu0 0.0
        %7926 = vmatprep.subr.mxu0 0.0
        %7927 = vmatpush2.msra.mxu0 0.0
        %7928 = vmatprep.subr.mxu0 0.0
        %7929 = vmatpush2.msra.mxu0 0.0
        %7930 = vmatprep.mubr.f32.mxu0 0.0
        %7931 = vmatmul.mubr.f32.gmra.mxu0 %v7843
        %v7932 = vpop.f32.mrf.mxu0
        %v7933 = vadd.f32 0.0, %v7932
        %v7934 = vpop.f32.mrf.mxu0
        %7935 = vmatprep.mubr.f32.mxu0 0.0
        %7936 = vmatmul.mubr.f32.gmra.mxu0 %v7846
        %v7937 = vpop.f32.mrf.mxu0
        %v7938 = vadd.f32 0.0, %v7937
        %v7939 = vpop.f32.mrf.mxu0
        %7940 = vmatprep.mubr.f32.mxu0 0.0
        %7941 = vmatmul.mubr.f32.gmra.mxu0 %v7849
        %v7942 = vpop.f32.mrf.mxu0
        %v7943 = vadd.f32 0.0, %v7942
        %v7944 = vpop.f32.mrf.mxu0
        %7945 = vmatprep.mubr.f32.mxu0 0.0
        %7946 = vmatmul.mubr.f32.gmra.mxu0 %v7852
        %v7947 = vpop.f32.mrf.mxu0
        %v7948 = vadd.f32 0.0, %v7947
        %v7949 = vpop.f32.mrf.mxu0
        %7950 = vmatprep.mubr.f32.mxu0 0.0
        %7951 = vmatmul.mubr.f32.gmra.mxu0 %v7855
        %v7952 = vpop.f32.mrf.mxu0
        %v7953 = vadd.f32 0.0, %v7952
        %v7954 = vpop.f32.mrf.mxu0
        %7955 = vmatprep.mubr.f32.mxu0 0.0
        %7956 = vmatmul.mubr.f32.gmra.mxu0 %v7858
        %v7957 = vpop.f32.mrf.mxu0
        %v7958 = vadd.f32 0.0, %v7957
        %v7959 = vpop.f32.mrf.mxu0
        %7960 = vmatprep.mubr.f32.mxu0 0.0
        %7961 = vmatmul.mubr.f32.gmra.mxu0 %v7861
        %v7962 = vpop.f32.mrf.mxu0
        %v7963 = vadd.f32 0.0, %v7962
        %v7964 = vpop.f32.mrf.mxu0
        %7965 = vmatprep.mubr.f32.mxu0 0.0
        %7966 = vmatmul.mubr.f32.gmra.mxu0 %v7864
        %v7967 = vpop.f32.mrf.mxu0
        %v7968 = vadd.f32 0.0, %v7967
        %v7969 = vpop.f32.mrf.mxu0
        %7970 = vdwg.mxu0
        %v7971 = vadd.f32 %v7823, %v7933
        %v7972 = vadd.f32 %v7824, %v7938
        %v7973 = vadd.f32 %v7825, %v7943
        %v7974 = vadd.f32 %v7826, %v7948
        %v7975 = vadd.f32 %v7827, %v7953
        %v7976 = vadd.f32 %v7828, %v7958
        %v7977 = vadd.f32 %v7829, %v7963
        %v7978 = vadd.f32 %v7830, %v7968
        %v7979 = vld [vmem:[%s7682 + $0x2] sm:$0xff]
        %v7980 = vld [vmem:[%s7682 + $0x12] sm:$0xff]
        %v7981 = vld [vmem:[%s7682 + $0x22] sm:$0xff]
        %v7982 = vld [vmem:[%s7682 + $0x32] sm:$0xff]
        %v7983 = vld [vmem:[%s7682 + $0x42] sm:$0xff]
        %v7984 = vld [vmem:[%s7682 + $0x52] sm:$0xff]
        %v7985 = vld [vmem:[%s7682 + $0x62] sm:$0xff]
        %v7986 = vld [vmem:[%s7682 + $0x72] sm:$0xff]
        %s7987 = scalar_lea.vmem %s5, 368
        %v7988 = vld [vmem:[%s7987] sm:$0xff]
        %v7989 = vld [vmem:[%s7987 + $0x8] sm:$0xff]
        %v7991 = vsel %vm4598, %v7979, 0
        %v7994 = vsel %vm4598, %v7980, 0
        %v7997 = vsel %vm4598, %v7981, 0
        %v8000 = vsel %vm4598, %v7982, 0
        %v8003 = vsel %vm4598, %v7983, 0
        %v8006 = vsel %vm4598, %v7984, 0
        %v8009 = vsel %vm4598, %v7985, 0
        %v8012 = vsel %vm4598, %v7986, 0
        %8014 = vmatprep.subr.mxu0 0.0
        %8015 = vmatpush1.msra.mxu0 0.0
        %8016 = vmatprep.subr.mxu0 0.0
        %8017 = vmatpush1.msra.mxu0 0.0
        %8018 = vmatprep.subr.mxu0 0.0
        %8019 = vmatpush1.msra.mxu0 0.0
        %8020 = vmatprep.subr.mxu0 0.0
        %8021 = vmatpush1.msra.mxu0 0.0
        %8022 = vmatprep.subr.mxu0 0.0
        %8023 = vmatpush1.msra.mxu0 0.0
        %8024 = vmatprep.subr.mxu0 0.0
        %8025 = vmatpush1.msra.mxu0 0.0
        %8026 = vmatprep.subr.mxu0 0.0
        %8027 = vmatpush1.msra.mxu0 0.0
        %8028 = vmatprep.subr.mxu0 0.0
        %8029 = vmatpush1.msra.mxu0 0.0
        %8030 = vmatprep.subr.mxu0 0.0
        %8031 = vmatpush1.msra.mxu0 0.0
        %8032 = vmatprep.subr.mxu0 0.0
        %8033 = vmatpush1.msra.mxu0 0.0
        %8034 = vmatprep.subr.mxu0 0.0
        %8035 = vmatpush1.msra.mxu0 0.0
        %8036 = vmatprep.subr.mxu0 0.0
        %8037 = vmatpush1.msra.mxu0 0.0
        %8038 = vmatprep.subr.mxu0 0.0
        %8039 = vmatpush1.msra.mxu0 0.0
        %8040 = vmatprep.subr.mxu0 0.0
        %8041 = vmatpush1.msra.mxu0 0.0
        %8042 = vmatprep.subr.mxu0 0.0
        %8043 = vmatpush1.msra.mxu0 %v7989
        %8044 = vmatprep.subr.mxu0 0.0
        %8045 = vmatpush1.msra.mxu0 %v7988
        %8046 = vmatprep.subr.mxu0 0.0
        %8047 = vmatpush2.msra.mxu0 0.0
        %8048 = vmatprep.subr.mxu0 0.0
        %8049 = vmatpush2.msra.mxu0 0.0
        %8050 = vmatprep.subr.mxu0 0.0
        %8051 = vmatpush2.msra.mxu0 0.0
        %8052 = vmatprep.subr.mxu0 0.0
        %8053 = vmatpush2.msra.mxu0 0.0
        %8054 = vmatprep.subr.mxu0 0.0
        %8055 = vmatpush2.msra.mxu0 0.0
        %8056 = vmatprep.subr.mxu0 0.0
        %8057 = vmatpush2.msra.mxu0 0.0
        %8058 = vmatprep.subr.mxu0 0.0
        %8059 = vmatpush2.msra.mxu0 0.0
        %8060 = vmatprep.subr.mxu0 0.0
        %8061 = vmatpush2.msra.mxu0 0.0
        %8062 = vmatprep.subr.mxu0 0.0
        %8063 = vmatpush2.msra.mxu0 0.0
        %8064 = vmatprep.subr.mxu0 0.0
        %8065 = vmatpush2.msra.mxu0 0.0
        %8066 = vmatprep.subr.mxu0 0.0
        %8067 = vmatpush2.msra.mxu0 0.0
        %8068 = vmatprep.subr.mxu0 0.0
        %8069 = vmatpush2.msra.mxu0 0.0
        %8070 = vmatprep.subr.mxu0 0.0
        %8071 = vmatpush2.msra.mxu0 0.0
        %8072 = vmatprep.subr.mxu0 0.0
        %8073 = vmatpush2.msra.mxu0 0.0
        %8074 = vmatprep.subr.mxu0 0.0
        %8075 = vmatpush2.msra.mxu0 0.0
        %8076 = vmatprep.subr.mxu0 0.0
        %8077 = vmatpush2.msra.mxu0 0.0
        %8078 = vmatprep.mubr.f32.mxu0 0.0
        %8079 = vmatmul.mubr.f32.gmra.mxu0 %v7991
        %v8080 = vpop.f32.mrf.mxu0
        %v8081 = vadd.f32 0.0, %v8080
        %v8082 = vpop.f32.mrf.mxu0
        %8083 = vmatprep.mubr.f32.mxu0 0.0
        %8084 = vmatmul.mubr.f32.gmra.mxu0 %v7994
        %v8085 = vpop.f32.mrf.mxu0
        %v8086 = vadd.f32 0.0, %v8085
        %v8087 = vpop.f32.mrf.mxu0
        %8088 = vmatprep.mubr.f32.mxu0 0.0
        %8089 = vmatmul.mubr.f32.gmra.mxu0 %v7997
        %v8090 = vpop.f32.mrf.mxu0
        %v8091 = vadd.f32 0.0, %v8090
        %v8092 = vpop.f32.mrf.mxu0
        %8093 = vmatprep.mubr.f32.mxu0 0.0
        %8094 = vmatmul.mubr.f32.gmra.mxu0 %v8000
        %v8095 = vpop.f32.mrf.mxu0
        %v8096 = vadd.f32 0.0, %v8095
        %v8097 = vpop.f32.mrf.mxu0
        %8098 = vmatprep.mubr.f32.mxu0 0.0
        %8099 = vmatmul.mubr.f32.gmra.mxu0 %v8003
        %v8100 = vpop.f32.mrf.mxu0
        %v8101 = vadd.f32 0.0, %v8100
        %v8102 = vpop.f32.mrf.mxu0
        %8103 = vmatprep.mubr.f32.mxu0 0.0
        %8104 = vmatmul.mubr.f32.gmra.mxu0 %v8006
        %v8105 = vpop.f32.mrf.mxu0
        %v8106 = vadd.f32 0.0, %v8105
        %v8107 = vpop.f32.mrf.mxu0
        %8108 = vmatprep.mubr.f32.mxu0 0.0
        %8109 = vmatmul.mubr.f32.gmra.mxu0 %v8009
        %v8110 = vpop.f32.mrf.mxu0
        %v8111 = vadd.f32 0.0, %v8110
        %v8112 = vpop.f32.mrf.mxu0
        %8113 = vmatprep.mubr.f32.mxu0 0.0
        %8114 = vmatmul.mubr.f32.gmra.mxu0 %v8012
        %v8115 = vpop.f32.mrf.mxu0
        %v8116 = vadd.f32 0.0, %v8115
        %v8117 = vpop.f32.mrf.mxu0
        %8118 = vdwg.mxu0
        %v8119 = vadd.f32 %v7971, %v8081
        %v8120 = vadd.f32 %v7972, %v8086
        %v8121 = vadd.f32 %v7973, %v8091
        %v8122 = vadd.f32 %v7974, %v8096
        %v8123 = vadd.f32 %v7975, %v8101
        %v8124 = vadd.f32 %v7976, %v8106
        %v8125 = vadd.f32 %v7977, %v8111
        %v8126 = vadd.f32 %v7978, %v8116
        %s8127 = sadd.s32 32, %s7235
        %s8128 = scalar_lea.vmem [#allocation2], %s8127
        %v8129 = vld [vmem:[%s8128] sm:$0xff]
        %v8130 = vld [vmem:[%s8128 + $0x10] sm:$0xff]
        %v8131 = vld [vmem:[%s8128 + $0x20] sm:$0xff]
        %v8132 = vld [vmem:[%s8128 + $0x30] sm:$0xff]
        %v8133 = vld [vmem:[%s8128 + $0x40] sm:$0xff]
        %v8134 = vld [vmem:[%s8128 + $0x50] sm:$0xff]
        %v8135 = vld [vmem:[%s8128 + $0x60] sm:$0xff]
        %v8136 = vld [vmem:[%s8128 + $0x70] sm:$0xff]
        %s8137 = scalar_lea.vmem %s5, 384
        %v8138 = vld [vmem:[%s8137] sm:$0xff]
        %v8139 = vld [vmem:[%s8137 + $0x8] sm:$0xff]
        %v8141 = vsel %vm4598, %v8129, 0
        %v8144 = vsel %vm4598, %v8130, 0
        %v8147 = vsel %vm4598, %v8131, 0
        %v8150 = vsel %vm4598, %v8132, 0
        %v8153 = vsel %vm4598, %v8133, 0
        %v8156 = vsel %vm4598, %v8134, 0
        %v8159 = vsel %vm4598, %v8135, 0
        %v8162 = vsel %vm4598, %v8136, 0
        %8164 = vmatprep.subr.mxu0 0.0
        %8165 = vmatpush1.msra.mxu0 0.0
        %8166 = vmatprep.subr.mxu0 0.0
        %8167 = vmatpush1.msra.mxu0 0.0
        %8168 = vmatprep.subr.mxu0 0.0
        %8169 = vmatpush1.msra.mxu0 0.0
        %8170 = vmatprep.subr.mxu0 0.0
        %8171 = vmatpush1.msra.mxu0 0.0
        %8172 = vmatprep.subr.mxu0 0.0
        %8173 = vmatpush1.msra.mxu0 0.0
        %8174 = vmatprep.subr.mxu0 0.0
        %8175 = vmatpush1.msra.mxu0 0.0
        %8176 = vmatprep.subr.mxu0 0.0
        %8177 = vmatpush1.msra.mxu0 0.0
        %8178 = vmatprep.subr.mxu0 0.0
        %8179 = vmatpush1.msra.mxu0 0.0
        %8180 = vmatprep.subr.mxu0 0.0
        %8181 = vmatpush1.msra.mxu0 0.0
        %8182 = vmatprep.subr.mxu0 0.0
        %8183 = vmatpush1.msra.mxu0 0.0
        %8184 = vmatprep.subr.mxu0 0.0
        %8185 = vmatpush1.msra.mxu0 0.0
        %8186 = vmatprep.subr.mxu0 0.0
        %8187 = vmatpush1.msra.mxu0 0.0
        %8188 = vmatprep.subr.mxu0 0.0
        %8189 = vmatpush1.msra.mxu0 0.0
        %8190 = vmatprep.subr.mxu0 0.0
        %8191 = vmatpush1.msra.mxu0 0.0
        %8192 = vmatprep.subr.mxu0 0.0
        %8193 = vmatpush1.msra.mxu0 %v8139
        %8194 = vmatprep.subr.mxu0 0.0
        %8195 = vmatpush1.msra.mxu0 %v8138
        %8196 = vmatprep.subr.mxu0 0.0
        %8197 = vmatpush2.msra.mxu0 0.0
        %8198 = vmatprep.subr.mxu0 0.0
        %8199 = vmatpush2.msra.mxu0 0.0
        %8200 = vmatprep.subr.mxu0 0.0
        %8201 = vmatpush2.msra.mxu0 0.0
        %8202 = vmatprep.subr.mxu0 0.0
        %8203 = vmatpush2.msra.mxu0 0.0
        %8204 = vmatprep.subr.mxu0 0.0
        %8205 = vmatpush2.msra.mxu0 0.0
        %8206 = vmatprep.subr.mxu0 0.0
        %8207 = vmatpush2.msra.mxu0 0.0
        %8208 = vmatprep.subr.mxu0 0.0
        %8209 = vmatpush2.msra.mxu0 0.0
        %8210 = vmatprep.subr.mxu0 0.0
        %8211 = vmatpush2.msra.mxu0 0.0
        %8212 = vmatprep.subr.mxu0 0.0
        %8213 = vmatpush2.msra.mxu0 0.0
        %8214 = vmatprep.subr.mxu0 0.0
        %8215 = vmatpush2.msra.mxu0 0.0
        %8216 = vmatprep.subr.mxu0 0.0
        %8217 = vmatpush2.msra.mxu0 0.0
        %8218 = vmatprep.subr.mxu0 0.0
        %8219 = vmatpush2.msra.mxu0 0.0
        %8220 = vmatprep.subr.mxu0 0.0
        %8221 = vmatpush2.msra.mxu0 0.0
        %8222 = vmatprep.subr.mxu0 0.0
        %8223 = vmatpush2.msra.mxu0 0.0
        %8224 = vmatprep.subr.mxu0 0.0
        %8225 = vmatpush2.msra.mxu0 0.0
        %8226 = vmatprep.subr.mxu0 0.0
        %8227 = vmatpush2.msra.mxu0 0.0
        %8228 = vmatprep.mubr.f32.mxu0 0.0
        %8229 = vmatmul.mubr.f32.gmra.mxu0 %v8141
        %v8230 = vpop.f32.mrf.mxu0
        %v8231 = vadd.f32 0.0, %v8230
        %v8232 = vpop.f32.mrf.mxu0
        %8233 = vmatprep.mubr.f32.mxu0 0.0
        %8234 = vmatmul.mubr.f32.gmra.mxu0 %v8144
        %v8235 = vpop.f32.mrf.mxu0
        %v8236 = vadd.f32 0.0, %v8235
        %v8237 = vpop.f32.mrf.mxu0
        %8238 = vmatprep.mubr.f32.mxu0 0.0
        %8239 = vmatmul.mubr.f32.gmra.mxu0 %v8147
        %v8240 = vpop.f32.mrf.mxu0
        %v8241 = vadd.f32 0.0, %v8240
        %v8242 = vpop.f32.mrf.mxu0
        %8243 = vmatprep.mubr.f32.mxu0 0.0
        %8244 = vmatmul.mubr.f32.gmra.mxu0 %v8150
        %v8245 = vpop.f32.mrf.mxu0
        %v8246 = vadd.f32 0.0, %v8245
        %v8247 = vpop.f32.mrf.mxu0
        %8248 = vmatprep.mubr.f32.mxu0 0.0
        %8249 = vmatmul.mubr.f32.gmra.mxu0 %v8153
        %v8250 = vpop.f32.mrf.mxu0
        %v8251 = vadd.f32 0.0, %v8250
        %v8252 = vpop.f32.mrf.mxu0
        %8253 = vmatprep.mubr.f32.mxu0 0.0
        %8254 = vmatmul.mubr.f32.gmra.mxu0 %v8156
        %v8255 = vpop.f32.mrf.mxu0
        %v8256 = vadd.f32 0.0, %v8255
        %v8257 = vpop.f32.mrf.mxu0
        %8258 = vmatprep.mubr.f32.mxu0 0.0
        %8259 = vmatmul.mubr.f32.gmra.mxu0 %v8159
        %v8260 = vpop.f32.mrf.mxu0
        %v8261 = vadd.f32 0.0, %v8260
        %v8262 = vpop.f32.mrf.mxu0
        %8263 = vmatprep.mubr.f32.mxu0 0.0
        %8264 = vmatmul.mubr.f32.gmra.mxu0 %v8162
        %v8265 = vpop.f32.mrf.mxu0
        %v8266 = vadd.f32 0.0, %v8265
        %v8267 = vpop.f32.mrf.mxu0
        %8268 = vdwg.mxu0
        %v8269 = vadd.f32 %v8119, %v8231
        %v8270 = vadd.f32 %v8120, %v8236
        %v8271 = vadd.f32 %v8121, %v8241
        %v8272 = vadd.f32 %v8122, %v8246
        %v8273 = vadd.f32 %v8123, %v8251
        %v8274 = vadd.f32 %v8124, %v8256
        %v8275 = vadd.f32 %v8125, %v8261
        %v8276 = vadd.f32 %v8126, %v8266
        %v8277 = vld [vmem:[%s8128 + $0x1] sm:$0xff]
        %v8278 = vld [vmem:[%s8128 + $0x11] sm:$0xff]
        %v8279 = vld [vmem:[%s8128 + $0x21] sm:$0xff]
        %v8280 = vld [vmem:[%s8128 + $0x31] sm:$0xff]
        %v8281 = vld [vmem:[%s8128 + $0x41] sm:$0xff]
        %v8282 = vld [vmem:[%s8128 + $0x51] sm:$0xff]
        %v8283 = vld [vmem:[%s8128 + $0x61] sm:$0xff]
        %v8284 = vld [vmem:[%s8128 + $0x71] sm:$0xff]
        %s8285 = scalar_lea.vmem %s5, 400
        %v8286 = vld [vmem:[%s8285] sm:$0xff]
        %v8287 = vld [vmem:[%s8285 + $0x8] sm:$0xff]
        %v8289 = vsel %vm4598, %v8277, 0
        %v8292 = vsel %vm4598, %v8278, 0
        %v8295 = vsel %vm4598, %v8279, 0
        %v8298 = vsel %vm4598, %v8280, 0
        %v8301 = vsel %vm4598, %v8281, 0
        %v8304 = vsel %vm4598, %v8282, 0
        %v8307 = vsel %vm4598, %v8283, 0
        %v8310 = vsel %vm4598, %v8284, 0
        %8312 = vmatprep.subr.mxu0 0.0
        %8313 = vmatpush1.msra.mxu0 0.0
        %8314 = vmatprep.subr.mxu0 0.0
        %8315 = vmatpush1.msra.mxu0 0.0
        %8316 = vmatprep.subr.mxu0 0.0
        %8317 = vmatpush1.msra.mxu0 0.0
        %8318 = vmatprep.subr.mxu0 0.0
        %8319 = vmatpush1.msra.mxu0 0.0
        %8320 = vmatprep.subr.mxu0 0.0
        %8321 = vmatpush1.msra.mxu0 0.0
        %8322 = vmatprep.subr.mxu0 0.0
        %8323 = vmatpush1.msra.mxu0 0.0
        %8324 = vmatprep.subr.mxu0 0.0
        %8325 = vmatpush1.msra.mxu0 0.0
        %8326 = vmatprep.subr.mxu0 0.0
        %8327 = vmatpush1.msra.mxu0 0.0
        %8328 = vmatprep.subr.mxu0 0.0
        %8329 = vmatpush1.msra.mxu0 0.0
        %8330 = vmatprep.subr.mxu0 0.0
        %8331 = vmatpush1.msra.mxu0 0.0
        %8332 = vmatprep.subr.mxu0 0.0
        %8333 = vmatpush1.msra.mxu0 0.0
        %8334 = vmatprep.subr.mxu0 0.0
        %8335 = vmatpush1.msra.mxu0 0.0
        %8336 = vmatprep.subr.mxu0 0.0
        %8337 = vmatpush1.msra.mxu0 0.0
        %8338 = vmatprep.subr.mxu0 0.0
        %8339 = vmatpush1.msra.mxu0 0.0
        %8340 = vmatprep.subr.mxu0 0.0
        %8341 = vmatpush1.msra.mxu0 %v8287
        %8342 = vmatprep.subr.mxu0 0.0
        %8343 = vmatpush1.msra.mxu0 %v8286
        %8344 = vmatprep.subr.mxu0 0.0
        %8345 = vmatpush2.msra.mxu0 0.0
        %8346 = vmatprep.subr.mxu0 0.0
        %8347 = vmatpush2.msra.mxu0 0.0
        %8348 = vmatprep.subr.mxu0 0.0
        %8349 = vmatpush2.msra.mxu0 0.0
        %8350 = vmatprep.subr.mxu0 0.0
        %8351 = vmatpush2.msra.mxu0 0.0
        %8352 = vmatprep.subr.mxu0 0.0
        %8353 = vmatpush2.msra.mxu0 0.0
        %8354 = vmatprep.subr.mxu0 0.0
        %8355 = vmatpush2.msra.mxu0 0.0
        %8356 = vmatprep.subr.mxu0 0.0
        %8357 = vmatpush2.msra.mxu0 0.0
        %8358 = vmatprep.subr.mxu0 0.0
        %8359 = vmatpush2.msra.mxu0 0.0
        %8360 = vmatprep.subr.mxu0 0.0
        %8361 = vmatpush2.msra.mxu0 0.0
        %8362 = vmatprep.subr.mxu0 0.0
        %8363 = vmatpush2.msra.mxu0 0.0
        %8364 = vmatprep.subr.mxu0 0.0
        %8365 = vmatpush2.msra.mxu0 0.0
        %8366 = vmatprep.subr.mxu0 0.0
        %8367 = vmatpush2.msra.mxu0 0.0
        %8368 = vmatprep.subr.mxu0 0.0
        %8369 = vmatpush2.msra.mxu0 0.0
        %8370 = vmatprep.subr.mxu0 0.0
        %8371 = vmatpush2.msra.mxu0 0.0
        %8372 = vmatprep.subr.mxu0 0.0
        %8373 = vmatpush2.msra.mxu0 0.0
        %8374 = vmatprep.subr.mxu0 0.0
        %8375 = vmatpush2.msra.mxu0 0.0
        %8376 = vmatprep.mubr.f32.mxu0 0.0
        %8377 = vmatmul.mubr.f32.gmra.mxu0 %v8289
        %v8378 = vpop.f32.mrf.mxu0
        %v8379 = vadd.f32 0.0, %v8378
        %v8380 = vpop.f32.mrf.mxu0
        %8381 = vmatprep.mubr.f32.mxu0 0.0
        %8382 = vmatmul.mubr.f32.gmra.mxu0 %v8292
        %v8383 = vpop.f32.mrf.mxu0
        %v8384 = vadd.f32 0.0, %v8383
        %v8385 = vpop.f32.mrf.mxu0
        %8386 = vmatprep.mubr.f32.mxu0 0.0
        %8387 = vmatmul.mubr.f32.gmra.mxu0 %v8295
        %v8388 = vpop.f32.mrf.mxu0
        %v8389 = vadd.f32 0.0, %v8388
        %v8390 = vpop.f32.mrf.mxu0
        %8391 = vmatprep.mubr.f32.mxu0 0.0
        %8392 = vmatmul.mubr.f32.gmra.mxu0 %v8298
        %v8393 = vpop.f32.mrf.mxu0
        %v8394 = vadd.f32 0.0, %v8393
        %v8395 = vpop.f32.mrf.mxu0
        %8396 = vmatprep.mubr.f32.mxu0 0.0
        %8397 = vmatmul.mubr.f32.gmra.mxu0 %v8301
        %v8398 = vpop.f32.mrf.mxu0
        %v8399 = vadd.f32 0.0, %v8398
        %v8400 = vpop.f32.mrf.mxu0
        %8401 = vmatprep.mubr.f32.mxu0 0.0
        %8402 = vmatmul.mubr.f32.gmra.mxu0 %v8304
        %v8403 = vpop.f32.mrf.mxu0
        %v8404 = vadd.f32 0.0, %v8403
        %v8405 = vpop.f32.mrf.mxu0
        %8406 = vmatprep.mubr.f32.mxu0 0.0
        %8407 = vmatmul.mubr.f32.gmra.mxu0 %v8307
        %v8408 = vpop.f32.mrf.mxu0
        %v8409 = vadd.f32 0.0, %v8408
        %v8410 = vpop.f32.mrf.mxu0
        %8411 = vmatprep.mubr.f32.mxu0 0.0
        %8412 = vmatmul.mubr.f32.gmra.mxu0 %v8310
        %v8413 = vpop.f32.mrf.mxu0
        %v8414 = vadd.f32 0.0, %v8413
        %v8415 = vpop.f32.mrf.mxu0
        %8416 = vdwg.mxu0
        %v8417 = vadd.f32 %v8269, %v8379
        %v8418 = vadd.f32 %v8270, %v8384
        %v8419 = vadd.f32 %v8271, %v8389
        %v8420 = vadd.f32 %v8272, %v8394
        %v8421 = vadd.f32 %v8273, %v8399
        %v8422 = vadd.f32 %v8274, %v8404
        %v8423 = vadd.f32 %v8275, %v8409
        %v8424 = vadd.f32 %v8276, %v8414
        %v8425 = vld [vmem:[%s8128 + $0x2] sm:$0xff]
        %v8426 = vld [vmem:[%s8128 + $0x12] sm:$0xff]
        %v8427 = vld [vmem:[%s8128 + $0x22] sm:$0xff]
        %v8428 = vld [vmem:[%s8128 + $0x32] sm:$0xff]
        %v8429 = vld [vmem:[%s8128 + $0x42] sm:$0xff]
        %v8430 = vld [vmem:[%s8128 + $0x52] sm:$0xff]
        %v8431 = vld [vmem:[%s8128 + $0x62] sm:$0xff]
        %v8432 = vld [vmem:[%s8128 + $0x72] sm:$0xff]
        %s8433 = scalar_lea.vmem %s5, 416
        %v8434 = vld [vmem:[%s8433] sm:$0xff]
        %v8435 = vld [vmem:[%s8433 + $0x8] sm:$0xff]
        %v8437 = vsel %vm4598, %v8425, 0
        %v8440 = vsel %vm4598, %v8426, 0
        %v8443 = vsel %vm4598, %v8427, 0
        %v8446 = vsel %vm4598, %v8428, 0
        %v8449 = vsel %vm4598, %v8429, 0
        %v8452 = vsel %vm4598, %v8430, 0
        %v8455 = vsel %vm4598, %v8431, 0
        %v8458 = vsel %vm4598, %v8432, 0
        %8460 = vmatprep.subr.mxu0 0.0
        %8461 = vmatpush1.msra.mxu0 0.0
        %8462 = vmatprep.subr.mxu0 0.0
        %8463 = vmatpush1.msra.mxu0 0.0
        %8464 = vmatprep.subr.mxu0 0.0
        %8465 = vmatpush1.msra.mxu0 0.0
        %8466 = vmatprep.subr.mxu0 0.0
        %8467 = vmatpush1.msra.mxu0 0.0
        %8468 = vmatprep.subr.mxu0 0.0
        %8469 = vmatpush1.msra.mxu0 0.0
        %8470 = vmatprep.subr.mxu0 0.0
        %8471 = vmatpush1.msra.mxu0 0.0
        %8472 = vmatprep.subr.mxu0 0.0
        %8473 = vmatpush1.msra.mxu0 0.0
        %8474 = vmatprep.subr.mxu0 0.0
        %8475 = vmatpush1.msra.mxu0 0.0
        %8476 = vmatprep.subr.mxu0 0.0
        %8477 = vmatpush1.msra.mxu0 0.0
        %8478 = vmatprep.subr.mxu0 0.0
        %8479 = vmatpush1.msra.mxu0 0.0
        %8480 = vmatprep.subr.mxu0 0.0
        %8481 = vmatpush1.msra.mxu0 0.0
        %8482 = vmatprep.subr.mxu0 0.0
        %8483 = vmatpush1.msra.mxu0 0.0
        %8484 = vmatprep.subr.mxu0 0.0
        %8485 = vmatpush1.msra.mxu0 0.0
        %8486 = vmatprep.subr.mxu0 0.0
        %8487 = vmatpush1.msra.mxu0 0.0
        %8488 = vmatprep.subr.mxu0 0.0
        %8489 = vmatpush1.msra.mxu0 %v8435
        %8490 = vmatprep.subr.mxu0 0.0
        %8491 = vmatpush1.msra.mxu0 %v8434
        %8492 = vmatprep.subr.mxu0 0.0
        %8493 = vmatpush2.msra.mxu0 0.0
        %8494 = vmatprep.subr.mxu0 0.0
        %8495 = vmatpush2.msra.mxu0 0.0
        %8496 = vmatprep.subr.mxu0 0.0
        %8497 = vmatpush2.msra.mxu0 0.0
        %8498 = vmatprep.subr.mxu0 0.0
        %8499 = vmatpush2.msra.mxu0 0.0
        %8500 = vmatprep.subr.mxu0 0.0
        %8501 = vmatpush2.msra.mxu0 0.0
        %8502 = vmatprep.subr.mxu0 0.0
        %8503 = vmatpush2.msra.mxu0 0.0
        %8504 = vmatprep.subr.mxu0 0.0
        %8505 = vmatpush2.msra.mxu0 0.0
        %8506 = vmatprep.subr.mxu0 0.0
        %8507 = vmatpush2.msra.mxu0 0.0
        %8508 = vmatprep.subr.mxu0 0.0
        %8509 = vmatpush2.msra.mxu0 0.0
        %8510 = vmatprep.subr.mxu0 0.0
        %8511 = vmatpush2.msra.mxu0 0.0
        %8512 = vmatprep.subr.mxu0 0.0
        %8513 = vmatpush2.msra.mxu0 0.0
        %8514 = vmatprep.subr.mxu0 0.0
        %8515 = vmatpush2.msra.mxu0 0.0
        %8516 = vmatprep.subr.mxu0 0.0
        %8517 = vmatpush2.msra.mxu0 0.0
        %8518 = vmatprep.subr.mxu0 0.0
        %8519 = vmatpush2.msra.mxu0 0.0
        %8520 = vmatprep.subr.mxu0 0.0
        %8521 = vmatpush2.msra.mxu0 0.0
        %8522 = vmatprep.subr.mxu0 0.0
        %8523 = vmatpush2.msra.mxu0 0.0
        %8524 = vmatprep.mubr.f32.mxu0 0.0
        %8525 = vmatmul.mubr.f32.gmra.mxu0 %v8437
        %v8526 = vpop.f32.mrf.mxu0
        %v8527 = vadd.f32 0.0, %v8526
        %v8528 = vpop.f32.mrf.mxu0
        %8529 = vmatprep.mubr.f32.mxu0 0.0
        %8530 = vmatmul.mubr.f32.gmra.mxu0 %v8440
        %v8531 = vpop.f32.mrf.mxu0
        %v8532 = vadd.f32 0.0, %v8531
        %v8533 = vpop.f32.mrf.mxu0
        %8534 = vmatprep.mubr.f32.mxu0 0.0
        %8535 = vmatmul.mubr.f32.gmra.mxu0 %v8443
        %v8536 = vpop.f32.mrf.mxu0
        %v8537 = vadd.f32 0.0, %v8536
        %v8538 = vpop.f32.mrf.mxu0
        %8539 = vmatprep.mubr.f32.mxu0 0.0
        %8540 = vmatmul.mubr.f32.gmra.mxu0 %v8446
        %v8541 = vpop.f32.mrf.mxu0
        %v8542 = vadd.f32 0.0, %v8541
        %v8543 = vpop.f32.mrf.mxu0
        %8544 = vmatprep.mubr.f32.mxu0 0.0
        %8545 = vmatmul.mubr.f32.gmra.mxu0 %v8449
        %v8546 = vpop.f32.mrf.mxu0
        %v8547 = vadd.f32 0.0, %v8546
        %v8548 = vpop.f32.mrf.mxu0
        %8549 = vmatprep.mubr.f32.mxu0 0.0
        %8550 = vmatmul.mubr.f32.gmra.mxu0 %v8452
        %v8551 = vpop.f32.mrf.mxu0
        %v8552 = vadd.f32 0.0, %v8551
        %v8553 = vpop.f32.mrf.mxu0
        %8554 = vmatprep.mubr.f32.mxu0 0.0
        %8555 = vmatmul.mubr.f32.gmra.mxu0 %v8455
        %v8556 = vpop.f32.mrf.mxu0
        %v8557 = vadd.f32 0.0, %v8556
        %v8558 = vpop.f32.mrf.mxu0
        %8559 = vmatprep.mubr.f32.mxu0 0.0
        %8560 = vmatmul.mubr.f32.gmra.mxu0 %v8458
        %v8561 = vpop.f32.mrf.mxu0
        %v8562 = vadd.f32 0.0, %v8561
        %v8563 = vpop.f32.mrf.mxu0
        %8564 = vdwg.mxu0
        %v8565 = vadd.f32 %v8417, %v8527
        %v8566 = vadd.f32 %v8418, %v8532
        %v8567 = vadd.f32 %v8419, %v8537
        %v8568 = vadd.f32 %v8420, %v8542
        %v8569 = vadd.f32 %v8421, %v8547
        %v8570 = vadd.f32 %v8422, %v8552
        %v8571 = vadd.f32 %v8423, %v8557
        %v8572 = vadd.f32 %v8424, %v8562
        %v8573 = vld [vmem:[%s6] sm:$0x1]
        %v8575 = vlaneseq
        %v8576 = vshrl.u32 %v8575, 7
        %v8577 = vsub.s32 0, %v8576
        %v8578 = vrot.slane %v8573, %v8577
        %v8580 = vadd.f32 %v8565, %v8578
        %v8581 = vadd.f32 %v8566, %v8578
        %v8582 = vadd.f32 %v8567, %v8578
        %v8583 = vadd.f32 %v8568, %v8578
        %v8584 = vadd.f32 %v8569, %v8578
        %v8585 = vadd.f32 %v8570, %v8578
        %v8586 = vadd.f32 %v8571, %v8578
        %v8587 = vadd.f32 %v8572, %v8578
        %vm8588 = vcmask 15360
        %8589 = vst.msk [vmem:[%s450] sm:$0xff] %vm8588, %v8580
        %8590 = vst.msk [vmem:[%s450 + $0x8] sm:$0xff] %vm8588, %v8581
        %8591 = vst.msk [vmem:[%s450 + $0x10] sm:$0xff] %vm8588, %v8582
        %8592 = vst.msk [vmem:[%s450 + $0x18] sm:$0xff] %vm8588, %v8583
        %8593 = vst.msk [vmem:[%s450 + $0x20] sm:$0xff] %vm8588, %v8584
        %8594 = vst.msk [vmem:[%s450 + $0x28] sm:$0xff] %vm8588, %v8585
        %8595 = vst.msk [vmem:[%s450 + $0x30] sm:$0xff] %vm8588, %v8586
        %8596 = vst.msk [vmem:[%s450 + $0x38] sm:$0xff] %vm8588, %v8587
      $region64: #{flowhead3d_forward.1} parent=47 // pred_fallthru
        _
      %s8597 = ssub.s32 %s23, 1
      %p8598 = scmp.gt.s32.totalorder %s8597, 0
      %s8599 = scalar_select %p8598, %s8597, 0
      %p8600 = scmp.lt.s32.totalorder %s22, 1
      %s8601 = scalar_select %p8600, %s22, 1
      %p8602 = scmp.lt.s32.totalorder %s8599, 7
      %s8603 = scalar_select %p8602, %s8599, 7
      %s8604 = smul.addr %s8603, 8
      %s8605 = smul.addr %s8601, 64
      %s8606 = sadd.s32 %s8604, %s8605
      %s8607 = smul.addr %s8606, 8
      %s8608 = scalar_lea.vmem %s7, %s8607
      // Predicated region
      $region65: #{flowhead3d_forward.1} parent=47 // pred_check
        %p8609 = pneg %p240
      $region66: #{flowhead3d_forward.1} parent=47 // pred_check_branch
        %8611 = sbr.rel (%p8609) target = $region68
      $region67: #{flowhead3d_forward.1} parent=47 // pred_region
        %s8612 = ssub.s32 %s23, 1
        %p8613 = scmp.gt.s32.totalorder %s8612, 0
        %s8614 = scalar_select %p8613, %s8612, 0
      $region68: #{flowhead3d_forward.1} parent=47 // pred_fallthru
        _
    $region48: #{flowhead3d_forward.1} parent=5 // pred_fallthru
      _
    %p8615 = scmp.le.s32.totalorder 2, %s13
    // Predicated region
    $region69: #{flowhead3d_forward.1} parent=5 // pred_check
      %p8616 = pneg %p8615
    $region70: #{flowhead3d_forward.1} parent=5 // pred_check_branch
      %8618 = sbr.rel (%p8616) target = $region72
    $region71: #{flowhead3d_forward.1} parent=5 // pred_region
      %s8619 = ssub.s32 %s13, 2
      // Predicated region
      $region73: #{flowhead3d_forward.1} parent=71 // pred_check
        %p8620 = pneg %p246
      $region74: #{flowhead3d_forward.1} parent=71 // pred_check_branch
        %8622 = sbr.rel (%p8620) target = $region76
      $region75: #{flowhead3d_forward.1} parent=71 // pred_region
        %s8623 = ssub.s32 %s25, 1
        %p8624 = scmp.gt.s32.totalorder %s8623, 0
        %s8625 = scalar_select %p8624, %s8623, 0
        %p8626 = scmp.lt.s32.totalorder %s24, 1
        %s8627 = scalar_select %p8626, %s24, 1
        %p8628 = scmp.lt.s32.totalorder %s8625, 7
        %s8629 = scalar_select %p8628, %s8625, 7
        %s8630 = smul.addr %s8629, 8
        %s8631 = smul.addr %s8627, 64
        %s8632 = sadd.s32 %s8630, %s8631
        %s8633 = smul.addr %s8632, 8
        %s8634 = scalar_lea.vmem %s7, %s8633
      $region76: #{flowhead3d_forward.1} parent=71 // pred_fallthru
        _
    $region72: #{flowhead3d_forward.1} parent=5 // pred_fallthru
      _
  $region6: #{flowhead3d_forward.1} parent=0 // loop_footer
    %s17 = sadd.s32 1, %s13
  $region7: #{flowhead3d_forward.1} parent=0 // loop_footer_branch
    %12 = sbr.rel target = $region3
  $region8: #{flowhead3d_forward.1} parent=0 // loop_exit
    _

</llo_original>
